<compile_context>
chip_gen: v7x
topology: tpu7x:2x2x1
jax: 0.10.0
libtpu: 0.0.40
codegen_flags: <defaults>
</compile_context>

<pallas_src>
import math
import numpy as np
import jax
import jax.numpy as jnp
from jax.experimental import pallas as pl
from jax.experimental.pallas import tpu as pltpu

KERNEL_SIZE = 3
DILATIONS = (1, 3, 5)
N_LAYERS = 3
LOWPASS_WIDTH = 12
ROLLOFF = 0.5
BETA = 4.663800127934911
TIME_TILE = 128          # lane tile used by the banded resample / conv matmuls


# ----------------------- glue: deterministic filter / parameter setup -------

def _kaiser_sinc_kernel(orig, new):
    """Mirror of torchaudio._get_sinc_resample_kernel (kaiser_window method)."""
    base_freq = min(orig, new) * ROLLOFF
    width = int(math.ceil(LOWPASS_WIDTH * orig / base_freq))
    idx = np.arange(-width, width + orig, dtype=np.float64) / orig
    t = np.arange(0, -new, -1, dtype=np.float64)[:, None] / new + idx[None, :]
    t = t * base_freq
    t = np.clip(t, -LOWPASS_WIDTH, LOWPASS_WIDTH)
    window = np.i0(BETA * np.sqrt(1.0 - (t / LOWPASS_WIDTH) ** 2)) / np.i0(BETA)
    t = t * math.pi
    scale = base_freq / orig
    safe_t = np.where(t == 0.0, 1.0, t)
    kernels = np.where(t == 0.0, 1.0, np.sin(safe_t) / safe_t) * window * scale
    return kernels, width  # (new, 2*width + orig), int


def _resample_matrix(length, orig, new):
    """Dense R (reference only): torchaudio-resample(x) == x @ R."""
    kernels, width = _kaiser_sinc_kernel(orig, new)
    n_taps = kernels.shape[1]
    out_len = int(math.ceil(new * length / orig))
    n_frames = length // orig + 1
    R = np.zeros((length, out_len), dtype=np.float32)
    for fr in range(n_frames):
        for p in range(new):
            to = fr * new + p
            if to >= out_len:
                continue
            for j in range(n_taps):
                ti = fr * orig + j - width
                if 0 <= ti < length:
                    R[ti, to] += kernels[p, j]
    return R


def _band_matrix_up(tt):
    """Banded x2-upsample matrix: (3*tt, 2*tt).  Output tile o of the upsampled
    signal = xext[:, o*tt : o*tt + 3*tt] @ B, where xext has one zero tile of
    halo on each side.  Exactly reproduces the dense torchaudio matrix."""
    k, width = _kaiser_sinc_kernel(1, 2)          # (2, 2*width + 1)
    assert tt >= width
    B = np.zeros((3 * tt, 2 * tt), np.float32)
    for c in range(2 * tt):
        p, f = c % 2, c // 2
        for j in range(k.shape[1]):
            r = tt + f + j - width
            if 0 <= r < 3 * tt:
                B[r, c] += k[p, j]
    return B


def _band_matrix_dn(tt):
    """Banded x2-downsample matrix: (4*tt, tt).  Output tile o of the
    downsampled signal = upext[:, 2*o*tt : 2*o*tt + 4*tt] @ B, where upext has
    one zero tile (tt lanes) of halo on each side.  Tight 128-aligned window
    around the FIR support: 1.5x fewer FLOPs than a (6*tt, tt) band while
    exactly reproducing the dense torchaudio matrix."""
    k, width = _kaiser_sinc_kernel(2, 1)          # (1, 2*width + 2)
    n_taps = k.shape[1]
    # FIR support of output column c is rows [tt - width, tt + 2*(tt-1) + n_taps-1 - width]
    assert tt >= width and 3 * tt + n_taps - 1 - width < 4 * tt
    B = np.zeros((4 * tt, tt), np.float32)
    for c in range(tt):
        for j in range(n_taps):
            r = tt + 2 * c + j - width
            B[r, c] += k[0, j]
    return B


def init_params(channels, key):
    """Deterministic synthetic parameters matching AMPBlock.__init__ shapes."""
    kw1, kw2, kb1, kb2 = jax.random.split(key, 4)
    # init_weights: normal(0, 0.01); weight_norm is identity at init.
    w1 = 0.01 * jax.random.normal(kw1, (N_LAYERS, KERNEL_SIZE, channels, channels), jnp.float32)
    w2 = 0.01 * jax.random.normal(kw2, (N_LAYERS, KERNEL_SIZE, channels, channels), jnp.float32)
    b1 = 0.01 * jax.random.normal(kb1, (N_LAYERS, channels, 1), jnp.float32)
    b2 = 0.01 * jax.random.normal(kb2, (N_LAYERS, channels, 1), jnp.float32)
    a1 = jnp.ones((N_LAYERS, channels, 1), jnp.float32)   # alpha1 = ones(1, C, 1)
    a2 = jnp.ones((N_LAYERS, channels, 1), jnp.float32)   # alpha2 = ones(1, C, 1)
    return dict(w1=w1, b1=b1, a1=a1, w2=w2, b2=b2, a2=a2)


def _round_up(n, m):
    return ((n + m - 1) // m) * m


# ----------------------- fused Pallas forward --------------------------------

def amp_block(x, params):
    """Fused AMPBlock forward: (B, C, T) f32 -> (B, C, T) f32."""
    B, C, T = x.shape
    TT = TIME_TILE
    Cp = _round_up(max(C, 8), 8)          # sublane alignment
    Tp = _round_up(T, TT)                 # lane-dense time
    ntiles = Tp // TT
    L, K = N_LAYERS, KERNEL_SIZE
    f32, bf16 = jnp.float32, jnp.bfloat16

    # ---- constant operands (host-side prep) --------------------------------
    bup = jnp.asarray(_band_matrix_up(TT), dtype=bf16)      # (3TT, 2TT)
    bdn = jnp.asarray(_band_matrix_dn(TT), dtype=bf16)      # (4TT, TT)

    def fold_w(w):   # (L, K, C, C) -> (L, Cp, K*Cp): taps folded into contraction
        wp = jnp.zeros((L, K, Cp, Cp), f32).at[:, :, :C, :C].set(w)
        return jnp.concatenate([wp[:, k] for k in range(K)], axis=-1).astype(bf16)

    def pad_cvec(v, fill):
        return jnp.full((L, Cp, 1), fill, f32).at[:, :C].set(v)

    w1c, w2c = fold_w(params["w1"]), fold_w(params["w2"])
    b1, b2 = pad_cvec(params["b1"], 0.0), pad_cvec(params["b2"], 0.0)
    a1, a2 = pad_cvec(params["a1"], 1.0), pad_cvec(params["a2"], 1.0)
    # TODO(synk): module computes a bare 1/alpha; add +1e-9 if trained alphas can hit 0.
    ia1, ia2 = 1.0 / a1, 1.0 / a2

    xp = jnp.zeros((B, Cp, Tp), f32).at[:, :C, :T].set(x.astype(f32))

    # ---- kernel body ---------------------------------------------------------
    def kernel(x_ref, bup_ref, bdn_ref, w1_ref, b1_ref, a1_ref, ia1_ref,
               w2_ref, b2_ref, a2_ref, ia2_ref, o_ref):
        lane1 = jax.lax.broadcasted_iota(jnp.int32, (Cp, Tp), 1)
        lane2 = jax.lax.broadcasted_iota(jnp.int32, (Cp, 2 * Tp), 1)
        # hoisted masks: true-length region of the padded buffers + conv edges
        tmask1 = (lane1 < T).astype(f32)
        tmask2 = (lane2 < 2 * T).astype(f32)
        emask = {d: ((lane1 >= d).astype(f32), (lane1 < T - d).astype(f32))
                 for d in sorted(set(DILATIONS) | {1})}
        zhalo = jnp.zeros((Cp, TT), f32)
        bup_m = bup_ref[...]
        bdn_m = bdn_ref[...]

        def up2(v):    # kaiser-sinc x2 upsample: banded matmul per 128-lane tile
            vext = jnp.concatenate([zhalo, v, zhalo], axis=1)        # zero halo tiles
            tiles = [jnp.dot(vext[:, o * TT:(o + 3) * TT].astype(bf16), bup_m,
                             preferred_element_type=f32)
                     for o in range(ntiles)]
            return tiles[0] if ntiles == 1 else jnp.concatenate(tiles, axis=1)

        def dn2(v):    # kaiser-sinc x2 downsample (tight 4*TT contraction window)
            vext = jnp.concatenate([zhalo, v, zhalo], axis=1)        # (Cp, 2Tp + 2TT)
            tiles = [jnp.dot(vext[:, 2 * o * TT:(2 * o + 4) * TT].astype(bf16), bdn_m,
                             preferred_element_type=f32)
                     for o in range(ntiles)]
            return tiles[0] if ntiles == 1 else jnp.concatenate(tiles, axis=1)

        def conv3(v, wcat, b, d):
            # 'same' dilated Conv1d (kernel_size=3) as ONE (Cp,3Cp)@(3Cp,Tp) MXU
            # matmul; shifted operands built on the XLU via roll + edge masks
            # (edge masks also reproduce the conv's zero padding at t<d, t>=T-d).
            ml, mr = emask[d]
            left = pltpu.roll(v, shift=d, axis=1) * ml            # v[t - d]
            right = pltpu.roll(v, shift=Tp - d, axis=1) * mr      # v[t + d]
            stk = jnp.concatenate([left, v, right], axis=0).astype(bf16)
            return jnp.dot(wcat, stk, preferred_element_type=f32) + b

        xcur = x_ref[0]                                      # (Cp, Tp) f32
        for i in range(N_LAYERS):
            d = DILATIONS[i]
            al1, inv1 = a1_ref[i], ia1_ref[i]
            al2, inv2 = a2_ref[i], ia2_ref[i]
            xt = up2(xcur)                                   # (Cp, 2Tp)
            xt = xt + inv1 * jnp.sin(al1 * xt) ** 2          # snake (f32 VPU/EUP)
            xt = xt * tmask2                                 # clip to true 2T length
            xt = dn2(xt)                                     # (Cp, Tp)
            xt = conv3(xt, w1_ref[i], b1_ref[i], d)          # convs1[i]
            xt = xt + inv2 * jnp.sin(al2 * xt) ** 2
            xt = conv3(xt, w2_ref[i], b2_ref[i], 1)          # convs2[i]
            xcur = xt * tmask1 + xcur                        # residual; t >= T stays 0
        o_ref[0] = xcur

    # ---- pallas_call plumbing ------------------------------------------------
    const_shapes = [
        (3 * TT, 2 * TT), (4 * TT, TT),
        (L, Cp, 3 * Cp), (L, Cp, 1), (L, Cp, 1), (L, Cp, 1),
        (L, Cp, 3 * Cp), (L, Cp, 1), (L, Cp, 1), (L, Cp, 1),
    ]
    args = (xp, bup, bdn, w1c, b1, a1, ia1, w2c, b2, a2, ia2)

    # VMEM residency estimate -> explicit scoped limit.
    bytes_const = 2 * int(bup.size + bdn.size + w1c.size + w2c.size) + 6 * L * Cp * 4
    bytes_io = 2 * 2 * Cp * Tp * 4                      # x + out blocks, double-buffered
    bytes_live = 6 * Cp * (2 * Tp + 4 * TT) * 4         # value intermediates (headroom)
    vmem_limit = int(min(64 * 2 ** 20,
                         max(4 * (bytes_const + bytes_io + bytes_live), 16 * 2 ** 20)))

    flops = int(B * N_LAYERS * (2 * Cp * 3 * TT * 2 * TT * ntiles       # upsample
                                + 2 * Cp * 4 * TT * TT * ntiles         # downsample
                                + 2 * 2 * Cp * 3 * Cp * Tp))            # two convs
    transcendentals = int(B * N_LAYERS * 3 * Cp * Tp)                   # sin at 2T + T rate
    bytes_accessed = int(2 * B * Cp * Tp * 4 + bytes_const)
    cost = pl.CostEstimate(flops=flops, transcendentals=transcendentals,
                           bytes_accessed=bytes_accessed)

    def build_call(single_buffer_consts):
        def const_spec(shape):
            kwargs = {}
            if single_buffer_consts:
                # constant block index across the batch grid -> no double buffer
                kwargs["pipeline_mode"] = pl.Buffered(1)
            return pl.BlockSpec(shape, lambda b: (0,) * len(shape), **kwargs)

        grid_spec = pltpu.PrefetchScalarGridSpec(
            num_scalar_prefetch=0,
            grid=(B,),
            in_specs=[pl.BlockSpec((1, Cp, Tp), lambda b: (b, 0, 0))]
                     + [const_spec(s) for s in const_shapes],
            out_specs=pl.BlockSpec((1, Cp, Tp), lambda b: (b, 0, 0)),
        )
        return pl.pallas_call(
            kernel,
            out_shape=jax.ShapeDtypeStruct((B, Cp, Tp), jnp.float32),
            grid_spec=grid_spec,
            compiler_params=pltpu.CompilerParams(
                dimension_semantics=("parallel",),
                vmem_limit_bytes=vmem_limit),
            cost_estimate=cost,
        )

    try:
        y = build_call(True)(*args)
    except Exception:
        # Compatibility fallback for jax versions that reject single-buffered
        # (Buffered(1)) constant inputs; semantics are identical.
        y = build_call(False)(*args)

    return y[:, :C, :T]


# ----------------------- pure-JAX reference (f32, dense resample) ------------

def amp_block_ref(x, params):
    B, C, T = x.shape
    rup = jnp.asarray(_resample_matrix(T, 1, 2))         # (T, 2T)
    rdn = jnp.asarray(_resample_matrix(2 * T, 2, 1))     # (2T, T)
    hp = jax.lax.Precision.HIGHEST

    def conv(xt, w, b, d):
        xpad = jnp.pad(xt, ((0, 0), (0, 0), (d, d)))
        out = jnp.broadcast_to(b[None], (B, C, T))
        for k in range(KERNEL_SIZE):
            out = out + jnp.einsum('oc,bct->bot', w[k],
                                   xpad[:, :, k * d:k * d + T], precision=hp)
        return out

    for i in range(N_LAYERS):
        d = DILATIONS[i]
        a1 = params["a1"][i][None]
        a2 = params["a2"][i][None]
        xt = jnp.einsum('bct,tu->bcu', x, rup, precision=hp)
        xt = xt + (1.0 / a1) * jnp.sin(a1 * xt) ** 2
        xt = jnp.einsum('bcu,ut->bct', xt, rdn, precision=hp)
        xt = conv(xt, params["w1"][i], params["b1"][i], d)
        xt = xt + (1.0 / a2) * jnp.sin(a2 * xt) ** 2
        xt = conv(xt, params["w2"][i], params["b2"][i], 1)
        x = xt + x
    return x


if __name__ == "__main__":
    B, C, T = 2, 4, 16
    key = jax.random.PRNGKey(0)
    kx, kp = jax.random.split(key)
    x = jax.random.normal(kx, (B, C, T), jnp.float32)
    params = init_params(C, kp)

    y = amp_block(x, params)
    jax.block_until_ready(y)
    assert y.shape == (B, C, T) and y.dtype == jnp.float32

    y_ref = amp_block_ref(x, params)
    # bf16 operands at the MXU dots (weights / resample filters / activations)
    # vs. a full-f32 reference -> loosened tolerance.
    if not bool(jnp.allclose(y, y_ref, atol=5e-3, rtol=5e-3)):
        raise SystemExit("Pallas kernel mismatch vs pure-JAX reference")
    print("KERNEL_OK")
</pallas_src>

<mosaic_0001>
module attributes {stable_mosaic.version = 11 : i64} {
  func.func @kernel(%arg0: i32, %arg1: memref<1x8x128xf32, #tpu.memory_space<vmem>>, %arg2: memref<384x256xbf16, #tpu.memory_space<vmem>>, %arg3: memref<512x128xbf16, #tpu.memory_space<vmem>>, %arg4: memref<3x8x24xbf16, #tpu.memory_space<vmem>>, %arg5: memref<3x8x1xf32, #tpu.memory_space<vmem>>, %arg6: memref<3x8x1xf32, #tpu.memory_space<vmem>>, %arg7: memref<3x8x1xf32, #tpu.memory_space<vmem>>, %arg8: memref<3x8x24xbf16, #tpu.memory_space<vmem>>, %arg9: memref<3x8x1xf32, #tpu.memory_space<vmem>>, %arg10: memref<3x8x1xf32, #tpu.memory_space<vmem>>, %arg11: memref<3x8x1xf32, #tpu.memory_space<vmem>>, %arg12: memref<1x8x128xf32, #tpu.memory_space<vmem>>) attributes {dimension_semantics = [#tpu.dimension_semantics<parallel>], iteration_bounds = array<i64: 2>, scalar_prefetch = 0 : i64, scratch_operands = 0 : i64, tpu.core_type = #tpu.core_type<tc>, window_params = [{transform_indices = @transform_0, window_bounds = array<i64: 1, 8, 128>}, {pipeline_mode = #tpu.pipeline_mode<synchronous>, transform_indices = @transform_1, window_bounds = array<i64: 384, 256>}, {pipeline_mode = #tpu.pipeline_mode<synchronous>, transform_indices = @transform_2, window_bounds = array<i64: 512, 128>}, {pipeline_mode = #tpu.pipeline_mode<synchronous>, transform_indices = @transform_3, window_bounds = array<i64: 3, 8, 24>}, {pipeline_mode = #tpu.pipeline_mode<synchronous>, transform_indices = @transform_4, window_bounds = array<i64: 3, 8, 1>}, {pipeline_mode = #tpu.pipeline_mode<synchronous>, transform_indices = @transform_5, window_bounds = array<i64: 3, 8, 1>}, {pipeline_mode = #tpu.pipeline_mode<synchronous>, transform_indices = @transform_6, window_bounds = array<i64: 3, 8, 1>}, {pipeline_mode = #tpu.pipeline_mode<synchronous>, transform_indices = @transform_7, window_bounds = array<i64: 3, 8, 24>}, {pipeline_mode = #tpu.pipeline_mode<synchronous>, transform_indices = @transform_8, window_bounds = array<i64: 3, 8, 1>}, {pipeline_mode = #tpu.pipeline_mode<synchronous>, transform_indices = @transform_9, window_bounds = array<i64: 3, 8, 1>}, {pipeline_mode = #tpu.pipeline_mode<synchronous>, transform_indices = @transform_10, window_bounds = array<i64: 3, 8, 1>}, {transform_indices = @transform_11, window_bounds = array<i64: 1, 8, 128>}]} {
    %0 = tpu.iota {dimensions = array<i32: 1>} : vector<8x128xi32>
    %1 = tpu.iota {dimensions = array<i32: 1>} : vector<8x256xi32>
    %c16_i32 = arith.constant 16 : i32
    %2 = vector.broadcast %c16_i32 : i32 to vector<8x128xi32>
    %3 = arith.cmpi slt, %0, %2 : vector<8x128xi32>
    %4 = arith.extui %3 : vector<8x128xi1> to vector<8x128xi32>
    %5 = arith.sitofp %4 : vector<8x128xi32> to vector<8x128xf32>
    %c32_i32 = arith.constant 32 : i32
    %6 = vector.broadcast %c32_i32 : i32 to vector<8x256xi32>
    %7 = arith.cmpi slt, %1, %6 : vector<8x256xi32>
    %8 = arith.extui %7 : vector<8x256xi1> to vector<8x256xi32>
    %9 = arith.sitofp %8 : vector<8x256xi32> to vector<8x256xf32>
    %c1_i32 = arith.constant 1 : i32
    %10 = vector.broadcast %c1_i32 : i32 to vector<8x128xi32>
    %11 = arith.cmpi sge, %0, %10 : vector<8x128xi32>
    %12 = arith.extui %11 : vector<8x128xi1> to vector<8x128xi32>
    %13 = arith.sitofp %12 : vector<8x128xi32> to vector<8x128xf32>
    %c15_i32 = arith.constant 15 : i32
    %14 = vector.broadcast %c15_i32 : i32 to vector<8x128xi32>
    %15 = arith.cmpi slt, %0, %14 : vector<8x128xi32>
    %16 = arith.extui %15 : vector<8x128xi1> to vector<8x128xi32>
    %17 = arith.sitofp %16 : vector<8x128xi32> to vector<8x128xf32>
    %c3_i32 = arith.constant 3 : i32
    %18 = vector.broadcast %c3_i32 : i32 to vector<8x128xi32>
    %19 = arith.cmpi sge, %0, %18 : vector<8x128xi32>
    %20 = arith.extui %19 : vector<8x128xi1> to vector<8x128xi32>
    %21 = arith.sitofp %20 : vector<8x128xi32> to vector<8x128xf32>
    %c13_i32 = arith.constant 13 : i32
    %22 = vector.broadcast %c13_i32 : i32 to vector<8x128xi32>
    %23 = arith.cmpi slt, %0, %22 : vector<8x128xi32>
    %24 = arith.extui %23 : vector<8x128xi1> to vector<8x128xi32>
    %25 = arith.sitofp %24 : vector<8x128xi32> to vector<8x128xf32>
    %c5_i32 = arith.constant 5 : i32
    %26 = vector.broadcast %c5_i32 : i32 to vector<8x128xi32>
    %27 = arith.cmpi sge, %0, %26 : vector<8x128xi32>
    %28 = arith.extui %27 : vector<8x128xi1> to vector<8x128xi32>
    %29 = arith.sitofp %28 : vector<8x128xi32> to vector<8x128xf32>
    %c11_i32 = arith.constant 11 : i32
    %30 = vector.broadcast %c11_i32 : i32 to vector<8x128xi32>
    %31 = arith.cmpi slt, %0, %30 : vector<8x128xi32>
    %32 = arith.extui %31 : vector<8x128xi1> to vector<8x128xi32>
    %33 = arith.sitofp %32 : vector<8x128xi32> to vector<8x128xf32>
    %cst = arith.constant 0.000000e+00 : f32
    %34 = vector.broadcast %cst : f32 to vector<8x128xf32>
    %c0 = arith.constant 0 : index
    %c0_0 = arith.constant 0 : index
    %35 = vector.load %arg2[%c0, %c0_0] : memref<384x256xbf16, #tpu.memory_space<vmem>>, vector<384x256xbf16>
    %c0_1 = arith.constant 0 : index
    %c0_2 = arith.constant 0 : index
    %36 = vector.load %arg3[%c0_1, %c0_2] : memref<512x128xbf16, #tpu.memory_space<vmem>>, vector<512x128xbf16>
    %c0_3 = arith.constant 0 : index
    %c0_4 = arith.constant 0 : index
    %c0_5 = arith.constant 0 : index
    %37 = vector.load %arg1[%c0_3, %c0_4, %c0_5] : memref<1x8x128xf32, #tpu.memory_space<vmem>>, vector<1x8x128xf32>
    %38 = vector.shape_cast %37 : vector<1x8x128xf32> to vector<8x128xf32>
    %c0_6 = arith.constant 0 : index
    %c0_7 = arith.constant 0 : index
    %c0_8 = arith.constant 0 : index
    %39 = vector.load %arg6[%c0_6, %c0_7, %c0_8] : memref<3x8x1xf32, #tpu.memory_space<vmem>>, vector<1x8x1xf32>
    %40 = vector.shape_cast %39 : vector<1x8x1xf32> to vector<8x1xf32>
    %c0_9 = arith.constant 0 : index
    %c0_10 = arith.constant 0 : index
    %c0_11 = arith.constant 0 : index
    %41 = vector.load %arg7[%c0_9, %c0_10, %c0_11] : memref<3x8x1xf32, #tpu.memory_space<vmem>>, vector<1x8x1xf32>
    %42 = vector.shape_cast %41 : vector<1x8x1xf32> to vector<8x1xf32>
    %c0_12 = arith.constant 0 : index
    %c0_13 = arith.constant 0 : index
    %c0_14 = arith.constant 0 : index
    %43 = vector.load %arg10[%c0_12, %c0_13, %c0_14] : memref<3x8x1xf32, #tpu.memory_space<vmem>>, vector<1x8x1xf32>
    %44 = vector.shape_cast %43 : vector<1x8x1xf32> to vector<8x1xf32>
    %c0_15 = arith.constant 0 : index
    %c0_16 = arith.constant 0 : index
    %c0_17 = arith.constant 0 : index
    %45 = vector.load %arg11[%c0_15, %c0_16, %c0_17] : memref<3x8x1xf32, #tpu.memory_space<vmem>>, vector<1x8x1xf32>
    %46 = vector.shape_cast %45 : vector<1x8x1xf32> to vector<8x1xf32>
    %47 = tpu.concatenate %34, %38, %34 in 1 : vector<8x128xf32>, vector<8x128xf32>, vector<8x128xf32> -> vector<8x384xf32>
    %48 = arith.truncf %47 : vector<8x384xf32> to vector<8x384xbf16>
    %cst_18 = arith.constant dense<0.000000e+00> : vector<8x256xf32>
    %49 = tpu.matmul %48, %35, %cst_18 {dimension_numbers = #tpu.dot_dimension_numbers<[1], [0], [0], [1], [0, 0, 1, 1], [], []>} : vector<8x384xbf16>, vector<384x256xbf16>, vector<8x256xf32> -> vector<8x256xf32>
    %50 = vector.broadcast %40 : vector<8x1xf32> to vector<8x256xf32>
    %51 = arith.mulf %50, %49 : vector<8x256xf32>
    %52 = math.sin %51 : vector<8x256xf32>
    %53 = arith.mulf %52, %52 : vector<8x256xf32>
    %54 = vector.broadcast %42 : vector<8x1xf32> to vector<8x256xf32>
    %55 = arith.mulf %54, %53 : vector<8x256xf32>
    %56 = arith.addf %49, %55 : vector<8x256xf32>
    %57 = arith.mulf %56, %9 : vector<8x256xf32>
    %58 = tpu.concatenate %34, %57, %34 in 1 : vector<8x128xf32>, vector<8x256xf32>, vector<8x128xf32> -> vector<8x512xf32>
    %59 = arith.truncf %58 : vector<8x512xf32> to vector<8x512xbf16>
    %cst_19 = arith.constant dense<0.000000e+00> : vector<8x128xf32>
    %60 = tpu.matmul %59, %36, %cst_19 {dimension_numbers = #tpu.dot_dimension_numbers<[1], [0], [0], [1], [0, 0, 1, 1], [], []>} : vector<8x512xbf16>, vector<512x128xbf16>, vector<8x128xf32> -> vector<8x128xf32>
    %c0_20 = arith.constant 0 : index
    %c0_21 = arith.constant 0 : index
    %c0_22 = arith.constant 0 : index
    %61 = vector.load %arg4[%c0_20, %c0_21, %c0_22] : memref<3x8x24xbf16, #tpu.memory_space<vmem>>, vector<1x8x24xbf16>
    %62 = vector.shape_cast %61 : vector<1x8x24xbf16> to vector<8x24xbf16>
    %c0_23 = arith.constant 0 : index
    %c0_24 = arith.constant 0 : index
    %c0_25 = arith.constant 0 : index
    %63 = vector.load %arg5[%c0_23, %c0_24, %c0_25] : memref<3x8x1xf32, #tpu.memory_space<vmem>>, vector<1x8x1xf32>
    %64 = vector.shape_cast %63 : vector<1x8x1xf32> to vector<8x1xf32>
    %c1_i32_26 = arith.constant 1 : i32
    %65 = tpu.dynamic_rotate %60 by %c1_i32_26 dim 1 : vector<8x128xf32>, i32 -> vector<8x128xf32>
    %66 = arith.mulf %65, %13 : vector<8x128xf32>
    %c127_i32 = arith.constant 127 : i32
    %67 = tpu.dynamic_rotate %60 by %c127_i32 dim 1 : vector<8x128xf32>, i32 -> vector<8x128xf32>
    %68 = arith.mulf %67, %17 : vector<8x128xf32>
    %69 = tpu.concatenate %66, %60, %68 in 0 : vector<8x128xf32>, vector<8x128xf32>, vector<8x128xf32> -> vector<24x128xf32>
    %70 = arith.truncf %69 : vector<24x128xf32> to vector<24x128xbf16>
    %cst_27 = arith.constant dense<0.000000e+00> : vector<8x128xf32>
    %71 = tpu.matmul %62, %70, %cst_27 {dimension_numbers = #tpu.dot_dimension_numbers<[1], [0], [0], [1], [0, 0, 1, 1], [], []>} : vector<8x24xbf16>, vector<24x128xbf16>, vector<8x128xf32> -> vector<8x128xf32>
    %72 = vector.broadcast %64 : vector<8x1xf32> to vector<8x128xf32>
    %73 = arith.addf %71, %72 : vector<8x128xf32>
    %74 = vector.broadcast %44 : vector<8x1xf32> to vector<8x128xf32>
    %75 = arith.mulf %74, %73 : vector<8x128xf32>
    %76 = math.sin %75 : vector<8x128xf32>
    %77 = arith.mulf %76, %76 : vector<8x128xf32>
    %78 = vector.broadcast %46 : vector<8x1xf32> to vector<8x128xf32>
    %79 = arith.mulf %78, %77 : vector<8x128xf32>
    %80 = arith.addf %73, %79 : vector<8x128xf32>
    %c0_28 = arith.constant 0 : index
    %c0_29 = arith.constant 0 : index
    %c0_30 = arith.constant 0 : index
    %81 = vector.load %arg8[%c0_28, %c0_29, %c0_30] : memref<3x8x24xbf16, #tpu.memory_space<vmem>>, vector<1x8x24xbf16>
    %82 = vector.shape_cast %81 : vector<1x8x24xbf16> to vector<8x24xbf16>
    %c0_31 = arith.constant 0 : index
    %c0_32 = arith.constant 0 : index
    %c0_33 = arith.constant 0 : index
    %83 = vector.load %arg9[%c0_31, %c0_32, %c0_33] : memref<3x8x1xf32, #tpu.memory_space<vmem>>, vector<1x8x1xf32>
    %84 = vector.shape_cast %83 : vector<1x8x1xf32> to vector<8x1xf32>
    %c1_i32_34 = arith.constant 1 : i32
    %85 = tpu.dynamic_rotate %80 by %c1_i32_34 dim 1 : vector<8x128xf32>, i32 -> vector<8x128xf32>
    %86 = arith.mulf %85, %13 : vector<8x128xf32>
    %c127_i32_35 = arith.constant 127 : i32
    %87 = tpu.dynamic_rotate %80 by %c127_i32_35 dim 1 : vector<8x128xf32>, i32 -> vector<8x128xf32>
    %88 = arith.mulf %87, %17 : vector<8x128xf32>
    %89 = tpu.concatenate %86, %80, %88 in 0 : vector<8x128xf32>, vector<8x128xf32>, vector<8x128xf32> -> vector<24x128xf32>
    %90 = arith.truncf %89 : vector<24x128xf32> to vector<24x128xbf16>
    %cst_36 = arith.constant dense<0.000000e+00> : vector<8x128xf32>
    %91 = tpu.matmul %82, %90, %cst_36 {dimension_numbers = #tpu.dot_dimension_numbers<[1], [0], [0], [1], [0, 0, 1, 1], [], []>} : vector<8x24xbf16>, vector<24x128xbf16>, vector<8x128xf32> -> vector<8x128xf32>
    %92 = vector.broadcast %84 : vector<8x1xf32> to vector<8x128xf32>
    %93 = arith.addf %91, %92 : vector<8x128xf32>
    %94 = arith.mulf %93, %5 : vector<8x128xf32>
    %95 = arith.addf %94, %38 : vector<8x128xf32>
    %c1 = arith.constant 1 : index
    %c0_37 = arith.constant 0 : index
    %c0_38 = arith.constant 0 : index
    %96 = vector.load %arg6[%c1, %c0_37, %c0_38] : memref<3x8x1xf32, #tpu.memory_space<vmem>>, vector<1x8x1xf32>
    %97 = vector.shape_cast %96 : vector<1x8x1xf32> to vector<8x1xf32>
    %c1_39 = arith.constant 1 : index
    %c0_40 = arith.constant 0 : index
    %c0_41 = arith.constant 0 : index
    %98 = vector.load %arg7[%c1_39, %c0_40, %c0_41] : memref<3x8x1xf32, #tpu.memory_space<vmem>>, vector<1x8x1xf32>
    %99 = vector.shape_cast %98 : vector<1x8x1xf32> to vector<8x1xf32>
    %c1_42 = arith.constant 1 : index
    %c0_43 = arith.constant 0 : index
    %c0_44 = arith.constant 0 : index
    %100 = vector.load %arg10[%c1_42, %c0_43, %c0_44] : memref<3x8x1xf32, #tpu.memory_space<vmem>>, vector<1x8x1xf32>
    %101 = vector.shape_cast %100 : vector<1x8x1xf32> to vector<8x1xf32>
    %c1_45 = arith.constant 1 : index
    %c0_46 = arith.constant 0 : index
    %c0_47 = arith.constant 0 : index
    %102 = vector.load %arg11[%c1_45, %c0_46, %c0_47] : memref<3x8x1xf32, #tpu.memory_space<vmem>>, vector<1x8x1xf32>
    %103 = vector.shape_cast %102 : vector<1x8x1xf32> to vector<8x1xf32>
    %104 = tpu.concatenate %34, %95, %34 in 1 : vector<8x128xf32>, vector<8x128xf32>, vector<8x128xf32> -> vector<8x384xf32>
    %105 = arith.truncf %104 : vector<8x384xf32> to vector<8x384xbf16>
    %cst_48 = arith.constant dense<0.000000e+00> : vector<8x256xf32>
    %106 = tpu.matmul %105, %35, %cst_48 {dimension_numbers = #tpu.dot_dimension_numbers<[1], [0], [0], [1], [0, 0, 1, 1], [], []>} : vector<8x384xbf16>, vector<384x256xbf16>, vector<8x256xf32> -> vector<8x256xf32>
    %107 = vector.broadcast %97 : vector<8x1xf32> to vector<8x256xf32>
    %108 = arith.mulf %107, %106 : vector<8x256xf32>
    %109 = math.sin %108 : vector<8x256xf32>
    %110 = arith.mulf %109, %109 : vector<8x256xf32>
    %111 = vector.broadcast %99 : vector<8x1xf32> to vector<8x256xf32>
    %112 = arith.mulf %111, %110 : vector<8x256xf32>
    %113 = arith.addf %106, %112 : vector<8x256xf32>
    %114 = arith.mulf %113, %9 : vector<8x256xf32>
    %115 = tpu.concatenate %34, %114, %34 in 1 : vector<8x128xf32>, vector<8x256xf32>, vector<8x128xf32> -> vector<8x512xf32>
    %116 = arith.truncf %115 : vector<8x512xf32> to vector<8x512xbf16>
    %cst_49 = arith.constant dense<0.000000e+00> : vector<8x128xf32>
    %117 = tpu.matmul %116, %36, %cst_49 {dimension_numbers = #tpu.dot_dimension_numbers<[1], [0], [0], [1], [0, 0, 1, 1], [], []>} : vector<8x512xbf16>, vector<512x128xbf16>, vector<8x128xf32> -> vector<8x128xf32>
    %c1_50 = arith.constant 1 : index
    %c0_51 = arith.constant 0 : index
    %c0_52 = arith.constant 0 : index
    %118 = vector.load %arg4[%c1_50, %c0_51, %c0_52] : memref<3x8x24xbf16, #tpu.memory_space<vmem>>, vector<1x8x24xbf16>
    %119 = vector.shape_cast %118 : vector<1x8x24xbf16> to vector<8x24xbf16>
    %c1_53 = arith.constant 1 : index
    %c0_54 = arith.constant 0 : index
    %c0_55 = arith.constant 0 : index
    %120 = vector.load %arg5[%c1_53, %c0_54, %c0_55] : memref<3x8x1xf32, #tpu.memory_space<vmem>>, vector<1x8x1xf32>
    %121 = vector.shape_cast %120 : vector<1x8x1xf32> to vector<8x1xf32>
    %c3_i32_56 = arith.constant 3 : i32
    %122 = tpu.dynamic_rotate %117 by %c3_i32_56 dim 1 : vector<8x128xf32>, i32 -> vector<8x128xf32>
    %123 = arith.mulf %122, %21 : vector<8x128xf32>
    %c125_i32 = arith.constant 125 : i32
    %124 = tpu.dynamic_rotate %117 by %c125_i32 dim 1 : vector<8x128xf32>, i32 -> vector<8x128xf32>
    %125 = arith.mulf %124, %25 : vector<8x128xf32>
    %126 = tpu.concatenate %123, %117, %125 in 0 : vector<8x128xf32>, vector<8x128xf32>, vector<8x128xf32> -> vector<24x128xf32>
    %127 = arith.truncf %126 : vector<24x128xf32> to vector<24x128xbf16>
    %cst_57 = arith.constant dense<0.000000e+00> : vector<8x128xf32>
    %128 = tpu.matmul %119, %127, %cst_57 {dimension_numbers = #tpu.dot_dimension_numbers<[1], [0], [0], [1], [0, 0, 1, 1], [], []>} : vector<8x24xbf16>, vector<24x128xbf16>, vector<8x128xf32> -> vector<8x128xf32>
    %129 = vector.broadcast %121 : vector<8x1xf32> to vector<8x128xf32>
    %130 = arith.addf %128, %129 : vector<8x128xf32>
    %131 = vector.broadcast %101 : vector<8x1xf32> to vector<8x128xf32>
    %132 = arith.mulf %131, %130 : vector<8x128xf32>
    %133 = math.sin %132 : vector<8x128xf32>
    %134 = arith.mulf %133, %133 : vector<8x128xf32>
    %135 = vector.broadcast %103 : vector<8x1xf32> to vector<8x128xf32>
    %136 = arith.mulf %135, %134 : vector<8x128xf32>
    %137 = arith.addf %130, %136 : vector<8x128xf32>
    %c1_58 = arith.constant 1 : index
    %c0_59 = arith.constant 0 : index
    %c0_60 = arith.constant 0 : index
    %138 = vector.load %arg8[%c1_58, %c0_59, %c0_60] : memref<3x8x24xbf16, #tpu.memory_space<vmem>>, vector<1x8x24xbf16>
    %139 = vector.shape_cast %138 : vector<1x8x24xbf16> to vector<8x24xbf16>
    %c1_61 = arith.constant 1 : index
    %c0_62 = arith.constant 0 : index
    %c0_63 = arith.constant 0 : index
    %140 = vector.load %arg9[%c1_61, %c0_62, %c0_63] : memref<3x8x1xf32, #tpu.memory_space<vmem>>, vector<1x8x1xf32>
    %141 = vector.shape_cast %140 : vector<1x8x1xf32> to vector<8x1xf32>
    %c1_i32_64 = arith.constant 1 : i32
    %142 = tpu.dynamic_rotate %137 by %c1_i32_64 dim 1 : vector<8x128xf32>, i32 -> vector<8x128xf32>
    %143 = arith.mulf %142, %13 : vector<8x128xf32>
    %c127_i32_65 = arith.constant 127 : i32
    %144 = tpu.dynamic_rotate %137 by %c127_i32_65 dim 1 : vector<8x128xf32>, i32 -> vector<8x128xf32>
    %145 = arith.mulf %144, %17 : vector<8x128xf32>
    %146 = tpu.concatenate %143, %137, %145 in 0 : vector<8x128xf32>, vector<8x128xf32>, vector<8x128xf32> -> vector<24x128xf32>
    %147 = arith.truncf %146 : vector<24x128xf32> to vector<24x128xbf16>
    %cst_66 = arith.constant dense<0.000000e+00> : vector<8x128xf32>
    %148 = tpu.matmul %139, %147, %cst_66 {dimension_numbers = #tpu.dot_dimension_numbers<[1], [0], [0], [1], [0, 0, 1, 1], [], []>} : vector<8x24xbf16>, vector<24x128xbf16>, vector<8x128xf32> -> vector<8x128xf32>
    %149 = vector.broadcast %141 : vector<8x1xf32> to vector<8x128xf32>
    %150 = arith.addf %148, %149 : vector<8x128xf32>
    %151 = arith.mulf %150, %5 : vector<8x128xf32>
    %152 = arith.addf %151, %95 : vector<8x128xf32>
    %c2 = arith.constant 2 : index
    %c0_67 = arith.constant 0 : index
    %c0_68 = arith.constant 0 : index
    %153 = vector.load %arg6[%c2, %c0_67, %c0_68] : memref<3x8x1xf32, #tpu.memory_space<vmem>>, vector<1x8x1xf32>
    %154 = vector.shape_cast %153 : vector<1x8x1xf32> to vector<8x1xf32>
    %c2_69 = arith.constant 2 : index
    %c0_70 = arith.constant 0 : index
    %c0_71 = arith.constant 0 : index
    %155 = vector.load %arg7[%c2_69, %c0_70, %c0_71] : memref<3x8x1xf32, #tpu.memory_space<vmem>>, vector<1x8x1xf32>
    %156 = vector.shape_cast %155 : vector<1x8x1xf32> to vector<8x1xf32>
    %c2_72 = arith.constant 2 : index
    %c0_73 = arith.constant 0 : index
    %c0_74 = arith.constant 0 : index
    %157 = vector.load %arg10[%c2_72, %c0_73, %c0_74] : memref<3x8x1xf32, #tpu.memory_space<vmem>>, vector<1x8x1xf32>
    %158 = vector.shape_cast %157 : vector<1x8x1xf32> to vector<8x1xf32>
    %c2_75 = arith.constant 2 : index
    %c0_76 = arith.constant 0 : index
    %c0_77 = arith.constant 0 : index
    %159 = vector.load %arg11[%c2_75, %c0_76, %c0_77] : memref<3x8x1xf32, #tpu.memory_space<vmem>>, vector<1x8x1xf32>
    %160 = vector.shape_cast %159 : vector<1x8x1xf32> to vector<8x1xf32>
    %161 = tpu.concatenate %34, %152, %34 in 1 : vector<8x128xf32>, vector<8x128xf32>, vector<8x128xf32> -> vector<8x384xf32>
    %162 = arith.truncf %161 : vector<8x384xf32> to vector<8x384xbf16>
    %cst_78 = arith.constant dense<0.000000e+00> : vector<8x256xf32>
    %163 = tpu.matmul %162, %35, %cst_78 {dimension_numbers = #tpu.dot_dimension_numbers<[1], [0], [0], [1], [0, 0, 1, 1], [], []>} : vector<8x384xbf16>, vector<384x256xbf16>, vector<8x256xf32> -> vector<8x256xf32>
    %164 = vector.broadcast %154 : vector<8x1xf32> to vector<8x256xf32>
    %165 = arith.mulf %164, %163 : vector<8x256xf32>
    %166 = math.sin %165 : vector<8x256xf32>
    %167 = arith.mulf %166, %166 : vector<8x256xf32>
    %168 = vector.broadcast %156 : vector<8x1xf32> to vector<8x256xf32>
    %169 = arith.mulf %168, %167 : vector<8x256xf32>
    %170 = arith.addf %163, %169 : vector<8x256xf32>
    %171 = arith.mulf %170, %9 : vector<8x256xf32>
    %172 = tpu.concatenate %34, %171, %34 in 1 : vector<8x128xf32>, vector<8x256xf32>, vector<8x128xf32> -> vector<8x512xf32>
    %173 = arith.truncf %172 : vector<8x512xf32> to vector<8x512xbf16>
    %cst_79 = arith.constant dense<0.000000e+00> : vector<8x128xf32>
    %174 = tpu.matmul %173, %36, %cst_79 {dimension_numbers = #tpu.dot_dimension_numbers<[1], [0], [0], [1], [0, 0, 1, 1], [], []>} : vector<8x512xbf16>, vector<512x128xbf16>, vector<8x128xf32> -> vector<8x128xf32>
    %c2_80 = arith.constant 2 : index
    %c0_81 = arith.constant 0 : index
    %c0_82 = arith.constant 0 : index
    %175 = vector.load %arg4[%c2_80, %c0_81, %c0_82] : memref<3x8x24xbf16, #tpu.memory_space<vmem>>, vector<1x8x24xbf16>
    %176 = vector.shape_cast %175 : vector<1x8x24xbf16> to vector<8x24xbf16>
    %c2_83 = arith.constant 2 : index
    %c0_84 = arith.constant 0 : index
    %c0_85 = arith.constant 0 : index
    %177 = vector.load %arg5[%c2_83, %c0_84, %c0_85] : memref<3x8x1xf32, #tpu.memory_space<vmem>>, vector<1x8x1xf32>
    %178 = vector.shape_cast %177 : vector<1x8x1xf32> to vector<8x1xf32>
    %c5_i32_86 = arith.constant 5 : i32
    %179 = tpu.dynamic_rotate %174 by %c5_i32_86 dim 1 : vector<8x128xf32>, i32 -> vector<8x128xf32>
    %180 = arith.mulf %179, %29 : vector<8x128xf32>
    %c123_i32 = arith.constant 123 : i32
    %181 = tpu.dynamic_rotate %174 by %c123_i32 dim 1 : vector<8x128xf32>, i32 -> vector<8x128xf32>
    %182 = arith.mulf %181, %33 : vector<8x128xf32>
    %183 = tpu.concatenate %180, %174, %182 in 0 : vector<8x128xf32>, vector<8x128xf32>, vector<8x128xf32> -> vector<24x128xf32>
    %184 = arith.truncf %183 : vector<24x128xf32> to vector<24x128xbf16>
    %cst_87 = arith.constant dense<0.000000e+00> : vector<8x128xf32>
    %185 = tpu.matmul %176, %184, %cst_87 {dimension_numbers = #tpu.dot_dimension_numbers<[1], [0], [0], [1], [0, 0, 1, 1], [], []>} : vector<8x24xbf16>, vector<24x128xbf16>, vector<8x128xf32> -> vector<8x128xf32>
    %186 = vector.broadcast %178 : vector<8x1xf32> to vector<8x128xf32>
    %187 = arith.addf %185, %186 : vector<8x128xf32>
    %188 = vector.broadcast %158 : vector<8x1xf32> to vector<8x128xf32>
    %189 = arith.mulf %188, %187 : vector<8x128xf32>
    %190 = math.sin %189 : vector<8x128xf32>
    %191 = arith.mulf %190, %190 : vector<8x128xf32>
    %192 = vector.broadcast %160 : vector<8x1xf32> to vector<8x128xf32>
    %193 = arith.mulf %192, %191 : vector<8x128xf32>
    %194 = arith.addf %187, %193 : vector<8x128xf32>
    %c2_88 = arith.constant 2 : index
    %c0_89 = arith.constant 0 : index
    %c0_90 = arith.constant 0 : index
    %195 = vector.load %arg8[%c2_88, %c0_89, %c0_90] : memref<3x8x24xbf16, #tpu.memory_space<vmem>>, vector<1x8x24xbf16>
    %196 = vector.shape_cast %195 : vector<1x8x24xbf16> to vector<8x24xbf16>
    %c2_91 = arith.constant 2 : index
    %c0_92 = arith.constant 0 : index
    %c0_93 = arith.constant 0 : index
    %197 = vector.load %arg9[%c2_91, %c0_92, %c0_93] : memref<3x8x1xf32, #tpu.memory_space<vmem>>, vector<1x8x1xf32>
    %198 = vector.shape_cast %197 : vector<1x8x1xf32> to vector<8x1xf32>
    %c1_i32_94 = arith.constant 1 : i32
    %199 = tpu.dynamic_rotate %194 by %c1_i32_94 dim 1 : vector<8x128xf32>, i32 -> vector<8x128xf32>
    %200 = arith.mulf %199, %13 : vector<8x128xf32>
    %c127_i32_95 = arith.constant 127 : i32
    %201 = tpu.dynamic_rotate %194 by %c127_i32_95 dim 1 : vector<8x128xf32>, i32 -> vector<8x128xf32>
    %202 = arith.mulf %201, %17 : vector<8x128xf32>
    %203 = tpu.concatenate %200, %194, %202 in 0 : vector<8x128xf32>, vector<8x128xf32>, vector<8x128xf32> -> vector<24x128xf32>
    %204 = arith.truncf %203 : vector<24x128xf32> to vector<24x128xbf16>
    %cst_96 = arith.constant dense<0.000000e+00> : vector<8x128xf32>
    %205 = tpu.matmul %196, %204, %cst_96 {dimension_numbers = #tpu.dot_dimension_numbers<[1], [0], [0], [1], [0, 0, 1, 1], [], []>} : vector<8x24xbf16>, vector<24x128xbf16>, vector<8x128xf32> -> vector<8x128xf32>
    %206 = vector.broadcast %198 : vector<8x1xf32> to vector<8x128xf32>
    %207 = arith.addf %205, %206 : vector<8x128xf32>
    %208 = arith.mulf %207, %5 : vector<8x128xf32>
    %209 = arith.addf %208, %152 : vector<8x128xf32>
    %c0_97 = arith.constant 0 : index
    %c0_98 = arith.constant 0 : index
    %c0_99 = arith.constant 0 : index
    %210 = vector.load %arg12[%c0_97, %c0_98, %c0_99] : memref<1x8x128xf32, #tpu.memory_space<vmem>>, vector<1x8x128xf32>
    %211 = vector.shape_cast %210 : vector<1x8x128xf32> to vector<8x128xf32>
    %212 = vector.shape_cast %209 : vector<8x128xf32> to vector<1x8x128xf32>
    tpu.vector_store %arg12[%c0_97, %c0_98, %c0_99], %212 {strides = array<i32>} : memref<1x8x128xf32, #tpu.memory_space<vmem>>, vector<1x8x128xf32>,
    return
  }
  func.func @transform_0(%arg0: i32) -> (i32, i32, i32) {
    %c0_i32 = arith.constant 0 : i32
    %c0_i32_0 = arith.constant 0 : i32
    %c0_i32_1 = arith.constant 0 : i32
    return %arg0, %c0_i32, %c0_i32_0 : i32, i32, i32
  }
  func.func @transform_1(%arg0: i32) -> (i32, i32) {
    %c0_i32 = arith.constant 0 : i32
    %c0_i32_0 = arith.constant 0 : i32
    %c0_i32_1 = arith.constant 0 : i32
    return %c0_i32, %c0_i32_0 : i32, i32
  }
  func.func @transform_2(%arg0: i32) -> (i32, i32) {
    %c0_i32 = arith.constant 0 : i32
    %c0_i32_0 = arith.constant 0 : i32
    %c0_i32_1 = arith.constant 0 : i32
    return %c0_i32, %c0_i32_0 : i32, i32
  }
  func.func @transform_3(%arg0: i32) -> (i32, i32, i32) {
    %c0_i32 = arith.constant 0 : i32
    %c0_i32_0 = arith.constant 0 : i32
    %c0_i32_1 = arith.constant 0 : i32
    %c0_i32_2 = arith.constant 0 : i32
    return %c0_i32, %c0_i32_0, %c0_i32_1 : i32, i32, i32
  }
  func.func @transform_4(%arg0: i32) -> (i32, i32, i32) {
    %c0_i32 = arith.constant 0 : i32
    %c0_i32_0 = arith.constant 0 : i32
    %c0_i32_1 = arith.constant 0 : i32
    %c0_i32_2 = arith.constant 0 : i32
    return %c0_i32, %c0_i32_0, %c0_i32_1 : i32, i32, i32
  }
  func.func @transform_5(%arg0: i32) -> (i32, i32, i32) {
    %c0_i32 = arith.constant 0 : i32
    %c0_i32_0 = arith.constant 0 : i32
    %c0_i32_1 = arith.constant 0 : i32
    %c0_i32_2 = arith.constant 0 : i32
    return %c0_i32, %c0_i32_0, %c0_i32_1 : i32, i32, i32
  }
  func.func @transform_6(%arg0: i32) -> (i32, i32, i32) {
    %c0_i32 = arith.constant 0 : i32
    %c0_i32_0 = arith.constant 0 : i32
    %c0_i32_1 = arith.constant 0 : i32
    %c0_i32_2 = arith.constant 0 : i32
    return %c0_i32, %c0_i32_0, %c0_i32_1 : i32, i32, i32
  }
  func.func @transform_7(%arg0: i32) -> (i32, i32, i32) {
    %c0_i32 = arith.constant 0 : i32
    %c0_i32_0 = arith.constant 0 : i32
    %c0_i32_1 = arith.constant 0 : i32
    %c0_i32_2 = arith.constant 0 : i32
    return %c0_i32, %c0_i32_0, %c0_i32_1 : i32, i32, i32
  }
  func.func @transform_8(%arg0: i32) -> (i32, i32, i32) {
    %c0_i32 = arith.constant 0 : i32
    %c0_i32_0 = arith.constant 0 : i32
    %c0_i32_1 = arith.constant 0 : i32
    %c0_i32_2 = arith.constant 0 : i32
    return %c0_i32, %c0_i32_0, %c0_i32_1 : i32, i32, i32
  }
  func.func @transform_9(%arg0: i32) -> (i32, i32, i32) {
    %c0_i32 = arith.constant 0 : i32
    %c0_i32_0 = arith.constant 0 : i32
    %c0_i32_1 = arith.constant 0 : i32
    %c0_i32_2 = arith.constant 0 : i32
    return %c0_i32, %c0_i32_0, %c0_i32_1 : i32, i32, i32
  }
  func.func @transform_10(%arg0: i32) -> (i32, i32, i32) {
    %c0_i32 = arith.constant 0 : i32
    %c0_i32_0 = arith.constant 0 : i32
    %c0_i32_1 = arith.constant 0 : i32
    %c0_i32_2 = arith.constant 0 : i32
    return %c0_i32, %c0_i32_0, %c0_i32_1 : i32, i32, i32
  }
  func.func @transform_11(%arg0: i32) -> (i32, i32, i32) {
    %c0_i32 = arith.constant 0 : i32
    %c0_i32_0 = arith.constant 0 : i32
    %c0_i32_1 = arith.constant 0 : i32
    return %arg0, %c0_i32, %c0_i32_0 : i32, i32, i32
  }
}

module attributes {stable_mosaic.version = 11 : i64} {
  func.func @kernel(%arg0: i32, %arg1: memref<1x8x128xf32, #tpu.memory_space<vmem>>, %arg2: memref<384x256xbf16, #tpu.memory_space<vmem>>, %arg3: memref<512x128xbf16, #tpu.memory_space<vmem>>, %arg4: memref<3x8x24xbf16, #tpu.memory_space<vmem>>, %arg5: memref<3x8x1xf32, #tpu.memory_space<vmem>>, %arg6: memref<3x8x1xf32, #tpu.memory_space<vmem>>, %arg7: memref<3x8x1xf32, #tpu.memory_space<vmem>>, %arg8: memref<3x8x24xbf16, #tpu.memory_space<vmem>>, %arg9: memref<3x8x1xf32, #tpu.memory_space<vmem>>, %arg10: memref<3x8x1xf32, #tpu.memory_space<vmem>>, %arg11: memref<3x8x1xf32, #tpu.memory_space<vmem>>, %arg12: memref<1x8x128xf32, #tpu.memory_space<vmem>>) attributes {dimension_semantics = [#tpu.dimension_semantics<parallel>], iteration_bounds = array<i64: 2>, scalar_prefetch = 0 : i64, scratch_operands = 0 : i64, tpu.core_type = #tpu.core_type<tc>, window_params = [{transform_indices = @transform_0, window_bounds = array<i64: 1, 8, 128>}, {pipeline_mode = #tpu.pipeline_mode<synchronous>, transform_indices = @transform_1, window_bounds = array<i64: 384, 256>}, {pipeline_mode = #tpu.pipeline_mode<synchronous>, transform_indices = @transform_2, window_bounds = array<i64: 512, 128>}, {pipeline_mode = #tpu.pipeline_mode<synchronous>, transform_indices = @transform_3, window_bounds = array<i64: 3, 8, 24>}, {pipeline_mode = #tpu.pipeline_mode<synchronous>, transform_indices = @transform_4, window_bounds = array<i64: 3, 8, 1>}, {pipeline_mode = #tpu.pipeline_mode<synchronous>, transform_indices = @transform_5, window_bounds = array<i64: 3, 8, 1>}, {pipeline_mode = #tpu.pipeline_mode<synchronous>, transform_indices = @transform_6, window_bounds = array<i64: 3, 8, 1>}, {pipeline_mode = #tpu.pipeline_mode<synchronous>, transform_indices = @transform_7, window_bounds = array<i64: 3, 8, 24>}, {pipeline_mode = #tpu.pipeline_mode<synchronous>, transform_indices = @transform_8, window_bounds = array<i64: 3, 8, 1>}, {pipeline_mode = #tpu.pipeline_mode<synchronous>, transform_indices = @transform_9, window_bounds = array<i64: 3, 8, 1>}, {pipeline_mode = #tpu.pipeline_mode<synchronous>, transform_indices = @transform_10, window_bounds = array<i64: 3, 8, 1>}, {transform_indices = @transform_11, window_bounds = array<i64: 1, 8, 128>}]} {
    %0 = tpu.iota {dimensions = array<i32: 1>} : vector<8x128xi32>
    %1 = tpu.iota {dimensions = array<i32: 1>} : vector<8x256xi32>
    %c16_i32 = arith.constant 16 : i32
    %2 = vector.broadcast %c16_i32 : i32 to vector<8x128xi32>
    %3 = arith.cmpi slt, %0, %2 : vector<8x128xi32>
    %4 = arith.extui %3 : vector<8x128xi1> to vector<8x128xi32>
    %5 = arith.sitofp %4 : vector<8x128xi32> to vector<8x128xf32>
    %c32_i32 = arith.constant 32 : i32
    %6 = vector.broadcast %c32_i32 : i32 to vector<8x256xi32>
    %7 = arith.cmpi slt, %1, %6 : vector<8x256xi32>
    %8 = arith.extui %7 : vector<8x256xi1> to vector<8x256xi32>
    %9 = arith.sitofp %8 : vector<8x256xi32> to vector<8x256xf32>
    %c1_i32 = arith.constant 1 : i32
    %10 = vector.broadcast %c1_i32 : i32 to vector<8x128xi32>
    %11 = arith.cmpi sge, %0, %10 : vector<8x128xi32>
    %12 = arith.extui %11 : vector<8x128xi1> to vector<8x128xi32>
    %13 = arith.sitofp %12 : vector<8x128xi32> to vector<8x128xf32>
    %c15_i32 = arith.constant 15 : i32
    %14 = vector.broadcast %c15_i32 : i32 to vector<8x128xi32>
    %15 = arith.cmpi slt, %0, %14 : vector<8x128xi32>
    %16 = arith.extui %15 : vector<8x128xi1> to vector<8x128xi32>
    %17 = arith.sitofp %16 : vector<8x128xi32> to vector<8x128xf32>
    %c3_i32 = arith.constant 3 : i32
    %18 = vector.broadcast %c3_i32 : i32 to vector<8x128xi32>
    %19 = arith.cmpi sge, %0, %18 : vector<8x128xi32>
    %20 = arith.extui %19 : vector<8x128xi1> to vector<8x128xi32>
    %21 = arith.sitofp %20 : vector<8x128xi32> to vector<8x128xf32>
    %c13_i32 = arith.constant 13 : i32
    %22 = vector.broadcast %c13_i32 : i32 to vector<8x128xi32>
    %23 = arith.cmpi slt, %0, %22 : vector<8x128xi32>
    %24 = arith.extui %23 : vector<8x128xi1> to vector<8x128xi32>
    %25 = arith.sitofp %24 : vector<8x128xi32> to vector<8x128xf32>
    %c5_i32 = arith.constant 5 : i32
    %26 = vector.broadcast %c5_i32 : i32 to vector<8x128xi32>
    %27 = arith.cmpi sge, %0, %26 : vector<8x128xi32>
    %28 = arith.extui %27 : vector<8x128xi1> to vector<8x128xi32>
    %29 = arith.sitofp %28 : vector<8x128xi32> to vector<8x128xf32>
    %c11_i32 = arith.constant 11 : i32
    %30 = vector.broadcast %c11_i32 : i32 to vector<8x128xi32>
    %31 = arith.cmpi slt, %0, %30 : vector<8x128xi32>
    %32 = arith.extui %31 : vector<8x128xi1> to vector<8x128xi32>
    %33 = arith.sitofp %32 : vector<8x128xi32> to vector<8x128xf32>
    %cst = arith.constant 0.000000e+00 : f32
    %34 = vector.broadcast %cst : f32 to vector<8x128xf32>
    %c0 = arith.constant 0 : index
    %c0_0 = arith.constant 0 : index
    %35 = vector.load %arg2[%c0, %c0_0] : memref<384x256xbf16, #tpu.memory_space<vmem>>, vector<384x256xbf16>
    %c0_1 = arith.constant 0 : index
    %c0_2 = arith.constant 0 : index
    %36 = vector.load %arg3[%c0_1, %c0_2] : memref<512x128xbf16, #tpu.memory_space<vmem>>, vector<512x128xbf16>
    %c0_3 = arith.constant 0 : index
    %c0_4 = arith.constant 0 : index
    %c0_5 = arith.constant 0 : index
    %37 = vector.load %arg1[%c0_3, %c0_4, %c0_5] : memref<1x8x128xf32, #tpu.memory_space<vmem>>, vector<1x8x128xf32>
    %38 = vector.shape_cast %37 : vector<1x8x128xf32> to vector<8x128xf32>
    %c0_6 = arith.constant 0 : index
    %c0_7 = arith.constant 0 : index
    %c0_8 = arith.constant 0 : index
    %39 = vector.load %arg6[%c0_6, %c0_7, %c0_8] : memref<3x8x1xf32, #tpu.memory_space<vmem>>, vector<1x8x1xf32>
    %40 = vector.shape_cast %39 : vector<1x8x1xf32> to vector<8x1xf32>
    %c0_9 = arith.constant 0 : index
    %c0_10 = arith.constant 0 : index
    %c0_11 = arith.constant 0 : index
    %41 = vector.load %arg7[%c0_9, %c0_10, %c0_11] : memref<3x8x1xf32, #tpu.memory_space<vmem>>, vector<1x8x1xf32>
    %42 = vector.shape_cast %41 : vector<1x8x1xf32> to vector<8x1xf32>
    %c0_12 = arith.constant 0 : index
    %c0_13 = arith.constant 0 : index
    %c0_14 = arith.constant 0 : index
    %43 = vector.load %arg10[%c0_12, %c0_13, %c0_14] : memref<3x8x1xf32, #tpu.memory_space<vmem>>, vector<1x8x1xf32>
    %44 = vector.shape_cast %43 : vector<1x8x1xf32> to vector<8x1xf32>
    %c0_15 = arith.constant 0 : index
    %c0_16 = arith.constant 0 : index
    %c0_17 = arith.constant 0 : index
    %45 = vector.load %arg11[%c0_15, %c0_16, %c0_17] : memref<3x8x1xf32, #tpu.memory_space<vmem>>, vector<1x8x1xf32>
    %46 = vector.shape_cast %45 : vector<1x8x1xf32> to vector<8x1xf32>
    %47 = tpu.concatenate %34, %38, %34 in 1 : vector<8x128xf32>, vector<8x128xf32>, vector<8x128xf32> -> vector<8x384xf32>
    %48 = arith.truncf %47 : vector<8x384xf32> to vector<8x384xbf16>
    %cst_18 = arith.constant dense<0.000000e+00> : vector<8x256xf32>
    %49 = tpu.matmul %48, %35, %cst_18 {dimension_numbers = #tpu.dot_dimension_numbers<[1], [0], [0], [1], [0, 0, 1, 1], [], []>} : vector<8x384xbf16>, vector<384x256xbf16>, vector<8x256xf32> -> vector<8x256xf32>
    %50 = vector.broadcast %40 : vector<8x1xf32> to vector<8x256xf32>
    %51 = arith.mulf %50, %49 : vector<8x256xf32>
    %52 = math.sin %51 : vector<8x256xf32>
    %53 = arith.mulf %52, %52 : vector<8x256xf32>
    %54 = vector.broadcast %42 : vector<8x1xf32> to vector<8x256xf32>
    %55 = arith.mulf %54, %53 : vector<8x256xf32>
    %56 = arith.addf %49, %55 : vector<8x256xf32>
    %57 = arith.mulf %56, %9 : vector<8x256xf32>
    %58 = tpu.concatenate %34, %57, %34 in 1 : vector<8x128xf32>, vector<8x256xf32>, vector<8x128xf32> -> vector<8x512xf32>
    %59 = arith.truncf %58 : vector<8x512xf32> to vector<8x512xbf16>
    %cst_19 = arith.constant dense<0.000000e+00> : vector<8x128xf32>
    %60 = tpu.matmul %59, %36, %cst_19 {dimension_numbers = #tpu.dot_dimension_numbers<[1], [0], [0], [1], [0, 0, 1, 1], [], []>} : vector<8x512xbf16>, vector<512x128xbf16>, vector<8x128xf32> -> vector<8x128xf32>
    %c0_20 = arith.constant 0 : index
    %c0_21 = arith.constant 0 : index
    %c0_22 = arith.constant 0 : index
    %61 = vector.load %arg4[%c0_20, %c0_21, %c0_22] : memref<3x8x24xbf16, #tpu.memory_space<vmem>>, vector<1x8x24xbf16>
    %62 = vector.shape_cast %61 : vector<1x8x24xbf16> to vector<8x24xbf16>
    %c0_23 = arith.constant 0 : index
    %c0_24 = arith.constant 0 : index
    %c0_25 = arith.constant 0 : index
    %63 = vector.load %arg5[%c0_23, %c0_24, %c0_25] : memref<3x8x1xf32, #tpu.memory_space<vmem>>, vector<1x8x1xf32>
    %64 = vector.shape_cast %63 : vector<1x8x1xf32> to vector<8x1xf32>
    %c1_i32_26 = arith.constant 1 : i32
    %65 = tpu.dynamic_rotate %60 by %c1_i32_26 dim 1 : vector<8x128xf32>, i32 -> vector<8x128xf32>
    %66 = arith.mulf %65, %13 : vector<8x128xf32>
    %c127_i32 = arith.constant 127 : i32
    %67 = tpu.dynamic_rotate %60 by %c127_i32 dim 1 : vector<8x128xf32>, i32 -> vector<8x128xf32>
    %68 = arith.mulf %67, %17 : vector<8x128xf32>
    %69 = tpu.concatenate %66, %60, %68 in 0 : vector<8x128xf32>, vector<8x128xf32>, vector<8x128xf32> -> vector<24x128xf32>
    %70 = arith.truncf %69 : vector<24x128xf32> to vector<24x128xbf16>
    %cst_27 = arith.constant dense<0.000000e+00> : vector<8x128xf32>
    %71 = tpu.matmul %62, %70, %cst_27 {dimension_numbers = #tpu.dot_dimension_numbers<[1], [0], [0], [1], [0, 0, 1, 1], [], []>} : vector<8x24xbf16>, vector<24x128xbf16>, vector<8x128xf32> -> vector<8x128xf32>
    %72 = vector.broadcast %64 : vector<8x1xf32> to vector<8x128xf32>
    %73 = arith.addf %71, %72 : vector<8x128xf32>
    %74 = vector.broadcast %44 : vector<8x1xf32> to vector<8x128xf32>
    %75 = arith.mulf %74, %73 : vector<8x128xf32>
    %76 = math.sin %75 : vector<8x128xf32>
    %77 = arith.mulf %76, %76 : vector<8x128xf32>
    %78 = vector.broadcast %46 : vector<8x1xf32> to vector<8x128xf32>
    %79 = arith.mulf %78, %77 : vector<8x128xf32>
    %80 = arith.addf %73, %79 : vector<8x128xf32>
    %c0_28 = arith.constant 0 : index
    %c0_29 = arith.constant 0 : index
    %c0_30 = arith.constant 0 : index
    %81 = vector.load %arg8[%c0_28, %c0_29, %c0_30] : memref<3x8x24xbf16, #tpu.memory_space<vmem>>, vector<1x8x24xbf16>
    %82 = vector.shape_cast %81 : vector<1x8x24xbf16> to vector<8x24xbf16>
    %c0_31 = arith.constant 0 : index
    %c0_32 = arith.constant 0 : index
    %c0_33 = arith.constant 0 : index
    %83 = vector.load %arg9[%c0_31, %c0_32, %c0_33] : memref<3x8x1xf32, #tpu.memory_space<vmem>>, vector<1x8x1xf32>
    %84 = vector.shape_cast %83 : vector<1x8x1xf32> to vector<8x1xf32>
    %c1_i32_34 = arith.constant 1 : i32
    %85 = tpu.dynamic_rotate %80 by %c1_i32_34 dim 1 : vector<8x128xf32>, i32 -> vector<8x128xf32>
    %86 = arith.mulf %85, %13 : vector<8x128xf32>
    %c127_i32_35 = arith.constant 127 : i32
    %87 = tpu.dynamic_rotate %80 by %c127_i32_35 dim 1 : vector<8x128xf32>, i32 -> vector<8x128xf32>
    %88 = arith.mulf %87, %17 : vector<8x128xf32>
    %89 = tpu.concatenate %86, %80, %88 in 0 : vector<8x128xf32>, vector<8x128xf32>, vector<8x128xf32> -> vector<24x128xf32>
    %90 = arith.truncf %89 : vector<24x128xf32> to vector<24x128xbf16>
    %cst_36 = arith.constant dense<0.000000e+00> : vector<8x128xf32>
    %91 = tpu.matmul %82, %90, %cst_36 {dimension_numbers = #tpu.dot_dimension_numbers<[1], [0], [0], [1], [0, 0, 1, 1], [], []>} : vector<8x24xbf16>, vector<24x128xbf16>, vector<8x128xf32> -> vector<8x128xf32>
    %92 = vector.broadcast %84 : vector<8x1xf32> to vector<8x128xf32>
    %93 = arith.addf %91, %92 : vector<8x128xf32>
    %94 = arith.mulf %93, %5 : vector<8x128xf32>
    %95 = arith.addf %94, %38 : vector<8x128xf32>
    %c1 = arith.constant 1 : index
    %c0_37 = arith.constant 0 : index
    %c0_38 = arith.constant 0 : index
    %96 = vector.load %arg6[%c1, %c0_37, %c0_38] : memref<3x8x1xf32, #tpu.memory_space<vmem>>, vector<1x8x1xf32>
    %97 = vector.shape_cast %96 : vector<1x8x1xf32> to vector<8x1xf32>
    %c1_39 = arith.constant 1 : index
    %c0_40 = arith.constant 0 : index
    %c0_41 = arith.constant 0 : index
    %98 = vector.load %arg7[%c1_39, %c0_40, %c0_41] : memref<3x8x1xf32, #tpu.memory_space<vmem>>, vector<1x8x1xf32>
    %99 = vector.shape_cast %98 : vector<1x8x1xf32> to vector<8x1xf32>
    %c1_42 = arith.constant 1 : index
    %c0_43 = arith.constant 0 : index
    %c0_44 = arith.constant 0 : index
    %100 = vector.load %arg10[%c1_42, %c0_43, %c0_44] : memref<3x8x1xf32, #tpu.memory_space<vmem>>, vector<1x8x1xf32>
    %101 = vector.shape_cast %100 : vector<1x8x1xf32> to vector<8x1xf32>
    %c1_45 = arith.constant 1 : index
    %c0_46 = arith.constant 0 : index
    %c0_47 = arith.constant 0 : index
    %102 = vector.load %arg11[%c1_45, %c0_46, %c0_47] : memref<3x8x1xf32, #tpu.memory_space<vmem>>, vector<1x8x1xf32>
    %103 = vector.shape_cast %102 : vector<1x8x1xf32> to vector<8x1xf32>
    %104 = tpu.concatenate %34, %95, %34 in 1 : vector<8x128xf32>, vector<8x128xf32>, vector<8x128xf32> -> vector<8x384xf32>
    %105 = arith.truncf %104 : vector<8x384xf32> to vector<8x384xbf16>
    %cst_48 = arith.constant dense<0.000000e+00> : vector<8x256xf32>
    %106 = tpu.matmul %105, %35, %cst_48 {dimension_numbers = #tpu.dot_dimension_numbers<[1], [0], [0], [1], [0, 0, 1, 1], [], []>} : vector<8x384xbf16>, vector<384x256xbf16>, vector<8x256xf32> -> vector<8x256xf32>
    %107 = vector.broadcast %97 : vector<8x1xf32> to vector<8x256xf32>
    %108 = arith.mulf %107, %106 : vector<8x256xf32>
    %109 = math.sin %108 : vector<8x256xf32>
    %110 = arith.mulf %109, %109 : vector<8x256xf32>
    %111 = vector.broadcast %99 : vector<8x1xf32> to vector<8x256xf32>
    %112 = arith.mulf %111, %110 : vector<8x256xf32>
    %113 = arith.addf %106, %112 : vector<8x256xf32>
    %114 = arith.mulf %113, %9 : vector<8x256xf32>
    %115 = tpu.concatenate %34, %114, %34 in 1 : vector<8x128xf32>, vector<8x256xf32>, vector<8x128xf32> -> vector<8x512xf32>
    %116 = arith.truncf %115 : vector<8x512xf32> to vector<8x512xbf16>
    %cst_49 = arith.constant dense<0.000000e+00> : vector<8x128xf32>
    %117 = tpu.matmul %116, %36, %cst_49 {dimension_numbers = #tpu.dot_dimension_numbers<[1], [0], [0], [1], [0, 0, 1, 1], [], []>} : vector<8x512xbf16>, vector<512x128xbf16>, vector<8x128xf32> -> vector<8x128xf32>
    %c1_50 = arith.constant 1 : index
    %c0_51 = arith.constant 0 : index
    %c0_52 = arith.constant 0 : index
    %118 = vector.load %arg4[%c1_50, %c0_51, %c0_52] : memref<3x8x24xbf16, #tpu.memory_space<vmem>>, vector<1x8x24xbf16>
    %119 = vector.shape_cast %118 : vector<1x8x24xbf16> to vector<8x24xbf16>
    %c1_53 = arith.constant 1 : index
    %c0_54 = arith.constant 0 : index
    %c0_55 = arith.constant 0 : index
    %120 = vector.load %arg5[%c1_53, %c0_54, %c0_55] : memref<3x8x1xf32, #tpu.memory_space<vmem>>, vector<1x8x1xf32>
    %121 = vector.shape_cast %120 : vector<1x8x1xf32> to vector<8x1xf32>
    %c3_i32_56 = arith.constant 3 : i32
    %122 = tpu.dynamic_rotate %117 by %c3_i32_56 dim 1 : vector<8x128xf32>, i32 -> vector<8x128xf32>
    %123 = arith.mulf %122, %21 : vector<8x128xf32>
    %c125_i32 = arith.constant 125 : i32
    %124 = tpu.dynamic_rotate %117 by %c125_i32 dim 1 : vector<8x128xf32>, i32 -> vector<8x128xf32>
    %125 = arith.mulf %124, %25 : vector<8x128xf32>
    %126 = tpu.concatenate %123, %117, %125 in 0 : vector<8x128xf32>, vector<8x128xf32>, vector<8x128xf32> -> vector<24x128xf32>
    %127 = arith.truncf %126 : vector<24x128xf32> to vector<24x128xbf16>
    %cst_57 = arith.constant dense<0.000000e+00> : vector<8x128xf32>
    %128 = tpu.matmul %119, %127, %cst_57 {dimension_numbers = #tpu.dot_dimension_numbers<[1], [0], [0], [1], [0, 0, 1, 1], [], []>} : vector<8x24xbf16>, vector<24x128xbf16>, vector<8x128xf32> -> vector<8x128xf32>
    %129 = vector.broadcast %121 : vector<8x1xf32> to vector<8x128xf32>
    %130 = arith.addf %128, %129 : vector<8x128xf32>
    %131 = vector.broadcast %101 : vector<8x1xf32> to vector<8x128xf32>
    %132 = arith.mulf %131, %130 : vector<8x128xf32>
    %133 = math.sin %132 : vector<8x128xf32>
    %134 = arith.mulf %133, %133 : vector<8x128xf32>
    %135 = vector.broadcast %103 : vector<8x1xf32> to vector<8x128xf32>
    %136 = arith.mulf %135, %134 : vector<8x128xf32>
    %137 = arith.addf %130, %136 : vector<8x128xf32>
    %c1_58 = arith.constant 1 : index
    %c0_59 = arith.constant 0 : index
    %c0_60 = arith.constant 0 : index
    %138 = vector.load %arg8[%c1_58, %c0_59, %c0_60] : memref<3x8x24xbf16, #tpu.memory_space<vmem>>, vector<1x8x24xbf16>
    %139 = vector.shape_cast %138 : vector<1x8x24xbf16> to vector<8x24xbf16>
    %c1_61 = arith.constant 1 : index
    %c0_62 = arith.constant 0 : index
    %c0_63 = arith.constant 0 : index
    %140 = vector.load %arg9[%c1_61, %c0_62, %c0_63] : memref<3x8x1xf32, #tpu.memory_space<vmem>>, vector<1x8x1xf32>
    %141 = vector.shape_cast %140 : vector<1x8x1xf32> to vector<8x1xf32>
    %c1_i32_64 = arith.constant 1 : i32
    %142 = tpu.dynamic_rotate %137 by %c1_i32_64 dim 1 : vector<8x128xf32>, i32 -> vector<8x128xf32>
    %143 = arith.mulf %142, %13 : vector<8x128xf32>
    %c127_i32_65 = arith.constant 127 : i32
    %144 = tpu.dynamic_rotate %137 by %c127_i32_65 dim 1 : vector<8x128xf32>, i32 -> vector<8x128xf32>
    %145 = arith.mulf %144, %17 : vector<8x128xf32>
    %146 = tpu.concatenate %143, %137, %145 in 0 : vector<8x128xf32>, vector<8x128xf32>, vector<8x128xf32> -> vector<24x128xf32>
    %147 = arith.truncf %146 : vector<24x128xf32> to vector<24x128xbf16>
    %cst_66 = arith.constant dense<0.000000e+00> : vector<8x128xf32>
    %148 = tpu.matmul %139, %147, %cst_66 {dimension_numbers = #tpu.dot_dimension_numbers<[1], [0], [0], [1], [0, 0, 1, 1], [], []>} : vector<8x24xbf16>, vector<24x128xbf16>, vector<8x128xf32> -> vector<8x128xf32>
    %149 = vector.broadcast %141 : vector<8x1xf32> to vector<8x128xf32>
    %150 = arith.addf %148, %149 : vector<8x128xf32>
    %151 = arith.mulf %150, %5 : vector<8x128xf32>
    %152 = arith.addf %151, %95 : vector<8x128xf32>
    %c2 = arith.constant 2 : index
    %c0_67 = arith.constant 0 : index
    %c0_68 = arith.constant 0 : index
    %153 = vector.load %arg6[%c2, %c0_67, %c0_68] : memref<3x8x1xf32, #tpu.memory_space<vmem>>, vector<1x8x1xf32>
    %154 = vector.shape_cast %153 : vector<1x8x1xf32> to vector<8x1xf32>
    %c2_69 = arith.constant 2 : index
    %c0_70 = arith.constant 0 : index
    %c0_71 = arith.constant 0 : index
    %155 = vector.load %arg7[%c2_69, %c0_70, %c0_71] : memref<3x8x1xf32, #tpu.memory_space<vmem>>, vector<1x8x1xf32>
    %156 = vector.shape_cast %155 : vector<1x8x1xf32> to vector<8x1xf32>
    %c2_72 = arith.constant 2 : index
    %c0_73 = arith.constant 0 : index
    %c0_74 = arith.constant 0 : index
    %157 = vector.load %arg10[%c2_72, %c0_73, %c0_74] : memref<3x8x1xf32, #tpu.memory_space<vmem>>, vector<1x8x1xf32>
    %158 = vector.shape_cast %157 : vector<1x8x1xf32> to vector<8x1xf32>
    %c2_75 = arith.constant 2 : index
    %c0_76 = arith.constant 0 : index
    %c0_77 = arith.constant 0 : index
    %159 = vector.load %arg11[%c2_75, %c0_76, %c0_77] : memref<3x8x1xf32, #tpu.memory_space<vmem>>, vector<1x8x1xf32>
    %160 = vector.shape_cast %159 : vector<1x8x1xf32> to vector<8x1xf32>
    %161 = tpu.concatenate %34, %152, %34 in 1 : vector<8x128xf32>, vector<8x128xf32>, vector<8x128xf32> -> vector<8x384xf32>
    %162 = arith.truncf %161 : vector<8x384xf32> to vector<8x384xbf16>
    %cst_78 = arith.constant dense<0.000000e+00> : vector<8x256xf32>
    %163 = tpu.matmul %162, %35, %cst_78 {dimension_numbers = #tpu.dot_dimension_numbers<[1], [0], [0], [1], [0, 0, 1, 1], [], []>} : vector<8x384xbf16>, vector<384x256xbf16>, vector<8x256xf32> -> vector<8x256xf32>
    %164 = vector.broadcast %154 : vector<8x1xf32> to vector<8x256xf32>
    %165 = arith.mulf %164, %163 : vector<8x256xf32>
    %166 = math.sin %165 : vector<8x256xf32>
    %167 = arith.mulf %166, %166 : vector<8x256xf32>
    %168 = vector.broadcast %156 : vector<8x1xf32> to vector<8x256xf32>
    %169 = arith.mulf %168, %167 : vector<8x256xf32>
    %170 = arith.addf %163, %169 : vector<8x256xf32>
    %171 = arith.mulf %170, %9 : vector<8x256xf32>
    %172 = tpu.concatenate %34, %171, %34 in 1 : vector<8x128xf32>, vector<8x256xf32>, vector<8x128xf32> -> vector<8x512xf32>
    %173 = arith.truncf %172 : vector<8x512xf32> to vector<8x512xbf16>
    %cst_79 = arith.constant dense<0.000000e+00> : vector<8x128xf32>
    %174 = tpu.matmul %173, %36, %cst_79 {dimension_numbers = #tpu.dot_dimension_numbers<[1], [0], [0], [1], [0, 0, 1, 1], [], []>} : vector<8x512xbf16>, vector<512x128xbf16>, vector<8x128xf32> -> vector<8x128xf32>
    %c2_80 = arith.constant 2 : index
    %c0_81 = arith.constant 0 : index
    %c0_82 = arith.constant 0 : index
    %175 = vector.load %arg4[%c2_80, %c0_81, %c0_82] : memref<3x8x24xbf16, #tpu.memory_space<vmem>>, vector<1x8x24xbf16>
    %176 = vector.shape_cast %175 : vector<1x8x24xbf16> to vector<8x24xbf16>
    %c2_83 = arith.constant 2 : index
    %c0_84 = arith.constant 0 : index
    %c0_85 = arith.constant 0 : index
    %177 = vector.load %arg5[%c2_83, %c0_84, %c0_85] : memref<3x8x1xf32, #tpu.memory_space<vmem>>, vector<1x8x1xf32>
    %178 = vector.shape_cast %177 : vector<1x8x1xf32> to vector<8x1xf32>
    %c5_i32_86 = arith.constant 5 : i32
    %179 = tpu.dynamic_rotate %174 by %c5_i32_86 dim 1 : vector<8x128xf32>, i32 -> vector<8x128xf32>
    %180 = arith.mulf %179, %29 : vector<8x128xf32>
    %c123_i32 = arith.constant 123 : i32
    %181 = tpu.dynamic_rotate %174 by %c123_i32 dim 1 : vector<8x128xf32>, i32 -> vector<8x128xf32>
    %182 = arith.mulf %181, %33 : vector<8x128xf32>
    %183 = tpu.concatenate %180, %174, %182 in 0 : vector<8x128xf32>, vector<8x128xf32>, vector<8x128xf32> -> vector<24x128xf32>
    %184 = arith.truncf %183 : vector<24x128xf32> to vector<24x128xbf16>
    %cst_87 = arith.constant dense<0.000000e+00> : vector<8x128xf32>
    %185 = tpu.matmul %176, %184, %cst_87 {dimension_numbers = #tpu.dot_dimension_numbers<[1], [0], [0], [1], [0, 0, 1, 1], [], []>} : vector<8x24xbf16>, vector<24x128xbf16>, vector<8x128xf32> -> vector<8x128xf32>
    %186 = vector.broadcast %178 : vector<8x1xf32> to vector<8x128xf32>
    %187 = arith.addf %185, %186 : vector<8x128xf32>
    %188 = vector.broadcast %158 : vector<8x1xf32> to vector<8x128xf32>
    %189 = arith.mulf %188, %187 : vector<8x128xf32>
    %190 = math.sin %189 : vector<8x128xf32>
    %191 = arith.mulf %190, %190 : vector<8x128xf32>
    %192 = vector.broadcast %160 : vector<8x1xf32> to vector<8x128xf32>
    %193 = arith.mulf %192, %191 : vector<8x128xf32>
    %194 = arith.addf %187, %193 : vector<8x128xf32>
    %c2_88 = arith.constant 2 : index
    %c0_89 = arith.constant 0 : index
    %c0_90 = arith.constant 0 : index
    %195 = vector.load %arg8[%c2_88, %c0_89, %c0_90] : memref<3x8x24xbf16, #tpu.memory_space<vmem>>, vector<1x8x24xbf16>
    %196 = vector.shape_cast %195 : vector<1x8x24xbf16> to vector<8x24xbf16>
    %c2_91 = arith.constant 2 : index
    %c0_92 = arith.constant 0 : index
    %c0_93 = arith.constant 0 : index
    %197 = vector.load %arg9[%c2_91, %c0_92, %c0_93] : memref<3x8x1xf32, #tpu.memory_space<vmem>>, vector<1x8x1xf32>
    %198 = vector.shape_cast %197 : vector<1x8x1xf32> to vector<8x1xf32>
    %c1_i32_94 = arith.constant 1 : i32
    %199 = tpu.dynamic_rotate %194 by %c1_i32_94 dim 1 : vector<8x128xf32>, i32 -> vector<8x128xf32>
    %200 = arith.mulf %199, %13 : vector<8x128xf32>
    %c127_i32_95 = arith.constant 127 : i32
    %201 = tpu.dynamic_rotate %194 by %c127_i32_95 dim 1 : vector<8x128xf32>, i32 -> vector<8x128xf32>
    %202 = arith.mulf %201, %17 : vector<8x128xf32>
    %203 = tpu.concatenate %200, %194, %202 in 0 : vector<8x128xf32>, vector<8x128xf32>, vector<8x128xf32> -> vector<24x128xf32>
    %204 = arith.truncf %203 : vector<24x128xf32> to vector<24x128xbf16>
    %cst_96 = arith.constant dense<0.000000e+00> : vector<8x128xf32>
    %205 = tpu.matmul %196, %204, %cst_96 {dimension_numbers = #tpu.dot_dimension_numbers<[1], [0], [0], [1], [0, 0, 1, 1], [], []>} : vector<8x24xbf16>, vector<24x128xbf16>, vector<8x128xf32> -> vector<8x128xf32>
    %206 = vector.broadcast %198 : vector<8x1xf32> to vector<8x128xf32>
    %207 = arith.addf %205, %206 : vector<8x128xf32>
    %208 = arith.mulf %207, %5 : vector<8x128xf32>
    %209 = arith.addf %208, %152 : vector<8x128xf32>
    %c0_97 = arith.constant 0 : index
    %c0_98 = arith.constant 0 : index
    %c0_99 = arith.constant 0 : index
    %210 = vector.load %arg12[%c0_97, %c0_98, %c0_99] : memref<1x8x128xf32, #tpu.memory_space<vmem>>, vector<1x8x128xf32>
    %211 = vector.shape_cast %210 : vector<1x8x128xf32> to vector<8x128xf32>
    %212 = vector.shape_cast %209 : vector<8x128xf32> to vector<1x8x128xf32>
    tpu.vector_store %arg12[%c0_97, %c0_98, %c0_99], %212 {strides = array<i32>} : memref<1x8x128xf32, #tpu.memory_space<vmem>>, vector<1x8x128xf32>,
    return
  }
  func.func @transform_0(%arg0: i32) -> (i32, i32, i32) {
    %c0_i32 = arith.constant 0 : i32
    %c0_i32_0 = arith.constant 0 : i32
    %c0_i32_1 = arith.constant 0 : i32
    return %arg0, %c0_i32, %c0_i32_0 : i32, i32, i32
  }
  func.func @transform_1(%arg0: i32) -> (i32, i32) {
    %c0_i32 = arith.constant 0 : i32
    %c0_i32_0 = arith.constant 0 : i32
    %c0_i32_1 = arith.constant 0 : i32
    return %c0_i32, %c0_i32_0 : i32, i32
  }
  func.func @transform_2(%arg0: i32) -> (i32, i32) {
    %c0_i32 = arith.constant 0 : i32
    %c0_i32_0 = arith.constant 0 : i32
    %c0_i32_1 = arith.constant 0 : i32
    return %c0_i32, %c0_i32_0 : i32, i32
  }
  func.func @transform_3(%arg0: i32) -> (i32, i32, i32) {
    %c0_i32 = arith.constant 0 : i32
    %c0_i32_0 = arith.constant 0 : i32
    %c0_i32_1 = arith.constant 0 : i32
    %c0_i32_2 = arith.constant 0 : i32
    return %c0_i32, %c0_i32_0, %c0_i32_1 : i32, i32, i32
  }
  func.func @transform_4(%arg0: i32) -> (i32, i32, i32) {
    %c0_i32 = arith.constant 0 : i32
    %c0_i32_0 = arith.constant 0 : i32
    %c0_i32_1 = arith.constant 0 : i32
    %c0_i32_2 = arith.constant 0 : i32
    return %c0_i32, %c0_i32_0, %c0_i32_1 : i32, i32, i32
  }
  func.func @transform_5(%arg0: i32) -> (i32, i32, i32) {
    %c0_i32 = arith.constant 0 : i32
    %c0_i32_0 = arith.constant 0 : i32
    %c0_i32_1 = arith.constant 0 : i32
    %c0_i32_2 = arith.constant 0 : i32
    return %c0_i32, %c0_i32_0, %c0_i32_1 : i32, i32, i32
  }
  func.func @transform_6(%arg0: i32) -> (i32, i32, i32) {
    %c0_i32 = arith.constant 0 : i32
    %c0_i32_0 = arith.constant 0 : i32
    %c0_i32_1 = arith.constant 0 : i32
    %c0_i32_2 = arith.constant 0 : i32
    return %c0_i32, %c0_i32_0, %c0_i32_1 : i32, i32, i32
  }
  func.func @transform_7(%arg0: i32) -> (i32, i32, i32) {
    %c0_i32 = arith.constant 0 : i32
    %c0_i32_0 = arith.constant 0 : i32
    %c0_i32_1 = arith.constant 0 : i32
    %c0_i32_2 = arith.constant 0 : i32
    return %c0_i32, %c0_i32_0, %c0_i32_1 : i32, i32, i32
  }
  func.func @transform_8(%arg0: i32) -> (i32, i32, i32) {
    %c0_i32 = arith.constant 0 : i32
    %c0_i32_0 = arith.constant 0 : i32
    %c0_i32_1 = arith.constant 0 : i32
    %c0_i32_2 = arith.constant 0 : i32
    return %c0_i32, %c0_i32_0, %c0_i32_1 : i32, i32, i32
  }
  func.func @transform_9(%arg0: i32) -> (i32, i32, i32) {
    %c0_i32 = arith.constant 0 : i32
    %c0_i32_0 = arith.constant 0 : i32
    %c0_i32_1 = arith.constant 0 : i32
    %c0_i32_2 = arith.constant 0 : i32
    return %c0_i32, %c0_i32_0, %c0_i32_1 : i32, i32, i32
  }
  func.func @transform_10(%arg0: i32) -> (i32, i32, i32) {
    %c0_i32 = arith.constant 0 : i32
    %c0_i32_0 = arith.constant 0 : i32
    %c0_i32_1 = arith.constant 0 : i32
    %c0_i32_2 = arith.constant 0 : i32
    return %c0_i32, %c0_i32_0, %c0_i32_1 : i32, i32, i32
  }
  func.func @transform_11(%arg0: i32) -> (i32, i32, i32) {
    %c0_i32 = arith.constant 0 : i32
    %c0_i32_0 = arith.constant 0 : i32
    %c0_i32_1 = arith.constant 0 : i32
    return %arg0, %c0_i32, %c0_i32_0 : i32, i32, i32
  }
}

</mosaic_0001>

<llo_original>
// kernel: tpu_custom_call.1
$region0: #{tpu_custom_call.1}
  #allocation0 [shape = 'u32[]', space=smem, size = 0x4, offset = 0x4, fixed_abs, tag = 'smem constant byte address 0x4 - core index']
  #allocation1 [shape = 'u32[144,128]{1,0:T(1,128)}', space=vmem, size = 0x12000, scoped, tag = 'internal scratch']
  %s0 = inlined_call_operand.vmem [shape: f32[2,8,128], index: 0, kind: input, shape index: {}]
  %s1 = inlined_call_operand.hbm [shape: bf16[384,256], index: 1, kind: input, shape index: {}]
  %s2 = inlined_call_operand.hbm [shape: bf16[512,128], index: 2, kind: input, shape index: {}]
  %s3 = inlined_call_operand.vmem [shape: bf16[3,8,24], index: 3, kind: input, shape index: {}]
  %s4 = inlined_call_operand.vmem [shape: f32[3,8,1], index: 4, kind: input, shape index: {}]
  %s5 = inlined_call_operand.vmem [shape: f32[3,8,1], index: 5, kind: input, shape index: {}]
  %s6 = inlined_call_operand.vmem [shape: f32[3,8,1], index: 6, kind: input, shape index: {}]
  %s7 = inlined_call_operand.vmem [shape: bf16[3,8,24], index: 7, kind: input, shape index: {}]
  %s8 = inlined_call_operand.vmem [shape: f32[3,8,1], index: 8, kind: input, shape index: {}]
  %s9 = inlined_call_operand.vmem [shape: f32[3,8,1], index: 9, kind: input, shape index: {}]
  %s10 = inlined_call_operand.vmem [shape: f32[3,8,1], index: 10, kind: input, shape index: {}]
  %s11 = inlined_call_operand.hbm [shape: f32[2,8,128], index: 11, kind: output, shape index: {}]
  %s12 = sld [smem:[#allocation0]]
  $region85: #{tpu_custom_call.1} parent=0
    _
  %s14 = ssub.s32 1, %s12
  %s15 = scalar_select 0, %s14, %s12
  $region1: #{tpu_custom_call.1} parent=0
    #allocation2 [shape = 'u8[196608]{0}', space=vmem, size = 0x30000, scoped, tag = 'input window, operand 1, single buffered']
    #allocation3 [shape = 's32[2]{0}', space=sflag, size = 0x8, scoped, tag = 'scoped memory for tpu_custom_call.1']
    #allocation4 [shape = 's32[2]{0}', space=sflag, size = 0x8, scoped, tag = 'scoped memory for tpu_custom_call.1']
    #allocation5 [shape = 'u8[131072]{0}', space=vmem, size = 0x20000, scoped, tag = 'input window, operand 2, single buffered']
    #allocation6 [shape = 's32[1]{0}', space=sflag, size = 0x4, scoped, tag = 'scoped memory for tpu_custom_call.1']
    #allocation7 [shape = 'u8[8192]{0}', space=vmem, size = 0x2000, scoped, tag = 'output window, operand 0']
    %16 = vsyncpa [#allocation3], 0
    %17 = vsyncpa [#allocation6], 0
    %18 = vsyncpa [#allocation4], 0
    %s19 = scalar_lea.sflag [#allocation4], 1
    %20 = vsyncpa %s19, 0
    loop: start=0, step=1, limit=4
    $region2: #{tpu_custom_call.1} parent=1 // loop_pre_header
      _
    $region3: #{tpu_custom_call.1} parent=1 // loop_header
      %s22 = sphi 0, %s26
      %p23 = scmp.ge.s32.totalorder %s22, 4
      %s32 = sphi 0, %s34
      %s35 = sphi 0, %s32
      %s36 = sphi 0, %s35
      %s52 = sphi 0, %s36
      %s56 = sphi 0, %s56
      %s58 = sphi 0, %s56
      %s59 = sphi 0, %s58
      %s73 = sphi 0, %s59
      %s77 = sphi 0, %s77
      %s79 = sphi 0, %s77
      %s80 = sphi 0, %s79
      %s94 = sphi 0, %s80
      %s98 = sphi 0, %s98
      %s100 = sphi 0, %s98
      %s101 = sphi 0, %s100
      %s115 = sphi 0, %s101
      %s119 = sphi 0, %s119
      %s121 = sphi 0, %s119
      %s122 = sphi 0, %s121
      %s136 = sphi 0, %s122
      %s140 = sphi 0, %s140
      %s142 = sphi 0, %s140
      %s143 = sphi 0, %s142
      %s157 = sphi 0, %s143
      %s161 = sphi 0, %s161
      %s163 = sphi 0, %s161
      %s164 = sphi 0, %s163
      %s178 = sphi 0, %s164
      %s182 = sphi 0, %s182
      %s184 = sphi 0, %s182
      %s185 = sphi 0, %s184
      %s199 = sphi 0, %s185
      %s203 = sphi 0, %s203
      %s205 = sphi 0, %s203
      %s206 = sphi 0, %s205
      %s220 = sphi 0, %s206
      %s224 = sphi 0, %s224
      %s226 = sphi 0, %s224
      %s227 = sphi 0, %s226
      %s241 = sphi 0, %s227
      %s245 = sphi 0, %s245
      %s247 = sphi 0, %s245
      %s248 = sphi 0, %s247
      %s262 = sphi 0, %s248
      %s268 = sphi 0, %s270
      %s271 = sphi 0, %s268
      %s272 = sphi 0, %s271
      %s288 = sphi 0, %s272
    $region4: #{tpu_custom_call.1} parent=1 // loop_header_branch
      %25 = sbr.rel (%p23) target = $region8
    $region5: #{tpu_custom_call.1} parent=1 // loop_body
      %s27 = ssub.s32 %s22, 1
      %s28 = ssub.s32 %s22, 2
      %s29 = sadd.s32 %s22, 1
      %s30 = ssub.s32 %s22, %s29
      %p31 = scmp.eq.s32.totalorder %s30, 0
      %s33 = sadd.s32 %s32, 1
      %s34 = scalar_select %p31, %s32, %s33
      %p37 = pneg %p31
      %p38 = scmp.eq.s32.totalorder %s22, 1
      %p39 = por %p37, %p38
      %p40 = scmp.ne.s32.totalorder %s32, %s35
      %p41 = scmp.eq.s32.totalorder %s22, 0
      %p42 = por %p40, %p41
      %p43 = scmp.ne.s32.totalorder %s32, %s35
      %p44 = scmp.eq.s32.totalorder %s27, 1
      %p45 = por %p43, %p44
      %p46 = scmp.ne.s32.totalorder %s35, %s36
      %p47 = scmp.eq.s32.totalorder %s27, 0
      %p48 = por %p46, %p47
      %p49 = scmp.ne.s32.totalorder %s35, %s36
      %p50 = scmp.eq.s32.totalorder %s28, 1
      %p51 = por %p49, %p50
      %p53 = scmp.ne.s32.totalorder %s36, %s52
      %p54 = scmp.eq.s32.totalorder %s28, 0
      %p55 = por %p53, %p54
      %s57 = sadd.s32 %s56, 1
      %p60 = scmp.eq.s32.totalorder %s22, 1
      %p61 = scmp.ne.s32.totalorder %s56, %s58
      %p62 = scmp.eq.s32.totalorder %s22, 0
      %p63 = por %p61, %p62
      %p64 = scmp.ne.s32.totalorder %s56, %s58
      %p65 = scmp.eq.s32.totalorder %s27, 1
      %p66 = por %p64, %p65
      %p67 = scmp.ne.s32.totalorder %s58, %s59
      %p68 = scmp.eq.s32.totalorder %s27, 0
      %p69 = por %p67, %p68
      %p70 = scmp.ne.s32.totalorder %s58, %s59
      %p71 = scmp.eq.s32.totalorder %s28, 1
      %p72 = por %p70, %p71
      %p74 = scmp.ne.s32.totalorder %s59, %s73
      %p75 = scmp.eq.s32.totalorder %s28, 0
      %p76 = por %p74, %p75
      %s78 = sadd.s32 %s77, 1
      %p81 = scmp.eq.s32.totalorder %s22, 1
      %p82 = scmp.ne.s32.totalorder %s77, %s79
      %p83 = scmp.eq.s32.totalorder %s22, 0
      %p84 = por %p82, %p83
      %p85 = scmp.ne.s32.totalorder %s77, %s79
      %p86 = scmp.eq.s32.totalorder %s27, 1
      %p87 = por %p85, %p86
      %p88 = scmp.ne.s32.totalorder %s79, %s80
      %p89 = scmp.eq.s32.totalorder %s27, 0
      %p90 = por %p88, %p89
      %p91 = scmp.ne.s32.totalorder %s79, %s80
      %p92 = scmp.eq.s32.totalorder %s28, 1
      %p93 = por %p91, %p92
      %p95 = scmp.ne.s32.totalorder %s80, %s94
      %p96 = scmp.eq.s32.totalorder %s28, 0
      %p97 = por %p95, %p96
      %s99 = sadd.s32 %s98, 1
      %p102 = scmp.eq.s32.totalorder %s22, 1
      %p103 = scmp.ne.s32.totalorder %s98, %s100
      %p104 = scmp.eq.s32.totalorder %s22, 0
      %p105 = por %p103, %p104
      %p106 = scmp.ne.s32.totalorder %s98, %s100
      %p107 = scmp.eq.s32.totalorder %s27, 1
      %p108 = por %p106, %p107
      %p109 = scmp.ne.s32.totalorder %s100, %s101
      %p110 = scmp.eq.s32.totalorder %s27, 0
      %p111 = por %p109, %p110
      %p112 = scmp.ne.s32.totalorder %s100, %s101
      %p113 = scmp.eq.s32.totalorder %s28, 1
      %p114 = por %p112, %p113
      %p116 = scmp.ne.s32.totalorder %s101, %s115
      %p117 = scmp.eq.s32.totalorder %s28, 0
      %p118 = por %p116, %p117
      %s120 = sadd.s32 %s119, 1
      %p123 = scmp.eq.s32.totalorder %s22, 1
      %p124 = scmp.ne.s32.totalorder %s119, %s121
      %p125 = scmp.eq.s32.totalorder %s22, 0
      %p126 = por %p124, %p125
      %p127 = scmp.ne.s32.totalorder %s119, %s121
      %p128 = scmp.eq.s32.totalorder %s27, 1
      %p129 = por %p127, %p128
      %p130 = scmp.ne.s32.totalorder %s121, %s122
      %p131 = scmp.eq.s32.totalorder %s27, 0
      %p132 = por %p130, %p131
      %p133 = scmp.ne.s32.totalorder %s121, %s122
      %p134 = scmp.eq.s32.totalorder %s28, 1
      %p135 = por %p133, %p134
      %p137 = scmp.ne.s32.totalorder %s122, %s136
      %p138 = scmp.eq.s32.totalorder %s28, 0
      %p139 = por %p137, %p138
      %s141 = sadd.s32 %s140, 1
      %p144 = scmp.eq.s32.totalorder %s22, 1
      %p145 = scmp.ne.s32.totalorder %s140, %s142
      %p146 = scmp.eq.s32.totalorder %s22, 0
      %p147 = por %p145, %p146
      %p148 = scmp.ne.s32.totalorder %s140, %s142
      %p149 = scmp.eq.s32.totalorder %s27, 1
      %p150 = por %p148, %p149
      %p151 = scmp.ne.s32.totalorder %s142, %s143
      %p152 = scmp.eq.s32.totalorder %s27, 0
      %p153 = por %p151, %p152
      %p154 = scmp.ne.s32.totalorder %s142, %s143
      %p155 = scmp.eq.s32.totalorder %s28, 1
      %p156 = por %p154, %p155
      %p158 = scmp.ne.s32.totalorder %s143, %s157
      %p159 = scmp.eq.s32.totalorder %s28, 0
      %p160 = por %p158, %p159
      %s162 = sadd.s32 %s161, 1
      %p165 = scmp.eq.s32.totalorder %s22, 1
      %p166 = scmp.ne.s32.totalorder %s161, %s163
      %p167 = scmp.eq.s32.totalorder %s22, 0
      %p168 = por %p166, %p167
      %p169 = scmp.ne.s32.totalorder %s161, %s163
      %p170 = scmp.eq.s32.totalorder %s27, 1
      %p171 = por %p169, %p170
      %p172 = scmp.ne.s32.totalorder %s163, %s164
      %p173 = scmp.eq.s32.totalorder %s27, 0
      %p174 = por %p172, %p173
      %p175 = scmp.ne.s32.totalorder %s163, %s164
      %p176 = scmp.eq.s32.totalorder %s28, 1
      %p177 = por %p175, %p176
      %p179 = scmp.ne.s32.totalorder %s164, %s178
      %p180 = scmp.eq.s32.totalorder %s28, 0
      %p181 = por %p179, %p180
      %s183 = sadd.s32 %s182, 1
      %p186 = scmp.eq.s32.totalorder %s22, 1
      %p187 = scmp.ne.s32.totalorder %s182, %s184
      %p188 = scmp.eq.s32.totalorder %s22, 0
      %p189 = por %p187, %p188
      %p190 = scmp.ne.s32.totalorder %s182, %s184
      %p191 = scmp.eq.s32.totalorder %s27, 1
      %p192 = por %p190, %p191
      %p193 = scmp.ne.s32.totalorder %s184, %s185
      %p194 = scmp.eq.s32.totalorder %s27, 0
      %p195 = por %p193, %p194
      %p196 = scmp.ne.s32.totalorder %s184, %s185
      %p197 = scmp.eq.s32.totalorder %s28, 1
      %p198 = por %p196, %p197
      %p200 = scmp.ne.s32.totalorder %s185, %s199
      %p201 = scmp.eq.s32.totalorder %s28, 0
      %p202 = por %p200, %p201
      %s204 = sadd.s32 %s203, 1
      %p207 = scmp.eq.s32.totalorder %s22, 1
      %p208 = scmp.ne.s32.totalorder %s203, %s205
      %p209 = scmp.eq.s32.totalorder %s22, 0
      %p210 = por %p208, %p209
      %p211 = scmp.ne.s32.totalorder %s203, %s205
      %p212 = scmp.eq.s32.totalorder %s27, 1
      %p213 = por %p211, %p212
      %p214 = scmp.ne.s32.totalorder %s205, %s206
      %p215 = scmp.eq.s32.totalorder %s27, 0
      %p216 = por %p214, %p215
      %p217 = scmp.ne.s32.totalorder %s205, %s206
      %p218 = scmp.eq.s32.totalorder %s28, 1
      %p219 = por %p217, %p218
      %p221 = scmp.ne.s32.totalorder %s206, %s220
      %p222 = scmp.eq.s32.totalorder %s28, 0
      %p223 = por %p221, %p222
      %s225 = sadd.s32 %s224, 1
      %p228 = scmp.eq.s32.totalorder %s22, 1
      %p229 = scmp.ne.s32.totalorder %s224, %s226
      %p230 = scmp.eq.s32.totalorder %s22, 0
      %p231 = por %p229, %p230
      %p232 = scmp.ne.s32.totalorder %s224, %s226
      %p233 = scmp.eq.s32.totalorder %s27, 1
      %p234 = por %p232, %p233
      %p235 = scmp.ne.s32.totalorder %s226, %s227
      %p236 = scmp.eq.s32.totalorder %s27, 0
      %p237 = por %p235, %p236
      %p238 = scmp.ne.s32.totalorder %s226, %s227
      %p239 = scmp.eq.s32.totalorder %s28, 1
      %p240 = por %p238, %p239
      %p242 = scmp.ne.s32.totalorder %s227, %s241
      %p243 = scmp.eq.s32.totalorder %s28, 0
      %p244 = por %p242, %p243
      %s246 = sadd.s32 %s245, 1
      %p249 = scmp.eq.s32.totalorder %s22, 1
      %p250 = scmp.ne.s32.totalorder %s245, %s247
      %p251 = scmp.eq.s32.totalorder %s22, 0
      %p252 = por %p250, %p251
      %p253 = scmp.ne.s32.totalorder %s245, %s247
      %p254 = scmp.eq.s32.totalorder %s27, 1
      %p255 = por %p253, %p254
      %p256 = scmp.ne.s32.totalorder %s247, %s248
      %p257 = scmp.eq.s32.totalorder %s27, 0
      %p258 = por %p256, %p257
      %p259 = scmp.ne.s32.totalorder %s247, %s248
      %p260 = scmp.eq.s32.totalorder %s28, 1
      %p261 = por %p259, %p260
      %p263 = scmp.ne.s32.totalorder %s248, %s262
      %p264 = scmp.eq.s32.totalorder %s28, 0
      %p265 = por %p263, %p264
      %s266 = ssub.s32 %s22, %s29
      %p267 = scmp.eq.s32.totalorder %s266, 0
      %s269 = sadd.s32 %s268, 1
      %s270 = scalar_select %p267, %s268, %s269
      %p273 = pneg %p267
      %p274 = scmp.eq.s32.totalorder %s22, 1
      %p275 = por %p273, %p274
      %p276 = scmp.ne.s32.totalorder %s268, %s271
      %p277 = scmp.eq.s32.totalorder %s22, 0
      %p278 = por %p276, %p277
      %p279 = scmp.ne.s32.totalorder %s268, %s271
      %p280 = scmp.eq.s32.totalorder %s27, 1
      %p281 = por %p279, %p280
      %p282 = scmp.ne.s32.totalorder %s271, %s272
      %p283 = scmp.eq.s32.totalorder %s27, 0
      %p284 = por %p282, %p283
      %p285 = scmp.ne.s32.totalorder %s271, %s272
      %p286 = scmp.eq.s32.totalorder %s28, 1
      %p287 = por %p285, %p286
      %p289 = scmp.ne.s32.totalorder %s272, %s288
      %p290 = scmp.eq.s32.totalorder %s28, 0
      %p291 = por %p289, %p290
      %p292 = scmp.le.s32.totalorder 1, %s22
      %p293 = scmp.lt.s32.totalorder %s22, 3
      %p294 = pnand %p292, %p293
      %p295 = pneg %p294
      // Predicated region
      $region9: #{tpu_custom_call.1} parent=5 // pred_check
        _
      $region10: #{tpu_custom_call.1} parent=5 // pred_check_branch
        %297 = sbr.rel (%p294) target = $region12
      $region11: #{tpu_custom_call.1} parent=5 // pred_region
        %s298 = ssub.s32 %s22, 1
        // Predicated region
        $region13: #{tpu_custom_call.1} parent=11 // pred_check
          %p299 = pneg %p69
        $region14: #{tpu_custom_call.1} parent=11 // pred_check_branch
          %301 = sbr.rel (%p299) target = $region16
        $region15: #{tpu_custom_call.1} parent=11 // pred_region
          %s303 = ssub.s32 6144, 6144
          %304 = vsyncadd [#allocation3], %s303
          %s305 = sshll.u32 [#allocation2], 4
          %s306 = int_to_ptr.vmem [resolvable:$true] %s305
          %311 = dma.hbm_to_vmem [thread:$0]  %s1, 6144, %s306, [#allocation3], 128, 128, 8
        $region16: #{tpu_custom_call.1} parent=11 // pred_fallthru
          _
        // Predicated region
        $region17: #{tpu_custom_call.1} parent=11 // pred_check
          %p312 = pneg %p90
        $region18: #{tpu_custom_call.1} parent=11 // pred_check_branch
          %314 = sbr.rel (%p312) target = $region20
        $region19: #{tpu_custom_call.1} parent=11 // pred_region
          %s316 = ssub.s32 4096, 4096
          %317 = vsyncadd [#allocation6], %s316
          %s318 = sshll.u32 [#allocation5], 4
          %s319 = int_to_ptr.vmem [resolvable:$true] %s318
          %324 = dma.hbm_to_vmem [thread:$0]  %s2, 4096, %s319, [#allocation6], 64, 64, 4
        $region20: #{tpu_custom_call.1} parent=11 // pred_fallthru
          _
        // Predicated region
        $region21: #{tpu_custom_call.1} parent=11 // pred_check
          %p325 = pneg %p111
        $region22: #{tpu_custom_call.1} parent=11 // pred_check_branch
          %327 = sbr.rel (%p325) target = $region24
        $region23: #{tpu_custom_call.1} parent=11 // pred_region
          _
        $region24: #{tpu_custom_call.1} parent=11 // pred_fallthru
          _
        // Predicated region
        $region25: #{tpu_custom_call.1} parent=11 // pred_check
          %p328 = pneg %p132
        $region26: #{tpu_custom_call.1} parent=11 // pred_check_branch
          %330 = sbr.rel (%p328) target = $region28
        $region27: #{tpu_custom_call.1} parent=11 // pred_region
          _
        $region28: #{tpu_custom_call.1} parent=11 // pred_fallthru
          _
        // Predicated region
        $region29: #{tpu_custom_call.1} parent=11 // pred_check
          %p331 = pneg %p153
        $region30: #{tpu_custom_call.1} parent=11 // pred_check_branch
          %333 = sbr.rel (%p331) target = $region32
        $region31: #{tpu_custom_call.1} parent=11 // pred_region
          _
        $region32: #{tpu_custom_call.1} parent=11 // pred_fallthru
          _
        // Predicated region
        $region33: #{tpu_custom_call.1} parent=11 // pred_check
          %p334 = pneg %p174
        $region34: #{tpu_custom_call.1} parent=11 // pred_check_branch
          %336 = sbr.rel (%p334) target = $region36
        $region35: #{tpu_custom_call.1} parent=11 // pred_region
          _
        $region36: #{tpu_custom_call.1} parent=11 // pred_fallthru
          _
        // Predicated region
        $region37: #{tpu_custom_call.1} parent=11 // pred_check
          %p337 = pneg %p195
        $region38: #{tpu_custom_call.1} parent=11 // pred_check_branch
          %339 = sbr.rel (%p337) target = $region40
        $region39: #{tpu_custom_call.1} parent=11 // pred_region
          _
        $region40: #{tpu_custom_call.1} parent=11 // pred_fallthru
          _
        // Predicated region
        $region41: #{tpu_custom_call.1} parent=11 // pred_check
          %p340 = pneg %p216
        $region42: #{tpu_custom_call.1} parent=11 // pred_check_branch
          %342 = sbr.rel (%p340) target = $region44
        $region43: #{tpu_custom_call.1} parent=11 // pred_region
          _
        $region44: #{tpu_custom_call.1} parent=11 // pred_fallthru
          _
        // Predicated region
        $region45: #{tpu_custom_call.1} parent=11 // pred_check
          %p343 = pneg %p237
        $region46: #{tpu_custom_call.1} parent=11 // pred_check_branch
          %345 = sbr.rel (%p343) target = $region48
        $region47: #{tpu_custom_call.1} parent=11 // pred_region
          _
        $region48: #{tpu_custom_call.1} parent=11 // pred_fallthru
          _
        // Predicated region
        $region49: #{tpu_custom_call.1} parent=11 // pred_check
          %p346 = pneg %p258
        $region50: #{tpu_custom_call.1} parent=11 // pred_check_branch
          %348 = sbr.rel (%p346) target = $region52
        $region51: #{tpu_custom_call.1} parent=11 // pred_region
          _
        $region52: #{tpu_custom_call.1} parent=11 // pred_fallthru
          _
      $region12: #{tpu_custom_call.1} parent=5 // pred_fallthru
        _
      %p349 = scmp.lt.s32.totalorder %s22, 2
      // Predicated region
      $region53: #{tpu_custom_call.1} parent=5 // pred_check
        %p350 = pneg %p349
      $region54: #{tpu_custom_call.1} parent=5 // pred_check_branch
        %352 = sbr.rel (%p350) target = $region56
      $region55: #{tpu_custom_call.1} parent=5 // pred_region
        // Predicated region
        $region57: #{tpu_custom_call.1} parent=55 // pred_check
          %p353 = pneg %p42
        $region58: #{tpu_custom_call.1} parent=55 // pred_check_branch
          %355 = sbr.rel (%p353) target = $region60
        $region59: #{tpu_custom_call.1} parent=55 // pred_region
          %p356 = scmp.lt.s32.totalorder %s22, 1
          %s357 = scalar_select %p356, %s22, 1
          %s358 = smul.addr %s357, 8
          %s359 = scalar_lea.vmem %s0, %s358
        $region60: #{tpu_custom_call.1} parent=55 // pred_fallthru
          _
      $region56: #{tpu_custom_call.1} parent=5 // pred_fallthru
        _
      %p360 = scmp.le.s32.totalorder 1, %s22
      %p361 = scmp.lt.s32.totalorder %s22, 3
      %p362 = pnand %p360, %p361
      %p363 = pneg %p362
      // Predicated region
      $region61: #{tpu_custom_call.1} parent=5 // pred_check
        _
      $region62: #{tpu_custom_call.1} parent=5 // pred_check_branch
        %365 = sbr.rel (%p362) target = $region64
      $region63: #{tpu_custom_call.1} parent=5 // pred_region
        %s366 = ssub.s32 %s22, 1
        // Predicated region
        $region65: #{tpu_custom_call.1} parent=63 // pred_check
          %p367 = pneg %p69
        $region66: #{tpu_custom_call.1} parent=63 // pred_check_branch
          %369 = sbr.rel (%p367) target = $region68
        $region67: #{tpu_custom_call.1} parent=63 // pred_region
          %370 = dma.done [#allocation3], 6144
        $region68: #{tpu_custom_call.1} parent=63 // pred_fallthru
          _
        // Predicated region
        $region69: #{tpu_custom_call.1} parent=63 // pred_check
          %p371 = pneg %p90
        $region70: #{tpu_custom_call.1} parent=63 // pred_check_branch
          %373 = sbr.rel (%p371) target = $region72
        $region71: #{tpu_custom_call.1} parent=63 // pred_region
          %374 = dma.done [#allocation6], 4096
        $region72: #{tpu_custom_call.1} parent=63 // pred_fallthru
          _
        %p375 = scmp.lt.s32.totalorder %s27, 1
        %s376 = scalar_select %p375, %s27, 1
        %s377 = smul.addr %s376, 8
        %s378 = scalar_lea.vmem %s0, %s377
        %p379 = pneg %p48
        %p380 = pneg %p45
        %p381 = pneg %p69
        %p382 = pneg %p66
        %p383 = pneg %p90
        %p384 = pneg %p87
        %p385 = pneg %p111
        %p386 = pneg %p108
        %p387 = pneg %p132
        %p388 = pneg %p129
        %p389 = pneg %p153
        %p390 = pneg %p150
        %p391 = pneg %p174
        %p392 = pneg %p171
        %p393 = pneg %p195
        %p394 = pneg %p192
        %p395 = pneg %p216
        %p396 = pneg %p213
        %p397 = pneg %p237
        %p398 = pneg %p234
        %p399 = pneg %p258
        %p400 = pneg %p255
        %p401 = pneg %p284
        %p402 = pneg %p281
        %s403 = sand.u32 %s271, 1
        %s404 = scalar_lea.sflag [#allocation4], %s403
        %s405 = sand.u32 %s271, 1
        %s406 = smul.addr %s405, 8
        %s407 = scalar_lea.vmem [#allocation7], %s406
        %p408 = scmp.lt.s32.totalorder %s27, 1
        %s409 = scalar_select %p408, %s27, 1
        %s410 = smul.addr %s409, 8
        %s411 = scalar_lea.vmem %s0, %s410
        %v413 = vlaneseq
        %v414 = vand.u32 %v413, 127
        %v415 = vadd.s32 %v414, 128
        %vm416 = vcmp.lt.s32.totalorder %v414, 16
        %v417 = vsel %vm416, 1, 0
        %v418 = vcvt.s32.f32 %v417
        %vm419 = vcmp.lt.s32.totalorder %v414, 32
        %vm420 = vcmp.lt.s32.totalorder %v415, 32
        %v421 = vsel %vm419, 1, 0
        %v422 = vsel %vm420, 1, 0
        %v423 = vcvt.s32.f32 %v421
        %v424 = vcvt.s32.f32 %v422
        %vm425 = vcmp.ge.s32.totalorder %v414, 1
        %v426 = vsel %vm425, 1, 0
        %v427 = vcvt.s32.f32 %v426
        %vm428 = vcmp.lt.s32.totalorder %v414, 15
        %v429 = vsel %vm428, 1, 0
        %v430 = vcvt.s32.f32 %v429
        %vm431 = vcmp.ge.s32.totalorder %v414, 3
        %v432 = vsel %vm431, 1, 0
        %v433 = vcvt.s32.f32 %v432
        %vm434 = vcmp.lt.s32.totalorder %v414, 13
        %v435 = vsel %vm434, 1, 0
        %v436 = vcvt.s32.f32 %v435
        %vm437 = vcmp.ge.s32.totalorder %v414, 5
        %v438 = vsel %vm437, 1, 0
        %v439 = vcvt.s32.f32 %v438
        %vm440 = vcmp.lt.s32.totalorder %v414, 11
        %v441 = vsel %vm440, 1, 0
        %v442 = vcvt.s32.f32 %v441
        %v443 = vld [vmem:[#allocation2] sm:$0xff]
        %v444 = vld [vmem:[#allocation2 + $0x8] sm:$0xff]
        %v445 = vld [vmem:[#allocation2 + $0x10] sm:$0xff]
        %v446 = vld [vmem:[#allocation2 + $0x18] sm:$0xff]
        %v447 = vld [vmem:[#allocation2 + $0x20] sm:$0xff]
        %v448 = vld [vmem:[#allocation2 + $0x28] sm:$0xff]
        %v449 = vld [vmem:[#allocation2 + $0x30] sm:$0xff]
        %v450 = vld [vmem:[#allocation2 + $0x38] sm:$0xff]
        %v451 = vld [vmem:[#allocation2 + $0x40] sm:$0xff]
        %v452 = vld [vmem:[#allocation2 + $0x48] sm:$0xff]
        %v453 = vld [vmem:[#allocation2 + $0x50] sm:$0xff]
        %v454 = vld [vmem:[#allocation2 + $0x58] sm:$0xff]
        %v455 = vld [vmem:[#allocation2 + $0x60] sm:$0xff]
        %v456 = vld [vmem:[#allocation2 + $0x68] sm:$0xff]
        %v457 = vld [vmem:[#allocation2 + $0x70] sm:$0xff]
        %v458 = vld [vmem:[#allocation2 + $0x78] sm:$0xff]
        %v459 = vld [vmem:[#allocation2 + $0x80] sm:$0xff]
        %v460 = vld [vmem:[#allocation2 + $0x88] sm:$0xff]
        %v461 = vld [vmem:[#allocation2 + $0x90] sm:$0xff]
        %v462 = vld [vmem:[#allocation2 + $0x98] sm:$0xff]
        %v463 = vld [vmem:[#allocation2 + $0xa0] sm:$0xff]
        %v464 = vld [vmem:[#allocation2 + $0xa8] sm:$0xff]
        %v465 = vld [vmem:[#allocation2 + $0xb0] sm:$0xff]
        %v466 = vld [vmem:[#allocation2 + $0xb8] sm:$0xff]
        %v467 = vld [vmem:[#allocation2 + $0xc0] sm:$0xff]
        %v468 = vld [vmem:[#allocation2 + $0xc8] sm:$0xff]
        %v469 = vld [vmem:[#allocation2 + $0xd0] sm:$0xff]
        %v470 = vld [vmem:[#allocation2 + $0xd8] sm:$0xff]
        %v471 = vld [vmem:[#allocation2 + $0xe0] sm:$0xff]
        %v472 = vld [vmem:[#allocation2 + $0xe8] sm:$0xff]
        %v473 = vld [vmem:[#allocation2 + $0xf0] sm:$0xff]
        %v474 = vld [vmem:[#allocation2 + $0xf8] sm:$0xff]
        %v475 = vld [vmem:[#allocation2 + $0x100] sm:$0xff]
        %v476 = vld [vmem:[#allocation2 + $0x108] sm:$0xff]
        %v477 = vld [vmem:[#allocation2 + $0x110] sm:$0xff]
        %v478 = vld [vmem:[#allocation2 + $0x118] sm:$0xff]
        %v479 = vld [vmem:[#allocation2 + $0x120] sm:$0xff]
        %v480 = vld [vmem:[#allocation2 + $0x128] sm:$0xff]
        %v481 = vld [vmem:[#allocation2 + $0x130] sm:$0xff]
        %v482 = vld [vmem:[#allocation2 + $0x138] sm:$0xff]
        %v483 = vld [vmem:[#allocation2 + $0x140] sm:$0xff]
        %v484 = vld [vmem:[#allocation2 + $0x148] sm:$0xff]
        %v485 = vld [vmem:[#allocation2 + $0x150] sm:$0xff]
        %v486 = vld [vmem:[#allocation2 + $0x158] sm:$0xff]
        %v487 = vld [vmem:[#allocation2 + $0x160] sm:$0xff]
        %v488 = vld [vmem:[#allocation2 + $0x168] sm:$0xff]
        %v489 = vld [vmem:[#allocation2 + $0x170] sm:$0xff]
        %v490 = vld [vmem:[#allocation2 + $0x178] sm:$0xff]
        %v491 = vld [vmem:[#allocation5] sm:$0xf]
        %v492 = vld [vmem:[#allocation5 + $0x4] sm:$0xf]
        %v493 = vld [vmem:[#allocation5 + $0x8] sm:$0xf]
        %v494 = vld [vmem:[#allocation5 + $0xc] sm:$0xf]
        %v495 = vld [vmem:[#allocation5 + $0x10] sm:$0xf]
        %v496 = vld [vmem:[#allocation5 + $0x14] sm:$0xf]
        %v497 = vld [vmem:[#allocation5 + $0x18] sm:$0xf]
        %v498 = vld [vmem:[#allocation5 + $0x1c] sm:$0xf]
        %v499 = vld [vmem:[#allocation5 + $0x20] sm:$0xf]
        %v500 = vld [vmem:[#allocation5 + $0x24] sm:$0xf]
        %v501 = vld [vmem:[#allocation5 + $0x28] sm:$0xf]
        %v502 = vld [vmem:[#allocation5 + $0x2c] sm:$0xf]
        %v503 = vld [vmem:[#allocation5 + $0x30] sm:$0xf]
        %v504 = vld [vmem:[#allocation5 + $0x34] sm:$0xf]
        %v505 = vld [vmem:[#allocation5 + $0x38] sm:$0xf]
        %v506 = vld [vmem:[#allocation5 + $0x3c] sm:$0xf]
        %v507 = vld [vmem:[#allocation5 + $0x40] sm:$0xf]
        %v508 = vld [vmem:[#allocation5 + $0x44] sm:$0xf]
        %v509 = vld [vmem:[#allocation5 + $0x48] sm:$0xf]
        %v510 = vld [vmem:[#allocation5 + $0x4c] sm:$0xf]
        %v511 = vld [vmem:[#allocation5 + $0x50] sm:$0xf]
        %v512 = vld [vmem:[#allocation5 + $0x54] sm:$0xf]
        %v513 = vld [vmem:[#allocation5 + $0x58] sm:$0xf]
        %v514 = vld [vmem:[#allocation5 + $0x5c] sm:$0xf]
        %v515 = vld [vmem:[#allocation5 + $0x60] sm:$0xf]
        %v516 = vld [vmem:[#allocation5 + $0x64] sm:$0xf]
        %v517 = vld [vmem:[#allocation5 + $0x68] sm:$0xf]
        %v518 = vld [vmem:[#allocation5 + $0x6c] sm:$0xf]
        %v519 = vld [vmem:[#allocation5 + $0x70] sm:$0xf]
        %v520 = vld [vmem:[#allocation5 + $0x74] sm:$0xf]
        %v521 = vld [vmem:[#allocation5 + $0x78] sm:$0xf]
        %v522 = vld [vmem:[#allocation5 + $0x7c] sm:$0xf]
        %v523 = vld [vmem:[#allocation5 + $0x80] sm:$0xf]
        %v524 = vld [vmem:[#allocation5 + $0x84] sm:$0xf]
        %v525 = vld [vmem:[#allocation5 + $0x88] sm:$0xf]
        %v526 = vld [vmem:[#allocation5 + $0x8c] sm:$0xf]
        %v527 = vld [vmem:[#allocation5 + $0x90] sm:$0xf]
        %v528 = vld [vmem:[#allocation5 + $0x94] sm:$0xf]
        %v529 = vld [vmem:[#allocation5 + $0x98] sm:$0xf]
        %v530 = vld [vmem:[#allocation5 + $0x9c] sm:$0xf]
        %v531 = vld [vmem:[#allocation5 + $0xa0] sm:$0xf]
        %v532 = vld [vmem:[#allocation5 + $0xa4] sm:$0xf]
        %v533 = vld [vmem:[#allocation5 + $0xa8] sm:$0xf]
        %v534 = vld [vmem:[#allocation5 + $0xac] sm:$0xf]
        %v535 = vld [vmem:[#allocation5 + $0xb0] sm:$0xf]
        %v536 = vld [vmem:[#allocation5 + $0xb4] sm:$0xf]
        %v537 = vld [vmem:[#allocation5 + $0xb8] sm:$0xf]
        %v538 = vld [vmem:[#allocation5 + $0xbc] sm:$0xf]
        %v539 = vld [vmem:[#allocation5 + $0xc0] sm:$0xf]
        %v540 = vld [vmem:[#allocation5 + $0xc4] sm:$0xf]
        %v541 = vld [vmem:[#allocation5 + $0xc8] sm:$0xf]
        %v542 = vld [vmem:[#allocation5 + $0xcc] sm:$0xf]
        %v543 = vld [vmem:[#allocation5 + $0xd0] sm:$0xf]
        %v544 = vld [vmem:[#allocation5 + $0xd4] sm:$0xf]
        %v545 = vld [vmem:[#allocation5 + $0xd8] sm:$0xf]
        %v546 = vld [vmem:[#allocation5 + $0xdc] sm:$0xf]
        %v547 = vld [vmem:[#allocation5 + $0xe0] sm:$0xf]
        %v548 = vld [vmem:[#allocation5 + $0xe4] sm:$0xf]
        %v549 = vld [vmem:[#allocation5 + $0xe8] sm:$0xf]
        %v550 = vld [vmem:[#allocation5 + $0xec] sm:$0xf]
        %v551 = vld [vmem:[#allocation5 + $0xf0] sm:$0xf]
        %v552 = vld [vmem:[#allocation5 + $0xf4] sm:$0xf]
        %v553 = vld [vmem:[#allocation5 + $0xf8] sm:$0xf]
        %v554 = vld [vmem:[#allocation5 + $0xfc] sm:$0xf]
        %v555 = vld [vmem:[%s411] sm:$0xff]
        %v556 = vld [vmem:[%s5] sm:$0xff]
        %v557 = vld [vmem:[%s6] sm:$0xff]
        %v558 = vld [vmem:[%s9] sm:$0xff]
        %v559 = vld [vmem:[%s10] sm:$0xff]
        %v560 = vpack.c.bf16 0.0, 0.0
        %v561 = vpack.c.bf16 %v555, %v555
        %v610 = vunpack.c.l.b16 %v443
        %v611 = vunpack.c.h.b16 %v443
        %v612 = vunpack.c.l.b16 %v444
        %v613 = vunpack.c.h.b16 %v444
        %v614 = vunpack.c.l.b16 %v445
        %v615 = vunpack.c.h.b16 %v445
        %v616 = vunpack.c.l.b16 %v446
        %v617 = vunpack.c.h.b16 %v446
        %v618 = vunpack.c.l.b16 %v447
        %v619 = vunpack.c.h.b16 %v447
        %v620 = vunpack.c.l.b16 %v448
        %v621 = vunpack.c.h.b16 %v448
        %v622 = vunpack.c.l.b16 %v449
        %v623 = vunpack.c.h.b16 %v449
        %v624 = vunpack.c.l.b16 %v450
        %v625 = vunpack.c.h.b16 %v450
        %v626 = vunpack.c.l.b16 %v451
        %v627 = vunpack.c.h.b16 %v451
        %v628 = vunpack.c.l.b16 %v452
        %v629 = vunpack.c.h.b16 %v452
        %v630 = vunpack.c.l.b16 %v453
        %v631 = vunpack.c.h.b16 %v453
        %v632 = vunpack.c.l.b16 %v454
        %v633 = vunpack.c.h.b16 %v454
        %v634 = vunpack.c.l.b16 %v455
        %v635 = vunpack.c.h.b16 %v455
        %v636 = vunpack.c.l.b16 %v456
        %v637 = vunpack.c.h.b16 %v456
        %v638 = vunpack.c.l.b16 %v457
        %v639 = vunpack.c.h.b16 %v457
        %v640 = vunpack.c.l.b16 %v458
        %v641 = vunpack.c.h.b16 %v458
        %v642 = vunpack.c.l.b16 %v459
        %v643 = vunpack.c.h.b16 %v459
        %v644 = vunpack.c.l.b16 %v460
        %v645 = vunpack.c.h.b16 %v460
        %v646 = vunpack.c.l.b16 %v461
        %v647 = vunpack.c.h.b16 %v461
        %v648 = vunpack.c.l.b16 %v462
        %v649 = vunpack.c.h.b16 %v462
        %v650 = vunpack.c.l.b16 %v463
        %v651 = vunpack.c.h.b16 %v463
        %v652 = vunpack.c.l.b16 %v464
        %v653 = vunpack.c.h.b16 %v464
        %v654 = vunpack.c.l.b16 %v465
        %v655 = vunpack.c.h.b16 %v465
        %v656 = vunpack.c.l.b16 %v466
        %v657 = vunpack.c.h.b16 %v466
        %v658 = vunpack.c.l.b16 %v467
        %v659 = vunpack.c.h.b16 %v467
        %v660 = vunpack.c.l.b16 %v468
        %v661 = vunpack.c.h.b16 %v468
        %v662 = vunpack.c.l.b16 %v469
        %v663 = vunpack.c.h.b16 %v469
        %v664 = vunpack.c.l.b16 %v470
        %v665 = vunpack.c.h.b16 %v470
        %v666 = vunpack.c.l.b16 %v471
        %v667 = vunpack.c.h.b16 %v471
        %v668 = vunpack.c.l.b16 %v472
        %v669 = vunpack.c.h.b16 %v472
        %v670 = vunpack.c.l.b16 %v473
        %v671 = vunpack.c.h.b16 %v473
        %v672 = vunpack.c.l.b16 %v474
        %v673 = vunpack.c.h.b16 %v474
        %v674 = vunpack.c.l.b16 %v475
        %v675 = vunpack.c.h.b16 %v475
        %v676 = vunpack.c.l.b16 %v476
        %v677 = vunpack.c.h.b16 %v476
        %v678 = vunpack.c.l.b16 %v477
        %v679 = vunpack.c.h.b16 %v477
        %v680 = vunpack.c.l.b16 %v478
        %v681 = vunpack.c.h.b16 %v478
        %v682 = vunpack.c.l.b16 %v479
        %v683 = vunpack.c.h.b16 %v479
        %v684 = vunpack.c.l.b16 %v480
        %v685 = vunpack.c.h.b16 %v480
        %v686 = vunpack.c.l.b16 %v481
        %v687 = vunpack.c.h.b16 %v481
        %v688 = vunpack.c.l.b16 %v482
        %v689 = vunpack.c.h.b16 %v482
        %v690 = vunpack.c.l.b16 %v483
        %v691 = vunpack.c.h.b16 %v483
        %v692 = vunpack.c.l.b16 %v484
        %v693 = vunpack.c.h.b16 %v484
        %v694 = vunpack.c.l.b16 %v485
        %v695 = vunpack.c.h.b16 %v485
        %v696 = vunpack.c.l.b16 %v486
        %v697 = vunpack.c.h.b16 %v486
        %v698 = vunpack.c.l.b16 %v487
        %v699 = vunpack.c.h.b16 %v487
        %v700 = vunpack.c.l.b16 %v488
        %v701 = vunpack.c.h.b16 %v488
        %v702 = vunpack.c.l.b16 %v489
        %v703 = vunpack.c.h.b16 %v489
        %v704 = vunpack.c.l.b16 %v490
        %v705 = vunpack.c.h.b16 %v490
        %v706 = vpack.c.b16 %v612, %v610
        %v707 = vpack.c.b16 %v613, %v611
        %v708 = vpack.c.b16 %v616, %v614
        %v709 = vpack.c.b16 %v617, %v615
        %v710 = vpack.c.b16 %v620, %v618
        %v711 = vpack.c.b16 %v621, %v619
        %v712 = vpack.c.b16 %v624, %v622
        %v713 = vpack.c.b16 %v625, %v623
        %v714 = vpack.c.b16 %v628, %v626
        %v715 = vpack.c.b16 %v629, %v627
        %v716 = vpack.c.b16 %v632, %v630
        %v717 = vpack.c.b16 %v633, %v631
        %v718 = vpack.c.b16 %v636, %v634
        %v719 = vpack.c.b16 %v637, %v635
        %v720 = vpack.c.b16 %v640, %v638
        %v721 = vpack.c.b16 %v641, %v639
        %v722 = vpack.c.b16 %v644, %v642
        %v723 = vpack.c.b16 %v645, %v643
        %v724 = vpack.c.b16 %v648, %v646
        %v725 = vpack.c.b16 %v649, %v647
        %v726 = vpack.c.b16 %v652, %v650
        %v727 = vpack.c.b16 %v653, %v651
        %v728 = vpack.c.b16 %v656, %v654
        %v729 = vpack.c.b16 %v657, %v655
        %v730 = vpack.c.b16 %v660, %v658
        %v731 = vpack.c.b16 %v661, %v659
        %v732 = vpack.c.b16 %v664, %v662
        %v733 = vpack.c.b16 %v665, %v663
        %v734 = vpack.c.b16 %v668, %v666
        %v735 = vpack.c.b16 %v669, %v667
        %v736 = vpack.c.b16 %v672, %v670
        %v737 = vpack.c.b16 %v673, %v671
        %v738 = vpack.c.b16 %v676, %v674
        %v739 = vpack.c.b16 %v677, %v675
        %v740 = vpack.c.b16 %v680, %v678
        %v741 = vpack.c.b16 %v681, %v679
        %v742 = vpack.c.b16 %v684, %v682
        %v743 = vpack.c.b16 %v685, %v683
        %v744 = vpack.c.b16 %v688, %v686
        %v745 = vpack.c.b16 %v689, %v687
        %v746 = vpack.c.b16 %v692, %v690
        %v747 = vpack.c.b16 %v693, %v691
        %v748 = vpack.c.b16 %v696, %v694
        %v749 = vpack.c.b16 %v697, %v695
        %v750 = vpack.c.b16 %v700, %v698
        %v751 = vpack.c.b16 %v701, %v699
        %v752 = vpack.c.b16 %v704, %v702
        %v753 = vpack.c.b16 %v705, %v703
        %802 = vmatprep.subr.bf16.mxu0 %v707
        %803 = vmatpush1.bf16.msra.mxu0 %v706
        %804 = vmatprep.subr.bf16.mxu0 %v709
        %805 = vmatpush1.bf16.msra.mxu0 %v708
        %806 = vmatprep.subr.bf16.mxu0 %v711
        %807 = vmatpush1.bf16.msra.mxu0 %v710
        %808 = vmatprep.subr.bf16.mxu0 %v713
        %809 = vmatpush1.bf16.msra.mxu0 %v712
        %810 = vmatprep.subr.bf16.mxu0 %v715
        %811 = vmatpush1.bf16.msra.mxu0 %v714
        %812 = vmatprep.subr.bf16.mxu0 %v717
        %813 = vmatpush1.bf16.msra.mxu0 %v716
        %814 = vmatprep.subr.bf16.mxu0 %v719
        %815 = vmatpush1.bf16.msra.mxu0 %v718
        %816 = vmatprep.subr.bf16.mxu0 %v721
        %817 = vmatpush1.bf16.msra.mxu0 %v720
        %818 = vmatprep.subr.bf16.mxu0 %v723
        %819 = vmatpush1.bf16.msra.mxu0 %v722
        %820 = vmatprep.subr.bf16.mxu0 %v725
        %821 = vmatpush1.bf16.msra.mxu0 %v724
        %822 = vmatprep.subr.bf16.mxu0 %v727
        %823 = vmatpush1.bf16.msra.mxu0 %v726
        %824 = vmatprep.subr.bf16.mxu0 %v729
        %825 = vmatpush1.bf16.msra.mxu0 %v728
        %826 = vmatprep.subr.bf16.mxu0 %v731
        %827 = vmatpush1.bf16.msra.mxu0 %v730
        %828 = vmatprep.subr.bf16.mxu0 %v733
        %829 = vmatpush1.bf16.msra.mxu0 %v732
        %830 = vmatprep.subr.bf16.mxu0 %v735
        %831 = vmatpush1.bf16.msra.mxu0 %v734
        %832 = vmatprep.subr.bf16.mxu0 %v737
        %833 = vmatpush1.bf16.msra.mxu0 %v736
        %834 = vmatprep.mubr.bf16.mxu0 %v561
        %835 = vmatmul.mubr.bf16.gmra.mrb[0].mxu0 %v560
        %v836 = vpop.f32.mrb[0].mxu0
        %v837 = vadd.f32 0.0, %v836
        %v838 = vpop.f32.mrb[0].mxu0
        %v839 = vadd.f32 0.0, %v838
        %v840 = vpop.f32.mrb[0].mxu0
        %v841 = vpop.f32.mrb[0].mxu0
        %842 = vdwg.mxu0
        %843 = vmatprep.subr.bf16.mxu0 %v739
        %844 = vmatpush1.bf16.msra.mxu0 %v738
        %845 = vmatprep.subr.bf16.mxu0 %v741
        %846 = vmatpush1.bf16.msra.mxu0 %v740
        %847 = vmatprep.subr.bf16.mxu0 %v743
        %848 = vmatpush1.bf16.msra.mxu0 %v742
        %849 = vmatprep.subr.bf16.mxu0 %v745
        %850 = vmatpush1.bf16.msra.mxu0 %v744
        %851 = vmatprep.subr.bf16.mxu0 %v747
        %852 = vmatpush1.bf16.msra.mxu0 %v746
        %853 = vmatprep.subr.bf16.mxu0 %v749
        %854 = vmatpush1.bf16.msra.mxu0 %v748
        %855 = vmatprep.subr.bf16.mxu0 %v751
        %856 = vmatpush1.bf16.msra.mxu0 %v750
        %857 = vmatprep.subr.bf16.mxu0 %v753
        %858 = vmatpush1.bf16.msra.mxu0 %v752
        %859 = vmatprep.subr.bf16.mxu0 0
        %860 = vmatpush1.bf16.msra.mxu0 0
        %861 = vmatprep.subr.bf16.mxu0 0
        %862 = vmatpush1.bf16.msra.mxu0 0
        %863 = vmatprep.subr.bf16.mxu0 0
        %864 = vmatpush1.bf16.msra.mxu0 0
        %865 = vmatprep.subr.bf16.mxu0 0
        %866 = vmatpush1.bf16.msra.mxu0 0
        %867 = vmatprep.subr.bf16.mxu0 0
        %868 = vmatpush1.bf16.msra.mxu0 0
        %869 = vmatprep.subr.bf16.mxu0 0
        %870 = vmatpush1.bf16.msra.mxu0 0
        %871 = vmatprep.subr.bf16.mxu0 0
        %872 = vmatpush1.bf16.msra.mxu0 0
        %873 = vmatprep.subr.bf16.mxu0 0
        %874 = vmatpush1.bf16.msra.mxu0 0
        %875 = vmatprep.mubr.bf16.mxu0 0
        %876 = vmatmul.mubr.bf16.gmra.mrb[0].mxu0 %v560
        %v877 = vpop.f32.mrb[0].mxu0
        %v878 = vadd.f32 %v837, %v877
        %v879 = vpop.f32.mrb[0].mxu0
        %v880 = vadd.f32 %v839, %v879
        %v881 = vpop.f32.mrb[0].mxu0
        %v882 = vpop.f32.mrb[0].mxu0
        %883 = vdwg.mxu0
        %885 = vset.pattern.permute.xlu0 0
        %886 = vperm.xlu0 %885, %v556
        %v887 = vpop.permute.xlu0 %886
        %v889 = vmul.f32 %v887, %v878
        %v890 = vmul.f32 %v887, %v880
        %v891 = vand.u32 2147483647, %v889
        %vm892 = vcmp.le.f32.partialorder %v891, 0.7853982
        %vm893 = vcmp.lt.s32.totalorder %v889, 0
        %v894 = vand.u32 %v889, 2139095040
        %v895 = vshrl.u32 %v894, 23
        %v896 = vsub.s32 %v895, 127
        %v897 = vand.u32 2147483647, %v889
        %v898 = vand.u32 %v897, 8388607
        %v899 = vor.u32 %v898, 8388608
        %v900 = vsub.s32 0, %v899
        %v901 = vadd.s32 %v896, 1
        %vm902 = vcmp.gt.s32.totalorder %v901, 0
        %v903 = vsel %vm902, %v901, 0
        %v904 = vshrl.u32 %v903, 5
        %v905 = vand.u32 %v903, 31
        %v906 = vsub.s32 32, %v905
        %v907 = vshrl.u32 683565275, %v906
        %v908 = vshll.u32 683565275, %v905
        %v909 = vshrl.u32 2475754826, %v906
        %v910 = vor.u32 %v908, %v909
        %v911 = vshll.u32 2475754826, %v905
        %v912 = vshrl.u32 2131351028, %v906
        %v913 = vor.u32 %v911, %v912
        %v914 = vshll.u32 2131351028, %v905
        %v915 = vshrl.u32 2102212464, %v906
        %v916 = vor.u32 %v914, %v915
        %v917 = vshll.u32 2102212464, %v905
        %v918 = vshrl.u32 920167782, %v906
        %v919 = vor.u32 %v917, %v918
        %v920 = vshll.u32 920167782, %v905
        %v921 = vshrl.u32 1326507024, %v906
        %v922 = vor.u32 %v920, %v921
        %vm923 = vcmp.lt.s32.totalorder %v904, 1
        %vm924 = vcmp.lt.s32.totalorder %v904, 2
        %vm925 = vcmp.lt.s32.totalorder %v904, 3
        %vm926 = vcmp.lt.s32.totalorder %v904, 4
        %v927 = vsel %vm923, %v907, %v910
        %v928 = vsel %vm926, %v916, 2102212464
        %v929 = vsel %vm925, %v913, %v928
        %v930 = vsel %vm924, %v927, %v929
        %v931 = vsel %vm923, %v910, %v913
        %v932 = vsel %vm926, %v919, 920167782
        %v933 = vsel %vm925, %v916, %v932
        %v934 = vsel %vm924, %v931, %v933
        %v935 = vsel %vm923, %v913, %v916
        %v936 = vsel %vm926, %v922, 1326507024
        %v937 = vsel %vm925, %v919, %v936
        %v938 = vsel %vm924, %v935, %v937
        %v939 = vshll.u32 %v899, 8
        %v940 = vmul.u32.u64.compose %v939, %v938
        %v941 = vextract.low.u32 %v940
        %v942 = vextract.high.u32 %v940
        %v943 = vmul.u32.u64.compose %v939, %v934
        %v944 = vextract.low.u32 %v943
        %v945 = vextract.high.u32 %v943
        %v946 = vmul.u32 %v939, %v930
        %v947 = vadd.s32 %v942, %v944
        %vm948 = vc.u32 %v942, %v944
        %v949 = vadd.s32 %v945, 1
        %v950 = vsel %vm948, %v949, %v945
        %v951 = vadd.s32 %v946, %v950
        %v952 = vadd.s32 %v951, 536870912
        %v953 = vshrl.u32 %v952, 30
        %v954 = vshll.u32 %v953, 30
        %v955 = vsub.s32 %v951, %v954
        %vm956 = vcmp.lt.s32.totalorder %v955, 0
        %v957 = vsub.s32 0, %v955
        %v958 = vsel %vm956, %v957, %v955
        %v959 = vclz %v958
        %v960 = vsub.s32 %v959, 2
        %vm961 = vcmp.gt.s32.totalorder 0, %v960
        %v962 = vsel %vm961, 0, %v960
        %v963 = vsub.s32 32, %v962
        %v964 = vshll.u32 %v955, %v962
        %v965 = vshrl.u32 %v947, %v963
        %v966 = vor.u32 %v964, %v965
        %v967 = vsub.s32 4294967266, %v962
        %v968 = vadd.s32 %v967, 127
        %v969 = vshll.u32 %v968, 23
        %v970 = vor.u32 4788187, %v969
        %v971 = vand.u32 2147483647, %v970
        %v973 = vcvt.s32.f32 %v966
        %v974 = vmul.f32 %v973, %v971
        %v975 = vxor.u32 %v974, 2147483648
        %v976 = vsel %vm893, %v975, %v974
        %v977 = vsub.s32 4, %v953
        %v978 = vsel %vm893, %v977, %v953
        %v979 = vsel %vm892, %v889, %v976
        %v980 = vsel %vm892, 0, %v978
        %v981 = vcosq.f32.pop %v979
        %v982 = vsinq.f32.pop %v979
        %vm983 = vweird.f32 %v889
        %v984 = vadd.s32 %v980, 3
        %v985 = vand.u32 %v984, 3
        %vm986 = vcmp.lt.s32.totalorder %v985, 2
        %vm987 = vcmp.eq.s32.totalorder %v985, 0
        %v988 = vxor.u32 %v982, 2147483648
        %v989 = vsel %vm987, %v981, %v988
        %vm990 = vcmp.eq.s32.totalorder %v985, 2
        %v991 = vxor.u32 %v981, 2147483648
        %v992 = vsel %vm990, %v991, %v982
        %v993 = vsel %vm986, %v989, %v992
        %v994 = vsel %vm983, nan, %v993
        %v995 = vand.u32 2147483647, %v890
        %vm996 = vcmp.le.f32.partialorder %v995, 0.7853982
        %vm997 = vcmp.lt.s32.totalorder %v890, 0
        %v998 = vand.u32 %v890, 2139095040
        %v999 = vshrl.u32 %v998, 23
        %v1000 = vsub.s32 %v999, 127
        %v1001 = vand.u32 2147483647, %v890
        %v1002 = vand.u32 %v1001, 8388607
        %v1003 = vor.u32 %v1002, 8388608
        %v1004 = vsub.s32 0, %v1003
        %v1005 = vadd.s32 %v1000, 1
        %vm1006 = vcmp.gt.s32.totalorder %v1005, 0
        %v1007 = vsel %vm1006, %v1005, 0
        %v1008 = vshrl.u32 %v1007, 5
        %v1009 = vand.u32 %v1007, 31
        %v1010 = vsub.s32 32, %v1009
        %v1011 = vshrl.u32 683565275, %v1010
        %v1012 = vshll.u32 683565275, %v1009
        %v1013 = vshrl.u32 2475754826, %v1010
        %v1014 = vor.u32 %v1012, %v1013
        %v1015 = vshll.u32 2475754826, %v1009
        %v1016 = vshrl.u32 2131351028, %v1010
        %v1017 = vor.u32 %v1015, %v1016
        %v1018 = vshll.u32 2131351028, %v1009
        %v1019 = vshrl.u32 2102212464, %v1010
        %v1020 = vor.u32 %v1018, %v1019
        %v1021 = vshll.u32 2102212464, %v1009
        %v1022 = vshrl.u32 920167782, %v1010
        %v1023 = vor.u32 %v1021, %v1022
        %v1024 = vshll.u32 920167782, %v1009
        %v1025 = vshrl.u32 1326507024, %v1010
        %v1026 = vor.u32 %v1024, %v1025
        %vm1027 = vcmp.lt.s32.totalorder %v1008, 1
        %vm1028 = vcmp.lt.s32.totalorder %v1008, 2
        %vm1029 = vcmp.lt.s32.totalorder %v1008, 3
        %vm1030 = vcmp.lt.s32.totalorder %v1008, 4
        %v1031 = vsel %vm1027, %v1011, %v1014
        %v1032 = vsel %vm1030, %v1020, 2102212464
        %v1033 = vsel %vm1029, %v1017, %v1032
        %v1034 = vsel %vm1028, %v1031, %v1033
        %v1035 = vsel %vm1027, %v1014, %v1017
        %v1036 = vsel %vm1030, %v1023, 920167782
        %v1037 = vsel %vm1029, %v1020, %v1036
        %v1038 = vsel %vm1028, %v1035, %v1037
        %v1039 = vsel %vm1027, %v1017, %v1020
        %v1040 = vsel %vm1030, %v1026, 1326507024
        %v1041 = vsel %vm1029, %v1023, %v1040
        %v1042 = vsel %vm1028, %v1039, %v1041
        %v1043 = vshll.u32 %v1003, 8
        %v1044 = vmul.u32.u64.compose %v1043, %v1042
        %v1045 = vextract.low.u32 %v1044
        %v1046 = vextract.high.u32 %v1044
        %v1047 = vmul.u32.u64.compose %v1043, %v1038
        %v1048 = vextract.low.u32 %v1047
        %v1049 = vextract.high.u32 %v1047
        %v1050 = vmul.u32 %v1043, %v1034
        %v1051 = vadd.s32 %v1046, %v1048
        %vm1052 = vc.u32 %v1046, %v1048
        %v1053 = vadd.s32 %v1049, 1
        %v1054 = vsel %vm1052, %v1053, %v1049
        %v1055 = vadd.s32 %v1050, %v1054
        %v1056 = vadd.s32 %v1055, 536870912
        %v1057 = vshrl.u32 %v1056, 30
        %v1058 = vshll.u32 %v1057, 30
        %v1059 = vsub.s32 %v1055, %v1058
        %vm1060 = vcmp.lt.s32.totalorder %v1059, 0
        %v1061 = vsub.s32 0, %v1059
        %v1062 = vsel %vm1060, %v1061, %v1059
        %v1063 = vclz %v1062
        %v1064 = vsub.s32 %v1063, 2
        %vm1065 = vcmp.gt.s32.totalorder 0, %v1064
        %v1066 = vsel %vm1065, 0, %v1064
        %v1067 = vsub.s32 32, %v1066
        %v1068 = vshll.u32 %v1059, %v1066
        %v1069 = vshrl.u32 %v1051, %v1067
        %v1070 = vor.u32 %v1068, %v1069
        %v1071 = vsub.s32 4294967266, %v1066
        %v1072 = vadd.s32 %v1071, 127
        %v1073 = vshll.u32 %v1072, 23
        %v1074 = vor.u32 4788187, %v1073
        %v1075 = vand.u32 2147483647, %v1074
        %v1077 = vcvt.s32.f32 %v1070
        %v1078 = vmul.f32 %v1077, %v1075
        %v1079 = vxor.u32 %v1078, 2147483648
        %v1080 = vsel %vm997, %v1079, %v1078
        %v1081 = vsub.s32 4, %v1057
        %v1082 = vsel %vm997, %v1081, %v1057
        %v1083 = vsel %vm996, %v890, %v1080
        %v1084 = vsel %vm996, 0, %v1082
        %v1085 = vcosq.f32.pop %v1083
        %v1086 = vsinq.f32.pop %v1083
        %vm1087 = vweird.f32 %v890
        %v1088 = vadd.s32 %v1084, 3
        %v1089 = vand.u32 %v1088, 3
        %vm1090 = vcmp.lt.s32.totalorder %v1089, 2
        %vm1091 = vcmp.eq.s32.totalorder %v1089, 0
        %v1092 = vxor.u32 %v1086, 2147483648
        %v1093 = vsel %vm1091, %v1085, %v1092
        %vm1094 = vcmp.eq.s32.totalorder %v1089, 2
        %v1095 = vxor.u32 %v1085, 2147483648
        %v1096 = vsel %vm1094, %v1095, %v1086
        %v1097 = vsel %vm1090, %v1093, %v1096
        %v1098 = vsel %vm1087, nan, %v1097
        %v1099 = vmul.f32 %v994, %v994
        %v1100 = vmul.f32 %v1098, %v1098
        %1102 = vset.pattern.permute.xlu0 0
        %1103 = vperm.xlu0 %1102, %v557
        %v1104 = vpop.permute.xlu0 %1103
        %v1106 = vmul.f32 %v1104, %v1099
        %v1107 = vmul.f32 %v1104, %v1100
        %v1108 = vadd.f32 %v878, %v1106
        %v1109 = vadd.f32 %v880, %v1107
        %v1110 = vmul.f32 %v1108, %v423
        %v1111 = vmul.f32 %v1109, %v424
        %v1112 = vpack.c.bf16 %v1110, %v1110
        %v1113 = vpack.c.bf16 %v1111, %v1111
        %v1178 = vunpack.c.l.b16 %v491
        %v1179 = vunpack.c.l.b16 %v492
        %v1180 = vunpack.c.l.b16 %v493
        %v1181 = vunpack.c.l.b16 %v494
        %v1182 = vunpack.c.l.b16 %v495
        %v1183 = vunpack.c.l.b16 %v496
        %v1184 = vunpack.c.l.b16 %v497
        %v1185 = vunpack.c.l.b16 %v498
        %v1186 = vunpack.c.l.b16 %v499
        %v1187 = vunpack.c.l.b16 %v500
        %v1188 = vunpack.c.l.b16 %v501
        %v1189 = vunpack.c.l.b16 %v502
        %v1190 = vunpack.c.l.b16 %v503
        %v1191 = vunpack.c.l.b16 %v504
        %v1192 = vunpack.c.l.b16 %v505
        %v1193 = vunpack.c.l.b16 %v506
        %v1194 = vunpack.c.l.b16 %v507
        %v1195 = vunpack.c.l.b16 %v508
        %v1196 = vunpack.c.l.b16 %v509
        %v1197 = vunpack.c.l.b16 %v510
        %v1198 = vunpack.c.l.b16 %v511
        %v1199 = vunpack.c.l.b16 %v512
        %v1200 = vunpack.c.l.b16 %v513
        %v1201 = vunpack.c.l.b16 %v514
        %v1202 = vunpack.c.l.b16 %v515
        %v1203 = vunpack.c.l.b16 %v516
        %v1204 = vunpack.c.l.b16 %v517
        %v1205 = vunpack.c.l.b16 %v518
        %v1206 = vunpack.c.l.b16 %v519
        %v1207 = vunpack.c.l.b16 %v520
        %v1208 = vunpack.c.l.b16 %v521
        %v1209 = vunpack.c.l.b16 %v522
        %v1210 = vunpack.c.l.b16 %v523
        %v1211 = vunpack.c.l.b16 %v524
        %v1212 = vunpack.c.l.b16 %v525
        %v1213 = vunpack.c.l.b16 %v526
        %v1214 = vunpack.c.l.b16 %v527
        %v1215 = vunpack.c.l.b16 %v528
        %v1216 = vunpack.c.l.b16 %v529
        %v1217 = vunpack.c.l.b16 %v530
        %v1218 = vunpack.c.l.b16 %v531
        %v1219 = vunpack.c.l.b16 %v532
        %v1220 = vunpack.c.l.b16 %v533
        %v1221 = vunpack.c.l.b16 %v534
        %v1222 = vunpack.c.l.b16 %v535
        %v1223 = vunpack.c.l.b16 %v536
        %v1224 = vunpack.c.l.b16 %v537
        %v1225 = vunpack.c.l.b16 %v538
        %v1226 = vunpack.c.l.b16 %v539
        %v1227 = vunpack.c.l.b16 %v540
        %v1228 = vunpack.c.l.b16 %v541
        %v1229 = vunpack.c.l.b16 %v542
        %v1230 = vunpack.c.l.b16 %v543
        %v1231 = vunpack.c.l.b16 %v544
        %v1232 = vunpack.c.l.b16 %v545
        %v1233 = vunpack.c.l.b16 %v546
        %v1234 = vunpack.c.l.b16 %v547
        %v1235 = vunpack.c.l.b16 %v548
        %v1236 = vunpack.c.l.b16 %v549
        %v1237 = vunpack.c.l.b16 %v550
        %v1238 = vunpack.c.l.b16 %v551
        %v1239 = vunpack.c.l.b16 %v552
        %v1240 = vunpack.c.l.b16 %v553
        %v1241 = vunpack.c.l.b16 %v554
        %v1242 = vpack.c.b16 %v1179, %v1178
        %v1243 = vpack.c.b16 %v1181, %v1180
        %v1244 = vpack.c.b16 %v1183, %v1182
        %v1245 = vpack.c.b16 %v1185, %v1184
        %v1246 = vpack.c.b16 %v1187, %v1186
        %v1247 = vpack.c.b16 %v1189, %v1188
        %v1248 = vpack.c.b16 %v1191, %v1190
        %v1249 = vpack.c.b16 %v1193, %v1192
        %v1250 = vpack.c.b16 %v1195, %v1194
        %v1251 = vpack.c.b16 %v1197, %v1196
        %v1252 = vpack.c.b16 %v1199, %v1198
        %v1253 = vpack.c.b16 %v1201, %v1200
        %v1254 = vpack.c.b16 %v1203, %v1202
        %v1255 = vpack.c.b16 %v1205, %v1204
        %v1256 = vpack.c.b16 %v1207, %v1206
        %v1257 = vpack.c.b16 %v1209, %v1208
        %v1258 = vpack.c.b16 %v1211, %v1210
        %v1259 = vpack.c.b16 %v1213, %v1212
        %v1260 = vpack.c.b16 %v1215, %v1214
        %v1261 = vpack.c.b16 %v1217, %v1216
        %v1262 = vpack.c.b16 %v1219, %v1218
        %v1263 = vpack.c.b16 %v1221, %v1220
        %v1264 = vpack.c.b16 %v1223, %v1222
        %v1265 = vpack.c.b16 %v1225, %v1224
        %v1266 = vpack.c.b16 %v1227, %v1226
        %v1267 = vpack.c.b16 %v1229, %v1228
        %v1268 = vpack.c.b16 %v1231, %v1230
        %v1269 = vpack.c.b16 %v1233, %v1232
        %v1270 = vpack.c.b16 %v1235, %v1234
        %v1271 = vpack.c.b16 %v1237, %v1236
        %v1272 = vpack.c.b16 %v1239, %v1238
        %v1273 = vpack.c.b16 %v1241, %v1240
        %1306 = vmatprep.subr.bf16.mxu0 0
        %1307 = vmatpush1.bf16.msra.mxu0 %v1242
        %1308 = vmatprep.subr.bf16.mxu0 0
        %1309 = vmatpush1.bf16.msra.mxu0 %v1243
        %1310 = vmatprep.subr.bf16.mxu0 0
        %1311 = vmatpush1.bf16.msra.mxu0 %v1244
        %1312 = vmatprep.subr.bf16.mxu0 0
        %1313 = vmatpush1.bf16.msra.mxu0 %v1245
        %1314 = vmatprep.subr.bf16.mxu0 0
        %1315 = vmatpush1.bf16.msra.mxu0 %v1246
        %1316 = vmatprep.subr.bf16.mxu0 0
        %1317 = vmatpush1.bf16.msra.mxu0 %v1247
        %1318 = vmatprep.subr.bf16.mxu0 0
        %1319 = vmatpush1.bf16.msra.mxu0 %v1248
        %1320 = vmatprep.subr.bf16.mxu0 0
        %1321 = vmatpush1.bf16.msra.mxu0 %v1249
        %1322 = vmatprep.subr.bf16.mxu0 0
        %1323 = vmatpush1.bf16.msra.mxu0 %v1250
        %1324 = vmatprep.subr.bf16.mxu0 0
        %1325 = vmatpush1.bf16.msra.mxu0 %v1251
        %1326 = vmatprep.subr.bf16.mxu0 0
        %1327 = vmatpush1.bf16.msra.mxu0 %v1252
        %1328 = vmatprep.subr.bf16.mxu0 0
        %1329 = vmatpush1.bf16.msra.mxu0 %v1253
        %1330 = vmatprep.subr.bf16.mxu0 0
        %1331 = vmatpush1.bf16.msra.mxu0 %v1254
        %1332 = vmatprep.subr.bf16.mxu0 0
        %1333 = vmatpush1.bf16.msra.mxu0 %v1255
        %1334 = vmatprep.subr.bf16.mxu0 0
        %1335 = vmatpush1.bf16.msra.mxu0 %v1256
        %1336 = vmatprep.subr.bf16.mxu0 0
        %1337 = vmatpush1.bf16.msra.mxu0 %v1257
        %1338 = vmatprep.mubr.bf16.mxu0 %v1112
        %1339 = vmatmul.mubr.bf16.gmra.mrb[0].mxu0 %v560
        %v1340 = vpop.f32.mrb[0].mxu0
        %v1341 = vadd.f32 0.0, %v1340
        %v1342 = vpop.f32.mrb[0].mxu0
        %v1343 = vpop.f32.mrb[0].mxu0
        %v1344 = vpop.f32.mrb[0].mxu0
        %1345 = vdwg.mxu0
        %1346 = vmatprep.subr.bf16.mxu0 0
        %1347 = vmatpush1.bf16.msra.mxu0 %v1258
        %1348 = vmatprep.subr.bf16.mxu0 0
        %1349 = vmatpush1.bf16.msra.mxu0 %v1259
        %1350 = vmatprep.subr.bf16.mxu0 0
        %1351 = vmatpush1.bf16.msra.mxu0 %v1260
        %1352 = vmatprep.subr.bf16.mxu0 0
        %1353 = vmatpush1.bf16.msra.mxu0 %v1261
        %1354 = vmatprep.subr.bf16.mxu0 0
        %1355 = vmatpush1.bf16.msra.mxu0 %v1262
        %1356 = vmatprep.subr.bf16.mxu0 0
        %1357 = vmatpush1.bf16.msra.mxu0 %v1263
        %1358 = vmatprep.subr.bf16.mxu0 0
        %1359 = vmatpush1.bf16.msra.mxu0 %v1264
        %1360 = vmatprep.subr.bf16.mxu0 0
        %1361 = vmatpush1.bf16.msra.mxu0 %v1265
        %1362 = vmatprep.subr.bf16.mxu0 0
        %1363 = vmatpush1.bf16.msra.mxu0 %v1266
        %1364 = vmatprep.subr.bf16.mxu0 0
        %1365 = vmatpush1.bf16.msra.mxu0 %v1267
        %1366 = vmatprep.subr.bf16.mxu0 0
        %1367 = vmatpush1.bf16.msra.mxu0 %v1268
        %1368 = vmatprep.subr.bf16.mxu0 0
        %1369 = vmatpush1.bf16.msra.mxu0 %v1269
        %1370 = vmatprep.subr.bf16.mxu0 0
        %1371 = vmatpush1.bf16.msra.mxu0 %v1270
        %1372 = vmatprep.subr.bf16.mxu0 0
        %1373 = vmatpush1.bf16.msra.mxu0 %v1271
        %1374 = vmatprep.subr.bf16.mxu0 0
        %1375 = vmatpush1.bf16.msra.mxu0 %v1272
        %1376 = vmatprep.subr.bf16.mxu0 0
        %1377 = vmatpush1.bf16.msra.mxu0 %v1273
        %1378 = vmatprep.mubr.bf16.mxu0 %v560
        %1379 = vmatmul.mubr.bf16.gmra.mrb[0].mxu0 %v1113
        %v1380 = vpop.f32.mrb[0].mxu0
        %v1381 = vadd.f32 %v1341, %v1380
        %v1382 = vpop.f32.mrb[0].mxu0
        %v1383 = vpop.f32.mrb[0].mxu0
        %v1384 = vpop.f32.mrb[0].mxu0
        %1385 = vdwg.mxu0
        %v1386 = vld [vmem:[%s3] sm:$0xf]
        %v1387 = vld [vmem:[%s4] sm:$0xff]
        %1388 = vrot.lane.b32.xlu0 %v1381, 1
        %v1389 = vpop.permute.xlu0 %1388
        %v1390 = vmul.f32 %v1389, %v427
        %1391 = vrot.lane.b32.xlu0 %v1381, 127
        %v1392 = vpop.permute.xlu0 %1391
        %v1393 = vmul.f32 %v1392, %v430
        %v1394 = vpack.c.bf16 %v1381, %v1390
        %v1395 = vpack.c.bf16 %v1393, %v1393
        %1397 = vset.pattern.permute.xlu0 0
        %1398 = vperm.xlu0 %1397, %v1387
        %v1399 = vpop.permute.xlu0 %1398
        %vm1401 = vcmask 195584
        %v1403 = vsel %vm1401, %v1386, 0
        %vm1405 = vcmask 1043456
        %v1407 = vsel %vm1405, %v1395, 0
        %1409 = vmatprep.subr.bf16.mxu0 0
        %1410 = vmatpush1.bf16.msra.mxu0 %v1394
        %1411 = vmatprep.subr.bf16.mxu0 0
        %1412 = vmatpush1.bf16.msra.mxu0 %v1407
        %1413 = vmatprep.subr.bf16.mxu0 0
        %1414 = vmatpush1.bf16.msra.mxu0 0
        %1415 = vmatprep.subr.bf16.mxu0 0
        %1416 = vmatpush1.bf16.msra.mxu0 0
        %1417 = vmatprep.subr.bf16.mxu0 0
        %1418 = vmatpush1.bf16.msra.mxu0 0
        %1419 = vmatprep.subr.bf16.mxu0 0
        %1420 = vmatpush1.bf16.msra.mxu0 0
        %1421 = vmatprep.subr.bf16.mxu0 0
        %1422 = vmatpush1.bf16.msra.mxu0 0
        %1423 = vmatprep.subr.bf16.mxu0 0
        %1424 = vmatpush1.bf16.msra.mxu0 0
        %1425 = vmatprep.subr.bf16.mxu0 0
        %1426 = vmatpush1.bf16.msra.mxu0 0
        %1427 = vmatprep.subr.bf16.mxu0 0
        %1428 = vmatpush1.bf16.msra.mxu0 0
        %1429 = vmatprep.subr.bf16.mxu0 0
        %1430 = vmatpush1.bf16.msra.mxu0 0
        %1431 = vmatprep.subr.bf16.mxu0 0
        %1432 = vmatpush1.bf16.msra.mxu0 0
        %1433 = vmatprep.subr.bf16.mxu0 0
        %1434 = vmatpush1.bf16.msra.mxu0 0
        %1435 = vmatprep.subr.bf16.mxu0 0
        %1436 = vmatpush1.bf16.msra.mxu0 0
        %1437 = vmatprep.subr.bf16.mxu0 0
        %1438 = vmatpush1.bf16.msra.mxu0 0
        %1439 = vmatprep.subr.bf16.mxu0 0
        %1440 = vmatpush1.bf16.msra.mxu0 0
        %1441 = vmatprep.mubr.bf16.mxu0 0
        %1442 = vmatmul.mubr.bf16.gmra.mrb[0].mxu0 %v1403
        %v1443 = vpop.f32.mrb[0].mxu0
        %v1444 = vadd.f32 %v1399, %v1443
        %v1445 = vpop.f32.mrb[0].mxu0
        %v1446 = vpop.f32.mrb[0].mxu0
        %v1447 = vpop.f32.mrb[0].mxu0
        %1448 = vdwg.mxu0
        %1450 = vset.pattern.permute.xlu0 0
        %1451 = vperm.xlu0 %1450, %v558
        %v1452 = vpop.permute.xlu0 %1451
        %v1454 = vmul.f32 %v1452, %v1444
        %v1455 = vand.u32 2147483647, %v1454
        %vm1456 = vcmp.le.f32.partialorder %v1455, 0.7853982
        %vm1457 = vcmp.lt.s32.totalorder %v1454, 0
        %v1458 = vand.u32 %v1454, 2139095040
        %v1459 = vshrl.u32 %v1458, 23
        %v1460 = vsub.s32 %v1459, 127
        %v1461 = vand.u32 2147483647, %v1454
        %v1462 = vand.u32 %v1461, 8388607
        %v1463 = vor.u32 %v1462, 8388608
        %v1464 = vsub.s32 0, %v1463
        %v1465 = vadd.s32 %v1460, 1
        %vm1466 = vcmp.gt.s32.totalorder %v1465, 0
        %v1467 = vsel %vm1466, %v1465, 0
        %v1468 = vshrl.u32 %v1467, 5
        %v1469 = vand.u32 %v1467, 31
        %v1470 = vsub.s32 32, %v1469
        %v1471 = vshrl.u32 683565275, %v1470
        %v1472 = vshll.u32 683565275, %v1469
        %v1473 = vshrl.u32 2475754826, %v1470
        %v1474 = vor.u32 %v1472, %v1473
        %v1475 = vshll.u32 2475754826, %v1469
        %v1476 = vshrl.u32 2131351028, %v1470
        %v1477 = vor.u32 %v1475, %v1476
        %v1478 = vshll.u32 2131351028, %v1469
        %v1479 = vshrl.u32 2102212464, %v1470
        %v1480 = vor.u32 %v1478, %v1479
        %v1481 = vshll.u32 2102212464, %v1469
        %v1482 = vshrl.u32 920167782, %v1470
        %v1483 = vor.u32 %v1481, %v1482
        %v1484 = vshll.u32 920167782, %v1469
        %v1485 = vshrl.u32 1326507024, %v1470
        %v1486 = vor.u32 %v1484, %v1485
        %vm1487 = vcmp.lt.s32.totalorder %v1468, 1
        %vm1488 = vcmp.lt.s32.totalorder %v1468, 2
        %vm1489 = vcmp.lt.s32.totalorder %v1468, 3
        %vm1490 = vcmp.lt.s32.totalorder %v1468, 4
        %v1491 = vsel %vm1487, %v1471, %v1474
        %v1492 = vsel %vm1490, %v1480, 2102212464
        %v1493 = vsel %vm1489, %v1477, %v1492
        %v1494 = vsel %vm1488, %v1491, %v1493
        %v1495 = vsel %vm1487, %v1474, %v1477
        %v1496 = vsel %vm1490, %v1483, 920167782
        %v1497 = vsel %vm1489, %v1480, %v1496
        %v1498 = vsel %vm1488, %v1495, %v1497
        %v1499 = vsel %vm1487, %v1477, %v1480
        %v1500 = vsel %vm1490, %v1486, 1326507024
        %v1501 = vsel %vm1489, %v1483, %v1500
        %v1502 = vsel %vm1488, %v1499, %v1501
        %v1503 = vshll.u32 %v1463, 8
        %v1504 = vmul.u32.u64.compose %v1503, %v1502
        %v1505 = vextract.low.u32 %v1504
        %v1506 = vextract.high.u32 %v1504
        %v1507 = vmul.u32.u64.compose %v1503, %v1498
        %v1508 = vextract.low.u32 %v1507
        %v1509 = vextract.high.u32 %v1507
        %v1510 = vmul.u32 %v1503, %v1494
        %v1511 = vadd.s32 %v1506, %v1508
        %vm1512 = vc.u32 %v1506, %v1508
        %v1513 = vadd.s32 %v1509, 1
        %v1514 = vsel %vm1512, %v1513, %v1509
        %v1515 = vadd.s32 %v1510, %v1514
        %v1516 = vadd.s32 %v1515, 536870912
        %v1517 = vshrl.u32 %v1516, 30
        %v1518 = vshll.u32 %v1517, 30
        %v1519 = vsub.s32 %v1515, %v1518
        %vm1520 = vcmp.lt.s32.totalorder %v1519, 0
        %v1521 = vsub.s32 0, %v1519
        %v1522 = vsel %vm1520, %v1521, %v1519
        %v1523 = vclz %v1522
        %v1524 = vsub.s32 %v1523, 2
        %vm1525 = vcmp.gt.s32.totalorder 0, %v1524
        %v1526 = vsel %vm1525, 0, %v1524
        %v1527 = vsub.s32 32, %v1526
        %v1528 = vshll.u32 %v1519, %v1526
        %v1529 = vshrl.u32 %v1511, %v1527
        %v1530 = vor.u32 %v1528, %v1529
        %v1531 = vsub.s32 4294967266, %v1526
        %v1532 = vadd.s32 %v1531, 127
        %v1533 = vshll.u32 %v1532, 23
        %v1534 = vor.u32 4788187, %v1533
        %v1535 = vand.u32 2147483647, %v1534
        %v1537 = vcvt.s32.f32 %v1530
        %v1538 = vmul.f32 %v1537, %v1535
        %v1539 = vxor.u32 %v1538, 2147483648
        %v1540 = vsel %vm1457, %v1539, %v1538
        %v1541 = vsub.s32 4, %v1517
        %v1542 = vsel %vm1457, %v1541, %v1517
        %v1543 = vsel %vm1456, %v1454, %v1540
        %v1544 = vsel %vm1456, 0, %v1542
        %v1545 = vcosq.f32.pop %v1543
        %v1546 = vsinq.f32.pop %v1543
        %vm1547 = vweird.f32 %v1454
        %v1548 = vadd.s32 %v1544, 3
        %v1549 = vand.u32 %v1548, 3
        %vm1550 = vcmp.lt.s32.totalorder %v1549, 2
        %vm1551 = vcmp.eq.s32.totalorder %v1549, 0
        %v1552 = vxor.u32 %v1546, 2147483648
        %v1553 = vsel %vm1551, %v1545, %v1552
        %vm1554 = vcmp.eq.s32.totalorder %v1549, 2
        %v1555 = vxor.u32 %v1545, 2147483648
        %v1556 = vsel %vm1554, %v1555, %v1546
        %v1557 = vsel %vm1550, %v1553, %v1556
        %v1558 = vsel %vm1547, nan, %v1557
        %v1559 = vmul.f32 %v1558, %v1558
        %1561 = vset.pattern.permute.xlu0 0
        %1562 = vperm.xlu0 %1561, %v559
        %v1563 = vpop.permute.xlu0 %1562
        %v1565 = vmul.f32 %v1563, %v1559
        %v1566 = vadd.f32 %v1444, %v1565
        %v1567 = vld [vmem:[%s7] sm:$0xf]
        %v1568 = vld [vmem:[%s8] sm:$0xff]
        %1569 = vrot.lane.b32.xlu0 %v1566, 1
        %v1570 = vpop.permute.xlu0 %1569
        %v1571 = vmul.f32 %v1570, %v427
        %1572 = vrot.lane.b32.xlu0 %v1566, 127
        %v1573 = vpop.permute.xlu0 %1572
        %v1574 = vmul.f32 %v1573, %v430
        %v1575 = vpack.c.bf16 %v1566, %v1571
        %v1576 = vpack.c.bf16 %v1574, %v1574
        %1578 = vset.pattern.permute.xlu0 0
        %1579 = vperm.xlu0 %1578, %v1568
        %v1580 = vpop.permute.xlu0 %1579
        %v1583 = vsel %vm1401, %v1567, 0
        %v1586 = vsel %vm1405, %v1576, 0
        %1588 = vmatprep.subr.bf16.mxu0 0
        %1589 = vmatpush1.bf16.msra.mxu0 %v1575
        %1590 = vmatprep.subr.bf16.mxu0 0
        %1591 = vmatpush1.bf16.msra.mxu0 %v1586
        %1592 = vmatprep.subr.bf16.mxu0 0
        %1593 = vmatpush1.bf16.msra.mxu0 0
        %1594 = vmatprep.subr.bf16.mxu0 0
        %1595 = vmatpush1.bf16.msra.mxu0 0
        %1596 = vmatprep.subr.bf16.mxu0 0
        %1597 = vmatpush1.bf16.msra.mxu0 0
        %1598 = vmatprep.subr.bf16.mxu0 0
        %1599 = vmatpush1.bf16.msra.mxu0 0
        %1600 = vmatprep.subr.bf16.mxu0 0
        %1601 = vmatpush1.bf16.msra.mxu0 0
        %1602 = vmatprep.subr.bf16.mxu0 0
        %1603 = vmatpush1.bf16.msra.mxu0 0
        %1604 = vmatprep.subr.bf16.mxu0 0
        %1605 = vmatpush1.bf16.msra.mxu0 0
        %1606 = vmatprep.subr.bf16.mxu0 0
        %1607 = vmatpush1.bf16.msra.mxu0 0
        %1608 = vmatprep.subr.bf16.mxu0 0
        %1609 = vmatpush1.bf16.msra.mxu0 0
        %1610 = vmatprep.subr.bf16.mxu0 0
        %1611 = vmatpush1.bf16.msra.mxu0 0
        %1612 = vmatprep.subr.bf16.mxu0 0
        %1613 = vmatpush1.bf16.msra.mxu0 0
        %1614 = vmatprep.subr.bf16.mxu0 0
        %1615 = vmatpush1.bf16.msra.mxu0 0
        %1616 = vmatprep.subr.bf16.mxu0 0
        %1617 = vmatpush1.bf16.msra.mxu0 0
        %1618 = vmatprep.subr.bf16.mxu0 0
        %1619 = vmatpush1.bf16.msra.mxu0 0
        %1620 = vmatprep.mubr.bf16.mxu0 0
        %1621 = vmatmul.mubr.bf16.gmra.mrb[0].mxu0 %v1583
        %v1622 = vpop.f32.mrb[0].mxu0
        %v1623 = vadd.f32 %v1580, %v1622
        %v1624 = vpop.f32.mrb[0].mxu0
        %v1625 = vpop.f32.mrb[0].mxu0
        %v1626 = vpop.f32.mrb[0].mxu0
        %1627 = vdwg.mxu0
        %v1628 = vmul.f32 %v1623, %v418
        %v1629 = vadd.f32 %v1628, %v555
        %s1630 = scalar_lea.vmem %s5, 8
        %v1631 = vld [vmem:[%s1630] sm:$0xff]
        %s1632 = scalar_lea.vmem %s6, 8
        %v1633 = vld [vmem:[%s1632] sm:$0xff]
        %s1634 = scalar_lea.vmem %s9, 8
        %v1635 = vld [vmem:[%s1634] sm:$0xff]
        %s1636 = scalar_lea.vmem %s10, 8
        %v1637 = vld [vmem:[%s1636] sm:$0xff]
        %v1638 = vpack.c.bf16 %v1629, %v1629
        %1639 = vmatprep.subr.bf16.mxu0 %v707
        %1640 = vmatpush1.bf16.msra.mxu0 %v706
        %1641 = vmatprep.subr.bf16.mxu0 %v709
        %1642 = vmatpush1.bf16.msra.mxu0 %v708
        %1643 = vmatprep.subr.bf16.mxu0 %v711
        %1644 = vmatpush1.bf16.msra.mxu0 %v710
        %1645 = vmatprep.subr.bf16.mxu0 %v713
        %1646 = vmatpush1.bf16.msra.mxu0 %v712
        %1647 = vmatprep.subr.bf16.mxu0 %v715
        %1648 = vmatpush1.bf16.msra.mxu0 %v714
        %1649 = vmatprep.subr.bf16.mxu0 %v717
        %1650 = vmatpush1.bf16.msra.mxu0 %v716
        %1651 = vmatprep.subr.bf16.mxu0 %v719
        %1652 = vmatpush1.bf16.msra.mxu0 %v718
        %1653 = vmatprep.subr.bf16.mxu0 %v721
        %1654 = vmatpush1.bf16.msra.mxu0 %v720
        %1655 = vmatprep.subr.bf16.mxu0 %v723
        %1656 = vmatpush1.bf16.msra.mxu0 %v722
        %1657 = vmatprep.subr.bf16.mxu0 %v725
        %1658 = vmatpush1.bf16.msra.mxu0 %v724
        %1659 = vmatprep.subr.bf16.mxu0 %v727
        %1660 = vmatpush1.bf16.msra.mxu0 %v726
        %1661 = vmatprep.subr.bf16.mxu0 %v729
        %1662 = vmatpush1.bf16.msra.mxu0 %v728
        %1663 = vmatprep.subr.bf16.mxu0 %v731
        %1664 = vmatpush1.bf16.msra.mxu0 %v730
        %1665 = vmatprep.subr.bf16.mxu0 %v733
        %1666 = vmatpush1.bf16.msra.mxu0 %v732
        %1667 = vmatprep.subr.bf16.mxu0 %v735
        %1668 = vmatpush1.bf16.msra.mxu0 %v734
        %1669 = vmatprep.subr.bf16.mxu0 %v737
        %1670 = vmatpush1.bf16.msra.mxu0 %v736
        %1671 = vmatprep.mubr.bf16.mxu0 %v1638
        %1672 = vmatmul.mubr.bf16.gmra.mrb[0].mxu0 %v560
        %v1673 = vpop.f32.mrb[0].mxu0
        %v1674 = vadd.f32 0.0, %v1673
        %v1675 = vpop.f32.mrb[0].mxu0
        %v1676 = vadd.f32 0.0, %v1675
        %v1677 = vpop.f32.mrb[0].mxu0
        %v1678 = vpop.f32.mrb[0].mxu0
        %1679 = vdwg.mxu0
        %1680 = vmatprep.subr.bf16.mxu0 %v739
        %1681 = vmatpush1.bf16.msra.mxu0 %v738
        %1682 = vmatprep.subr.bf16.mxu0 %v741
        %1683 = vmatpush1.bf16.msra.mxu0 %v740
        %1684 = vmatprep.subr.bf16.mxu0 %v743
        %1685 = vmatpush1.bf16.msra.mxu0 %v742
        %1686 = vmatprep.subr.bf16.mxu0 %v745
        %1687 = vmatpush1.bf16.msra.mxu0 %v744
        %1688 = vmatprep.subr.bf16.mxu0 %v747
        %1689 = vmatpush1.bf16.msra.mxu0 %v746
        %1690 = vmatprep.subr.bf16.mxu0 %v749
        %1691 = vmatpush1.bf16.msra.mxu0 %v748
        %1692 = vmatprep.subr.bf16.mxu0 %v751
        %1693 = vmatpush1.bf16.msra.mxu0 %v750
        %1694 = vmatprep.subr.bf16.mxu0 %v753
        %1695 = vmatpush1.bf16.msra.mxu0 %v752
        %1696 = vmatprep.subr.bf16.mxu0 0
        %1697 = vmatpush1.bf16.msra.mxu0 0
        %1698 = vmatprep.subr.bf16.mxu0 0
        %1699 = vmatpush1.bf16.msra.mxu0 0
        %1700 = vmatprep.subr.bf16.mxu0 0
        %1701 = vmatpush1.bf16.msra.mxu0 0
        %1702 = vmatprep.subr.bf16.mxu0 0
        %1703 = vmatpush1.bf16.msra.mxu0 0
        %1704 = vmatprep.subr.bf16.mxu0 0
        %1705 = vmatpush1.bf16.msra.mxu0 0
        %1706 = vmatprep.subr.bf16.mxu0 0
        %1707 = vmatpush1.bf16.msra.mxu0 0
        %1708 = vmatprep.subr.bf16.mxu0 0
        %1709 = vmatpush1.bf16.msra.mxu0 0
        %1710 = vmatprep.subr.bf16.mxu0 0
        %1711 = vmatpush1.bf16.msra.mxu0 0
        %1712 = vmatprep.mubr.bf16.mxu0 0
        %1713 = vmatmul.mubr.bf16.gmra.mrb[0].mxu0 %v560
        %v1714 = vpop.f32.mrb[0].mxu0
        %v1715 = vadd.f32 %v1674, %v1714
        %v1716 = vpop.f32.mrb[0].mxu0
        %v1717 = vadd.f32 %v1676, %v1716
        %v1718 = vpop.f32.mrb[0].mxu0
        %v1719 = vpop.f32.mrb[0].mxu0
        %1720 = vdwg.mxu0
        %1722 = vset.pattern.permute.xlu0 0
        %1723 = vperm.xlu0 %1722, %v1631
        %v1724 = vpop.permute.xlu0 %1723
        %v1726 = vmul.f32 %v1724, %v1715
        %v1727 = vmul.f32 %v1724, %v1717
        %v1728 = vand.u32 2147483647, %v1726
        %vm1729 = vcmp.le.f32.partialorder %v1728, 0.7853982
        %vm1730 = vcmp.lt.s32.totalorder %v1726, 0
        %v1731 = vand.u32 %v1726, 2139095040
        %v1732 = vshrl.u32 %v1731, 23
        %v1733 = vsub.s32 %v1732, 127
        %v1734 = vand.u32 2147483647, %v1726
        %v1735 = vand.u32 %v1734, 8388607
        %v1736 = vor.u32 %v1735, 8388608
        %v1737 = vsub.s32 0, %v1736
        %v1738 = vadd.s32 %v1733, 1
        %vm1739 = vcmp.gt.s32.totalorder %v1738, 0
        %v1740 = vsel %vm1739, %v1738, 0
        %v1741 = vshrl.u32 %v1740, 5
        %v1742 = vand.u32 %v1740, 31
        %v1743 = vsub.s32 32, %v1742
        %v1744 = vshrl.u32 683565275, %v1743
        %v1745 = vshll.u32 683565275, %v1742
        %v1746 = vshrl.u32 2475754826, %v1743
        %v1747 = vor.u32 %v1745, %v1746
        %v1748 = vshll.u32 2475754826, %v1742
        %v1749 = vshrl.u32 2131351028, %v1743
        %v1750 = vor.u32 %v1748, %v1749
        %v1751 = vshll.u32 2131351028, %v1742
        %v1752 = vshrl.u32 2102212464, %v1743
        %v1753 = vor.u32 %v1751, %v1752
        %v1754 = vshll.u32 2102212464, %v1742
        %v1755 = vshrl.u32 920167782, %v1743
        %v1756 = vor.u32 %v1754, %v1755
        %v1757 = vshll.u32 920167782, %v1742
        %v1758 = vshrl.u32 1326507024, %v1743
        %v1759 = vor.u32 %v1757, %v1758
        %vm1760 = vcmp.lt.s32.totalorder %v1741, 1
        %vm1761 = vcmp.lt.s32.totalorder %v1741, 2
        %vm1762 = vcmp.lt.s32.totalorder %v1741, 3
        %vm1763 = vcmp.lt.s32.totalorder %v1741, 4
        %v1764 = vsel %vm1760, %v1744, %v1747
        %v1765 = vsel %vm1763, %v1753, 2102212464
        %v1766 = vsel %vm1762, %v1750, %v1765
        %v1767 = vsel %vm1761, %v1764, %v1766
        %v1768 = vsel %vm1760, %v1747, %v1750
        %v1769 = vsel %vm1763, %v1756, 920167782
        %v1770 = vsel %vm1762, %v1753, %v1769
        %v1771 = vsel %vm1761, %v1768, %v1770
        %v1772 = vsel %vm1760, %v1750, %v1753
        %v1773 = vsel %vm1763, %v1759, 1326507024
        %v1774 = vsel %vm1762, %v1756, %v1773
        %v1775 = vsel %vm1761, %v1772, %v1774
        %v1776 = vshll.u32 %v1736, 8
        %v1777 = vmul.u32.u64.compose %v1776, %v1775
        %v1778 = vextract.low.u32 %v1777
        %v1779 = vextract.high.u32 %v1777
        %v1780 = vmul.u32.u64.compose %v1776, %v1771
        %v1781 = vextract.low.u32 %v1780
        %v1782 = vextract.high.u32 %v1780
        %v1783 = vmul.u32 %v1776, %v1767
        %v1784 = vadd.s32 %v1779, %v1781
        %vm1785 = vc.u32 %v1779, %v1781
        %v1786 = vadd.s32 %v1782, 1
        %v1787 = vsel %vm1785, %v1786, %v1782
        %v1788 = vadd.s32 %v1783, %v1787
        %v1789 = vadd.s32 %v1788, 536870912
        %v1790 = vshrl.u32 %v1789, 30
        %v1791 = vshll.u32 %v1790, 30
        %v1792 = vsub.s32 %v1788, %v1791
        %vm1793 = vcmp.lt.s32.totalorder %v1792, 0
        %v1794 = vsub.s32 0, %v1792
        %v1795 = vsel %vm1793, %v1794, %v1792
        %v1796 = vclz %v1795
        %v1797 = vsub.s32 %v1796, 2
        %vm1798 = vcmp.gt.s32.totalorder 0, %v1797
        %v1799 = vsel %vm1798, 0, %v1797
        %v1800 = vsub.s32 32, %v1799
        %v1801 = vshll.u32 %v1792, %v1799
        %v1802 = vshrl.u32 %v1784, %v1800
        %v1803 = vor.u32 %v1801, %v1802
        %v1804 = vsub.s32 4294967266, %v1799
        %v1805 = vadd.s32 %v1804, 127
        %v1806 = vshll.u32 %v1805, 23
        %v1807 = vor.u32 4788187, %v1806
        %v1808 = vand.u32 2147483647, %v1807
        %v1810 = vcvt.s32.f32 %v1803
        %v1811 = vmul.f32 %v1810, %v1808
        %v1812 = vxor.u32 %v1811, 2147483648
        %v1813 = vsel %vm1730, %v1812, %v1811
        %v1814 = vsub.s32 4, %v1790
        %v1815 = vsel %vm1730, %v1814, %v1790
        %v1816 = vsel %vm1729, %v1726, %v1813
        %v1817 = vsel %vm1729, 0, %v1815
        %v1818 = vcosq.f32.pop %v1816
        %v1819 = vsinq.f32.pop %v1816
        %vm1820 = vweird.f32 %v1726
        %v1821 = vadd.s32 %v1817, 3
        %v1822 = vand.u32 %v1821, 3
        %vm1823 = vcmp.lt.s32.totalorder %v1822, 2
        %vm1824 = vcmp.eq.s32.totalorder %v1822, 0
        %v1825 = vxor.u32 %v1819, 2147483648
        %v1826 = vsel %vm1824, %v1818, %v1825
        %vm1827 = vcmp.eq.s32.totalorder %v1822, 2
        %v1828 = vxor.u32 %v1818, 2147483648
        %v1829 = vsel %vm1827, %v1828, %v1819
        %v1830 = vsel %vm1823, %v1826, %v1829
        %v1831 = vsel %vm1820, nan, %v1830
        %v1832 = vand.u32 2147483647, %v1727
        %vm1833 = vcmp.le.f32.partialorder %v1832, 0.7853982
        %vm1834 = vcmp.lt.s32.totalorder %v1727, 0
        %v1835 = vand.u32 %v1727, 2139095040
        %v1836 = vshrl.u32 %v1835, 23
        %v1837 = vsub.s32 %v1836, 127
        %v1838 = vand.u32 2147483647, %v1727
        %v1839 = vand.u32 %v1838, 8388607
        %v1840 = vor.u32 %v1839, 8388608
        %v1841 = vsub.s32 0, %v1840
        %v1842 = vadd.s32 %v1837, 1
        %vm1843 = vcmp.gt.s32.totalorder %v1842, 0
        %v1844 = vsel %vm1843, %v1842, 0
        %v1845 = vshrl.u32 %v1844, 5
        %v1846 = vand.u32 %v1844, 31
        %v1847 = vsub.s32 32, %v1846
        %v1848 = vshrl.u32 683565275, %v1847
        %v1849 = vshll.u32 683565275, %v1846
        %v1850 = vshrl.u32 2475754826, %v1847
        %v1851 = vor.u32 %v1849, %v1850
        %v1852 = vshll.u32 2475754826, %v1846
        %v1853 = vshrl.u32 2131351028, %v1847
        %v1854 = vor.u32 %v1852, %v1853
        %v1855 = vshll.u32 2131351028, %v1846
        %v1856 = vshrl.u32 2102212464, %v1847
        %v1857 = vor.u32 %v1855, %v1856
        %v1858 = vshll.u32 2102212464, %v1846
        %v1859 = vshrl.u32 920167782, %v1847
        %v1860 = vor.u32 %v1858, %v1859
        %v1861 = vshll.u32 920167782, %v1846
        %v1862 = vshrl.u32 1326507024, %v1847
        %v1863 = vor.u32 %v1861, %v1862
        %vm1864 = vcmp.lt.s32.totalorder %v1845, 1
        %vm1865 = vcmp.lt.s32.totalorder %v1845, 2
        %vm1866 = vcmp.lt.s32.totalorder %v1845, 3
        %vm1867 = vcmp.lt.s32.totalorder %v1845, 4
        %v1868 = vsel %vm1864, %v1848, %v1851
        %v1869 = vsel %vm1867, %v1857, 2102212464
        %v1870 = vsel %vm1866, %v1854, %v1869
        %v1871 = vsel %vm1865, %v1868, %v1870
        %v1872 = vsel %vm1864, %v1851, %v1854
        %v1873 = vsel %vm1867, %v1860, 920167782
        %v1874 = vsel %vm1866, %v1857, %v1873
        %v1875 = vsel %vm1865, %v1872, %v1874
        %v1876 = vsel %vm1864, %v1854, %v1857
        %v1877 = vsel %vm1867, %v1863, 1326507024
        %v1878 = vsel %vm1866, %v1860, %v1877
        %v1879 = vsel %vm1865, %v1876, %v1878
        %v1880 = vshll.u32 %v1840, 8
        %v1881 = vmul.u32.u64.compose %v1880, %v1879
        %v1882 = vextract.low.u32 %v1881
        %v1883 = vextract.high.u32 %v1881
        %v1884 = vmul.u32.u64.compose %v1880, %v1875
        %v1885 = vextract.low.u32 %v1884
        %v1886 = vextract.high.u32 %v1884
        %v1887 = vmul.u32 %v1880, %v1871
        %v1888 = vadd.s32 %v1883, %v1885
        %vm1889 = vc.u32 %v1883, %v1885
        %v1890 = vadd.s32 %v1886, 1
        %v1891 = vsel %vm1889, %v1890, %v1886
        %v1892 = vadd.s32 %v1887, %v1891
        %v1893 = vadd.s32 %v1892, 536870912
        %v1894 = vshrl.u32 %v1893, 30
        %v1895 = vshll.u32 %v1894, 30
        %v1896 = vsub.s32 %v1892, %v1895
        %vm1897 = vcmp.lt.s32.totalorder %v1896, 0
        %v1898 = vsub.s32 0, %v1896
        %v1899 = vsel %vm1897, %v1898, %v1896
        %v1900 = vclz %v1899
        %v1901 = vsub.s32 %v1900, 2
        %vm1902 = vcmp.gt.s32.totalorder 0, %v1901
        %v1903 = vsel %vm1902, 0, %v1901
        %v1904 = vsub.s32 32, %v1903
        %v1905 = vshll.u32 %v1896, %v1903
        %v1906 = vshrl.u32 %v1888, %v1904
        %v1907 = vor.u32 %v1905, %v1906
        %v1908 = vsub.s32 4294967266, %v1903
        %v1909 = vadd.s32 %v1908, 127
        %v1910 = vshll.u32 %v1909, 23
        %v1911 = vor.u32 4788187, %v1910
        %v1912 = vand.u32 2147483647, %v1911
        %v1914 = vcvt.s32.f32 %v1907
        %v1915 = vmul.f32 %v1914, %v1912
        %v1916 = vxor.u32 %v1915, 2147483648
        %v1917 = vsel %vm1834, %v1916, %v1915
        %v1918 = vsub.s32 4, %v1894
        %v1919 = vsel %vm1834, %v1918, %v1894
        %v1920 = vsel %vm1833, %v1727, %v1917
        %v1921 = vsel %vm1833, 0, %v1919
        %v1922 = vcosq.f32.pop %v1920
        %v1923 = vsinq.f32.pop %v1920
        %vm1924 = vweird.f32 %v1727
        %v1925 = vadd.s32 %v1921, 3
        %v1926 = vand.u32 %v1925, 3
        %vm1927 = vcmp.lt.s32.totalorder %v1926, 2
        %vm1928 = vcmp.eq.s32.totalorder %v1926, 0
        %v1929 = vxor.u32 %v1923, 2147483648
        %v1930 = vsel %vm1928, %v1922, %v1929
        %vm1931 = vcmp.eq.s32.totalorder %v1926, 2
        %v1932 = vxor.u32 %v1922, 2147483648
        %v1933 = vsel %vm1931, %v1932, %v1923
        %v1934 = vsel %vm1927, %v1930, %v1933
        %v1935 = vsel %vm1924, nan, %v1934
        %v1936 = vmul.f32 %v1831, %v1831
        %v1937 = vmul.f32 %v1935, %v1935
        %1939 = vset.pattern.permute.xlu0 0
        %1940 = vperm.xlu0 %1939, %v1633
        %v1941 = vpop.permute.xlu0 %1940
        %v1943 = vmul.f32 %v1941, %v1936
        %v1944 = vmul.f32 %v1941, %v1937
        %v1945 = vadd.f32 %v1715, %v1943
        %v1946 = vadd.f32 %v1717, %v1944
        %v1947 = vmul.f32 %v1945, %v423
        %v1948 = vmul.f32 %v1946, %v424
        %v1949 = vpack.c.bf16 %v1947, %v1947
        %v1950 = vpack.c.bf16 %v1948, %v1948
        %1951 = vmatprep.subr.bf16.mxu0 0
        %1952 = vmatpush1.bf16.msra.mxu0 %v1242
        %1953 = vmatprep.subr.bf16.mxu0 0
        %1954 = vmatpush1.bf16.msra.mxu0 %v1243
        %1955 = vmatprep.subr.bf16.mxu0 0
        %1956 = vmatpush1.bf16.msra.mxu0 %v1244
        %1957 = vmatprep.subr.bf16.mxu0 0
        %1958 = vmatpush1.bf16.msra.mxu0 %v1245
        %1959 = vmatprep.subr.bf16.mxu0 0
        %1960 = vmatpush1.bf16.msra.mxu0 %v1246
        %1961 = vmatprep.subr.bf16.mxu0 0
        %1962 = vmatpush1.bf16.msra.mxu0 %v1247
        %1963 = vmatprep.subr.bf16.mxu0 0
        %1964 = vmatpush1.bf16.msra.mxu0 %v1248
        %1965 = vmatprep.subr.bf16.mxu0 0
        %1966 = vmatpush1.bf16.msra.mxu0 %v1249
        %1967 = vmatprep.subr.bf16.mxu0 0
        %1968 = vmatpush1.bf16.msra.mxu0 %v1250
        %1969 = vmatprep.subr.bf16.mxu0 0
        %1970 = vmatpush1.bf16.msra.mxu0 %v1251
        %1971 = vmatprep.subr.bf16.mxu0 0
        %1972 = vmatpush1.bf16.msra.mxu0 %v1252
        %1973 = vmatprep.subr.bf16.mxu0 0
        %1974 = vmatpush1.bf16.msra.mxu0 %v1253
        %1975 = vmatprep.subr.bf16.mxu0 0
        %1976 = vmatpush1.bf16.msra.mxu0 %v1254
        %1977 = vmatprep.subr.bf16.mxu0 0
        %1978 = vmatpush1.bf16.msra.mxu0 %v1255
        %1979 = vmatprep.subr.bf16.mxu0 0
        %1980 = vmatpush1.bf16.msra.mxu0 %v1256
        %1981 = vmatprep.subr.bf16.mxu0 0
        %1982 = vmatpush1.bf16.msra.mxu0 %v1257
        %1983 = vmatprep.mubr.bf16.mxu0 %v1949
        %1984 = vmatmul.mubr.bf16.gmra.mrb[0].mxu0 %v560
        %v1985 = vpop.f32.mrb[0].mxu0
        %v1986 = vadd.f32 0.0, %v1985
        %v1987 = vpop.f32.mrb[0].mxu0
        %v1988 = vpop.f32.mrb[0].mxu0
        %v1989 = vpop.f32.mrb[0].mxu0
        %1990 = vdwg.mxu0
        %1991 = vmatprep.subr.bf16.mxu0 0
        %1992 = vmatpush1.bf16.msra.mxu0 %v1258
        %1993 = vmatprep.subr.bf16.mxu0 0
        %1994 = vmatpush1.bf16.msra.mxu0 %v1259
        %1995 = vmatprep.subr.bf16.mxu0 0
        %1996 = vmatpush1.bf16.msra.mxu0 %v1260
        %1997 = vmatprep.subr.bf16.mxu0 0
        %1998 = vmatpush1.bf16.msra.mxu0 %v1261
        %1999 = vmatprep.subr.bf16.mxu0 0
        %2000 = vmatpush1.bf16.msra.mxu0 %v1262
        %2001 = vmatprep.subr.bf16.mxu0 0
        %2002 = vmatpush1.bf16.msra.mxu0 %v1263
        %2003 = vmatprep.subr.bf16.mxu0 0
        %2004 = vmatpush1.bf16.msra.mxu0 %v1264
        %2005 = vmatprep.subr.bf16.mxu0 0
        %2006 = vmatpush1.bf16.msra.mxu0 %v1265
        %2007 = vmatprep.subr.bf16.mxu0 0
        %2008 = vmatpush1.bf16.msra.mxu0 %v1266
        %2009 = vmatprep.subr.bf16.mxu0 0
        %2010 = vmatpush1.bf16.msra.mxu0 %v1267
        %2011 = vmatprep.subr.bf16.mxu0 0
        %2012 = vmatpush1.bf16.msra.mxu0 %v1268
        %2013 = vmatprep.subr.bf16.mxu0 0
        %2014 = vmatpush1.bf16.msra.mxu0 %v1269
        %2015 = vmatprep.subr.bf16.mxu0 0
        %2016 = vmatpush1.bf16.msra.mxu0 %v1270
        %2017 = vmatprep.subr.bf16.mxu0 0
        %2018 = vmatpush1.bf16.msra.mxu0 %v1271
        %2019 = vmatprep.subr.bf16.mxu0 0
        %2020 = vmatpush1.bf16.msra.mxu0 %v1272
        %2021 = vmatprep.subr.bf16.mxu0 0
        %2022 = vmatpush1.bf16.msra.mxu0 %v1273
        %2023 = vmatprep.mubr.bf16.mxu0 %v560
        %2024 = vmatmul.mubr.bf16.gmra.mrb[0].mxu0 %v1950
        %v2025 = vpop.f32.mrb[0].mxu0
        %v2026 = vadd.f32 %v1986, %v2025
        %v2027 = vpop.f32.mrb[0].mxu0
        %v2028 = vpop.f32.mrb[0].mxu0
        %v2029 = vpop.f32.mrb[0].mxu0
        %2030 = vdwg.mxu0
        %s2031 = scalar_lea.vmem %s3, 4
        %v2032 = vld [vmem:[%s2031] sm:$0xf]
        %s2033 = scalar_lea.vmem %s4, 8
        %v2034 = vld [vmem:[%s2033] sm:$0xff]
        %2035 = vrot.lane.b32.xlu0 %v2026, 3
        %v2036 = vpop.permute.xlu0 %2035
        %v2037 = vmul.f32 %v2036, %v433
        %2038 = vrot.lane.b32.xlu0 %v2026, 125
        %v2039 = vpop.permute.xlu0 %2038
        %v2040 = vmul.f32 %v2039, %v436
        %v2041 = vpack.c.bf16 %v2026, %v2037
        %v2042 = vpack.c.bf16 %v2040, %v2040
        %2044 = vset.pattern.permute.xlu0 0
        %2045 = vperm.xlu0 %2044, %v2034
        %v2046 = vpop.permute.xlu0 %2045
        %v2049 = vsel %vm1401, %v2032, 0
        %v2052 = vsel %vm1405, %v2042, 0
        %2054 = vmatprep.subr.bf16.mxu0 0
        %2055 = vmatpush1.bf16.msra.mxu0 %v2041
        %2056 = vmatprep.subr.bf16.mxu0 0
        %2057 = vmatpush1.bf16.msra.mxu0 %v2052
        %2058 = vmatprep.subr.bf16.mxu0 0
        %2059 = vmatpush1.bf16.msra.mxu0 0
        %2060 = vmatprep.subr.bf16.mxu0 0
        %2061 = vmatpush1.bf16.msra.mxu0 0
        %2062 = vmatprep.subr.bf16.mxu0 0
        %2063 = vmatpush1.bf16.msra.mxu0 0
        %2064 = vmatprep.subr.bf16.mxu0 0
        %2065 = vmatpush1.bf16.msra.mxu0 0
        %2066 = vmatprep.subr.bf16.mxu0 0
        %2067 = vmatpush1.bf16.msra.mxu0 0
        %2068 = vmatprep.subr.bf16.mxu0 0
        %2069 = vmatpush1.bf16.msra.mxu0 0
        %2070 = vmatprep.subr.bf16.mxu0 0
        %2071 = vmatpush1.bf16.msra.mxu0 0
        %2072 = vmatprep.subr.bf16.mxu0 0
        %2073 = vmatpush1.bf16.msra.mxu0 0
        %2074 = vmatprep.subr.bf16.mxu0 0
        %2075 = vmatpush1.bf16.msra.mxu0 0
        %2076 = vmatprep.subr.bf16.mxu0 0
        %2077 = vmatpush1.bf16.msra.mxu0 0
        %2078 = vmatprep.subr.bf16.mxu0 0
        %2079 = vmatpush1.bf16.msra.mxu0 0
        %2080 = vmatprep.subr.bf16.mxu0 0
        %2081 = vmatpush1.bf16.msra.mxu0 0
        %2082 = vmatprep.subr.bf16.mxu0 0
        %2083 = vmatpush1.bf16.msra.mxu0 0
        %2084 = vmatprep.subr.bf16.mxu0 0
        %2085 = vmatpush1.bf16.msra.mxu0 0
        %2086 = vmatprep.mubr.bf16.mxu0 0
        %2087 = vmatmul.mubr.bf16.gmra.mrb[0].mxu0 %v2049
        %v2088 = vpop.f32.mrb[0].mxu0
        %v2089 = vadd.f32 %v2046, %v2088
        %v2090 = vpop.f32.mrb[0].mxu0
        %v2091 = vpop.f32.mrb[0].mxu0
        %v2092 = vpop.f32.mrb[0].mxu0
        %2093 = vdwg.mxu0
        %2095 = vset.pattern.permute.xlu0 0
        %2096 = vperm.xlu0 %2095, %v1635
        %v2097 = vpop.permute.xlu0 %2096
        %v2099 = vmul.f32 %v2097, %v2089
        %v2100 = vand.u32 2147483647, %v2099
        %vm2101 = vcmp.le.f32.partialorder %v2100, 0.7853982
        %vm2102 = vcmp.lt.s32.totalorder %v2099, 0
        %v2103 = vand.u32 %v2099, 2139095040
        %v2104 = vshrl.u32 %v2103, 23
        %v2105 = vsub.s32 %v2104, 127
        %v2106 = vand.u32 2147483647, %v2099
        %v2107 = vand.u32 %v2106, 8388607
        %v2108 = vor.u32 %v2107, 8388608
        %v2109 = vsub.s32 0, %v2108
        %v2110 = vadd.s32 %v2105, 1
        %vm2111 = vcmp.gt.s32.totalorder %v2110, 0
        %v2112 = vsel %vm2111, %v2110, 0
        %v2113 = vshrl.u32 %v2112, 5
        %v2114 = vand.u32 %v2112, 31
        %v2115 = vsub.s32 32, %v2114
        %v2116 = vshrl.u32 683565275, %v2115
        %v2117 = vshll.u32 683565275, %v2114
        %v2118 = vshrl.u32 2475754826, %v2115
        %v2119 = vor.u32 %v2117, %v2118
        %v2120 = vshll.u32 2475754826, %v2114
        %v2121 = vshrl.u32 2131351028, %v2115
        %v2122 = vor.u32 %v2120, %v2121
        %v2123 = vshll.u32 2131351028, %v2114
        %v2124 = vshrl.u32 2102212464, %v2115
        %v2125 = vor.u32 %v2123, %v2124
        %v2126 = vshll.u32 2102212464, %v2114
        %v2127 = vshrl.u32 920167782, %v2115
        %v2128 = vor.u32 %v2126, %v2127
        %v2129 = vshll.u32 920167782, %v2114
        %v2130 = vshrl.u32 1326507024, %v2115
        %v2131 = vor.u32 %v2129, %v2130
        %vm2132 = vcmp.lt.s32.totalorder %v2113, 1
        %vm2133 = vcmp.lt.s32.totalorder %v2113, 2
        %vm2134 = vcmp.lt.s32.totalorder %v2113, 3
        %vm2135 = vcmp.lt.s32.totalorder %v2113, 4
        %v2136 = vsel %vm2132, %v2116, %v2119
        %v2137 = vsel %vm2135, %v2125, 2102212464
        %v2138 = vsel %vm2134, %v2122, %v2137
        %v2139 = vsel %vm2133, %v2136, %v2138
        %v2140 = vsel %vm2132, %v2119, %v2122
        %v2141 = vsel %vm2135, %v2128, 920167782
        %v2142 = vsel %vm2134, %v2125, %v2141
        %v2143 = vsel %vm2133, %v2140, %v2142
        %v2144 = vsel %vm2132, %v2122, %v2125
        %v2145 = vsel %vm2135, %v2131, 1326507024
        %v2146 = vsel %vm2134, %v2128, %v2145
        %v2147 = vsel %vm2133, %v2144, %v2146
        %v2148 = vshll.u32 %v2108, 8
        %v2149 = vmul.u32.u64.compose %v2148, %v2147
        %v2150 = vextract.low.u32 %v2149
        %v2151 = vextract.high.u32 %v2149
        %v2152 = vmul.u32.u64.compose %v2148, %v2143
        %v2153 = vextract.low.u32 %v2152
        %v2154 = vextract.high.u32 %v2152
        %v2155 = vmul.u32 %v2148, %v2139
        %v2156 = vadd.s32 %v2151, %v2153
        %vm2157 = vc.u32 %v2151, %v2153
        %v2158 = vadd.s32 %v2154, 1
        %v2159 = vsel %vm2157, %v2158, %v2154
        %v2160 = vadd.s32 %v2155, %v2159
        %v2161 = vadd.s32 %v2160, 536870912
        %v2162 = vshrl.u32 %v2161, 30
        %v2163 = vshll.u32 %v2162, 30
        %v2164 = vsub.s32 %v2160, %v2163
        %vm2165 = vcmp.lt.s32.totalorder %v2164, 0
        %v2166 = vsub.s32 0, %v2164
        %v2167 = vsel %vm2165, %v2166, %v2164
        %v2168 = vclz %v2167
        %v2169 = vsub.s32 %v2168, 2
        %vm2170 = vcmp.gt.s32.totalorder 0, %v2169
        %v2171 = vsel %vm2170, 0, %v2169
        %v2172 = vsub.s32 32, %v2171
        %v2173 = vshll.u32 %v2164, %v2171
        %v2174 = vshrl.u32 %v2156, %v2172
        %v2175 = vor.u32 %v2173, %v2174
        %v2176 = vsub.s32 4294967266, %v2171
        %v2177 = vadd.s32 %v2176, 127
        %v2178 = vshll.u32 %v2177, 23
        %v2179 = vor.u32 4788187, %v2178
        %v2180 = vand.u32 2147483647, %v2179
        %v2182 = vcvt.s32.f32 %v2175
        %v2183 = vmul.f32 %v2182, %v2180
        %v2184 = vxor.u32 %v2183, 2147483648
        %v2185 = vsel %vm2102, %v2184, %v2183
        %v2186 = vsub.s32 4, %v2162
        %v2187 = vsel %vm2102, %v2186, %v2162
        %v2188 = vsel %vm2101, %v2099, %v2185
        %v2189 = vsel %vm2101, 0, %v2187
        %v2190 = vcosq.f32.pop %v2188
        %v2191 = vsinq.f32.pop %v2188
        %vm2192 = vweird.f32 %v2099
        %v2193 = vadd.s32 %v2189, 3
        %v2194 = vand.u32 %v2193, 3
        %vm2195 = vcmp.lt.s32.totalorder %v2194, 2
        %vm2196 = vcmp.eq.s32.totalorder %v2194, 0
        %v2197 = vxor.u32 %v2191, 2147483648
        %v2198 = vsel %vm2196, %v2190, %v2197
        %vm2199 = vcmp.eq.s32.totalorder %v2194, 2
        %v2200 = vxor.u32 %v2190, 2147483648
        %v2201 = vsel %vm2199, %v2200, %v2191
        %v2202 = vsel %vm2195, %v2198, %v2201
        %v2203 = vsel %vm2192, nan, %v2202
        %v2204 = vmul.f32 %v2203, %v2203
        %2206 = vset.pattern.permute.xlu0 0
        %2207 = vperm.xlu0 %2206, %v1637
        %v2208 = vpop.permute.xlu0 %2207
        %v2210 = vmul.f32 %v2208, %v2204
        %v2211 = vadd.f32 %v2089, %v2210
        %s2212 = scalar_lea.vmem %s7, 4
        %v2213 = vld [vmem:[%s2212] sm:$0xf]
        %s2214 = scalar_lea.vmem %s8, 8
        %v2215 = vld [vmem:[%s2214] sm:$0xff]
        %2216 = vrot.lane.b32.xlu0 %v2211, 1
        %v2217 = vpop.permute.xlu0 %2216
        %v2218 = vmul.f32 %v2217, %v427
        %2219 = vrot.lane.b32.xlu0 %v2211, 127
        %v2220 = vpop.permute.xlu0 %2219
        %v2221 = vmul.f32 %v2220, %v430
        %v2222 = vpack.c.bf16 %v2211, %v2218
        %v2223 = vpack.c.bf16 %v2221, %v2221
        %2225 = vset.pattern.permute.xlu0 0
        %2226 = vperm.xlu0 %2225, %v2215
        %v2227 = vpop.permute.xlu0 %2226
        %v2230 = vsel %vm1401, %v2213, 0
        %v2233 = vsel %vm1405, %v2223, 0
        %2235 = vmatprep.subr.bf16.mxu0 0
        %2236 = vmatpush1.bf16.msra.mxu0 %v2222
        %2237 = vmatprep.subr.bf16.mxu0 0
        %2238 = vmatpush1.bf16.msra.mxu0 %v2233
        %2239 = vmatprep.subr.bf16.mxu0 0
        %2240 = vmatpush1.bf16.msra.mxu0 0
        %2241 = vmatprep.subr.bf16.mxu0 0
        %2242 = vmatpush1.bf16.msra.mxu0 0
        %2243 = vmatprep.subr.bf16.mxu0 0
        %2244 = vmatpush1.bf16.msra.mxu0 0
        %2245 = vmatprep.subr.bf16.mxu0 0
        %2246 = vmatpush1.bf16.msra.mxu0 0
        %2247 = vmatprep.subr.bf16.mxu0 0
        %2248 = vmatpush1.bf16.msra.mxu0 0
        %2249 = vmatprep.subr.bf16.mxu0 0
        %2250 = vmatpush1.bf16.msra.mxu0 0
        %2251 = vmatprep.subr.bf16.mxu0 0
        %2252 = vmatpush1.bf16.msra.mxu0 0
        %2253 = vmatprep.subr.bf16.mxu0 0
        %2254 = vmatpush1.bf16.msra.mxu0 0
        %2255 = vmatprep.subr.bf16.mxu0 0
        %2256 = vmatpush1.bf16.msra.mxu0 0
        %2257 = vmatprep.subr.bf16.mxu0 0
        %2258 = vmatpush1.bf16.msra.mxu0 0
        %2259 = vmatprep.subr.bf16.mxu0 0
        %2260 = vmatpush1.bf16.msra.mxu0 0
        %2261 = vmatprep.subr.bf16.mxu0 0
        %2262 = vmatpush1.bf16.msra.mxu0 0
        %2263 = vmatprep.subr.bf16.mxu0 0
        %2264 = vmatpush1.bf16.msra.mxu0 0
        %2265 = vmatprep.subr.bf16.mxu0 0
        %2266 = vmatpush1.bf16.msra.mxu0 0
        %2267 = vmatprep.mubr.bf16.mxu0 0
        %2268 = vmatmul.mubr.bf16.gmra.mrb[0].mxu0 %v2230
        %v2269 = vpop.f32.mrb[0].mxu0
        %v2270 = vadd.f32 %v2227, %v2269
        %v2271 = vpop.f32.mrb[0].mxu0
        %v2272 = vpop.f32.mrb[0].mxu0
        %v2273 = vpop.f32.mrb[0].mxu0
        %2274 = vdwg.mxu0
        %v2275 = vmul.f32 %v2270, %v418
        %v2276 = vadd.f32 %v2275, %v1629
        %s2277 = scalar_lea.vmem %s5, 16
        %v2278 = vld [vmem:[%s2277] sm:$0xff]
        %s2279 = scalar_lea.vmem %s6, 16
        %v2280 = vld [vmem:[%s2279] sm:$0xff]
        %s2281 = scalar_lea.vmem %s9, 16
        %v2282 = vld [vmem:[%s2281] sm:$0xff]
        %s2283 = scalar_lea.vmem %s10, 16
        %v2284 = vld [vmem:[%s2283] sm:$0xff]
        %v2285 = vpack.c.bf16 %v2276, %v2276
        %2286 = vmatprep.subr.bf16.mxu0 %v707
        %2287 = vmatpush1.bf16.msra.mxu0 %v706
        %2288 = vmatprep.subr.bf16.mxu0 %v709
        %2289 = vmatpush1.bf16.msra.mxu0 %v708
        %2290 = vmatprep.subr.bf16.mxu0 %v711
        %2291 = vmatpush1.bf16.msra.mxu0 %v710
        %2292 = vmatprep.subr.bf16.mxu0 %v713
        %2293 = vmatpush1.bf16.msra.mxu0 %v712
        %2294 = vmatprep.subr.bf16.mxu0 %v715
        %2295 = vmatpush1.bf16.msra.mxu0 %v714
        %2296 = vmatprep.subr.bf16.mxu0 %v717
        %2297 = vmatpush1.bf16.msra.mxu0 %v716
        %2298 = vmatprep.subr.bf16.mxu0 %v719
        %2299 = vmatpush1.bf16.msra.mxu0 %v718
        %2300 = vmatprep.subr.bf16.mxu0 %v721
        %2301 = vmatpush1.bf16.msra.mxu0 %v720
        %2302 = vmatprep.subr.bf16.mxu0 %v723
        %2303 = vmatpush1.bf16.msra.mxu0 %v722
        %2304 = vmatprep.subr.bf16.mxu0 %v725
        %2305 = vmatpush1.bf16.msra.mxu0 %v724
        %2306 = vmatprep.subr.bf16.mxu0 %v727
        %2307 = vmatpush1.bf16.msra.mxu0 %v726
        %2308 = vmatprep.subr.bf16.mxu0 %v729
        %2309 = vmatpush1.bf16.msra.mxu0 %v728
        %2310 = vmatprep.subr.bf16.mxu0 %v731
        %2311 = vmatpush1.bf16.msra.mxu0 %v730
        %2312 = vmatprep.subr.bf16.mxu0 %v733
        %2313 = vmatpush1.bf16.msra.mxu0 %v732
        %2314 = vmatprep.subr.bf16.mxu0 %v735
        %2315 = vmatpush1.bf16.msra.mxu0 %v734
        %2316 = vmatprep.subr.bf16.mxu0 %v737
        %2317 = vmatpush1.bf16.msra.mxu0 %v736
        %2318 = vmatprep.mubr.bf16.mxu0 %v2285
        %2319 = vmatmul.mubr.bf16.gmra.mrb[0].mxu0 %v560
        %v2320 = vpop.f32.mrb[0].mxu0
        %v2321 = vadd.f32 0.0, %v2320
        %v2322 = vpop.f32.mrb[0].mxu0
        %v2323 = vadd.f32 0.0, %v2322
        %v2324 = vpop.f32.mrb[0].mxu0
        %v2325 = vpop.f32.mrb[0].mxu0
        %2326 = vdwg.mxu0
        %2327 = vmatprep.subr.bf16.mxu0 %v739
        %2328 = vmatpush1.bf16.msra.mxu0 %v738
        %2329 = vmatprep.subr.bf16.mxu0 %v741
        %2330 = vmatpush1.bf16.msra.mxu0 %v740
        %2331 = vmatprep.subr.bf16.mxu0 %v743
        %2332 = vmatpush1.bf16.msra.mxu0 %v742
        %2333 = vmatprep.subr.bf16.mxu0 %v745
        %2334 = vmatpush1.bf16.msra.mxu0 %v744
        %2335 = vmatprep.subr.bf16.mxu0 %v747
        %2336 = vmatpush1.bf16.msra.mxu0 %v746
        %2337 = vmatprep.subr.bf16.mxu0 %v749
        %2338 = vmatpush1.bf16.msra.mxu0 %v748
        %2339 = vmatprep.subr.bf16.mxu0 %v751
        %2340 = vmatpush1.bf16.msra.mxu0 %v750
        %2341 = vmatprep.subr.bf16.mxu0 %v753
        %2342 = vmatpush1.bf16.msra.mxu0 %v752
        %2343 = vmatprep.subr.bf16.mxu0 0
        %2344 = vmatpush1.bf16.msra.mxu0 0
        %2345 = vmatprep.subr.bf16.mxu0 0
        %2346 = vmatpush1.bf16.msra.mxu0 0
        %2347 = vmatprep.subr.bf16.mxu0 0
        %2348 = vmatpush1.bf16.msra.mxu0 0
        %2349 = vmatprep.subr.bf16.mxu0 0
        %2350 = vmatpush1.bf16.msra.mxu0 0
        %2351 = vmatprep.subr.bf16.mxu0 0
        %2352 = vmatpush1.bf16.msra.mxu0 0
        %2353 = vmatprep.subr.bf16.mxu0 0
        %2354 = vmatpush1.bf16.msra.mxu0 0
        %2355 = vmatprep.subr.bf16.mxu0 0
        %2356 = vmatpush1.bf16.msra.mxu0 0
        %2357 = vmatprep.subr.bf16.mxu0 0
        %2358 = vmatpush1.bf16.msra.mxu0 0
        %2359 = vmatprep.mubr.bf16.mxu0 0
        %2360 = vmatmul.mubr.bf16.gmra.mrb[0].mxu0 %v560
        %v2361 = vpop.f32.mrb[0].mxu0
        %v2362 = vadd.f32 %v2321, %v2361
        %v2363 = vpop.f32.mrb[0].mxu0
        %v2364 = vadd.f32 %v2323, %v2363
        %v2365 = vpop.f32.mrb[0].mxu0
        %v2366 = vpop.f32.mrb[0].mxu0
        %2367 = vdwg.mxu0
        %2369 = vset.pattern.permute.xlu0 0
        %2370 = vperm.xlu0 %2369, %v2278
        %v2371 = vpop.permute.xlu0 %2370
        %v2373 = vmul.f32 %v2371, %v2362
        %v2374 = vmul.f32 %v2371, %v2364
        %v2375 = vand.u32 2147483647, %v2373
        %vm2376 = vcmp.le.f32.partialorder %v2375, 0.7853982
        %vm2377 = vcmp.lt.s32.totalorder %v2373, 0
        %v2378 = vand.u32 %v2373, 2139095040
        %v2379 = vshrl.u32 %v2378, 23
        %v2380 = vsub.s32 %v2379, 127
        %v2381 = vand.u32 2147483647, %v2373
        %v2382 = vand.u32 %v2381, 8388607
        %v2383 = vor.u32 %v2382, 8388608
        %v2384 = vsub.s32 0, %v2383
        %v2385 = vadd.s32 %v2380, 1
        %vm2386 = vcmp.gt.s32.totalorder %v2385, 0
        %v2387 = vsel %vm2386, %v2385, 0
        %v2388 = vshrl.u32 %v2387, 5
        %v2389 = vand.u32 %v2387, 31
        %v2390 = vsub.s32 32, %v2389
        %v2391 = vshrl.u32 683565275, %v2390
        %v2392 = vshll.u32 683565275, %v2389
        %v2393 = vshrl.u32 2475754826, %v2390
        %v2394 = vor.u32 %v2392, %v2393
        %v2395 = vshll.u32 2475754826, %v2389
        %v2396 = vshrl.u32 2131351028, %v2390
        %v2397 = vor.u32 %v2395, %v2396
        %v2398 = vshll.u32 2131351028, %v2389
        %v2399 = vshrl.u32 2102212464, %v2390
        %v2400 = vor.u32 %v2398, %v2399
        %v2401 = vshll.u32 2102212464, %v2389
        %v2402 = vshrl.u32 920167782, %v2390
        %v2403 = vor.u32 %v2401, %v2402
        %v2404 = vshll.u32 920167782, %v2389
        %v2405 = vshrl.u32 1326507024, %v2390
        %v2406 = vor.u32 %v2404, %v2405
        %vm2407 = vcmp.lt.s32.totalorder %v2388, 1
        %vm2408 = vcmp.lt.s32.totalorder %v2388, 2
        %vm2409 = vcmp.lt.s32.totalorder %v2388, 3
        %vm2410 = vcmp.lt.s32.totalorder %v2388, 4
        %v2411 = vsel %vm2407, %v2391, %v2394
        %v2412 = vsel %vm2410, %v2400, 2102212464
        %v2413 = vsel %vm2409, %v2397, %v2412
        %v2414 = vsel %vm2408, %v2411, %v2413
        %v2415 = vsel %vm2407, %v2394, %v2397
        %v2416 = vsel %vm2410, %v2403, 920167782
        %v2417 = vsel %vm2409, %v2400, %v2416
        %v2418 = vsel %vm2408, %v2415, %v2417
        %v2419 = vsel %vm2407, %v2397, %v2400
        %v2420 = vsel %vm2410, %v2406, 1326507024
        %v2421 = vsel %vm2409, %v2403, %v2420
        %v2422 = vsel %vm2408, %v2419, %v2421
        %v2423 = vshll.u32 %v2383, 8
        %v2424 = vmul.u32.u64.compose %v2423, %v2422
        %v2425 = vextract.low.u32 %v2424
        %v2426 = vextract.high.u32 %v2424
        %v2427 = vmul.u32.u64.compose %v2423, %v2418
        %v2428 = vextract.low.u32 %v2427
        %v2429 = vextract.high.u32 %v2427
        %v2430 = vmul.u32 %v2423, %v2414
        %v2431 = vadd.s32 %v2426, %v2428
        %vm2432 = vc.u32 %v2426, %v2428
        %v2433 = vadd.s32 %v2429, 1
        %v2434 = vsel %vm2432, %v2433, %v2429
        %v2435 = vadd.s32 %v2430, %v2434
        %v2436 = vadd.s32 %v2435, 536870912
        %v2437 = vshrl.u32 %v2436, 30
        %v2438 = vshll.u32 %v2437, 30
        %v2439 = vsub.s32 %v2435, %v2438
        %vm2440 = vcmp.lt.s32.totalorder %v2439, 0
        %v2441 = vsub.s32 0, %v2439
        %v2442 = vsel %vm2440, %v2441, %v2439
        %v2443 = vclz %v2442
        %v2444 = vsub.s32 %v2443, 2
        %vm2445 = vcmp.gt.s32.totalorder 0, %v2444
        %v2446 = vsel %vm2445, 0, %v2444
        %v2447 = vsub.s32 32, %v2446
        %v2448 = vshll.u32 %v2439, %v2446
        %v2449 = vshrl.u32 %v2431, %v2447
        %v2450 = vor.u32 %v2448, %v2449
        %v2451 = vsub.s32 4294967266, %v2446
        %v2452 = vadd.s32 %v2451, 127
        %v2453 = vshll.u32 %v2452, 23
        %v2454 = vor.u32 4788187, %v2453
        %v2455 = vand.u32 2147483647, %v2454
        %v2457 = vcvt.s32.f32 %v2450
        %v2458 = vmul.f32 %v2457, %v2455
        %v2459 = vxor.u32 %v2458, 2147483648
        %v2460 = vsel %vm2377, %v2459, %v2458
        %v2461 = vsub.s32 4, %v2437
        %v2462 = vsel %vm2377, %v2461, %v2437
        %v2463 = vsel %vm2376, %v2373, %v2460
        %v2464 = vsel %vm2376, 0, %v2462
        %v2465 = vcosq.f32.pop %v2463
        %v2466 = vsinq.f32.pop %v2463
        %vm2467 = vweird.f32 %v2373
        %v2468 = vadd.s32 %v2464, 3
        %v2469 = vand.u32 %v2468, 3
        %vm2470 = vcmp.lt.s32.totalorder %v2469, 2
        %vm2471 = vcmp.eq.s32.totalorder %v2469, 0
        %v2472 = vxor.u32 %v2466, 2147483648
        %v2473 = vsel %vm2471, %v2465, %v2472
        %vm2474 = vcmp.eq.s32.totalorder %v2469, 2
        %v2475 = vxor.u32 %v2465, 2147483648
        %v2476 = vsel %vm2474, %v2475, %v2466
        %v2477 = vsel %vm2470, %v2473, %v2476
        %v2478 = vsel %vm2467, nan, %v2477
        %v2479 = vand.u32 2147483647, %v2374
        %vm2480 = vcmp.le.f32.partialorder %v2479, 0.7853982
        %vm2481 = vcmp.lt.s32.totalorder %v2374, 0
        %v2482 = vand.u32 %v2374, 2139095040
        %v2483 = vshrl.u32 %v2482, 23
        %v2484 = vsub.s32 %v2483, 127
        %v2485 = vand.u32 2147483647, %v2374
        %v2486 = vand.u32 %v2485, 8388607
        %v2487 = vor.u32 %v2486, 8388608
        %v2488 = vsub.s32 0, %v2487
        %v2489 = vadd.s32 %v2484, 1
        %vm2490 = vcmp.gt.s32.totalorder %v2489, 0
        %v2491 = vsel %vm2490, %v2489, 0
        %v2492 = vshrl.u32 %v2491, 5
        %v2493 = vand.u32 %v2491, 31
        %v2494 = vsub.s32 32, %v2493
        %v2495 = vshrl.u32 683565275, %v2494
        %v2496 = vshll.u32 683565275, %v2493
        %v2497 = vshrl.u32 2475754826, %v2494
        %v2498 = vor.u32 %v2496, %v2497
        %v2499 = vshll.u32 2475754826, %v2493
        %v2500 = vshrl.u32 2131351028, %v2494
        %v2501 = vor.u32 %v2499, %v2500
        %v2502 = vshll.u32 2131351028, %v2493
        %v2503 = vshrl.u32 2102212464, %v2494
        %v2504 = vor.u32 %v2502, %v2503
        %v2505 = vshll.u32 2102212464, %v2493
        %v2506 = vshrl.u32 920167782, %v2494
        %v2507 = vor.u32 %v2505, %v2506
        %v2508 = vshll.u32 920167782, %v2493
        %v2509 = vshrl.u32 1326507024, %v2494
        %v2510 = vor.u32 %v2508, %v2509
        %vm2511 = vcmp.lt.s32.totalorder %v2492, 1
        %vm2512 = vcmp.lt.s32.totalorder %v2492, 2
        %vm2513 = vcmp.lt.s32.totalorder %v2492, 3
        %vm2514 = vcmp.lt.s32.totalorder %v2492, 4
        %v2515 = vsel %vm2511, %v2495, %v2498
        %v2516 = vsel %vm2514, %v2504, 2102212464
        %v2517 = vsel %vm2513, %v2501, %v2516
        %v2518 = vsel %vm2512, %v2515, %v2517
        %v2519 = vsel %vm2511, %v2498, %v2501
        %v2520 = vsel %vm2514, %v2507, 920167782
        %v2521 = vsel %vm2513, %v2504, %v2520
        %v2522 = vsel %vm2512, %v2519, %v2521
        %v2523 = vsel %vm2511, %v2501, %v2504
        %v2524 = vsel %vm2514, %v2510, 1326507024
        %v2525 = vsel %vm2513, %v2507, %v2524
        %v2526 = vsel %vm2512, %v2523, %v2525
        %v2527 = vshll.u32 %v2487, 8
        %v2528 = vmul.u32.u64.compose %v2527, %v2526
        %v2529 = vextract.low.u32 %v2528
        %v2530 = vextract.high.u32 %v2528
        %v2531 = vmul.u32.u64.compose %v2527, %v2522
        %v2532 = vextract.low.u32 %v2531
        %v2533 = vextract.high.u32 %v2531
        %v2534 = vmul.u32 %v2527, %v2518
        %v2535 = vadd.s32 %v2530, %v2532
        %vm2536 = vc.u32 %v2530, %v2532
        %v2537 = vadd.s32 %v2533, 1
        %v2538 = vsel %vm2536, %v2537, %v2533
        %v2539 = vadd.s32 %v2534, %v2538
        %v2540 = vadd.s32 %v2539, 536870912
        %v2541 = vshrl.u32 %v2540, 30
        %v2542 = vshll.u32 %v2541, 30
        %v2543 = vsub.s32 %v2539, %v2542
        %vm2544 = vcmp.lt.s32.totalorder %v2543, 0
        %v2545 = vsub.s32 0, %v2543
        %v2546 = vsel %vm2544, %v2545, %v2543
        %v2547 = vclz %v2546
        %v2548 = vsub.s32 %v2547, 2
        %vm2549 = vcmp.gt.s32.totalorder 0, %v2548
        %v2550 = vsel %vm2549, 0, %v2548
        %v2551 = vsub.s32 32, %v2550
        %v2552 = vshll.u32 %v2543, %v2550
        %v2553 = vshrl.u32 %v2535, %v2551
        %v2554 = vor.u32 %v2552, %v2553
        %v2555 = vsub.s32 4294967266, %v2550
        %v2556 = vadd.s32 %v2555, 127
        %v2557 = vshll.u32 %v2556, 23
        %v2558 = vor.u32 4788187, %v2557
        %v2559 = vand.u32 2147483647, %v2558
        %v2561 = vcvt.s32.f32 %v2554
        %v2562 = vmul.f32 %v2561, %v2559
        %v2563 = vxor.u32 %v2562, 2147483648
        %v2564 = vsel %vm2481, %v2563, %v2562
        %v2565 = vsub.s32 4, %v2541
        %v2566 = vsel %vm2481, %v2565, %v2541
        %v2567 = vsel %vm2480, %v2374, %v2564
        %v2568 = vsel %vm2480, 0, %v2566
        %v2569 = vcosq.f32.pop %v2567
        %v2570 = vsinq.f32.pop %v2567
        %vm2571 = vweird.f32 %v2374
        %v2572 = vadd.s32 %v2568, 3
        %v2573 = vand.u32 %v2572, 3
        %vm2574 = vcmp.lt.s32.totalorder %v2573, 2
        %vm2575 = vcmp.eq.s32.totalorder %v2573, 0
        %v2576 = vxor.u32 %v2570, 2147483648
        %v2577 = vsel %vm2575, %v2569, %v2576
        %vm2578 = vcmp.eq.s32.totalorder %v2573, 2
        %v2579 = vxor.u32 %v2569, 2147483648
        %v2580 = vsel %vm2578, %v2579, %v2570
        %v2581 = vsel %vm2574, %v2577, %v2580
        %v2582 = vsel %vm2571, nan, %v2581
        %v2583 = vmul.f32 %v2478, %v2478
        %v2584 = vmul.f32 %v2582, %v2582
        %2586 = vset.pattern.permute.xlu0 0
        %2587 = vperm.xlu0 %2586, %v2280
        %v2588 = vpop.permute.xlu0 %2587
        %v2590 = vmul.f32 %v2588, %v2583
        %v2591 = vmul.f32 %v2588, %v2584
        %v2592 = vadd.f32 %v2362, %v2590
        %v2593 = vadd.f32 %v2364, %v2591
        %v2594 = vmul.f32 %v2592, %v423
        %v2595 = vmul.f32 %v2593, %v424
        %v2596 = vpack.c.bf16 %v2594, %v2594
        %v2597 = vpack.c.bf16 %v2595, %v2595
        %2598 = vmatprep.subr.bf16.mxu0 0
        %2599 = vmatpush1.bf16.msra.mxu0 %v1242
        %2600 = vmatprep.subr.bf16.mxu0 0
        %2601 = vmatpush1.bf16.msra.mxu0 %v1243
        %2602 = vmatprep.subr.bf16.mxu0 0
        %2603 = vmatpush1.bf16.msra.mxu0 %v1244
        %2604 = vmatprep.subr.bf16.mxu0 0
        %2605 = vmatpush1.bf16.msra.mxu0 %v1245
        %2606 = vmatprep.subr.bf16.mxu0 0
        %2607 = vmatpush1.bf16.msra.mxu0 %v1246
        %2608 = vmatprep.subr.bf16.mxu0 0
        %2609 = vmatpush1.bf16.msra.mxu0 %v1247
        %2610 = vmatprep.subr.bf16.mxu0 0
        %2611 = vmatpush1.bf16.msra.mxu0 %v1248
        %2612 = vmatprep.subr.bf16.mxu0 0
        %2613 = vmatpush1.bf16.msra.mxu0 %v1249
        %2614 = vmatprep.subr.bf16.mxu0 0
        %2615 = vmatpush1.bf16.msra.mxu0 %v1250
        %2616 = vmatprep.subr.bf16.mxu0 0
        %2617 = vmatpush1.bf16.msra.mxu0 %v1251
        %2618 = vmatprep.subr.bf16.mxu0 0
        %2619 = vmatpush1.bf16.msra.mxu0 %v1252
        %2620 = vmatprep.subr.bf16.mxu0 0
        %2621 = vmatpush1.bf16.msra.mxu0 %v1253
        %2622 = vmatprep.subr.bf16.mxu0 0
        %2623 = vmatpush1.bf16.msra.mxu0 %v1254
        %2624 = vmatprep.subr.bf16.mxu0 0
        %2625 = vmatpush1.bf16.msra.mxu0 %v1255
        %2626 = vmatprep.subr.bf16.mxu0 0
        %2627 = vmatpush1.bf16.msra.mxu0 %v1256
        %2628 = vmatprep.subr.bf16.mxu0 0
        %2629 = vmatpush1.bf16.msra.mxu0 %v1257
        %2630 = vmatprep.mubr.bf16.mxu0 %v2596
        %2631 = vmatmul.mubr.bf16.gmra.mrb[0].mxu0 %v560
        %v2632 = vpop.f32.mrb[0].mxu0
        %v2633 = vadd.f32 0.0, %v2632
        %v2634 = vpop.f32.mrb[0].mxu0
        %v2635 = vpop.f32.mrb[0].mxu0
        %v2636 = vpop.f32.mrb[0].mxu0
        %2637 = vdwg.mxu0
        %2638 = vmatprep.subr.bf16.mxu0 0
        %2639 = vmatpush1.bf16.msra.mxu0 %v1258
        %2640 = vmatprep.subr.bf16.mxu0 0
        %2641 = vmatpush1.bf16.msra.mxu0 %v1259
        %2642 = vmatprep.subr.bf16.mxu0 0
        %2643 = vmatpush1.bf16.msra.mxu0 %v1260
        %2644 = vmatprep.subr.bf16.mxu0 0
        %2645 = vmatpush1.bf16.msra.mxu0 %v1261
        %2646 = vmatprep.subr.bf16.mxu0 0
        %2647 = vmatpush1.bf16.msra.mxu0 %v1262
        %2648 = vmatprep.subr.bf16.mxu0 0
        %2649 = vmatpush1.bf16.msra.mxu0 %v1263
        %2650 = vmatprep.subr.bf16.mxu0 0
        %2651 = vmatpush1.bf16.msra.mxu0 %v1264
        %2652 = vmatprep.subr.bf16.mxu0 0
        %2653 = vmatpush1.bf16.msra.mxu0 %v1265
        %2654 = vmatprep.subr.bf16.mxu0 0
        %2655 = vmatpush1.bf16.msra.mxu0 %v1266
        %2656 = vmatprep.subr.bf16.mxu0 0
        %2657 = vmatpush1.bf16.msra.mxu0 %v1267
        %2658 = vmatprep.subr.bf16.mxu0 0
        %2659 = vmatpush1.bf16.msra.mxu0 %v1268
        %2660 = vmatprep.subr.bf16.mxu0 0
        %2661 = vmatpush1.bf16.msra.mxu0 %v1269
        %2662 = vmatprep.subr.bf16.mxu0 0
        %2663 = vmatpush1.bf16.msra.mxu0 %v1270
        %2664 = vmatprep.subr.bf16.mxu0 0
        %2665 = vmatpush1.bf16.msra.mxu0 %v1271
        %2666 = vmatprep.subr.bf16.mxu0 0
        %2667 = vmatpush1.bf16.msra.mxu0 %v1272
        %2668 = vmatprep.subr.bf16.mxu0 0
        %2669 = vmatpush1.bf16.msra.mxu0 %v1273
        %2670 = vmatprep.mubr.bf16.mxu0 %v560
        %2671 = vmatmul.mubr.bf16.gmra.mrb[0].mxu0 %v2597
        %v2672 = vpop.f32.mrb[0].mxu0
        %v2673 = vadd.f32 %v2633, %v2672
        %v2674 = vpop.f32.mrb[0].mxu0
        %v2675 = vpop.f32.mrb[0].mxu0
        %v2676 = vpop.f32.mrb[0].mxu0
        %2677 = vdwg.mxu0
        %s2678 = scalar_lea.vmem %s3, 8
        %v2679 = vld [vmem:[%s2678] sm:$0xf]
        %s2680 = scalar_lea.vmem %s4, 16
        %v2681 = vld [vmem:[%s2680] sm:$0xff]
        %2682 = vrot.lane.b32.xlu0 %v2673, 5
        %v2683 = vpop.permute.xlu0 %2682
        %v2684 = vmul.f32 %v2683, %v439
        %2685 = vrot.lane.b32.xlu0 %v2673, 123
        %v2686 = vpop.permute.xlu0 %2685
        %v2687 = vmul.f32 %v2686, %v442
        %v2688 = vpack.c.bf16 %v2673, %v2684
        %v2689 = vpack.c.bf16 %v2687, %v2687
        %2691 = vset.pattern.permute.xlu0 0
        %2692 = vperm.xlu0 %2691, %v2681
        %v2693 = vpop.permute.xlu0 %2692
        %v2696 = vsel %vm1401, %v2679, 0
        %v2699 = vsel %vm1405, %v2689, 0
        %2701 = vmatprep.subr.bf16.mxu0 0
        %2702 = vmatpush1.bf16.msra.mxu0 %v2688
        %2703 = vmatprep.subr.bf16.mxu0 0
        %2704 = vmatpush1.bf16.msra.mxu0 %v2699
        %2705 = vmatprep.subr.bf16.mxu0 0
        %2706 = vmatpush1.bf16.msra.mxu0 0
        %2707 = vmatprep.subr.bf16.mxu0 0
        %2708 = vmatpush1.bf16.msra.mxu0 0
        %2709 = vmatprep.subr.bf16.mxu0 0
        %2710 = vmatpush1.bf16.msra.mxu0 0
        %2711 = vmatprep.subr.bf16.mxu0 0
        %2712 = vmatpush1.bf16.msra.mxu0 0
        %2713 = vmatprep.subr.bf16.mxu0 0
        %2714 = vmatpush1.bf16.msra.mxu0 0
        %2715 = vmatprep.subr.bf16.mxu0 0
        %2716 = vmatpush1.bf16.msra.mxu0 0
        %2717 = vmatprep.subr.bf16.mxu0 0
        %2718 = vmatpush1.bf16.msra.mxu0 0
        %2719 = vmatprep.subr.bf16.mxu0 0
        %2720 = vmatpush1.bf16.msra.mxu0 0
        %2721 = vmatprep.subr.bf16.mxu0 0
        %2722 = vmatpush1.bf16.msra.mxu0 0
        %2723 = vmatprep.subr.bf16.mxu0 0
        %2724 = vmatpush1.bf16.msra.mxu0 0
        %2725 = vmatprep.subr.bf16.mxu0 0
        %2726 = vmatpush1.bf16.msra.mxu0 0
        %2727 = vmatprep.subr.bf16.mxu0 0
        %2728 = vmatpush1.bf16.msra.mxu0 0
        %2729 = vmatprep.subr.bf16.mxu0 0
        %2730 = vmatpush1.bf16.msra.mxu0 0
        %2731 = vmatprep.subr.bf16.mxu0 0
        %2732 = vmatpush1.bf16.msra.mxu0 0
        %2733 = vmatprep.mubr.bf16.mxu0 0
        %2734 = vmatmul.mubr.bf16.gmra.mrb[0].mxu0 %v2696
        %v2735 = vpop.f32.mrb[0].mxu0
        %v2736 = vadd.f32 %v2693, %v2735
        %v2737 = vpop.f32.mrb[0].mxu0
        %v2738 = vpop.f32.mrb[0].mxu0
        %v2739 = vpop.f32.mrb[0].mxu0
        %2740 = vdwg.mxu0
        %2742 = vset.pattern.permute.xlu0 0
        %2743 = vperm.xlu0 %2742, %v2282
        %v2744 = vpop.permute.xlu0 %2743
        %v2746 = vmul.f32 %v2744, %v2736
        %v2747 = vand.u32 2147483647, %v2746
        %vm2748 = vcmp.le.f32.partialorder %v2747, 0.7853982
        %vm2749 = vcmp.lt.s32.totalorder %v2746, 0
        %v2750 = vand.u32 %v2746, 2139095040
        %v2751 = vshrl.u32 %v2750, 23
        %v2752 = vsub.s32 %v2751, 127
        %v2753 = vand.u32 2147483647, %v2746
        %v2754 = vand.u32 %v2753, 8388607
        %v2755 = vor.u32 %v2754, 8388608
        %v2756 = vsub.s32 0, %v2755
        %v2757 = vadd.s32 %v2752, 1
        %vm2758 = vcmp.gt.s32.totalorder %v2757, 0
        %v2759 = vsel %vm2758, %v2757, 0
        %v2760 = vshrl.u32 %v2759, 5
        %v2761 = vand.u32 %v2759, 31
        %v2762 = vsub.s32 32, %v2761
        %v2763 = vshrl.u32 683565275, %v2762
        %v2764 = vshll.u32 683565275, %v2761
        %v2765 = vshrl.u32 2475754826, %v2762
        %v2766 = vor.u32 %v2764, %v2765
        %v2767 = vshll.u32 2475754826, %v2761
        %v2768 = vshrl.u32 2131351028, %v2762
        %v2769 = vor.u32 %v2767, %v2768
        %v2770 = vshll.u32 2131351028, %v2761
        %v2771 = vshrl.u32 2102212464, %v2762
        %v2772 = vor.u32 %v2770, %v2771
        %v2773 = vshll.u32 2102212464, %v2761
        %v2774 = vshrl.u32 920167782, %v2762
        %v2775 = vor.u32 %v2773, %v2774
        %v2776 = vshll.u32 920167782, %v2761
        %v2777 = vshrl.u32 1326507024, %v2762
        %v2778 = vor.u32 %v2776, %v2777
        %vm2779 = vcmp.lt.s32.totalorder %v2760, 1
        %vm2780 = vcmp.lt.s32.totalorder %v2760, 2
        %vm2781 = vcmp.lt.s32.totalorder %v2760, 3
        %vm2782 = vcmp.lt.s32.totalorder %v2760, 4
        %v2783 = vsel %vm2779, %v2763, %v2766
        %v2784 = vsel %vm2782, %v2772, 2102212464
        %v2785 = vsel %vm2781, %v2769, %v2784
        %v2786 = vsel %vm2780, %v2783, %v2785
        %v2787 = vsel %vm2779, %v2766, %v2769
        %v2788 = vsel %vm2782, %v2775, 920167782
        %v2789 = vsel %vm2781, %v2772, %v2788
        %v2790 = vsel %vm2780, %v2787, %v2789
        %v2791 = vsel %vm2779, %v2769, %v2772
        %v2792 = vsel %vm2782, %v2778, 1326507024
        %v2793 = vsel %vm2781, %v2775, %v2792
        %v2794 = vsel %vm2780, %v2791, %v2793
        %v2795 = vshll.u32 %v2755, 8
        %v2796 = vmul.u32.u64.compose %v2795, %v2794
        %v2797 = vextract.low.u32 %v2796
        %v2798 = vextract.high.u32 %v2796
        %v2799 = vmul.u32.u64.compose %v2795, %v2790
        %v2800 = vextract.low.u32 %v2799
        %v2801 = vextract.high.u32 %v2799
        %v2802 = vmul.u32 %v2795, %v2786
        %v2803 = vadd.s32 %v2798, %v2800
        %vm2804 = vc.u32 %v2798, %v2800
        %v2805 = vadd.s32 %v2801, 1
        %v2806 = vsel %vm2804, %v2805, %v2801
        %v2807 = vadd.s32 %v2802, %v2806
        %v2808 = vadd.s32 %v2807, 536870912
        %v2809 = vshrl.u32 %v2808, 30
        %v2810 = vshll.u32 %v2809, 30
        %v2811 = vsub.s32 %v2807, %v2810
        %vm2812 = vcmp.lt.s32.totalorder %v2811, 0
        %v2813 = vsub.s32 0, %v2811
        %v2814 = vsel %vm2812, %v2813, %v2811
        %v2815 = vclz %v2814
        %v2816 = vsub.s32 %v2815, 2
        %vm2817 = vcmp.gt.s32.totalorder 0, %v2816
        %v2818 = vsel %vm2817, 0, %v2816
        %v2819 = vsub.s32 32, %v2818
        %v2820 = vshll.u32 %v2811, %v2818
        %v2821 = vshrl.u32 %v2803, %v2819
        %v2822 = vor.u32 %v2820, %v2821
        %v2823 = vsub.s32 4294967266, %v2818
        %v2824 = vadd.s32 %v2823, 127
        %v2825 = vshll.u32 %v2824, 23
        %v2826 = vor.u32 4788187, %v2825
        %v2827 = vand.u32 2147483647, %v2826
        %v2829 = vcvt.s32.f32 %v2822
        %v2830 = vmul.f32 %v2829, %v2827
        %v2831 = vxor.u32 %v2830, 2147483648
        %v2832 = vsel %vm2749, %v2831, %v2830
        %v2833 = vsub.s32 4, %v2809
        %v2834 = vsel %vm2749, %v2833, %v2809
        %v2835 = vsel %vm2748, %v2746, %v2832
        %v2836 = vsel %vm2748, 0, %v2834
        %v2837 = vcosq.f32.pop %v2835
        %v2838 = vsinq.f32.pop %v2835
        %vm2839 = vweird.f32 %v2746
        %v2840 = vadd.s32 %v2836, 3
        %v2841 = vand.u32 %v2840, 3
        %vm2842 = vcmp.lt.s32.totalorder %v2841, 2
        %vm2843 = vcmp.eq.s32.totalorder %v2841, 0
        %v2844 = vxor.u32 %v2838, 2147483648
        %v2845 = vsel %vm2843, %v2837, %v2844
        %vm2846 = vcmp.eq.s32.totalorder %v2841, 2
        %v2847 = vxor.u32 %v2837, 2147483648
        %v2848 = vsel %vm2846, %v2847, %v2838
        %v2849 = vsel %vm2842, %v2845, %v2848
        %v2850 = vsel %vm2839, nan, %v2849
        %v2851 = vmul.f32 %v2850, %v2850
        %2853 = vset.pattern.permute.xlu0 0
        %2854 = vperm.xlu0 %2853, %v2284
        %v2855 = vpop.permute.xlu0 %2854
        %v2857 = vmul.f32 %v2855, %v2851
        %v2858 = vadd.f32 %v2736, %v2857
        %s2859 = scalar_lea.vmem %s7, 8
        %v2860 = vld [vmem:[%s2859] sm:$0xf]
        %s2861 = scalar_lea.vmem %s8, 16
        %v2862 = vld [vmem:[%s2861] sm:$0xff]
        %2863 = vrot.lane.b32.xlu0 %v2858, 1
        %v2864 = vpop.permute.xlu0 %2863
        %v2865 = vmul.f32 %v2864, %v427
        %2866 = vrot.lane.b32.xlu0 %v2858, 127
        %v2867 = vpop.permute.xlu0 %2866
        %v2868 = vmul.f32 %v2867, %v430
        %v2869 = vpack.c.bf16 %v2858, %v2865
        %v2870 = vpack.c.bf16 %v2868, %v2868
        %2872 = vset.pattern.permute.xlu0 0
        %2873 = vperm.xlu0 %2872, %v2862
        %v2874 = vpop.permute.xlu0 %2873
        %v2877 = vsel %vm1401, %v2860, 0
        %v2880 = vsel %vm1405, %v2870, 0
        %2882 = vmatprep.subr.bf16.mxu0 0
        %2883 = vmatpush1.bf16.msra.mxu0 %v2869
        %2884 = vmatprep.subr.bf16.mxu0 0
        %2885 = vmatpush1.bf16.msra.mxu0 %v2880
        %2886 = vmatprep.subr.bf16.mxu0 0
        %2887 = vmatpush1.bf16.msra.mxu0 0
        %2888 = vmatprep.subr.bf16.mxu0 0
        %2889 = vmatpush1.bf16.msra.mxu0 0
        %2890 = vmatprep.subr.bf16.mxu0 0
        %2891 = vmatpush1.bf16.msra.mxu0 0
        %2892 = vmatprep.subr.bf16.mxu0 0
        %2893 = vmatpush1.bf16.msra.mxu0 0
        %2894 = vmatprep.subr.bf16.mxu0 0
        %2895 = vmatpush1.bf16.msra.mxu0 0
        %2896 = vmatprep.subr.bf16.mxu0 0
        %2897 = vmatpush1.bf16.msra.mxu0 0
        %2898 = vmatprep.subr.bf16.mxu0 0
        %2899 = vmatpush1.bf16.msra.mxu0 0
        %2900 = vmatprep.subr.bf16.mxu0 0
        %2901 = vmatpush1.bf16.msra.mxu0 0
        %2902 = vmatprep.subr.bf16.mxu0 0
        %2903 = vmatpush1.bf16.msra.mxu0 0
        %2904 = vmatprep.subr.bf16.mxu0 0
        %2905 = vmatpush1.bf16.msra.mxu0 0
        %2906 = vmatprep.subr.bf16.mxu0 0
        %2907 = vmatpush1.bf16.msra.mxu0 0
        %2908 = vmatprep.subr.bf16.mxu0 0
        %2909 = vmatpush1.bf16.msra.mxu0 0
        %2910 = vmatprep.subr.bf16.mxu0 0
        %2911 = vmatpush1.bf16.msra.mxu0 0
        %2912 = vmatprep.subr.bf16.mxu0 0
        %2913 = vmatpush1.bf16.msra.mxu0 0
        %2914 = vmatprep.mubr.bf16.mxu0 0
        %2915 = vmatmul.mubr.bf16.gmra.mrb[0].mxu0 %v2877
        %v2916 = vpop.f32.mrb[0].mxu0
        %v2917 = vadd.f32 %v2874, %v2916
        %v2918 = vpop.f32.mrb[0].mxu0
        %v2919 = vpop.f32.mrb[0].mxu0
        %v2920 = vpop.f32.mrb[0].mxu0
        %2921 = vdwg.mxu0
        %v2922 = vmul.f32 %v2917, %v418
        %v2923 = vadd.f32 %v2922, %v2276
        %2924 = vst [vmem:[%s407] sm:$0xff] %v2923
        %s2925 = sand.u32 %s271, 1
        %s2926 = scalar_lea.sflag [#allocation4], %s2925
        %s2927 = sand.u32 %s271, 1
        %s2928 = smul.addr %s2927, 8
        %s2929 = scalar_lea.vmem [#allocation7], %s2928
        // Predicated region
        $region73: #{tpu_custom_call.1} parent=63 // pred_check
          %p2930 = pneg %p281
        $region74: #{tpu_custom_call.1} parent=63 // pred_check_branch
          %2932 = sbr.rel (%p2930) target = $region76
        $region75: #{tpu_custom_call.1} parent=63 // pred_region
          %s2934 = ssub.s32 128, 128
          %2935 = vsyncadd %s2926, %s2934
          %s2936 = smul.addr %s27, 128
          %s2937 = scalar_lea.hbm %s11, %s2936
          %s2939 = sshll.u32 %s2929, 4
          %s2940 = int_to_ptr.vmem [resolvable:$true] %s2939
          %2942 = dma.vmem_to_hbm [thread:$0]  %s2940, 128, %s2937, %s2926
        $region76: #{tpu_custom_call.1} parent=63 // pred_fallthru
          _
      $region64: #{tpu_custom_call.1} parent=5 // pred_fallthru
        _
      %p2943 = scmp.le.s32.totalorder 2, %s22
      // Predicated region
      $region77: #{tpu_custom_call.1} parent=5 // pred_check
        %p2944 = pneg %p2943
      $region78: #{tpu_custom_call.1} parent=5 // pred_check_branch
        %2946 = sbr.rel (%p2944) target = $region80
      $region79: #{tpu_custom_call.1} parent=5 // pred_region
        %s2947 = ssub.s32 %s22, 2
        // Predicated region
        $region81: #{tpu_custom_call.1} parent=79 // pred_check
          %p2948 = pneg %p287
        $region82: #{tpu_custom_call.1} parent=79 // pred_check_branch
          %2950 = sbr.rel (%p2948) target = $region84
        $region83: #{tpu_custom_call.1} parent=79 // pred_region
          %s2951 = sand.u32 %s272, 1
          %s2952 = scalar_lea.sflag [#allocation4], %s2951
          %s2953 = sand.u32 %s272, 1
          %s2954 = smul.addr %s2953, 8
          %s2955 = scalar_lea.vmem [#allocation7], %s2954
          %2956 = dma.done %s2952, 128
        $region84: #{tpu_custom_call.1} parent=79 // pred_fallthru
          _
      $region80: #{tpu_custom_call.1} parent=5 // pred_fallthru
        _
    $region6: #{tpu_custom_call.1} parent=1 // loop_footer
      %s26 = sadd.s32 1, %s22
    $region7: #{tpu_custom_call.1} parent=1 // loop_footer_branch
      %21 = sbr.rel target = $region3
    $region8: #{tpu_custom_call.1} parent=1 // loop_exit
      _
    %2957 = vsyncpa [#allocation3], 1
    %s2958 = scalar_lea.sflag [#allocation3], 1
    %2959 = vsyncpa %s2958, 1
    %2960 = vsyncpa [#allocation6], 1
    %2961 = vsyncpa [#allocation4], 1
    %s2962 = scalar_lea.sflag [#allocation4], 1
    %2963 = vsyncpa %s2962, 1

// kernel: tpu_custom_call.1
$region0: #{tpu_custom_call.1}
  #allocation0 [shape = 'u32[]', space=smem, size = 0x4, offset = 0x4, fixed_abs, tag = 'smem constant byte address 0x4 - core index']
  #allocation1 [shape = 'u32[144,128]{1,0:T(1,128)}', space=vmem, size = 0x12000, scoped, tag = 'internal scratch']
  %s0 = inlined_call_operand.vmem [shape: f32[2,8,128], index: 0, kind: input, shape index: {}]
  %s1 = inlined_call_operand.hbm [shape: bf16[384,256], index: 1, kind: input, shape index: {}]
  %s2 = inlined_call_operand.hbm [shape: bf16[512,128], index: 2, kind: input, shape index: {}]
  %s3 = inlined_call_operand.vmem [shape: bf16[3,8,24], index: 3, kind: input, shape index: {}]
  %s4 = inlined_call_operand.vmem [shape: f32[3,8,1], index: 4, kind: input, shape index: {}]
  %s5 = inlined_call_operand.vmem [shape: f32[3,8,1], index: 5, kind: input, shape index: {}]
  %s6 = inlined_call_operand.vmem [shape: f32[3,8,1], index: 6, kind: input, shape index: {}]
  %s7 = inlined_call_operand.vmem [shape: bf16[3,8,24], index: 7, kind: input, shape index: {}]
  %s8 = inlined_call_operand.vmem [shape: f32[3,8,1], index: 8, kind: input, shape index: {}]
  %s9 = inlined_call_operand.vmem [shape: f32[3,8,1], index: 9, kind: input, shape index: {}]
  %s10 = inlined_call_operand.vmem [shape: f32[3,8,1], index: 10, kind: input, shape index: {}]
  %s11 = inlined_call_operand.hbm [shape: f32[2,8,128], index: 11, kind: output, shape index: {}]
  %s12 = sld [smem:[#allocation0]]
  $region85: #{tpu_custom_call.1} parent=0
    _
  %s14 = ssub.s32 1, %s12
  %s15 = scalar_select 0, %s14, %s12
  $region1: #{tpu_custom_call.1} parent=0
    #allocation2 [shape = 'u8[196608]{0}', space=vmem, size = 0x30000, scoped, tag = 'input window, operand 1, single buffered']
    #allocation3 [shape = 's32[2]{0}', space=sflag, size = 0x8, scoped, tag = 'scoped memory for tpu_custom_call.1']
    #allocation4 [shape = 's32[2]{0}', space=sflag, size = 0x8, scoped, tag = 'scoped memory for tpu_custom_call.1']
    #allocation5 [shape = 'u8[131072]{0}', space=vmem, size = 0x20000, scoped, tag = 'input window, operand 2, single buffered']
    #allocation6 [shape = 's32[1]{0}', space=sflag, size = 0x4, scoped, tag = 'scoped memory for tpu_custom_call.1']
    #allocation7 [shape = 'u8[8192]{0}', space=vmem, size = 0x2000, scoped, tag = 'output window, operand 0']
    %16 = vsyncpa [#allocation3], 0
    %17 = vsyncpa [#allocation6], 0
    %18 = vsyncpa [#allocation4], 0
    %s19 = scalar_lea.sflag [#allocation4], 1
    %20 = vsyncpa %s19, 0
    loop: start=0, step=1, limit=4
    $region2: #{tpu_custom_call.1} parent=1 // loop_pre_header
      _
    $region3: #{tpu_custom_call.1} parent=1 // loop_header
      %s22 = sphi 0, %s26
      %p23 = scmp.ge.s32.totalorder %s22, 4
      %s32 = sphi 0, %s34
      %s35 = sphi 0, %s32
      %s36 = sphi 0, %s35
      %s52 = sphi 0, %s36
      %s56 = sphi 0, %s56
      %s58 = sphi 0, %s56
      %s59 = sphi 0, %s58
      %s73 = sphi 0, %s59
      %s77 = sphi 0, %s77
      %s79 = sphi 0, %s77
      %s80 = sphi 0, %s79
      %s94 = sphi 0, %s80
      %s98 = sphi 0, %s98
      %s100 = sphi 0, %s98
      %s101 = sphi 0, %s100
      %s115 = sphi 0, %s101
      %s119 = sphi 0, %s119
      %s121 = sphi 0, %s119
      %s122 = sphi 0, %s121
      %s136 = sphi 0, %s122
      %s140 = sphi 0, %s140
      %s142 = sphi 0, %s140
      %s143 = sphi 0, %s142
      %s157 = sphi 0, %s143
      %s161 = sphi 0, %s161
      %s163 = sphi 0, %s161
      %s164 = sphi 0, %s163
      %s178 = sphi 0, %s164
      %s182 = sphi 0, %s182
      %s184 = sphi 0, %s182
      %s185 = sphi 0, %s184
      %s199 = sphi 0, %s185
      %s203 = sphi 0, %s203
      %s205 = sphi 0, %s203
      %s206 = sphi 0, %s205
      %s220 = sphi 0, %s206
      %s224 = sphi 0, %s224
      %s226 = sphi 0, %s224
      %s227 = sphi 0, %s226
      %s241 = sphi 0, %s227
      %s245 = sphi 0, %s245
      %s247 = sphi 0, %s245
      %s248 = sphi 0, %s247
      %s262 = sphi 0, %s248
      %s268 = sphi 0, %s270
      %s271 = sphi 0, %s268
      %s272 = sphi 0, %s271
      %s288 = sphi 0, %s272
    $region4: #{tpu_custom_call.1} parent=1 // loop_header_branch
      %25 = sbr.rel (%p23) target = $region8
    $region5: #{tpu_custom_call.1} parent=1 // loop_body
      %s27 = ssub.s32 %s22, 1
      %s28 = ssub.s32 %s22, 2
      %s29 = sadd.s32 %s22, 1
      %s30 = ssub.s32 %s22, %s29
      %p31 = scmp.eq.s32.totalorder %s30, 0
      %s33 = sadd.s32 %s32, 1
      %s34 = scalar_select %p31, %s32, %s33
      %p37 = pneg %p31
      %p38 = scmp.eq.s32.totalorder %s22, 1
      %p39 = por %p37, %p38
      %p40 = scmp.ne.s32.totalorder %s32, %s35
      %p41 = scmp.eq.s32.totalorder %s22, 0
      %p42 = por %p40, %p41
      %p43 = scmp.ne.s32.totalorder %s32, %s35
      %p44 = scmp.eq.s32.totalorder %s27, 1
      %p45 = por %p43, %p44
      %p46 = scmp.ne.s32.totalorder %s35, %s36
      %p47 = scmp.eq.s32.totalorder %s27, 0
      %p48 = por %p46, %p47
      %p49 = scmp.ne.s32.totalorder %s35, %s36
      %p50 = scmp.eq.s32.totalorder %s28, 1
      %p51 = por %p49, %p50
      %p53 = scmp.ne.s32.totalorder %s36, %s52
      %p54 = scmp.eq.s32.totalorder %s28, 0
      %p55 = por %p53, %p54
      %s57 = sadd.s32 %s56, 1
      %p60 = scmp.eq.s32.totalorder %s22, 1
      %p61 = scmp.ne.s32.totalorder %s56, %s58
      %p62 = scmp.eq.s32.totalorder %s22, 0
      %p63 = por %p61, %p62
      %p64 = scmp.ne.s32.totalorder %s56, %s58
      %p65 = scmp.eq.s32.totalorder %s27, 1
      %p66 = por %p64, %p65
      %p67 = scmp.ne.s32.totalorder %s58, %s59
      %p68 = scmp.eq.s32.totalorder %s27, 0
      %p69 = por %p67, %p68
      %p70 = scmp.ne.s32.totalorder %s58, %s59
      %p71 = scmp.eq.s32.totalorder %s28, 1
      %p72 = por %p70, %p71
      %p74 = scmp.ne.s32.totalorder %s59, %s73
      %p75 = scmp.eq.s32.totalorder %s28, 0
      %p76 = por %p74, %p75
      %s78 = sadd.s32 %s77, 1
      %p81 = scmp.eq.s32.totalorder %s22, 1
      %p82 = scmp.ne.s32.totalorder %s77, %s79
      %p83 = scmp.eq.s32.totalorder %s22, 0
      %p84 = por %p82, %p83
      %p85 = scmp.ne.s32.totalorder %s77, %s79
      %p86 = scmp.eq.s32.totalorder %s27, 1
      %p87 = por %p85, %p86
      %p88 = scmp.ne.s32.totalorder %s79, %s80
      %p89 = scmp.eq.s32.totalorder %s27, 0
      %p90 = por %p88, %p89
      %p91 = scmp.ne.s32.totalorder %s79, %s80
      %p92 = scmp.eq.s32.totalorder %s28, 1
      %p93 = por %p91, %p92
      %p95 = scmp.ne.s32.totalorder %s80, %s94
      %p96 = scmp.eq.s32.totalorder %s28, 0
      %p97 = por %p95, %p96
      %s99 = sadd.s32 %s98, 1
      %p102 = scmp.eq.s32.totalorder %s22, 1
      %p103 = scmp.ne.s32.totalorder %s98, %s100
      %p104 = scmp.eq.s32.totalorder %s22, 0
      %p105 = por %p103, %p104
      %p106 = scmp.ne.s32.totalorder %s98, %s100
      %p107 = scmp.eq.s32.totalorder %s27, 1
      %p108 = por %p106, %p107
      %p109 = scmp.ne.s32.totalorder %s100, %s101
      %p110 = scmp.eq.s32.totalorder %s27, 0
      %p111 = por %p109, %p110
      %p112 = scmp.ne.s32.totalorder %s100, %s101
      %p113 = scmp.eq.s32.totalorder %s28, 1
      %p114 = por %p112, %p113
      %p116 = scmp.ne.s32.totalorder %s101, %s115
      %p117 = scmp.eq.s32.totalorder %s28, 0
      %p118 = por %p116, %p117
      %s120 = sadd.s32 %s119, 1
      %p123 = scmp.eq.s32.totalorder %s22, 1
      %p124 = scmp.ne.s32.totalorder %s119, %s121
      %p125 = scmp.eq.s32.totalorder %s22, 0
      %p126 = por %p124, %p125
      %p127 = scmp.ne.s32.totalorder %s119, %s121
      %p128 = scmp.eq.s32.totalorder %s27, 1
      %p129 = por %p127, %p128
      %p130 = scmp.ne.s32.totalorder %s121, %s122
      %p131 = scmp.eq.s32.totalorder %s27, 0
      %p132 = por %p130, %p131
      %p133 = scmp.ne.s32.totalorder %s121, %s122
      %p134 = scmp.eq.s32.totalorder %s28, 1
      %p135 = por %p133, %p134
      %p137 = scmp.ne.s32.totalorder %s122, %s136
      %p138 = scmp.eq.s32.totalorder %s28, 0
      %p139 = por %p137, %p138
      %s141 = sadd.s32 %s140, 1
      %p144 = scmp.eq.s32.totalorder %s22, 1
      %p145 = scmp.ne.s32.totalorder %s140, %s142
      %p146 = scmp.eq.s32.totalorder %s22, 0
      %p147 = por %p145, %p146
      %p148 = scmp.ne.s32.totalorder %s140, %s142
      %p149 = scmp.eq.s32.totalorder %s27, 1
      %p150 = por %p148, %p149
      %p151 = scmp.ne.s32.totalorder %s142, %s143
      %p152 = scmp.eq.s32.totalorder %s27, 0
      %p153 = por %p151, %p152
      %p154 = scmp.ne.s32.totalorder %s142, %s143
      %p155 = scmp.eq.s32.totalorder %s28, 1
      %p156 = por %p154, %p155
      %p158 = scmp.ne.s32.totalorder %s143, %s157
      %p159 = scmp.eq.s32.totalorder %s28, 0
      %p160 = por %p158, %p159
      %s162 = sadd.s32 %s161, 1
      %p165 = scmp.eq.s32.totalorder %s22, 1
      %p166 = scmp.ne.s32.totalorder %s161, %s163
      %p167 = scmp.eq.s32.totalorder %s22, 0
      %p168 = por %p166, %p167
      %p169 = scmp.ne.s32.totalorder %s161, %s163
      %p170 = scmp.eq.s32.totalorder %s27, 1
      %p171 = por %p169, %p170
      %p172 = scmp.ne.s32.totalorder %s163, %s164
      %p173 = scmp.eq.s32.totalorder %s27, 0
      %p174 = por %p172, %p173
      %p175 = scmp.ne.s32.totalorder %s163, %s164
      %p176 = scmp.eq.s32.totalorder %s28, 1
      %p177 = por %p175, %p176
      %p179 = scmp.ne.s32.totalorder %s164, %s178
      %p180 = scmp.eq.s32.totalorder %s28, 0
      %p181 = por %p179, %p180
      %s183 = sadd.s32 %s182, 1
      %p186 = scmp.eq.s32.totalorder %s22, 1
      %p187 = scmp.ne.s32.totalorder %s182, %s184
      %p188 = scmp.eq.s32.totalorder %s22, 0
      %p189 = por %p187, %p188
      %p190 = scmp.ne.s32.totalorder %s182, %s184
      %p191 = scmp.eq.s32.totalorder %s27, 1
      %p192 = por %p190, %p191
      %p193 = scmp.ne.s32.totalorder %s184, %s185
      %p194 = scmp.eq.s32.totalorder %s27, 0
      %p195 = por %p193, %p194
      %p196 = scmp.ne.s32.totalorder %s184, %s185
      %p197 = scmp.eq.s32.totalorder %s28, 1
      %p198 = por %p196, %p197
      %p200 = scmp.ne.s32.totalorder %s185, %s199
      %p201 = scmp.eq.s32.totalorder %s28, 0
      %p202 = por %p200, %p201
      %s204 = sadd.s32 %s203, 1
      %p207 = scmp.eq.s32.totalorder %s22, 1
      %p208 = scmp.ne.s32.totalorder %s203, %s205
      %p209 = scmp.eq.s32.totalorder %s22, 0
      %p210 = por %p208, %p209
      %p211 = scmp.ne.s32.totalorder %s203, %s205
      %p212 = scmp.eq.s32.totalorder %s27, 1
      %p213 = por %p211, %p212
      %p214 = scmp.ne.s32.totalorder %s205, %s206
      %p215 = scmp.eq.s32.totalorder %s27, 0
      %p216 = por %p214, %p215
      %p217 = scmp.ne.s32.totalorder %s205, %s206
      %p218 = scmp.eq.s32.totalorder %s28, 1
      %p219 = por %p217, %p218
      %p221 = scmp.ne.s32.totalorder %s206, %s220
      %p222 = scmp.eq.s32.totalorder %s28, 0
      %p223 = por %p221, %p222
      %s225 = sadd.s32 %s224, 1
      %p228 = scmp.eq.s32.totalorder %s22, 1
      %p229 = scmp.ne.s32.totalorder %s224, %s226
      %p230 = scmp.eq.s32.totalorder %s22, 0
      %p231 = por %p229, %p230
      %p232 = scmp.ne.s32.totalorder %s224, %s226
      %p233 = scmp.eq.s32.totalorder %s27, 1
      %p234 = por %p232, %p233
      %p235 = scmp.ne.s32.totalorder %s226, %s227
      %p236 = scmp.eq.s32.totalorder %s27, 0
      %p237 = por %p235, %p236
      %p238 = scmp.ne.s32.totalorder %s226, %s227
      %p239 = scmp.eq.s32.totalorder %s28, 1
      %p240 = por %p238, %p239
      %p242 = scmp.ne.s32.totalorder %s227, %s241
      %p243 = scmp.eq.s32.totalorder %s28, 0
      %p244 = por %p242, %p243
      %s246 = sadd.s32 %s245, 1
      %p249 = scmp.eq.s32.totalorder %s22, 1
      %p250 = scmp.ne.s32.totalorder %s245, %s247
      %p251 = scmp.eq.s32.totalorder %s22, 0
      %p252 = por %p250, %p251
      %p253 = scmp.ne.s32.totalorder %s245, %s247
      %p254 = scmp.eq.s32.totalorder %s27, 1
      %p255 = por %p253, %p254
      %p256 = scmp.ne.s32.totalorder %s247, %s248
      %p257 = scmp.eq.s32.totalorder %s27, 0
      %p258 = por %p256, %p257
      %p259 = scmp.ne.s32.totalorder %s247, %s248
      %p260 = scmp.eq.s32.totalorder %s28, 1
      %p261 = por %p259, %p260
      %p263 = scmp.ne.s32.totalorder %s248, %s262
      %p264 = scmp.eq.s32.totalorder %s28, 0
      %p265 = por %p263, %p264
      %s266 = ssub.s32 %s22, %s29
      %p267 = scmp.eq.s32.totalorder %s266, 0
      %s269 = sadd.s32 %s268, 1
      %s270 = scalar_select %p267, %s268, %s269
      %p273 = pneg %p267
      %p274 = scmp.eq.s32.totalorder %s22, 1
      %p275 = por %p273, %p274
      %p276 = scmp.ne.s32.totalorder %s268, %s271
      %p277 = scmp.eq.s32.totalorder %s22, 0
      %p278 = por %p276, %p277
      %p279 = scmp.ne.s32.totalorder %s268, %s271
      %p280 = scmp.eq.s32.totalorder %s27, 1
      %p281 = por %p279, %p280
      %p282 = scmp.ne.s32.totalorder %s271, %s272
      %p283 = scmp.eq.s32.totalorder %s27, 0
      %p284 = por %p282, %p283
      %p285 = scmp.ne.s32.totalorder %s271, %s272
      %p286 = scmp.eq.s32.totalorder %s28, 1
      %p287 = por %p285, %p286
      %p289 = scmp.ne.s32.totalorder %s272, %s288
      %p290 = scmp.eq.s32.totalorder %s28, 0
      %p291 = por %p289, %p290
      %p292 = scmp.le.s32.totalorder 1, %s22
      %p293 = scmp.lt.s32.totalorder %s22, 3
      %p294 = pnand %p292, %p293
      %p295 = pneg %p294
      // Predicated region
      $region9: #{tpu_custom_call.1} parent=5 // pred_check
        _
      $region10: #{tpu_custom_call.1} parent=5 // pred_check_branch
        %297 = sbr.rel (%p294) target = $region12
      $region11: #{tpu_custom_call.1} parent=5 // pred_region
        %s298 = ssub.s32 %s22, 1
        // Predicated region
        $region13: #{tpu_custom_call.1} parent=11 // pred_check
          %p299 = pneg %p69
        $region14: #{tpu_custom_call.1} parent=11 // pred_check_branch
          %301 = sbr.rel (%p299) target = $region16
        $region15: #{tpu_custom_call.1} parent=11 // pred_region
          %s303 = ssub.s32 6144, 6144
          %304 = vsyncadd [#allocation3], %s303
          %s305 = sshll.u32 [#allocation2], 4
          %s306 = int_to_ptr.vmem [resolvable:$true] %s305
          %311 = dma.hbm_to_vmem [thread:$0]  %s1, 6144, %s306, [#allocation3], 128, 128, 8
        $region16: #{tpu_custom_call.1} parent=11 // pred_fallthru
          _
        // Predicated region
        $region17: #{tpu_custom_call.1} parent=11 // pred_check
          %p312 = pneg %p90
        $region18: #{tpu_custom_call.1} parent=11 // pred_check_branch
          %314 = sbr.rel (%p312) target = $region20
        $region19: #{tpu_custom_call.1} parent=11 // pred_region
          %s316 = ssub.s32 4096, 4096
          %317 = vsyncadd [#allocation6], %s316
          %s318 = sshll.u32 [#allocation5], 4
          %s319 = int_to_ptr.vmem [resolvable:$true] %s318
          %324 = dma.hbm_to_vmem [thread:$0]  %s2, 4096, %s319, [#allocation6], 64, 64, 4
        $region20: #{tpu_custom_call.1} parent=11 // pred_fallthru
          _
        // Predicated region
        $region21: #{tpu_custom_call.1} parent=11 // pred_check
          %p325 = pneg %p111
        $region22: #{tpu_custom_call.1} parent=11 // pred_check_branch
          %327 = sbr.rel (%p325) target = $region24
        $region23: #{tpu_custom_call.1} parent=11 // pred_region
          _
        $region24: #{tpu_custom_call.1} parent=11 // pred_fallthru
          _
        // Predicated region
        $region25: #{tpu_custom_call.1} parent=11 // pred_check
          %p328 = pneg %p132
        $region26: #{tpu_custom_call.1} parent=11 // pred_check_branch
          %330 = sbr.rel (%p328) target = $region28
        $region27: #{tpu_custom_call.1} parent=11 // pred_region
          _
        $region28: #{tpu_custom_call.1} parent=11 // pred_fallthru
          _
        // Predicated region
        $region29: #{tpu_custom_call.1} parent=11 // pred_check
          %p331 = pneg %p153
        $region30: #{tpu_custom_call.1} parent=11 // pred_check_branch
          %333 = sbr.rel (%p331) target = $region32
        $region31: #{tpu_custom_call.1} parent=11 // pred_region
          _
        $region32: #{tpu_custom_call.1} parent=11 // pred_fallthru
          _
        // Predicated region
        $region33: #{tpu_custom_call.1} parent=11 // pred_check
          %p334 = pneg %p174
        $region34: #{tpu_custom_call.1} parent=11 // pred_check_branch
          %336 = sbr.rel (%p334) target = $region36
        $region35: #{tpu_custom_call.1} parent=11 // pred_region
          _
        $region36: #{tpu_custom_call.1} parent=11 // pred_fallthru
          _
        // Predicated region
        $region37: #{tpu_custom_call.1} parent=11 // pred_check
          %p337 = pneg %p195
        $region38: #{tpu_custom_call.1} parent=11 // pred_check_branch
          %339 = sbr.rel (%p337) target = $region40
        $region39: #{tpu_custom_call.1} parent=11 // pred_region
          _
        $region40: #{tpu_custom_call.1} parent=11 // pred_fallthru
          _
        // Predicated region
        $region41: #{tpu_custom_call.1} parent=11 // pred_check
          %p340 = pneg %p216
        $region42: #{tpu_custom_call.1} parent=11 // pred_check_branch
          %342 = sbr.rel (%p340) target = $region44
        $region43: #{tpu_custom_call.1} parent=11 // pred_region
          _
        $region44: #{tpu_custom_call.1} parent=11 // pred_fallthru
          _
        // Predicated region
        $region45: #{tpu_custom_call.1} parent=11 // pred_check
          %p343 = pneg %p237
        $region46: #{tpu_custom_call.1} parent=11 // pred_check_branch
          %345 = sbr.rel (%p343) target = $region48
        $region47: #{tpu_custom_call.1} parent=11 // pred_region
          _
        $region48: #{tpu_custom_call.1} parent=11 // pred_fallthru
          _
        // Predicated region
        $region49: #{tpu_custom_call.1} parent=11 // pred_check
          %p346 = pneg %p258
        $region50: #{tpu_custom_call.1} parent=11 // pred_check_branch
          %348 = sbr.rel (%p346) target = $region52
        $region51: #{tpu_custom_call.1} parent=11 // pred_region
          _
        $region52: #{tpu_custom_call.1} parent=11 // pred_fallthru
          _
      $region12: #{tpu_custom_call.1} parent=5 // pred_fallthru
        _
      %p349 = scmp.lt.s32.totalorder %s22, 2
      // Predicated region
      $region53: #{tpu_custom_call.1} parent=5 // pred_check
        %p350 = pneg %p349
      $region54: #{tpu_custom_call.1} parent=5 // pred_check_branch
        %352 = sbr.rel (%p350) target = $region56
      $region55: #{tpu_custom_call.1} parent=5 // pred_region
        // Predicated region
        $region57: #{tpu_custom_call.1} parent=55 // pred_check
          %p353 = pneg %p42
        $region58: #{tpu_custom_call.1} parent=55 // pred_check_branch
          %355 = sbr.rel (%p353) target = $region60
        $region59: #{tpu_custom_call.1} parent=55 // pred_region
          %p356 = scmp.lt.s32.totalorder %s22, 1
          %s357 = scalar_select %p356, %s22, 1
          %s358 = smul.addr %s357, 8
          %s359 = scalar_lea.vmem %s0, %s358
        $region60: #{tpu_custom_call.1} parent=55 // pred_fallthru
          _
      $region56: #{tpu_custom_call.1} parent=5 // pred_fallthru
        _
      %p360 = scmp.le.s32.totalorder 1, %s22
      %p361 = scmp.lt.s32.totalorder %s22, 3
      %p362 = pnand %p360, %p361
      %p363 = pneg %p362
      // Predicated region
      $region61: #{tpu_custom_call.1} parent=5 // pred_check
        _
      $region62: #{tpu_custom_call.1} parent=5 // pred_check_branch
        %365 = sbr.rel (%p362) target = $region64
      $region63: #{tpu_custom_call.1} parent=5 // pred_region
        %s366 = ssub.s32 %s22, 1
        // Predicated region
        $region65: #{tpu_custom_call.1} parent=63 // pred_check
          %p367 = pneg %p69
        $region66: #{tpu_custom_call.1} parent=63 // pred_check_branch
          %369 = sbr.rel (%p367) target = $region68
        $region67: #{tpu_custom_call.1} parent=63 // pred_region
          %370 = dma.done [#allocation3], 6144
        $region68: #{tpu_custom_call.1} parent=63 // pred_fallthru
          _
        // Predicated region
        $region69: #{tpu_custom_call.1} parent=63 // pred_check
          %p371 = pneg %p90
        $region70: #{tpu_custom_call.1} parent=63 // pred_check_branch
          %373 = sbr.rel (%p371) target = $region72
        $region71: #{tpu_custom_call.1} parent=63 // pred_region
          %374 = dma.done [#allocation6], 4096
        $region72: #{tpu_custom_call.1} parent=63 // pred_fallthru
          _
        %p375 = scmp.lt.s32.totalorder %s27, 1
        %s376 = scalar_select %p375, %s27, 1
        %s377 = smul.addr %s376, 8
        %s378 = scalar_lea.vmem %s0, %s377
        %p379 = pneg %p48
        %p380 = pneg %p45
        %p381 = pneg %p69
        %p382 = pneg %p66
        %p383 = pneg %p90
        %p384 = pneg %p87
        %p385 = pneg %p111
        %p386 = pneg %p108
        %p387 = pneg %p132
        %p388 = pneg %p129
        %p389 = pneg %p153
        %p390 = pneg %p150
        %p391 = pneg %p174
        %p392 = pneg %p171
        %p393 = pneg %p195
        %p394 = pneg %p192
        %p395 = pneg %p216
        %p396 = pneg %p213
        %p397 = pneg %p237
        %p398 = pneg %p234
        %p399 = pneg %p258
        %p400 = pneg %p255
        %p401 = pneg %p284
        %p402 = pneg %p281
        %s403 = sand.u32 %s271, 1
        %s404 = scalar_lea.sflag [#allocation4], %s403
        %s405 = sand.u32 %s271, 1
        %s406 = smul.addr %s405, 8
        %s407 = scalar_lea.vmem [#allocation7], %s406
        %p408 = scmp.lt.s32.totalorder %s27, 1
        %s409 = scalar_select %p408, %s27, 1
        %s410 = smul.addr %s409, 8
        %s411 = scalar_lea.vmem %s0, %s410
        %v413 = vlaneseq
        %v414 = vand.u32 %v413, 127
        %v415 = vadd.s32 %v414, 128
        %vm416 = vcmp.lt.s32.totalorder %v414, 16
        %v417 = vsel %vm416, 1, 0
        %v418 = vcvt.s32.f32 %v417
        %vm419 = vcmp.lt.s32.totalorder %v414, 32
        %vm420 = vcmp.lt.s32.totalorder %v415, 32
        %v421 = vsel %vm419, 1, 0
        %v422 = vsel %vm420, 1, 0
        %v423 = vcvt.s32.f32 %v421
        %v424 = vcvt.s32.f32 %v422
        %vm425 = vcmp.ge.s32.totalorder %v414, 1
        %v426 = vsel %vm425, 1, 0
        %v427 = vcvt.s32.f32 %v426
        %vm428 = vcmp.lt.s32.totalorder %v414, 15
        %v429 = vsel %vm428, 1, 0
        %v430 = vcvt.s32.f32 %v429
        %vm431 = vcmp.ge.s32.totalorder %v414, 3
        %v432 = vsel %vm431, 1, 0
        %v433 = vcvt.s32.f32 %v432
        %vm434 = vcmp.lt.s32.totalorder %v414, 13
        %v435 = vsel %vm434, 1, 0
        %v436 = vcvt.s32.f32 %v435
        %vm437 = vcmp.ge.s32.totalorder %v414, 5
        %v438 = vsel %vm437, 1, 0
        %v439 = vcvt.s32.f32 %v438
        %vm440 = vcmp.lt.s32.totalorder %v414, 11
        %v441 = vsel %vm440, 1, 0
        %v442 = vcvt.s32.f32 %v441
        %v443 = vld [vmem:[#allocation2] sm:$0xff]
        %v444 = vld [vmem:[#allocation2 + $0x8] sm:$0xff]
        %v445 = vld [vmem:[#allocation2 + $0x10] sm:$0xff]
        %v446 = vld [vmem:[#allocation2 + $0x18] sm:$0xff]
        %v447 = vld [vmem:[#allocation2 + $0x20] sm:$0xff]
        %v448 = vld [vmem:[#allocation2 + $0x28] sm:$0xff]
        %v449 = vld [vmem:[#allocation2 + $0x30] sm:$0xff]
        %v450 = vld [vmem:[#allocation2 + $0x38] sm:$0xff]
        %v451 = vld [vmem:[#allocation2 + $0x40] sm:$0xff]
        %v452 = vld [vmem:[#allocation2 + $0x48] sm:$0xff]
        %v453 = vld [vmem:[#allocation2 + $0x50] sm:$0xff]
        %v454 = vld [vmem:[#allocation2 + $0x58] sm:$0xff]
        %v455 = vld [vmem:[#allocation2 + $0x60] sm:$0xff]
        %v456 = vld [vmem:[#allocation2 + $0x68] sm:$0xff]
        %v457 = vld [vmem:[#allocation2 + $0x70] sm:$0xff]
        %v458 = vld [vmem:[#allocation2 + $0x78] sm:$0xff]
        %v459 = vld [vmem:[#allocation2 + $0x80] sm:$0xff]
        %v460 = vld [vmem:[#allocation2 + $0x88] sm:$0xff]
        %v461 = vld [vmem:[#allocation2 + $0x90] sm:$0xff]
        %v462 = vld [vmem:[#allocation2 + $0x98] sm:$0xff]
        %v463 = vld [vmem:[#allocation2 + $0xa0] sm:$0xff]
        %v464 = vld [vmem:[#allocation2 + $0xa8] sm:$0xff]
        %v465 = vld [vmem:[#allocation2 + $0xb0] sm:$0xff]
        %v466 = vld [vmem:[#allocation2 + $0xb8] sm:$0xff]
        %v467 = vld [vmem:[#allocation2 + $0xc0] sm:$0xff]
        %v468 = vld [vmem:[#allocation2 + $0xc8] sm:$0xff]
        %v469 = vld [vmem:[#allocation2 + $0xd0] sm:$0xff]
        %v470 = vld [vmem:[#allocation2 + $0xd8] sm:$0xff]
        %v471 = vld [vmem:[#allocation2 + $0xe0] sm:$0xff]
        %v472 = vld [vmem:[#allocation2 + $0xe8] sm:$0xff]
        %v473 = vld [vmem:[#allocation2 + $0xf0] sm:$0xff]
        %v474 = vld [vmem:[#allocation2 + $0xf8] sm:$0xff]
        %v475 = vld [vmem:[#allocation2 + $0x100] sm:$0xff]
        %v476 = vld [vmem:[#allocation2 + $0x108] sm:$0xff]
        %v477 = vld [vmem:[#allocation2 + $0x110] sm:$0xff]
        %v478 = vld [vmem:[#allocation2 + $0x118] sm:$0xff]
        %v479 = vld [vmem:[#allocation2 + $0x120] sm:$0xff]
        %v480 = vld [vmem:[#allocation2 + $0x128] sm:$0xff]
        %v481 = vld [vmem:[#allocation2 + $0x130] sm:$0xff]
        %v482 = vld [vmem:[#allocation2 + $0x138] sm:$0xff]
        %v483 = vld [vmem:[#allocation2 + $0x140] sm:$0xff]
        %v484 = vld [vmem:[#allocation2 + $0x148] sm:$0xff]
        %v485 = vld [vmem:[#allocation2 + $0x150] sm:$0xff]
        %v486 = vld [vmem:[#allocation2 + $0x158] sm:$0xff]
        %v487 = vld [vmem:[#allocation2 + $0x160] sm:$0xff]
        %v488 = vld [vmem:[#allocation2 + $0x168] sm:$0xff]
        %v489 = vld [vmem:[#allocation2 + $0x170] sm:$0xff]
        %v490 = vld [vmem:[#allocation2 + $0x178] sm:$0xff]
        %v491 = vld [vmem:[#allocation5] sm:$0xf]
        %v492 = vld [vmem:[#allocation5 + $0x4] sm:$0xf]
        %v493 = vld [vmem:[#allocation5 + $0x8] sm:$0xf]
        %v494 = vld [vmem:[#allocation5 + $0xc] sm:$0xf]
        %v495 = vld [vmem:[#allocation5 + $0x10] sm:$0xf]
        %v496 = vld [vmem:[#allocation5 + $0x14] sm:$0xf]
        %v497 = vld [vmem:[#allocation5 + $0x18] sm:$0xf]
        %v498 = vld [vmem:[#allocation5 + $0x1c] sm:$0xf]
        %v499 = vld [vmem:[#allocation5 + $0x20] sm:$0xf]
        %v500 = vld [vmem:[#allocation5 + $0x24] sm:$0xf]
        %v501 = vld [vmem:[#allocation5 + $0x28] sm:$0xf]
        %v502 = vld [vmem:[#allocation5 + $0x2c] sm:$0xf]
        %v503 = vld [vmem:[#allocation5 + $0x30] sm:$0xf]
        %v504 = vld [vmem:[#allocation5 + $0x34] sm:$0xf]
        %v505 = vld [vmem:[#allocation5 + $0x38] sm:$0xf]
        %v506 = vld [vmem:[#allocation5 + $0x3c] sm:$0xf]
        %v507 = vld [vmem:[#allocation5 + $0x40] sm:$0xf]
        %v508 = vld [vmem:[#allocation5 + $0x44] sm:$0xf]
        %v509 = vld [vmem:[#allocation5 + $0x48] sm:$0xf]
        %v510 = vld [vmem:[#allocation5 + $0x4c] sm:$0xf]
        %v511 = vld [vmem:[#allocation5 + $0x50] sm:$0xf]
        %v512 = vld [vmem:[#allocation5 + $0x54] sm:$0xf]
        %v513 = vld [vmem:[#allocation5 + $0x58] sm:$0xf]
        %v514 = vld [vmem:[#allocation5 + $0x5c] sm:$0xf]
        %v515 = vld [vmem:[#allocation5 + $0x60] sm:$0xf]
        %v516 = vld [vmem:[#allocation5 + $0x64] sm:$0xf]
        %v517 = vld [vmem:[#allocation5 + $0x68] sm:$0xf]
        %v518 = vld [vmem:[#allocation5 + $0x6c] sm:$0xf]
        %v519 = vld [vmem:[#allocation5 + $0x70] sm:$0xf]
        %v520 = vld [vmem:[#allocation5 + $0x74] sm:$0xf]
        %v521 = vld [vmem:[#allocation5 + $0x78] sm:$0xf]
        %v522 = vld [vmem:[#allocation5 + $0x7c] sm:$0xf]
        %v523 = vld [vmem:[#allocation5 + $0x80] sm:$0xf]
        %v524 = vld [vmem:[#allocation5 + $0x84] sm:$0xf]
        %v525 = vld [vmem:[#allocation5 + $0x88] sm:$0xf]
        %v526 = vld [vmem:[#allocation5 + $0x8c] sm:$0xf]
        %v527 = vld [vmem:[#allocation5 + $0x90] sm:$0xf]
        %v528 = vld [vmem:[#allocation5 + $0x94] sm:$0xf]
        %v529 = vld [vmem:[#allocation5 + $0x98] sm:$0xf]
        %v530 = vld [vmem:[#allocation5 + $0x9c] sm:$0xf]
        %v531 = vld [vmem:[#allocation5 + $0xa0] sm:$0xf]
        %v532 = vld [vmem:[#allocation5 + $0xa4] sm:$0xf]
        %v533 = vld [vmem:[#allocation5 + $0xa8] sm:$0xf]
        %v534 = vld [vmem:[#allocation5 + $0xac] sm:$0xf]
        %v535 = vld [vmem:[#allocation5 + $0xb0] sm:$0xf]
        %v536 = vld [vmem:[#allocation5 + $0xb4] sm:$0xf]
        %v537 = vld [vmem:[#allocation5 + $0xb8] sm:$0xf]
        %v538 = vld [vmem:[#allocation5 + $0xbc] sm:$0xf]
        %v539 = vld [vmem:[#allocation5 + $0xc0] sm:$0xf]
        %v540 = vld [vmem:[#allocation5 + $0xc4] sm:$0xf]
        %v541 = vld [vmem:[#allocation5 + $0xc8] sm:$0xf]
        %v542 = vld [vmem:[#allocation5 + $0xcc] sm:$0xf]
        %v543 = vld [vmem:[#allocation5 + $0xd0] sm:$0xf]
        %v544 = vld [vmem:[#allocation5 + $0xd4] sm:$0xf]
        %v545 = vld [vmem:[#allocation5 + $0xd8] sm:$0xf]
        %v546 = vld [vmem:[#allocation5 + $0xdc] sm:$0xf]
        %v547 = vld [vmem:[#allocation5 + $0xe0] sm:$0xf]
        %v548 = vld [vmem:[#allocation5 + $0xe4] sm:$0xf]
        %v549 = vld [vmem:[#allocation5 + $0xe8] sm:$0xf]
        %v550 = vld [vmem:[#allocation5 + $0xec] sm:$0xf]
        %v551 = vld [vmem:[#allocation5 + $0xf0] sm:$0xf]
        %v552 = vld [vmem:[#allocation5 + $0xf4] sm:$0xf]
        %v553 = vld [vmem:[#allocation5 + $0xf8] sm:$0xf]
        %v554 = vld [vmem:[#allocation5 + $0xfc] sm:$0xf]
        %v555 = vld [vmem:[%s411] sm:$0xff]
        %v556 = vld [vmem:[%s5] sm:$0xff]
        %v557 = vld [vmem:[%s6] sm:$0xff]
        %v558 = vld [vmem:[%s9] sm:$0xff]
        %v559 = vld [vmem:[%s10] sm:$0xff]
        %v560 = vpack.c.bf16 0.0, 0.0
        %v561 = vpack.c.bf16 %v555, %v555
        %v610 = vunpack.c.l.b16 %v443
        %v611 = vunpack.c.h.b16 %v443
        %v612 = vunpack.c.l.b16 %v444
        %v613 = vunpack.c.h.b16 %v444
        %v614 = vunpack.c.l.b16 %v445
        %v615 = vunpack.c.h.b16 %v445
        %v616 = vunpack.c.l.b16 %v446
        %v617 = vunpack.c.h.b16 %v446
        %v618 = vunpack.c.l.b16 %v447
        %v619 = vunpack.c.h.b16 %v447
        %v620 = vunpack.c.l.b16 %v448
        %v621 = vunpack.c.h.b16 %v448
        %v622 = vunpack.c.l.b16 %v449
        %v623 = vunpack.c.h.b16 %v449
        %v624 = vunpack.c.l.b16 %v450
        %v625 = vunpack.c.h.b16 %v450
        %v626 = vunpack.c.l.b16 %v451
        %v627 = vunpack.c.h.b16 %v451
        %v628 = vunpack.c.l.b16 %v452
        %v629 = vunpack.c.h.b16 %v452
        %v630 = vunpack.c.l.b16 %v453
        %v631 = vunpack.c.h.b16 %v453
        %v632 = vunpack.c.l.b16 %v454
        %v633 = vunpack.c.h.b16 %v454
        %v634 = vunpack.c.l.b16 %v455
        %v635 = vunpack.c.h.b16 %v455
        %v636 = vunpack.c.l.b16 %v456
        %v637 = vunpack.c.h.b16 %v456
        %v638 = vunpack.c.l.b16 %v457
        %v639 = vunpack.c.h.b16 %v457
        %v640 = vunpack.c.l.b16 %v458
        %v641 = vunpack.c.h.b16 %v458
        %v642 = vunpack.c.l.b16 %v459
        %v643 = vunpack.c.h.b16 %v459
        %v644 = vunpack.c.l.b16 %v460
        %v645 = vunpack.c.h.b16 %v460
        %v646 = vunpack.c.l.b16 %v461
        %v647 = vunpack.c.h.b16 %v461
        %v648 = vunpack.c.l.b16 %v462
        %v649 = vunpack.c.h.b16 %v462
        %v650 = vunpack.c.l.b16 %v463
        %v651 = vunpack.c.h.b16 %v463
        %v652 = vunpack.c.l.b16 %v464
        %v653 = vunpack.c.h.b16 %v464
        %v654 = vunpack.c.l.b16 %v465
        %v655 = vunpack.c.h.b16 %v465
        %v656 = vunpack.c.l.b16 %v466
        %v657 = vunpack.c.h.b16 %v466
        %v658 = vunpack.c.l.b16 %v467
        %v659 = vunpack.c.h.b16 %v467
        %v660 = vunpack.c.l.b16 %v468
        %v661 = vunpack.c.h.b16 %v468
        %v662 = vunpack.c.l.b16 %v469
        %v663 = vunpack.c.h.b16 %v469
        %v664 = vunpack.c.l.b16 %v470
        %v665 = vunpack.c.h.b16 %v470
        %v666 = vunpack.c.l.b16 %v471
        %v667 = vunpack.c.h.b16 %v471
        %v668 = vunpack.c.l.b16 %v472
        %v669 = vunpack.c.h.b16 %v472
        %v670 = vunpack.c.l.b16 %v473
        %v671 = vunpack.c.h.b16 %v473
        %v672 = vunpack.c.l.b16 %v474
        %v673 = vunpack.c.h.b16 %v474
        %v674 = vunpack.c.l.b16 %v475
        %v675 = vunpack.c.h.b16 %v475
        %v676 = vunpack.c.l.b16 %v476
        %v677 = vunpack.c.h.b16 %v476
        %v678 = vunpack.c.l.b16 %v477
        %v679 = vunpack.c.h.b16 %v477
        %v680 = vunpack.c.l.b16 %v478
        %v681 = vunpack.c.h.b16 %v478
        %v682 = vunpack.c.l.b16 %v479
        %v683 = vunpack.c.h.b16 %v479
        %v684 = vunpack.c.l.b16 %v480
        %v685 = vunpack.c.h.b16 %v480
        %v686 = vunpack.c.l.b16 %v481
        %v687 = vunpack.c.h.b16 %v481
        %v688 = vunpack.c.l.b16 %v482
        %v689 = vunpack.c.h.b16 %v482
        %v690 = vunpack.c.l.b16 %v483
        %v691 = vunpack.c.h.b16 %v483
        %v692 = vunpack.c.l.b16 %v484
        %v693 = vunpack.c.h.b16 %v484
        %v694 = vunpack.c.l.b16 %v485
        %v695 = vunpack.c.h.b16 %v485
        %v696 = vunpack.c.l.b16 %v486
        %v697 = vunpack.c.h.b16 %v486
        %v698 = vunpack.c.l.b16 %v487
        %v699 = vunpack.c.h.b16 %v487
        %v700 = vunpack.c.l.b16 %v488
        %v701 = vunpack.c.h.b16 %v488
        %v702 = vunpack.c.l.b16 %v489
        %v703 = vunpack.c.h.b16 %v489
        %v704 = vunpack.c.l.b16 %v490
        %v705 = vunpack.c.h.b16 %v490
        %v706 = vpack.c.b16 %v612, %v610
        %v707 = vpack.c.b16 %v613, %v611
        %v708 = vpack.c.b16 %v616, %v614
        %v709 = vpack.c.b16 %v617, %v615
        %v710 = vpack.c.b16 %v620, %v618
        %v711 = vpack.c.b16 %v621, %v619
        %v712 = vpack.c.b16 %v624, %v622
        %v713 = vpack.c.b16 %v625, %v623
        %v714 = vpack.c.b16 %v628, %v626
        %v715 = vpack.c.b16 %v629, %v627
        %v716 = vpack.c.b16 %v632, %v630
        %v717 = vpack.c.b16 %v633, %v631
        %v718 = vpack.c.b16 %v636, %v634
        %v719 = vpack.c.b16 %v637, %v635
        %v720 = vpack.c.b16 %v640, %v638
        %v721 = vpack.c.b16 %v641, %v639
        %v722 = vpack.c.b16 %v644, %v642
        %v723 = vpack.c.b16 %v645, %v643
        %v724 = vpack.c.b16 %v648, %v646
        %v725 = vpack.c.b16 %v649, %v647
        %v726 = vpack.c.b16 %v652, %v650
        %v727 = vpack.c.b16 %v653, %v651
        %v728 = vpack.c.b16 %v656, %v654
        %v729 = vpack.c.b16 %v657, %v655
        %v730 = vpack.c.b16 %v660, %v658
        %v731 = vpack.c.b16 %v661, %v659
        %v732 = vpack.c.b16 %v664, %v662
        %v733 = vpack.c.b16 %v665, %v663
        %v734 = vpack.c.b16 %v668, %v666
        %v735 = vpack.c.b16 %v669, %v667
        %v736 = vpack.c.b16 %v672, %v670
        %v737 = vpack.c.b16 %v673, %v671
        %v738 = vpack.c.b16 %v676, %v674
        %v739 = vpack.c.b16 %v677, %v675
        %v740 = vpack.c.b16 %v680, %v678
        %v741 = vpack.c.b16 %v681, %v679
        %v742 = vpack.c.b16 %v684, %v682
        %v743 = vpack.c.b16 %v685, %v683
        %v744 = vpack.c.b16 %v688, %v686
        %v745 = vpack.c.b16 %v689, %v687
        %v746 = vpack.c.b16 %v692, %v690
        %v747 = vpack.c.b16 %v693, %v691
        %v748 = vpack.c.b16 %v696, %v694
        %v749 = vpack.c.b16 %v697, %v695
        %v750 = vpack.c.b16 %v700, %v698
        %v751 = vpack.c.b16 %v701, %v699
        %v752 = vpack.c.b16 %v704, %v702
        %v753 = vpack.c.b16 %v705, %v703
        %802 = vmatprep.subr.bf16.mxu0 %v707
        %803 = vmatpush1.bf16.msra.mxu0 %v706
        %804 = vmatprep.subr.bf16.mxu0 %v709
        %805 = vmatpush1.bf16.msra.mxu0 %v708
        %806 = vmatprep.subr.bf16.mxu0 %v711
        %807 = vmatpush1.bf16.msra.mxu0 %v710
        %808 = vmatprep.subr.bf16.mxu0 %v713
        %809 = vmatpush1.bf16.msra.mxu0 %v712
        %810 = vmatprep.subr.bf16.mxu0 %v715
        %811 = vmatpush1.bf16.msra.mxu0 %v714
        %812 = vmatprep.subr.bf16.mxu0 %v717
        %813 = vmatpush1.bf16.msra.mxu0 %v716
        %814 = vmatprep.subr.bf16.mxu0 %v719
        %815 = vmatpush1.bf16.msra.mxu0 %v718
        %816 = vmatprep.subr.bf16.mxu0 %v721
        %817 = vmatpush1.bf16.msra.mxu0 %v720
        %818 = vmatprep.subr.bf16.mxu0 %v723
        %819 = vmatpush1.bf16.msra.mxu0 %v722
        %820 = vmatprep.subr.bf16.mxu0 %v725
        %821 = vmatpush1.bf16.msra.mxu0 %v724
        %822 = vmatprep.subr.bf16.mxu0 %v727
        %823 = vmatpush1.bf16.msra.mxu0 %v726
        %824 = vmatprep.subr.bf16.mxu0 %v729
        %825 = vmatpush1.bf16.msra.mxu0 %v728
        %826 = vmatprep.subr.bf16.mxu0 %v731
        %827 = vmatpush1.bf16.msra.mxu0 %v730
        %828 = vmatprep.subr.bf16.mxu0 %v733
        %829 = vmatpush1.bf16.msra.mxu0 %v732
        %830 = vmatprep.subr.bf16.mxu0 %v735
        %831 = vmatpush1.bf16.msra.mxu0 %v734
        %832 = vmatprep.subr.bf16.mxu0 %v737
        %833 = vmatpush1.bf16.msra.mxu0 %v736
        %834 = vmatprep.mubr.bf16.mxu0 %v561
        %835 = vmatmul.mubr.bf16.gmra.mrb[0].mxu0 %v560
        %v836 = vpop.f32.mrb[0].mxu0
        %v837 = vadd.f32 0.0, %v836
        %v838 = vpop.f32.mrb[0].mxu0
        %v839 = vadd.f32 0.0, %v838
        %v840 = vpop.f32.mrb[0].mxu0
        %v841 = vpop.f32.mrb[0].mxu0
        %842 = vdwg.mxu0
        %843 = vmatprep.subr.bf16.mxu0 %v739
        %844 = vmatpush1.bf16.msra.mxu0 %v738
        %845 = vmatprep.subr.bf16.mxu0 %v741
        %846 = vmatpush1.bf16.msra.mxu0 %v740
        %847 = vmatprep.subr.bf16.mxu0 %v743
        %848 = vmatpush1.bf16.msra.mxu0 %v742
        %849 = vmatprep.subr.bf16.mxu0 %v745
        %850 = vmatpush1.bf16.msra.mxu0 %v744
        %851 = vmatprep.subr.bf16.mxu0 %v747
        %852 = vmatpush1.bf16.msra.mxu0 %v746
        %853 = vmatprep.subr.bf16.mxu0 %v749
        %854 = vmatpush1.bf16.msra.mxu0 %v748
        %855 = vmatprep.subr.bf16.mxu0 %v751
        %856 = vmatpush1.bf16.msra.mxu0 %v750
        %857 = vmatprep.subr.bf16.mxu0 %v753
        %858 = vmatpush1.bf16.msra.mxu0 %v752
        %859 = vmatprep.subr.bf16.mxu0 0
        %860 = vmatpush1.bf16.msra.mxu0 0
        %861 = vmatprep.subr.bf16.mxu0 0
        %862 = vmatpush1.bf16.msra.mxu0 0
        %863 = vmatprep.subr.bf16.mxu0 0
        %864 = vmatpush1.bf16.msra.mxu0 0
        %865 = vmatprep.subr.bf16.mxu0 0
        %866 = vmatpush1.bf16.msra.mxu0 0
        %867 = vmatprep.subr.bf16.mxu0 0
        %868 = vmatpush1.bf16.msra.mxu0 0
        %869 = vmatprep.subr.bf16.mxu0 0
        %870 = vmatpush1.bf16.msra.mxu0 0
        %871 = vmatprep.subr.bf16.mxu0 0
        %872 = vmatpush1.bf16.msra.mxu0 0
        %873 = vmatprep.subr.bf16.mxu0 0
        %874 = vmatpush1.bf16.msra.mxu0 0
        %875 = vmatprep.mubr.bf16.mxu0 0
        %876 = vmatmul.mubr.bf16.gmra.mrb[0].mxu0 %v560
        %v877 = vpop.f32.mrb[0].mxu0
        %v878 = vadd.f32 %v837, %v877
        %v879 = vpop.f32.mrb[0].mxu0
        %v880 = vadd.f32 %v839, %v879
        %v881 = vpop.f32.mrb[0].mxu0
        %v882 = vpop.f32.mrb[0].mxu0
        %883 = vdwg.mxu0
        %885 = vset.pattern.permute.xlu0 0
        %886 = vperm.xlu0 %885, %v556
        %v887 = vpop.permute.xlu0 %886
        %v889 = vmul.f32 %v887, %v878
        %v890 = vmul.f32 %v887, %v880
        %v891 = vand.u32 2147483647, %v889
        %vm892 = vcmp.le.f32.partialorder %v891, 0.7853982
        %vm893 = vcmp.lt.s32.totalorder %v889, 0
        %v894 = vand.u32 %v889, 2139095040
        %v895 = vshrl.u32 %v894, 23
        %v896 = vsub.s32 %v895, 127
        %v897 = vand.u32 2147483647, %v889
        %v898 = vand.u32 %v897, 8388607
        %v899 = vor.u32 %v898, 8388608
        %v900 = vsub.s32 0, %v899
        %v901 = vadd.s32 %v896, 1
        %vm902 = vcmp.gt.s32.totalorder %v901, 0
        %v903 = vsel %vm902, %v901, 0
        %v904 = vshrl.u32 %v903, 5
        %v905 = vand.u32 %v903, 31
        %v906 = vsub.s32 32, %v905
        %v907 = vshrl.u32 683565275, %v906
        %v908 = vshll.u32 683565275, %v905
        %v909 = vshrl.u32 2475754826, %v906
        %v910 = vor.u32 %v908, %v909
        %v911 = vshll.u32 2475754826, %v905
        %v912 = vshrl.u32 2131351028, %v906
        %v913 = vor.u32 %v911, %v912
        %v914 = vshll.u32 2131351028, %v905
        %v915 = vshrl.u32 2102212464, %v906
        %v916 = vor.u32 %v914, %v915
        %v917 = vshll.u32 2102212464, %v905
        %v918 = vshrl.u32 920167782, %v906
        %v919 = vor.u32 %v917, %v918
        %v920 = vshll.u32 920167782, %v905
        %v921 = vshrl.u32 1326507024, %v906
        %v922 = vor.u32 %v920, %v921
        %vm923 = vcmp.lt.s32.totalorder %v904, 1
        %vm924 = vcmp.lt.s32.totalorder %v904, 2
        %vm925 = vcmp.lt.s32.totalorder %v904, 3
        %vm926 = vcmp.lt.s32.totalorder %v904, 4
        %v927 = vsel %vm923, %v907, %v910
        %v928 = vsel %vm926, %v916, 2102212464
        %v929 = vsel %vm925, %v913, %v928
        %v930 = vsel %vm924, %v927, %v929
        %v931 = vsel %vm923, %v910, %v913
        %v932 = vsel %vm926, %v919, 920167782
        %v933 = vsel %vm925, %v916, %v932
        %v934 = vsel %vm924, %v931, %v933
        %v935 = vsel %vm923, %v913, %v916
        %v936 = vsel %vm926, %v922, 1326507024
        %v937 = vsel %vm925, %v919, %v936
        %v938 = vsel %vm924, %v935, %v937
        %v939 = vshll.u32 %v899, 8
        %v940 = vmul.u32.u64.compose %v939, %v938
        %v941 = vextract.low.u32 %v940
        %v942 = vextract.high.u32 %v940
        %v943 = vmul.u32.u64.compose %v939, %v934
        %v944 = vextract.low.u32 %v943
        %v945 = vextract.high.u32 %v943
        %v946 = vmul.u32 %v939, %v930
        %v947 = vadd.s32 %v942, %v944
        %vm948 = vc.u32 %v942, %v944
        %v949 = vadd.s32 %v945, 1
        %v950 = vsel %vm948, %v949, %v945
        %v951 = vadd.s32 %v946, %v950
        %v952 = vadd.s32 %v951, 536870912
        %v953 = vshrl.u32 %v952, 30
        %v954 = vshll.u32 %v953, 30
        %v955 = vsub.s32 %v951, %v954
        %vm956 = vcmp.lt.s32.totalorder %v955, 0
        %v957 = vsub.s32 0, %v955
        %v958 = vsel %vm956, %v957, %v955
        %v959 = vclz %v958
        %v960 = vsub.s32 %v959, 2
        %vm961 = vcmp.gt.s32.totalorder 0, %v960
        %v962 = vsel %vm961, 0, %v960
        %v963 = vsub.s32 32, %v962
        %v964 = vshll.u32 %v955, %v962
        %v965 = vshrl.u32 %v947, %v963
        %v966 = vor.u32 %v964, %v965
        %v967 = vsub.s32 4294967266, %v962
        %v968 = vadd.s32 %v967, 127
        %v969 = vshll.u32 %v968, 23
        %v970 = vor.u32 4788187, %v969
        %v971 = vand.u32 2147483647, %v970
        %v973 = vcvt.s32.f32 %v966
        %v974 = vmul.f32 %v973, %v971
        %v975 = vxor.u32 %v974, 2147483648
        %v976 = vsel %vm893, %v975, %v974
        %v977 = vsub.s32 4, %v953
        %v978 = vsel %vm893, %v977, %v953
        %v979 = vsel %vm892, %v889, %v976
        %v980 = vsel %vm892, 0, %v978
        %v981 = vcosq.f32.pop %v979
        %v982 = vsinq.f32.pop %v979
        %vm983 = vweird.f32 %v889
        %v984 = vadd.s32 %v980, 3
        %v985 = vand.u32 %v984, 3
        %vm986 = vcmp.lt.s32.totalorder %v985, 2
        %vm987 = vcmp.eq.s32.totalorder %v985, 0
        %v988 = vxor.u32 %v982, 2147483648
        %v989 = vsel %vm987, %v981, %v988
        %vm990 = vcmp.eq.s32.totalorder %v985, 2
        %v991 = vxor.u32 %v981, 2147483648
        %v992 = vsel %vm990, %v991, %v982
        %v993 = vsel %vm986, %v989, %v992
        %v994 = vsel %vm983, nan, %v993
        %v995 = vand.u32 2147483647, %v890
        %vm996 = vcmp.le.f32.partialorder %v995, 0.7853982
        %vm997 = vcmp.lt.s32.totalorder %v890, 0
        %v998 = vand.u32 %v890, 2139095040
        %v999 = vshrl.u32 %v998, 23
        %v1000 = vsub.s32 %v999, 127
        %v1001 = vand.u32 2147483647, %v890
        %v1002 = vand.u32 %v1001, 8388607
        %v1003 = vor.u32 %v1002, 8388608
        %v1004 = vsub.s32 0, %v1003
        %v1005 = vadd.s32 %v1000, 1
        %vm1006 = vcmp.gt.s32.totalorder %v1005, 0
        %v1007 = vsel %vm1006, %v1005, 0
        %v1008 = vshrl.u32 %v1007, 5
        %v1009 = vand.u32 %v1007, 31
        %v1010 = vsub.s32 32, %v1009
        %v1011 = vshrl.u32 683565275, %v1010
        %v1012 = vshll.u32 683565275, %v1009
        %v1013 = vshrl.u32 2475754826, %v1010
        %v1014 = vor.u32 %v1012, %v1013
        %v1015 = vshll.u32 2475754826, %v1009
        %v1016 = vshrl.u32 2131351028, %v1010
        %v1017 = vor.u32 %v1015, %v1016
        %v1018 = vshll.u32 2131351028, %v1009
        %v1019 = vshrl.u32 2102212464, %v1010
        %v1020 = vor.u32 %v1018, %v1019
        %v1021 = vshll.u32 2102212464, %v1009
        %v1022 = vshrl.u32 920167782, %v1010
        %v1023 = vor.u32 %v1021, %v1022
        %v1024 = vshll.u32 920167782, %v1009
        %v1025 = vshrl.u32 1326507024, %v1010
        %v1026 = vor.u32 %v1024, %v1025
        %vm1027 = vcmp.lt.s32.totalorder %v1008, 1
        %vm1028 = vcmp.lt.s32.totalorder %v1008, 2
        %vm1029 = vcmp.lt.s32.totalorder %v1008, 3
        %vm1030 = vcmp.lt.s32.totalorder %v1008, 4
        %v1031 = vsel %vm1027, %v1011, %v1014
        %v1032 = vsel %vm1030, %v1020, 2102212464
        %v1033 = vsel %vm1029, %v1017, %v1032
        %v1034 = vsel %vm1028, %v1031, %v1033
        %v1035 = vsel %vm1027, %v1014, %v1017
        %v1036 = vsel %vm1030, %v1023, 920167782
        %v1037 = vsel %vm1029, %v1020, %v1036
        %v1038 = vsel %vm1028, %v1035, %v1037
        %v1039 = vsel %vm1027, %v1017, %v1020
        %v1040 = vsel %vm1030, %v1026, 1326507024
        %v1041 = vsel %vm1029, %v1023, %v1040
        %v1042 = vsel %vm1028, %v1039, %v1041
        %v1043 = vshll.u32 %v1003, 8
        %v1044 = vmul.u32.u64.compose %v1043, %v1042
        %v1045 = vextract.low.u32 %v1044
        %v1046 = vextract.high.u32 %v1044
        %v1047 = vmul.u32.u64.compose %v1043, %v1038
        %v1048 = vextract.low.u32 %v1047
        %v1049 = vextract.high.u32 %v1047
        %v1050 = vmul.u32 %v1043, %v1034
        %v1051 = vadd.s32 %v1046, %v1048
        %vm1052 = vc.u32 %v1046, %v1048
        %v1053 = vadd.s32 %v1049, 1
        %v1054 = vsel %vm1052, %v1053, %v1049
        %v1055 = vadd.s32 %v1050, %v1054
        %v1056 = vadd.s32 %v1055, 536870912
        %v1057 = vshrl.u32 %v1056, 30
        %v1058 = vshll.u32 %v1057, 30
        %v1059 = vsub.s32 %v1055, %v1058
        %vm1060 = vcmp.lt.s32.totalorder %v1059, 0
        %v1061 = vsub.s32 0, %v1059
        %v1062 = vsel %vm1060, %v1061, %v1059
        %v1063 = vclz %v1062
        %v1064 = vsub.s32 %v1063, 2
        %vm1065 = vcmp.gt.s32.totalorder 0, %v1064
        %v1066 = vsel %vm1065, 0, %v1064
        %v1067 = vsub.s32 32, %v1066
        %v1068 = vshll.u32 %v1059, %v1066
        %v1069 = vshrl.u32 %v1051, %v1067
        %v1070 = vor.u32 %v1068, %v1069
        %v1071 = vsub.s32 4294967266, %v1066
        %v1072 = vadd.s32 %v1071, 127
        %v1073 = vshll.u32 %v1072, 23
        %v1074 = vor.u32 4788187, %v1073
        %v1075 = vand.u32 2147483647, %v1074
        %v1077 = vcvt.s32.f32 %v1070
        %v1078 = vmul.f32 %v1077, %v1075
        %v1079 = vxor.u32 %v1078, 2147483648
        %v1080 = vsel %vm997, %v1079, %v1078
        %v1081 = vsub.s32 4, %v1057
        %v1082 = vsel %vm997, %v1081, %v1057
        %v1083 = vsel %vm996, %v890, %v1080
        %v1084 = vsel %vm996, 0, %v1082
        %v1085 = vcosq.f32.pop %v1083
        %v1086 = vsinq.f32.pop %v1083
        %vm1087 = vweird.f32 %v890
        %v1088 = vadd.s32 %v1084, 3
        %v1089 = vand.u32 %v1088, 3
        %vm1090 = vcmp.lt.s32.totalorder %v1089, 2
        %vm1091 = vcmp.eq.s32.totalorder %v1089, 0
        %v1092 = vxor.u32 %v1086, 2147483648
        %v1093 = vsel %vm1091, %v1085, %v1092
        %vm1094 = vcmp.eq.s32.totalorder %v1089, 2
        %v1095 = vxor.u32 %v1085, 2147483648
        %v1096 = vsel %vm1094, %v1095, %v1086
        %v1097 = vsel %vm1090, %v1093, %v1096
        %v1098 = vsel %vm1087, nan, %v1097
        %v1099 = vmul.f32 %v994, %v994
        %v1100 = vmul.f32 %v1098, %v1098
        %1102 = vset.pattern.permute.xlu0 0
        %1103 = vperm.xlu0 %1102, %v557
        %v1104 = vpop.permute.xlu0 %1103
        %v1106 = vmul.f32 %v1104, %v1099
        %v1107 = vmul.f32 %v1104, %v1100
        %v1108 = vadd.f32 %v878, %v1106
        %v1109 = vadd.f32 %v880, %v1107
        %v1110 = vmul.f32 %v1108, %v423
        %v1111 = vmul.f32 %v1109, %v424
        %v1112 = vpack.c.bf16 %v1110, %v1110
        %v1113 = vpack.c.bf16 %v1111, %v1111
        %v1178 = vunpack.c.l.b16 %v491
        %v1179 = vunpack.c.l.b16 %v492
        %v1180 = vunpack.c.l.b16 %v493
        %v1181 = vunpack.c.l.b16 %v494
        %v1182 = vunpack.c.l.b16 %v495
        %v1183 = vunpack.c.l.b16 %v496
        %v1184 = vunpack.c.l.b16 %v497
        %v1185 = vunpack.c.l.b16 %v498
        %v1186 = vunpack.c.l.b16 %v499
        %v1187 = vunpack.c.l.b16 %v500
        %v1188 = vunpack.c.l.b16 %v501
        %v1189 = vunpack.c.l.b16 %v502
        %v1190 = vunpack.c.l.b16 %v503
        %v1191 = vunpack.c.l.b16 %v504
        %v1192 = vunpack.c.l.b16 %v505
        %v1193 = vunpack.c.l.b16 %v506
        %v1194 = vunpack.c.l.b16 %v507
        %v1195 = vunpack.c.l.b16 %v508
        %v1196 = vunpack.c.l.b16 %v509
        %v1197 = vunpack.c.l.b16 %v510
        %v1198 = vunpack.c.l.b16 %v511
        %v1199 = vunpack.c.l.b16 %v512
        %v1200 = vunpack.c.l.b16 %v513
        %v1201 = vunpack.c.l.b16 %v514
        %v1202 = vunpack.c.l.b16 %v515
        %v1203 = vunpack.c.l.b16 %v516
        %v1204 = vunpack.c.l.b16 %v517
        %v1205 = vunpack.c.l.b16 %v518
        %v1206 = vunpack.c.l.b16 %v519
        %v1207 = vunpack.c.l.b16 %v520
        %v1208 = vunpack.c.l.b16 %v521
        %v1209 = vunpack.c.l.b16 %v522
        %v1210 = vunpack.c.l.b16 %v523
        %v1211 = vunpack.c.l.b16 %v524
        %v1212 = vunpack.c.l.b16 %v525
        %v1213 = vunpack.c.l.b16 %v526
        %v1214 = vunpack.c.l.b16 %v527
        %v1215 = vunpack.c.l.b16 %v528
        %v1216 = vunpack.c.l.b16 %v529
        %v1217 = vunpack.c.l.b16 %v530
        %v1218 = vunpack.c.l.b16 %v531
        %v1219 = vunpack.c.l.b16 %v532
        %v1220 = vunpack.c.l.b16 %v533
        %v1221 = vunpack.c.l.b16 %v534
        %v1222 = vunpack.c.l.b16 %v535
        %v1223 = vunpack.c.l.b16 %v536
        %v1224 = vunpack.c.l.b16 %v537
        %v1225 = vunpack.c.l.b16 %v538
        %v1226 = vunpack.c.l.b16 %v539
        %v1227 = vunpack.c.l.b16 %v540
        %v1228 = vunpack.c.l.b16 %v541
        %v1229 = vunpack.c.l.b16 %v542
        %v1230 = vunpack.c.l.b16 %v543
        %v1231 = vunpack.c.l.b16 %v544
        %v1232 = vunpack.c.l.b16 %v545
        %v1233 = vunpack.c.l.b16 %v546
        %v1234 = vunpack.c.l.b16 %v547
        %v1235 = vunpack.c.l.b16 %v548
        %v1236 = vunpack.c.l.b16 %v549
        %v1237 = vunpack.c.l.b16 %v550
        %v1238 = vunpack.c.l.b16 %v551
        %v1239 = vunpack.c.l.b16 %v552
        %v1240 = vunpack.c.l.b16 %v553
        %v1241 = vunpack.c.l.b16 %v554
        %v1242 = vpack.c.b16 %v1179, %v1178
        %v1243 = vpack.c.b16 %v1181, %v1180
        %v1244 = vpack.c.b16 %v1183, %v1182
        %v1245 = vpack.c.b16 %v1185, %v1184
        %v1246 = vpack.c.b16 %v1187, %v1186
        %v1247 = vpack.c.b16 %v1189, %v1188
        %v1248 = vpack.c.b16 %v1191, %v1190
        %v1249 = vpack.c.b16 %v1193, %v1192
        %v1250 = vpack.c.b16 %v1195, %v1194
        %v1251 = vpack.c.b16 %v1197, %v1196
        %v1252 = vpack.c.b16 %v1199, %v1198
        %v1253 = vpack.c.b16 %v1201, %v1200
        %v1254 = vpack.c.b16 %v1203, %v1202
        %v1255 = vpack.c.b16 %v1205, %v1204
        %v1256 = vpack.c.b16 %v1207, %v1206
        %v1257 = vpack.c.b16 %v1209, %v1208
        %v1258 = vpack.c.b16 %v1211, %v1210
        %v1259 = vpack.c.b16 %v1213, %v1212
        %v1260 = vpack.c.b16 %v1215, %v1214
        %v1261 = vpack.c.b16 %v1217, %v1216
        %v1262 = vpack.c.b16 %v1219, %v1218
        %v1263 = vpack.c.b16 %v1221, %v1220
        %v1264 = vpack.c.b16 %v1223, %v1222
        %v1265 = vpack.c.b16 %v1225, %v1224
        %v1266 = vpack.c.b16 %v1227, %v1226
        %v1267 = vpack.c.b16 %v1229, %v1228
        %v1268 = vpack.c.b16 %v1231, %v1230
        %v1269 = vpack.c.b16 %v1233, %v1232
        %v1270 = vpack.c.b16 %v1235, %v1234
        %v1271 = vpack.c.b16 %v1237, %v1236
        %v1272 = vpack.c.b16 %v1239, %v1238
        %v1273 = vpack.c.b16 %v1241, %v1240
        %1306 = vmatprep.subr.bf16.mxu0 0
        %1307 = vmatpush1.bf16.msra.mxu0 %v1242
        %1308 = vmatprep.subr.bf16.mxu0 0
        %1309 = vmatpush1.bf16.msra.mxu0 %v1243
        %1310 = vmatprep.subr.bf16.mxu0 0
        %1311 = vmatpush1.bf16.msra.mxu0 %v1244
        %1312 = vmatprep.subr.bf16.mxu0 0
        %1313 = vmatpush1.bf16.msra.mxu0 %v1245
        %1314 = vmatprep.subr.bf16.mxu0 0
        %1315 = vmatpush1.bf16.msra.mxu0 %v1246
        %1316 = vmatprep.subr.bf16.mxu0 0
        %1317 = vmatpush1.bf16.msra.mxu0 %v1247
        %1318 = vmatprep.subr.bf16.mxu0 0
        %1319 = vmatpush1.bf16.msra.mxu0 %v1248
        %1320 = vmatprep.subr.bf16.mxu0 0
        %1321 = vmatpush1.bf16.msra.mxu0 %v1249
        %1322 = vmatprep.subr.bf16.mxu0 0
        %1323 = vmatpush1.bf16.msra.mxu0 %v1250
        %1324 = vmatprep.subr.bf16.mxu0 0
        %1325 = vmatpush1.bf16.msra.mxu0 %v1251
        %1326 = vmatprep.subr.bf16.mxu0 0
        %1327 = vmatpush1.bf16.msra.mxu0 %v1252
        %1328 = vmatprep.subr.bf16.mxu0 0
        %1329 = vmatpush1.bf16.msra.mxu0 %v1253
        %1330 = vmatprep.subr.bf16.mxu0 0
        %1331 = vmatpush1.bf16.msra.mxu0 %v1254
        %1332 = vmatprep.subr.bf16.mxu0 0
        %1333 = vmatpush1.bf16.msra.mxu0 %v1255
        %1334 = vmatprep.subr.bf16.mxu0 0
        %1335 = vmatpush1.bf16.msra.mxu0 %v1256
        %1336 = vmatprep.subr.bf16.mxu0 0
        %1337 = vmatpush1.bf16.msra.mxu0 %v1257
        %1338 = vmatprep.mubr.bf16.mxu0 %v1112
        %1339 = vmatmul.mubr.bf16.gmra.mrb[0].mxu0 %v560
        %v1340 = vpop.f32.mrb[0].mxu0
        %v1341 = vadd.f32 0.0, %v1340
        %v1342 = vpop.f32.mrb[0].mxu0
        %v1343 = vpop.f32.mrb[0].mxu0
        %v1344 = vpop.f32.mrb[0].mxu0
        %1345 = vdwg.mxu0
        %1346 = vmatprep.subr.bf16.mxu0 0
        %1347 = vmatpush1.bf16.msra.mxu0 %v1258
        %1348 = vmatprep.subr.bf16.mxu0 0
        %1349 = vmatpush1.bf16.msra.mxu0 %v1259
        %1350 = vmatprep.subr.bf16.mxu0 0
        %1351 = vmatpush1.bf16.msra.mxu0 %v1260
        %1352 = vmatprep.subr.bf16.mxu0 0
        %1353 = vmatpush1.bf16.msra.mxu0 %v1261
        %1354 = vmatprep.subr.bf16.mxu0 0
        %1355 = vmatpush1.bf16.msra.mxu0 %v1262
        %1356 = vmatprep.subr.bf16.mxu0 0
        %1357 = vmatpush1.bf16.msra.mxu0 %v1263
        %1358 = vmatprep.subr.bf16.mxu0 0
        %1359 = vmatpush1.bf16.msra.mxu0 %v1264
        %1360 = vmatprep.subr.bf16.mxu0 0
        %1361 = vmatpush1.bf16.msra.mxu0 %v1265
        %1362 = vmatprep.subr.bf16.mxu0 0
        %1363 = vmatpush1.bf16.msra.mxu0 %v1266
        %1364 = vmatprep.subr.bf16.mxu0 0
        %1365 = vmatpush1.bf16.msra.mxu0 %v1267
        %1366 = vmatprep.subr.bf16.mxu0 0
        %1367 = vmatpush1.bf16.msra.mxu0 %v1268
        %1368 = vmatprep.subr.bf16.mxu0 0
        %1369 = vmatpush1.bf16.msra.mxu0 %v1269
        %1370 = vmatprep.subr.bf16.mxu0 0
        %1371 = vmatpush1.bf16.msra.mxu0 %v1270
        %1372 = vmatprep.subr.bf16.mxu0 0
        %1373 = vmatpush1.bf16.msra.mxu0 %v1271
        %1374 = vmatprep.subr.bf16.mxu0 0
        %1375 = vmatpush1.bf16.msra.mxu0 %v1272
        %1376 = vmatprep.subr.bf16.mxu0 0
        %1377 = vmatpush1.bf16.msra.mxu0 %v1273
        %1378 = vmatprep.mubr.bf16.mxu0 %v560
        %1379 = vmatmul.mubr.bf16.gmra.mrb[0].mxu0 %v1113
        %v1380 = vpop.f32.mrb[0].mxu0
        %v1381 = vadd.f32 %v1341, %v1380
        %v1382 = vpop.f32.mrb[0].mxu0
        %v1383 = vpop.f32.mrb[0].mxu0
        %v1384 = vpop.f32.mrb[0].mxu0
        %1385 = vdwg.mxu0
        %v1386 = vld [vmem:[%s3] sm:$0xf]
        %v1387 = vld [vmem:[%s4] sm:$0xff]
        %1388 = vrot.lane.b32.xlu0 %v1381, 1
        %v1389 = vpop.permute.xlu0 %1388
        %v1390 = vmul.f32 %v1389, %v427
        %1391 = vrot.lane.b32.xlu0 %v1381, 127
        %v1392 = vpop.permute.xlu0 %1391
        %v1393 = vmul.f32 %v1392, %v430
        %v1394 = vpack.c.bf16 %v1381, %v1390
        %v1395 = vpack.c.bf16 %v1393, %v1393
        %1397 = vset.pattern.permute.xlu0 0
        %1398 = vperm.xlu0 %1397, %v1387
        %v1399 = vpop.permute.xlu0 %1398
        %vm1401 = vcmask 195584
        %v1403 = vsel %vm1401, %v1386, 0
        %vm1405 = vcmask 1043456
        %v1407 = vsel %vm1405, %v1395, 0
        %1409 = vmatprep.subr.bf16.mxu0 0
        %1410 = vmatpush1.bf16.msra.mxu0 %v1394
        %1411 = vmatprep.subr.bf16.mxu0 0
        %1412 = vmatpush1.bf16.msra.mxu0 %v1407
        %1413 = vmatprep.subr.bf16.mxu0 0
        %1414 = vmatpush1.bf16.msra.mxu0 0
        %1415 = vmatprep.subr.bf16.mxu0 0
        %1416 = vmatpush1.bf16.msra.mxu0 0
        %1417 = vmatprep.subr.bf16.mxu0 0
        %1418 = vmatpush1.bf16.msra.mxu0 0
        %1419 = vmatprep.subr.bf16.mxu0 0
        %1420 = vmatpush1.bf16.msra.mxu0 0
        %1421 = vmatprep.subr.bf16.mxu0 0
        %1422 = vmatpush1.bf16.msra.mxu0 0
        %1423 = vmatprep.subr.bf16.mxu0 0
        %1424 = vmatpush1.bf16.msra.mxu0 0
        %1425 = vmatprep.subr.bf16.mxu0 0
        %1426 = vmatpush1.bf16.msra.mxu0 0
        %1427 = vmatprep.subr.bf16.mxu0 0
        %1428 = vmatpush1.bf16.msra.mxu0 0
        %1429 = vmatprep.subr.bf16.mxu0 0
        %1430 = vmatpush1.bf16.msra.mxu0 0
        %1431 = vmatprep.subr.bf16.mxu0 0
        %1432 = vmatpush1.bf16.msra.mxu0 0
        %1433 = vmatprep.subr.bf16.mxu0 0
        %1434 = vmatpush1.bf16.msra.mxu0 0
        %1435 = vmatprep.subr.bf16.mxu0 0
        %1436 = vmatpush1.bf16.msra.mxu0 0
        %1437 = vmatprep.subr.bf16.mxu0 0
        %1438 = vmatpush1.bf16.msra.mxu0 0
        %1439 = vmatprep.subr.bf16.mxu0 0
        %1440 = vmatpush1.bf16.msra.mxu0 0
        %1441 = vmatprep.mubr.bf16.mxu0 0
        %1442 = vmatmul.mubr.bf16.gmra.mrb[0].mxu0 %v1403
        %v1443 = vpop.f32.mrb[0].mxu0
        %v1444 = vadd.f32 %v1399, %v1443
        %v1445 = vpop.f32.mrb[0].mxu0
        %v1446 = vpop.f32.mrb[0].mxu0
        %v1447 = vpop.f32.mrb[0].mxu0
        %1448 = vdwg.mxu0
        %1450 = vset.pattern.permute.xlu0 0
        %1451 = vperm.xlu0 %1450, %v558
        %v1452 = vpop.permute.xlu0 %1451
        %v1454 = vmul.f32 %v1452, %v1444
        %v1455 = vand.u32 2147483647, %v1454
        %vm1456 = vcmp.le.f32.partialorder %v1455, 0.7853982
        %vm1457 = vcmp.lt.s32.totalorder %v1454, 0
        %v1458 = vand.u32 %v1454, 2139095040
        %v1459 = vshrl.u32 %v1458, 23
        %v1460 = vsub.s32 %v1459, 127
        %v1461 = vand.u32 2147483647, %v1454
        %v1462 = vand.u32 %v1461, 8388607
        %v1463 = vor.u32 %v1462, 8388608
        %v1464 = vsub.s32 0, %v1463
        %v1465 = vadd.s32 %v1460, 1
        %vm1466 = vcmp.gt.s32.totalorder %v1465, 0
        %v1467 = vsel %vm1466, %v1465, 0
        %v1468 = vshrl.u32 %v1467, 5
        %v1469 = vand.u32 %v1467, 31
        %v1470 = vsub.s32 32, %v1469
        %v1471 = vshrl.u32 683565275, %v1470
        %v1472 = vshll.u32 683565275, %v1469
        %v1473 = vshrl.u32 2475754826, %v1470
        %v1474 = vor.u32 %v1472, %v1473
        %v1475 = vshll.u32 2475754826, %v1469
        %v1476 = vshrl.u32 2131351028, %v1470
        %v1477 = vor.u32 %v1475, %v1476
        %v1478 = vshll.u32 2131351028, %v1469
        %v1479 = vshrl.u32 2102212464, %v1470
        %v1480 = vor.u32 %v1478, %v1479
        %v1481 = vshll.u32 2102212464, %v1469
        %v1482 = vshrl.u32 920167782, %v1470
        %v1483 = vor.u32 %v1481, %v1482
        %v1484 = vshll.u32 920167782, %v1469
        %v1485 = vshrl.u32 1326507024, %v1470
        %v1486 = vor.u32 %v1484, %v1485
        %vm1487 = vcmp.lt.s32.totalorder %v1468, 1
        %vm1488 = vcmp.lt.s32.totalorder %v1468, 2
        %vm1489 = vcmp.lt.s32.totalorder %v1468, 3
        %vm1490 = vcmp.lt.s32.totalorder %v1468, 4
        %v1491 = vsel %vm1487, %v1471, %v1474
        %v1492 = vsel %vm1490, %v1480, 2102212464
        %v1493 = vsel %vm1489, %v1477, %v1492
        %v1494 = vsel %vm1488, %v1491, %v1493
        %v1495 = vsel %vm1487, %v1474, %v1477
        %v1496 = vsel %vm1490, %v1483, 920167782
        %v1497 = vsel %vm1489, %v1480, %v1496
        %v1498 = vsel %vm1488, %v1495, %v1497
        %v1499 = vsel %vm1487, %v1477, %v1480
        %v1500 = vsel %vm1490, %v1486, 1326507024
        %v1501 = vsel %vm1489, %v1483, %v1500
        %v1502 = vsel %vm1488, %v1499, %v1501
        %v1503 = vshll.u32 %v1463, 8
        %v1504 = vmul.u32.u64.compose %v1503, %v1502
        %v1505 = vextract.low.u32 %v1504
        %v1506 = vextract.high.u32 %v1504
        %v1507 = vmul.u32.u64.compose %v1503, %v1498
        %v1508 = vextract.low.u32 %v1507
        %v1509 = vextract.high.u32 %v1507
        %v1510 = vmul.u32 %v1503, %v1494
        %v1511 = vadd.s32 %v1506, %v1508
        %vm1512 = vc.u32 %v1506, %v1508
        %v1513 = vadd.s32 %v1509, 1
        %v1514 = vsel %vm1512, %v1513, %v1509
        %v1515 = vadd.s32 %v1510, %v1514
        %v1516 = vadd.s32 %v1515, 536870912
        %v1517 = vshrl.u32 %v1516, 30
        %v1518 = vshll.u32 %v1517, 30
        %v1519 = vsub.s32 %v1515, %v1518
        %vm1520 = vcmp.lt.s32.totalorder %v1519, 0
        %v1521 = vsub.s32 0, %v1519
        %v1522 = vsel %vm1520, %v1521, %v1519
        %v1523 = vclz %v1522
        %v1524 = vsub.s32 %v1523, 2
        %vm1525 = vcmp.gt.s32.totalorder 0, %v1524
        %v1526 = vsel %vm1525, 0, %v1524
        %v1527 = vsub.s32 32, %v1526
        %v1528 = vshll.u32 %v1519, %v1526
        %v1529 = vshrl.u32 %v1511, %v1527
        %v1530 = vor.u32 %v1528, %v1529
        %v1531 = vsub.s32 4294967266, %v1526
        %v1532 = vadd.s32 %v1531, 127
        %v1533 = vshll.u32 %v1532, 23
        %v1534 = vor.u32 4788187, %v1533
        %v1535 = vand.u32 2147483647, %v1534
        %v1537 = vcvt.s32.f32 %v1530
        %v1538 = vmul.f32 %v1537, %v1535
        %v1539 = vxor.u32 %v1538, 2147483648
        %v1540 = vsel %vm1457, %v1539, %v1538
        %v1541 = vsub.s32 4, %v1517
        %v1542 = vsel %vm1457, %v1541, %v1517
        %v1543 = vsel %vm1456, %v1454, %v1540
        %v1544 = vsel %vm1456, 0, %v1542
        %v1545 = vcosq.f32.pop %v1543
        %v1546 = vsinq.f32.pop %v1543
        %vm1547 = vweird.f32 %v1454
        %v1548 = vadd.s32 %v1544, 3
        %v1549 = vand.u32 %v1548, 3
        %vm1550 = vcmp.lt.s32.totalorder %v1549, 2
        %vm1551 = vcmp.eq.s32.totalorder %v1549, 0
        %v1552 = vxor.u32 %v1546, 2147483648
        %v1553 = vsel %vm1551, %v1545, %v1552
        %vm1554 = vcmp.eq.s32.totalorder %v1549, 2
        %v1555 = vxor.u32 %v1545, 2147483648
        %v1556 = vsel %vm1554, %v1555, %v1546
        %v1557 = vsel %vm1550, %v1553, %v1556
        %v1558 = vsel %vm1547, nan, %v1557
        %v1559 = vmul.f32 %v1558, %v1558
        %1561 = vset.pattern.permute.xlu0 0
        %1562 = vperm.xlu0 %1561, %v559
        %v1563 = vpop.permute.xlu0 %1562
        %v1565 = vmul.f32 %v1563, %v1559
        %v1566 = vadd.f32 %v1444, %v1565
        %v1567 = vld [vmem:[%s7] sm:$0xf]
        %v1568 = vld [vmem:[%s8] sm:$0xff]
        %1569 = vrot.lane.b32.xlu0 %v1566, 1
        %v1570 = vpop.permute.xlu0 %1569
        %v1571 = vmul.f32 %v1570, %v427
        %1572 = vrot.lane.b32.xlu0 %v1566, 127
        %v1573 = vpop.permute.xlu0 %1572
        %v1574 = vmul.f32 %v1573, %v430
        %v1575 = vpack.c.bf16 %v1566, %v1571
        %v1576 = vpack.c.bf16 %v1574, %v1574
        %1578 = vset.pattern.permute.xlu0 0
        %1579 = vperm.xlu0 %1578, %v1568
        %v1580 = vpop.permute.xlu0 %1579
        %v1583 = vsel %vm1401, %v1567, 0
        %v1586 = vsel %vm1405, %v1576, 0
        %1588 = vmatprep.subr.bf16.mxu0 0
        %1589 = vmatpush1.bf16.msra.mxu0 %v1575
        %1590 = vmatprep.subr.bf16.mxu0 0
        %1591 = vmatpush1.bf16.msra.mxu0 %v1586
        %1592 = vmatprep.subr.bf16.mxu0 0
        %1593 = vmatpush1.bf16.msra.mxu0 0
        %1594 = vmatprep.subr.bf16.mxu0 0
        %1595 = vmatpush1.bf16.msra.mxu0 0
        %1596 = vmatprep.subr.bf16.mxu0 0
        %1597 = vmatpush1.bf16.msra.mxu0 0
        %1598 = vmatprep.subr.bf16.mxu0 0
        %1599 = vmatpush1.bf16.msra.mxu0 0
        %1600 = vmatprep.subr.bf16.mxu0 0
        %1601 = vmatpush1.bf16.msra.mxu0 0
        %1602 = vmatprep.subr.bf16.mxu0 0
        %1603 = vmatpush1.bf16.msra.mxu0 0
        %1604 = vmatprep.subr.bf16.mxu0 0
        %1605 = vmatpush1.bf16.msra.mxu0 0
        %1606 = vmatprep.subr.bf16.mxu0 0
        %1607 = vmatpush1.bf16.msra.mxu0 0
        %1608 = vmatprep.subr.bf16.mxu0 0
        %1609 = vmatpush1.bf16.msra.mxu0 0
        %1610 = vmatprep.subr.bf16.mxu0 0
        %1611 = vmatpush1.bf16.msra.mxu0 0
        %1612 = vmatprep.subr.bf16.mxu0 0
        %1613 = vmatpush1.bf16.msra.mxu0 0
        %1614 = vmatprep.subr.bf16.mxu0 0
        %1615 = vmatpush1.bf16.msra.mxu0 0
        %1616 = vmatprep.subr.bf16.mxu0 0
        %1617 = vmatpush1.bf16.msra.mxu0 0
        %1618 = vmatprep.subr.bf16.mxu0 0
        %1619 = vmatpush1.bf16.msra.mxu0 0
        %1620 = vmatprep.mubr.bf16.mxu0 0
        %1621 = vmatmul.mubr.bf16.gmra.mrb[0].mxu0 %v1583
        %v1622 = vpop.f32.mrb[0].mxu0
        %v1623 = vadd.f32 %v1580, %v1622
        %v1624 = vpop.f32.mrb[0].mxu0
        %v1625 = vpop.f32.mrb[0].mxu0
        %v1626 = vpop.f32.mrb[0].mxu0
        %1627 = vdwg.mxu0
        %v1628 = vmul.f32 %v1623, %v418
        %v1629 = vadd.f32 %v1628, %v555
        %s1630 = scalar_lea.vmem %s5, 8
        %v1631 = vld [vmem:[%s1630] sm:$0xff]
        %s1632 = scalar_lea.vmem %s6, 8
        %v1633 = vld [vmem:[%s1632] sm:$0xff]
        %s1634 = scalar_lea.vmem %s9, 8
        %v1635 = vld [vmem:[%s1634] sm:$0xff]
        %s1636 = scalar_lea.vmem %s10, 8
        %v1637 = vld [vmem:[%s1636] sm:$0xff]
        %v1638 = vpack.c.bf16 %v1629, %v1629
        %1639 = vmatprep.subr.bf16.mxu0 %v707
        %1640 = vmatpush1.bf16.msra.mxu0 %v706
        %1641 = vmatprep.subr.bf16.mxu0 %v709
        %1642 = vmatpush1.bf16.msra.mxu0 %v708
        %1643 = vmatprep.subr.bf16.mxu0 %v711
        %1644 = vmatpush1.bf16.msra.mxu0 %v710
        %1645 = vmatprep.subr.bf16.mxu0 %v713
        %1646 = vmatpush1.bf16.msra.mxu0 %v712
        %1647 = vmatprep.subr.bf16.mxu0 %v715
        %1648 = vmatpush1.bf16.msra.mxu0 %v714
        %1649 = vmatprep.subr.bf16.mxu0 %v717
        %1650 = vmatpush1.bf16.msra.mxu0 %v716
        %1651 = vmatprep.subr.bf16.mxu0 %v719
        %1652 = vmatpush1.bf16.msra.mxu0 %v718
        %1653 = vmatprep.subr.bf16.mxu0 %v721
        %1654 = vmatpush1.bf16.msra.mxu0 %v720
        %1655 = vmatprep.subr.bf16.mxu0 %v723
        %1656 = vmatpush1.bf16.msra.mxu0 %v722
        %1657 = vmatprep.subr.bf16.mxu0 %v725
        %1658 = vmatpush1.bf16.msra.mxu0 %v724
        %1659 = vmatprep.subr.bf16.mxu0 %v727
        %1660 = vmatpush1.bf16.msra.mxu0 %v726
        %1661 = vmatprep.subr.bf16.mxu0 %v729
        %1662 = vmatpush1.bf16.msra.mxu0 %v728
        %1663 = vmatprep.subr.bf16.mxu0 %v731
        %1664 = vmatpush1.bf16.msra.mxu0 %v730
        %1665 = vmatprep.subr.bf16.mxu0 %v733
        %1666 = vmatpush1.bf16.msra.mxu0 %v732
        %1667 = vmatprep.subr.bf16.mxu0 %v735
        %1668 = vmatpush1.bf16.msra.mxu0 %v734
        %1669 = vmatprep.subr.bf16.mxu0 %v737
        %1670 = vmatpush1.bf16.msra.mxu0 %v736
        %1671 = vmatprep.mubr.bf16.mxu0 %v1638
        %1672 = vmatmul.mubr.bf16.gmra.mrb[0].mxu0 %v560
        %v1673 = vpop.f32.mrb[0].mxu0
        %v1674 = vadd.f32 0.0, %v1673
        %v1675 = vpop.f32.mrb[0].mxu0
        %v1676 = vadd.f32 0.0, %v1675
        %v1677 = vpop.f32.mrb[0].mxu0
        %v1678 = vpop.f32.mrb[0].mxu0
        %1679 = vdwg.mxu0
        %1680 = vmatprep.subr.bf16.mxu0 %v739
        %1681 = vmatpush1.bf16.msra.mxu0 %v738
        %1682 = vmatprep.subr.bf16.mxu0 %v741
        %1683 = vmatpush1.bf16.msra.mxu0 %v740
        %1684 = vmatprep.subr.bf16.mxu0 %v743
        %1685 = vmatpush1.bf16.msra.mxu0 %v742
        %1686 = vmatprep.subr.bf16.mxu0 %v745
        %1687 = vmatpush1.bf16.msra.mxu0 %v744
        %1688 = vmatprep.subr.bf16.mxu0 %v747
        %1689 = vmatpush1.bf16.msra.mxu0 %v746
        %1690 = vmatprep.subr.bf16.mxu0 %v749
        %1691 = vmatpush1.bf16.msra.mxu0 %v748
        %1692 = vmatprep.subr.bf16.mxu0 %v751
        %1693 = vmatpush1.bf16.msra.mxu0 %v750
        %1694 = vmatprep.subr.bf16.mxu0 %v753
        %1695 = vmatpush1.bf16.msra.mxu0 %v752
        %1696 = vmatprep.subr.bf16.mxu0 0
        %1697 = vmatpush1.bf16.msra.mxu0 0
        %1698 = vmatprep.subr.bf16.mxu0 0
        %1699 = vmatpush1.bf16.msra.mxu0 0
        %1700 = vmatprep.subr.bf16.mxu0 0
        %1701 = vmatpush1.bf16.msra.mxu0 0
        %1702 = vmatprep.subr.bf16.mxu0 0
        %1703 = vmatpush1.bf16.msra.mxu0 0
        %1704 = vmatprep.subr.bf16.mxu0 0
        %1705 = vmatpush1.bf16.msra.mxu0 0
        %1706 = vmatprep.subr.bf16.mxu0 0
        %1707 = vmatpush1.bf16.msra.mxu0 0
        %1708 = vmatprep.subr.bf16.mxu0 0
        %1709 = vmatpush1.bf16.msra.mxu0 0
        %1710 = vmatprep.subr.bf16.mxu0 0
        %1711 = vmatpush1.bf16.msra.mxu0 0
        %1712 = vmatprep.mubr.bf16.mxu0 0
        %1713 = vmatmul.mubr.bf16.gmra.mrb[0].mxu0 %v560
        %v1714 = vpop.f32.mrb[0].mxu0
        %v1715 = vadd.f32 %v1674, %v1714
        %v1716 = vpop.f32.mrb[0].mxu0
        %v1717 = vadd.f32 %v1676, %v1716
        %v1718 = vpop.f32.mrb[0].mxu0
        %v1719 = vpop.f32.mrb[0].mxu0
        %1720 = vdwg.mxu0
        %1722 = vset.pattern.permute.xlu0 0
        %1723 = vperm.xlu0 %1722, %v1631
        %v1724 = vpop.permute.xlu0 %1723
        %v1726 = vmul.f32 %v1724, %v1715
        %v1727 = vmul.f32 %v1724, %v1717
        %v1728 = vand.u32 2147483647, %v1726
        %vm1729 = vcmp.le.f32.partialorder %v1728, 0.7853982
        %vm1730 = vcmp.lt.s32.totalorder %v1726, 0
        %v1731 = vand.u32 %v1726, 2139095040
        %v1732 = vshrl.u32 %v1731, 23
        %v1733 = vsub.s32 %v1732, 127
        %v1734 = vand.u32 2147483647, %v1726
        %v1735 = vand.u32 %v1734, 8388607
        %v1736 = vor.u32 %v1735, 8388608
        %v1737 = vsub.s32 0, %v1736
        %v1738 = vadd.s32 %v1733, 1
        %vm1739 = vcmp.gt.s32.totalorder %v1738, 0
        %v1740 = vsel %vm1739, %v1738, 0
        %v1741 = vshrl.u32 %v1740, 5
        %v1742 = vand.u32 %v1740, 31
        %v1743 = vsub.s32 32, %v1742
        %v1744 = vshrl.u32 683565275, %v1743
        %v1745 = vshll.u32 683565275, %v1742
        %v1746 = vshrl.u32 2475754826, %v1743
        %v1747 = vor.u32 %v1745, %v1746
        %v1748 = vshll.u32 2475754826, %v1742
        %v1749 = vshrl.u32 2131351028, %v1743
        %v1750 = vor.u32 %v1748, %v1749
        %v1751 = vshll.u32 2131351028, %v1742
        %v1752 = vshrl.u32 2102212464, %v1743
        %v1753 = vor.u32 %v1751, %v1752
        %v1754 = vshll.u32 2102212464, %v1742
        %v1755 = vshrl.u32 920167782, %v1743
        %v1756 = vor.u32 %v1754, %v1755
        %v1757 = vshll.u32 920167782, %v1742
        %v1758 = vshrl.u32 1326507024, %v1743
        %v1759 = vor.u32 %v1757, %v1758
        %vm1760 = vcmp.lt.s32.totalorder %v1741, 1
        %vm1761 = vcmp.lt.s32.totalorder %v1741, 2
        %vm1762 = vcmp.lt.s32.totalorder %v1741, 3
        %vm1763 = vcmp.lt.s32.totalorder %v1741, 4
        %v1764 = vsel %vm1760, %v1744, %v1747
        %v1765 = vsel %vm1763, %v1753, 2102212464
        %v1766 = vsel %vm1762, %v1750, %v1765
        %v1767 = vsel %vm1761, %v1764, %v1766
        %v1768 = vsel %vm1760, %v1747, %v1750
        %v1769 = vsel %vm1763, %v1756, 920167782
        %v1770 = vsel %vm1762, %v1753, %v1769
        %v1771 = vsel %vm1761, %v1768, %v1770
        %v1772 = vsel %vm1760, %v1750, %v1753
        %v1773 = vsel %vm1763, %v1759, 1326507024
        %v1774 = vsel %vm1762, %v1756, %v1773
        %v1775 = vsel %vm1761, %v1772, %v1774
        %v1776 = vshll.u32 %v1736, 8
        %v1777 = vmul.u32.u64.compose %v1776, %v1775
        %v1778 = vextract.low.u32 %v1777
        %v1779 = vextract.high.u32 %v1777
        %v1780 = vmul.u32.u64.compose %v1776, %v1771
        %v1781 = vextract.low.u32 %v1780
        %v1782 = vextract.high.u32 %v1780
        %v1783 = vmul.u32 %v1776, %v1767
        %v1784 = vadd.s32 %v1779, %v1781
        %vm1785 = vc.u32 %v1779, %v1781
        %v1786 = vadd.s32 %v1782, 1
        %v1787 = vsel %vm1785, %v1786, %v1782
        %v1788 = vadd.s32 %v1783, %v1787
        %v1789 = vadd.s32 %v1788, 536870912
        %v1790 = vshrl.u32 %v1789, 30
        %v1791 = vshll.u32 %v1790, 30
        %v1792 = vsub.s32 %v1788, %v1791
        %vm1793 = vcmp.lt.s32.totalorder %v1792, 0
        %v1794 = vsub.s32 0, %v1792
        %v1795 = vsel %vm1793, %v1794, %v1792
        %v1796 = vclz %v1795
        %v1797 = vsub.s32 %v1796, 2
        %vm1798 = vcmp.gt.s32.totalorder 0, %v1797
        %v1799 = vsel %vm1798, 0, %v1797
        %v1800 = vsub.s32 32, %v1799
        %v1801 = vshll.u32 %v1792, %v1799
        %v1802 = vshrl.u32 %v1784, %v1800
        %v1803 = vor.u32 %v1801, %v1802
        %v1804 = vsub.s32 4294967266, %v1799
        %v1805 = vadd.s32 %v1804, 127
        %v1806 = vshll.u32 %v1805, 23
        %v1807 = vor.u32 4788187, %v1806
        %v1808 = vand.u32 2147483647, %v1807
        %v1810 = vcvt.s32.f32 %v1803
        %v1811 = vmul.f32 %v1810, %v1808
        %v1812 = vxor.u32 %v1811, 2147483648
        %v1813 = vsel %vm1730, %v1812, %v1811
        %v1814 = vsub.s32 4, %v1790
        %v1815 = vsel %vm1730, %v1814, %v1790
        %v1816 = vsel %vm1729, %v1726, %v1813
        %v1817 = vsel %vm1729, 0, %v1815
        %v1818 = vcosq.f32.pop %v1816
        %v1819 = vsinq.f32.pop %v1816
        %vm1820 = vweird.f32 %v1726
        %v1821 = vadd.s32 %v1817, 3
        %v1822 = vand.u32 %v1821, 3
        %vm1823 = vcmp.lt.s32.totalorder %v1822, 2
        %vm1824 = vcmp.eq.s32.totalorder %v1822, 0
        %v1825 = vxor.u32 %v1819, 2147483648
        %v1826 = vsel %vm1824, %v1818, %v1825
        %vm1827 = vcmp.eq.s32.totalorder %v1822, 2
        %v1828 = vxor.u32 %v1818, 2147483648
        %v1829 = vsel %vm1827, %v1828, %v1819
        %v1830 = vsel %vm1823, %v1826, %v1829
        %v1831 = vsel %vm1820, nan, %v1830
        %v1832 = vand.u32 2147483647, %v1727
        %vm1833 = vcmp.le.f32.partialorder %v1832, 0.7853982
        %vm1834 = vcmp.lt.s32.totalorder %v1727, 0
        %v1835 = vand.u32 %v1727, 2139095040
        %v1836 = vshrl.u32 %v1835, 23
        %v1837 = vsub.s32 %v1836, 127
        %v1838 = vand.u32 2147483647, %v1727
        %v1839 = vand.u32 %v1838, 8388607
        %v1840 = vor.u32 %v1839, 8388608
        %v1841 = vsub.s32 0, %v1840
        %v1842 = vadd.s32 %v1837, 1
        %vm1843 = vcmp.gt.s32.totalorder %v1842, 0
        %v1844 = vsel %vm1843, %v1842, 0
        %v1845 = vshrl.u32 %v1844, 5
        %v1846 = vand.u32 %v1844, 31
        %v1847 = vsub.s32 32, %v1846
        %v1848 = vshrl.u32 683565275, %v1847
        %v1849 = vshll.u32 683565275, %v1846
        %v1850 = vshrl.u32 2475754826, %v1847
        %v1851 = vor.u32 %v1849, %v1850
        %v1852 = vshll.u32 2475754826, %v1846
        %v1853 = vshrl.u32 2131351028, %v1847
        %v1854 = vor.u32 %v1852, %v1853
        %v1855 = vshll.u32 2131351028, %v1846
        %v1856 = vshrl.u32 2102212464, %v1847
        %v1857 = vor.u32 %v1855, %v1856
        %v1858 = vshll.u32 2102212464, %v1846
        %v1859 = vshrl.u32 920167782, %v1847
        %v1860 = vor.u32 %v1858, %v1859
        %v1861 = vshll.u32 920167782, %v1846
        %v1862 = vshrl.u32 1326507024, %v1847
        %v1863 = vor.u32 %v1861, %v1862
        %vm1864 = vcmp.lt.s32.totalorder %v1845, 1
        %vm1865 = vcmp.lt.s32.totalorder %v1845, 2
        %vm1866 = vcmp.lt.s32.totalorder %v1845, 3
        %vm1867 = vcmp.lt.s32.totalorder %v1845, 4
        %v1868 = vsel %vm1864, %v1848, %v1851
        %v1869 = vsel %vm1867, %v1857, 2102212464
        %v1870 = vsel %vm1866, %v1854, %v1869
        %v1871 = vsel %vm1865, %v1868, %v1870
        %v1872 = vsel %vm1864, %v1851, %v1854
        %v1873 = vsel %vm1867, %v1860, 920167782
        %v1874 = vsel %vm1866, %v1857, %v1873
        %v1875 = vsel %vm1865, %v1872, %v1874
        %v1876 = vsel %vm1864, %v1854, %v1857
        %v1877 = vsel %vm1867, %v1863, 1326507024
        %v1878 = vsel %vm1866, %v1860, %v1877
        %v1879 = vsel %vm1865, %v1876, %v1878
        %v1880 = vshll.u32 %v1840, 8
        %v1881 = vmul.u32.u64.compose %v1880, %v1879
        %v1882 = vextract.low.u32 %v1881
        %v1883 = vextract.high.u32 %v1881
        %v1884 = vmul.u32.u64.compose %v1880, %v1875
        %v1885 = vextract.low.u32 %v1884
        %v1886 = vextract.high.u32 %v1884
        %v1887 = vmul.u32 %v1880, %v1871
        %v1888 = vadd.s32 %v1883, %v1885
        %vm1889 = vc.u32 %v1883, %v1885
        %v1890 = vadd.s32 %v1886, 1
        %v1891 = vsel %vm1889, %v1890, %v1886
        %v1892 = vadd.s32 %v1887, %v1891
        %v1893 = vadd.s32 %v1892, 536870912
        %v1894 = vshrl.u32 %v1893, 30
        %v1895 = vshll.u32 %v1894, 30
        %v1896 = vsub.s32 %v1892, %v1895
        %vm1897 = vcmp.lt.s32.totalorder %v1896, 0
        %v1898 = vsub.s32 0, %v1896
        %v1899 = vsel %vm1897, %v1898, %v1896
        %v1900 = vclz %v1899
        %v1901 = vsub.s32 %v1900, 2
        %vm1902 = vcmp.gt.s32.totalorder 0, %v1901
        %v1903 = vsel %vm1902, 0, %v1901
        %v1904 = vsub.s32 32, %v1903
        %v1905 = vshll.u32 %v1896, %v1903
        %v1906 = vshrl.u32 %v1888, %v1904
        %v1907 = vor.u32 %v1905, %v1906
        %v1908 = vsub.s32 4294967266, %v1903
        %v1909 = vadd.s32 %v1908, 127
        %v1910 = vshll.u32 %v1909, 23
        %v1911 = vor.u32 4788187, %v1910
        %v1912 = vand.u32 2147483647, %v1911
        %v1914 = vcvt.s32.f32 %v1907
        %v1915 = vmul.f32 %v1914, %v1912
        %v1916 = vxor.u32 %v1915, 2147483648
        %v1917 = vsel %vm1834, %v1916, %v1915
        %v1918 = vsub.s32 4, %v1894
        %v1919 = vsel %vm1834, %v1918, %v1894
        %v1920 = vsel %vm1833, %v1727, %v1917
        %v1921 = vsel %vm1833, 0, %v1919
        %v1922 = vcosq.f32.pop %v1920
        %v1923 = vsinq.f32.pop %v1920
        %vm1924 = vweird.f32 %v1727
        %v1925 = vadd.s32 %v1921, 3
        %v1926 = vand.u32 %v1925, 3
        %vm1927 = vcmp.lt.s32.totalorder %v1926, 2
        %vm1928 = vcmp.eq.s32.totalorder %v1926, 0
        %v1929 = vxor.u32 %v1923, 2147483648
        %v1930 = vsel %vm1928, %v1922, %v1929
        %vm1931 = vcmp.eq.s32.totalorder %v1926, 2
        %v1932 = vxor.u32 %v1922, 2147483648
        %v1933 = vsel %vm1931, %v1932, %v1923
        %v1934 = vsel %vm1927, %v1930, %v1933
        %v1935 = vsel %vm1924, nan, %v1934
        %v1936 = vmul.f32 %v1831, %v1831
        %v1937 = vmul.f32 %v1935, %v1935
        %1939 = vset.pattern.permute.xlu0 0
        %1940 = vperm.xlu0 %1939, %v1633
        %v1941 = vpop.permute.xlu0 %1940
        %v1943 = vmul.f32 %v1941, %v1936
        %v1944 = vmul.f32 %v1941, %v1937
        %v1945 = vadd.f32 %v1715, %v1943
        %v1946 = vadd.f32 %v1717, %v1944
        %v1947 = vmul.f32 %v1945, %v423
        %v1948 = vmul.f32 %v1946, %v424
        %v1949 = vpack.c.bf16 %v1947, %v1947
        %v1950 = vpack.c.bf16 %v1948, %v1948
        %1951 = vmatprep.subr.bf16.mxu0 0
        %1952 = vmatpush1.bf16.msra.mxu0 %v1242
        %1953 = vmatprep.subr.bf16.mxu0 0
        %1954 = vmatpush1.bf16.msra.mxu0 %v1243
        %1955 = vmatprep.subr.bf16.mxu0 0
        %1956 = vmatpush1.bf16.msra.mxu0 %v1244
        %1957 = vmatprep.subr.bf16.mxu0 0
        %1958 = vmatpush1.bf16.msra.mxu0 %v1245
        %1959 = vmatprep.subr.bf16.mxu0 0
        %1960 = vmatpush1.bf16.msra.mxu0 %v1246
        %1961 = vmatprep.subr.bf16.mxu0 0
        %1962 = vmatpush1.bf16.msra.mxu0 %v1247
        %1963 = vmatprep.subr.bf16.mxu0 0
        %1964 = vmatpush1.bf16.msra.mxu0 %v1248
        %1965 = vmatprep.subr.bf16.mxu0 0
        %1966 = vmatpush1.bf16.msra.mxu0 %v1249
        %1967 = vmatprep.subr.bf16.mxu0 0
        %1968 = vmatpush1.bf16.msra.mxu0 %v1250
        %1969 = vmatprep.subr.bf16.mxu0 0
        %1970 = vmatpush1.bf16.msra.mxu0 %v1251
        %1971 = vmatprep.subr.bf16.mxu0 0
        %1972 = vmatpush1.bf16.msra.mxu0 %v1252
        %1973 = vmatprep.subr.bf16.mxu0 0
        %1974 = vmatpush1.bf16.msra.mxu0 %v1253
        %1975 = vmatprep.subr.bf16.mxu0 0
        %1976 = vmatpush1.bf16.msra.mxu0 %v1254
        %1977 = vmatprep.subr.bf16.mxu0 0
        %1978 = vmatpush1.bf16.msra.mxu0 %v1255
        %1979 = vmatprep.subr.bf16.mxu0 0
        %1980 = vmatpush1.bf16.msra.mxu0 %v1256
        %1981 = vmatprep.subr.bf16.mxu0 0
        %1982 = vmatpush1.bf16.msra.mxu0 %v1257
        %1983 = vmatprep.mubr.bf16.mxu0 %v1949
        %1984 = vmatmul.mubr.bf16.gmra.mrb[0].mxu0 %v560
        %v1985 = vpop.f32.mrb[0].mxu0
        %v1986 = vadd.f32 0.0, %v1985
        %v1987 = vpop.f32.mrb[0].mxu0
        %v1988 = vpop.f32.mrb[0].mxu0
        %v1989 = vpop.f32.mrb[0].mxu0
        %1990 = vdwg.mxu0
        %1991 = vmatprep.subr.bf16.mxu0 0
        %1992 = vmatpush1.bf16.msra.mxu0 %v1258
        %1993 = vmatprep.subr.bf16.mxu0 0
        %1994 = vmatpush1.bf16.msra.mxu0 %v1259
        %1995 = vmatprep.subr.bf16.mxu0 0
        %1996 = vmatpush1.bf16.msra.mxu0 %v1260
        %1997 = vmatprep.subr.bf16.mxu0 0
        %1998 = vmatpush1.bf16.msra.mxu0 %v1261
        %1999 = vmatprep.subr.bf16.mxu0 0
        %2000 = vmatpush1.bf16.msra.mxu0 %v1262
        %2001 = vmatprep.subr.bf16.mxu0 0
        %2002 = vmatpush1.bf16.msra.mxu0 %v1263
        %2003 = vmatprep.subr.bf16.mxu0 0
        %2004 = vmatpush1.bf16.msra.mxu0 %v1264
        %2005 = vmatprep.subr.bf16.mxu0 0
        %2006 = vmatpush1.bf16.msra.mxu0 %v1265
        %2007 = vmatprep.subr.bf16.mxu0 0
        %2008 = vmatpush1.bf16.msra.mxu0 %v1266
        %2009 = vmatprep.subr.bf16.mxu0 0
        %2010 = vmatpush1.bf16.msra.mxu0 %v1267
        %2011 = vmatprep.subr.bf16.mxu0 0
        %2012 = vmatpush1.bf16.msra.mxu0 %v1268
        %2013 = vmatprep.subr.bf16.mxu0 0
        %2014 = vmatpush1.bf16.msra.mxu0 %v1269
        %2015 = vmatprep.subr.bf16.mxu0 0
        %2016 = vmatpush1.bf16.msra.mxu0 %v1270
        %2017 = vmatprep.subr.bf16.mxu0 0
        %2018 = vmatpush1.bf16.msra.mxu0 %v1271
        %2019 = vmatprep.subr.bf16.mxu0 0
        %2020 = vmatpush1.bf16.msra.mxu0 %v1272
        %2021 = vmatprep.subr.bf16.mxu0 0
        %2022 = vmatpush1.bf16.msra.mxu0 %v1273
        %2023 = vmatprep.mubr.bf16.mxu0 %v560
        %2024 = vmatmul.mubr.bf16.gmra.mrb[0].mxu0 %v1950
        %v2025 = vpop.f32.mrb[0].mxu0
        %v2026 = vadd.f32 %v1986, %v2025
        %v2027 = vpop.f32.mrb[0].mxu0
        %v2028 = vpop.f32.mrb[0].mxu0
        %v2029 = vpop.f32.mrb[0].mxu0
        %2030 = vdwg.mxu0
        %s2031 = scalar_lea.vmem %s3, 4
        %v2032 = vld [vmem:[%s2031] sm:$0xf]
        %s2033 = scalar_lea.vmem %s4, 8
        %v2034 = vld [vmem:[%s2033] sm:$0xff]
        %2035 = vrot.lane.b32.xlu0 %v2026, 3
        %v2036 = vpop.permute.xlu0 %2035
        %v2037 = vmul.f32 %v2036, %v433
        %2038 = vrot.lane.b32.xlu0 %v2026, 125
        %v2039 = vpop.permute.xlu0 %2038
        %v2040 = vmul.f32 %v2039, %v436
        %v2041 = vpack.c.bf16 %v2026, %v2037
        %v2042 = vpack.c.bf16 %v2040, %v2040
        %2044 = vset.pattern.permute.xlu0 0
        %2045 = vperm.xlu0 %2044, %v2034
        %v2046 = vpop.permute.xlu0 %2045
        %v2049 = vsel %vm1401, %v2032, 0
        %v2052 = vsel %vm1405, %v2042, 0
        %2054 = vmatprep.subr.bf16.mxu0 0
        %2055 = vmatpush1.bf16.msra.mxu0 %v2041
        %2056 = vmatprep.subr.bf16.mxu0 0
        %2057 = vmatpush1.bf16.msra.mxu0 %v2052
        %2058 = vmatprep.subr.bf16.mxu0 0
        %2059 = vmatpush1.bf16.msra.mxu0 0
        %2060 = vmatprep.subr.bf16.mxu0 0
        %2061 = vmatpush1.bf16.msra.mxu0 0
        %2062 = vmatprep.subr.bf16.mxu0 0
        %2063 = vmatpush1.bf16.msra.mxu0 0
        %2064 = vmatprep.subr.bf16.mxu0 0
        %2065 = vmatpush1.bf16.msra.mxu0 0
        %2066 = vmatprep.subr.bf16.mxu0 0
        %2067 = vmatpush1.bf16.msra.mxu0 0
        %2068 = vmatprep.subr.bf16.mxu0 0
        %2069 = vmatpush1.bf16.msra.mxu0 0
        %2070 = vmatprep.subr.bf16.mxu0 0
        %2071 = vmatpush1.bf16.msra.mxu0 0
        %2072 = vmatprep.subr.bf16.mxu0 0
        %2073 = vmatpush1.bf16.msra.mxu0 0
        %2074 = vmatprep.subr.bf16.mxu0 0
        %2075 = vmatpush1.bf16.msra.mxu0 0
        %2076 = vmatprep.subr.bf16.mxu0 0
        %2077 = vmatpush1.bf16.msra.mxu0 0
        %2078 = vmatprep.subr.bf16.mxu0 0
        %2079 = vmatpush1.bf16.msra.mxu0 0
        %2080 = vmatprep.subr.bf16.mxu0 0
        %2081 = vmatpush1.bf16.msra.mxu0 0
        %2082 = vmatprep.subr.bf16.mxu0 0
        %2083 = vmatpush1.bf16.msra.mxu0 0
        %2084 = vmatprep.subr.bf16.mxu0 0
        %2085 = vmatpush1.bf16.msra.mxu0 0
        %2086 = vmatprep.mubr.bf16.mxu0 0
        %2087 = vmatmul.mubr.bf16.gmra.mrb[0].mxu0 %v2049
        %v2088 = vpop.f32.mrb[0].mxu0
        %v2089 = vadd.f32 %v2046, %v2088
        %v2090 = vpop.f32.mrb[0].mxu0
        %v2091 = vpop.f32.mrb[0].mxu0
        %v2092 = vpop.f32.mrb[0].mxu0
        %2093 = vdwg.mxu0
        %2095 = vset.pattern.permute.xlu0 0
        %2096 = vperm.xlu0 %2095, %v1635
        %v2097 = vpop.permute.xlu0 %2096
        %v2099 = vmul.f32 %v2097, %v2089
        %v2100 = vand.u32 2147483647, %v2099
        %vm2101 = vcmp.le.f32.partialorder %v2100, 0.7853982
        %vm2102 = vcmp.lt.s32.totalorder %v2099, 0
        %v2103 = vand.u32 %v2099, 2139095040
        %v2104 = vshrl.u32 %v2103, 23
        %v2105 = vsub.s32 %v2104, 127
        %v2106 = vand.u32 2147483647, %v2099
        %v2107 = vand.u32 %v2106, 8388607
        %v2108 = vor.u32 %v2107, 8388608
        %v2109 = vsub.s32 0, %v2108
        %v2110 = vadd.s32 %v2105, 1
        %vm2111 = vcmp.gt.s32.totalorder %v2110, 0
        %v2112 = vsel %vm2111, %v2110, 0
        %v2113 = vshrl.u32 %v2112, 5
        %v2114 = vand.u32 %v2112, 31
        %v2115 = vsub.s32 32, %v2114
        %v2116 = vshrl.u32 683565275, %v2115
        %v2117 = vshll.u32 683565275, %v2114
        %v2118 = vshrl.u32 2475754826, %v2115
        %v2119 = vor.u32 %v2117, %v2118
        %v2120 = vshll.u32 2475754826, %v2114
        %v2121 = vshrl.u32 2131351028, %v2115
        %v2122 = vor.u32 %v2120, %v2121
        %v2123 = vshll.u32 2131351028, %v2114
        %v2124 = vshrl.u32 2102212464, %v2115
        %v2125 = vor.u32 %v2123, %v2124
        %v2126 = vshll.u32 2102212464, %v2114
        %v2127 = vshrl.u32 920167782, %v2115
        %v2128 = vor.u32 %v2126, %v2127
        %v2129 = vshll.u32 920167782, %v2114
        %v2130 = vshrl.u32 1326507024, %v2115
        %v2131 = vor.u32 %v2129, %v2130
        %vm2132 = vcmp.lt.s32.totalorder %v2113, 1
        %vm2133 = vcmp.lt.s32.totalorder %v2113, 2
        %vm2134 = vcmp.lt.s32.totalorder %v2113, 3
        %vm2135 = vcmp.lt.s32.totalorder %v2113, 4
        %v2136 = vsel %vm2132, %v2116, %v2119
        %v2137 = vsel %vm2135, %v2125, 2102212464
        %v2138 = vsel %vm2134, %v2122, %v2137
        %v2139 = vsel %vm2133, %v2136, %v2138
        %v2140 = vsel %vm2132, %v2119, %v2122
        %v2141 = vsel %vm2135, %v2128, 920167782
        %v2142 = vsel %vm2134, %v2125, %v2141
        %v2143 = vsel %vm2133, %v2140, %v2142
        %v2144 = vsel %vm2132, %v2122, %v2125
        %v2145 = vsel %vm2135, %v2131, 1326507024
        %v2146 = vsel %vm2134, %v2128, %v2145
        %v2147 = vsel %vm2133, %v2144, %v2146
        %v2148 = vshll.u32 %v2108, 8
        %v2149 = vmul.u32.u64.compose %v2148, %v2147
        %v2150 = vextract.low.u32 %v2149
        %v2151 = vextract.high.u32 %v2149
        %v2152 = vmul.u32.u64.compose %v2148, %v2143
        %v2153 = vextract.low.u32 %v2152
        %v2154 = vextract.high.u32 %v2152
        %v2155 = vmul.u32 %v2148, %v2139
        %v2156 = vadd.s32 %v2151, %v2153
        %vm2157 = vc.u32 %v2151, %v2153
        %v2158 = vadd.s32 %v2154, 1
        %v2159 = vsel %vm2157, %v2158, %v2154
        %v2160 = vadd.s32 %v2155, %v2159
        %v2161 = vadd.s32 %v2160, 536870912
        %v2162 = vshrl.u32 %v2161, 30
        %v2163 = vshll.u32 %v2162, 30
        %v2164 = vsub.s32 %v2160, %v2163
        %vm2165 = vcmp.lt.s32.totalorder %v2164, 0
        %v2166 = vsub.s32 0, %v2164
        %v2167 = vsel %vm2165, %v2166, %v2164
        %v2168 = vclz %v2167
        %v2169 = vsub.s32 %v2168, 2
        %vm2170 = vcmp.gt.s32.totalorder 0, %v2169
        %v2171 = vsel %vm2170, 0, %v2169
        %v2172 = vsub.s32 32, %v2171
        %v2173 = vshll.u32 %v2164, %v2171
        %v2174 = vshrl.u32 %v2156, %v2172
        %v2175 = vor.u32 %v2173, %v2174
        %v2176 = vsub.s32 4294967266, %v2171
        %v2177 = vadd.s32 %v2176, 127
        %v2178 = vshll.u32 %v2177, 23
        %v2179 = vor.u32 4788187, %v2178
        %v2180 = vand.u32 2147483647, %v2179
        %v2182 = vcvt.s32.f32 %v2175
        %v2183 = vmul.f32 %v2182, %v2180
        %v2184 = vxor.u32 %v2183, 2147483648
        %v2185 = vsel %vm2102, %v2184, %v2183
        %v2186 = vsub.s32 4, %v2162
        %v2187 = vsel %vm2102, %v2186, %v2162
        %v2188 = vsel %vm2101, %v2099, %v2185
        %v2189 = vsel %vm2101, 0, %v2187
        %v2190 = vcosq.f32.pop %v2188
        %v2191 = vsinq.f32.pop %v2188
        %vm2192 = vweird.f32 %v2099
        %v2193 = vadd.s32 %v2189, 3
        %v2194 = vand.u32 %v2193, 3
        %vm2195 = vcmp.lt.s32.totalorder %v2194, 2
        %vm2196 = vcmp.eq.s32.totalorder %v2194, 0
        %v2197 = vxor.u32 %v2191, 2147483648
        %v2198 = vsel %vm2196, %v2190, %v2197
        %vm2199 = vcmp.eq.s32.totalorder %v2194, 2
        %v2200 = vxor.u32 %v2190, 2147483648
        %v2201 = vsel %vm2199, %v2200, %v2191
        %v2202 = vsel %vm2195, %v2198, %v2201
        %v2203 = vsel %vm2192, nan, %v2202
        %v2204 = vmul.f32 %v2203, %v2203
        %2206 = vset.pattern.permute.xlu0 0
        %2207 = vperm.xlu0 %2206, %v1637
        %v2208 = vpop.permute.xlu0 %2207
        %v2210 = vmul.f32 %v2208, %v2204
        %v2211 = vadd.f32 %v2089, %v2210
        %s2212 = scalar_lea.vmem %s7, 4
        %v2213 = vld [vmem:[%s2212] sm:$0xf]
        %s2214 = scalar_lea.vmem %s8, 8
        %v2215 = vld [vmem:[%s2214] sm:$0xff]
        %2216 = vrot.lane.b32.xlu0 %v2211, 1
        %v2217 = vpop.permute.xlu0 %2216
        %v2218 = vmul.f32 %v2217, %v427
        %2219 = vrot.lane.b32.xlu0 %v2211, 127
        %v2220 = vpop.permute.xlu0 %2219
        %v2221 = vmul.f32 %v2220, %v430
        %v2222 = vpack.c.bf16 %v2211, %v2218
        %v2223 = vpack.c.bf16 %v2221, %v2221
        %2225 = vset.pattern.permute.xlu0 0
        %2226 = vperm.xlu0 %2225, %v2215
        %v2227 = vpop.permute.xlu0 %2226
        %v2230 = vsel %vm1401, %v2213, 0
        %v2233 = vsel %vm1405, %v2223, 0
        %2235 = vmatprep.subr.bf16.mxu0 0
        %2236 = vmatpush1.bf16.msra.mxu0 %v2222
        %2237 = vmatprep.subr.bf16.mxu0 0
        %2238 = vmatpush1.bf16.msra.mxu0 %v2233
        %2239 = vmatprep.subr.bf16.mxu0 0
        %2240 = vmatpush1.bf16.msra.mxu0 0
        %2241 = vmatprep.subr.bf16.mxu0 0
        %2242 = vmatpush1.bf16.msra.mxu0 0
        %2243 = vmatprep.subr.bf16.mxu0 0
        %2244 = vmatpush1.bf16.msra.mxu0 0
        %2245 = vmatprep.subr.bf16.mxu0 0
        %2246 = vmatpush1.bf16.msra.mxu0 0
        %2247 = vmatprep.subr.bf16.mxu0 0
        %2248 = vmatpush1.bf16.msra.mxu0 0
        %2249 = vmatprep.subr.bf16.mxu0 0
        %2250 = vmatpush1.bf16.msra.mxu0 0
        %2251 = vmatprep.subr.bf16.mxu0 0
        %2252 = vmatpush1.bf16.msra.mxu0 0
        %2253 = vmatprep.subr.bf16.mxu0 0
        %2254 = vmatpush1.bf16.msra.mxu0 0
        %2255 = vmatprep.subr.bf16.mxu0 0
        %2256 = vmatpush1.bf16.msra.mxu0 0
        %2257 = vmatprep.subr.bf16.mxu0 0
        %2258 = vmatpush1.bf16.msra.mxu0 0
        %2259 = vmatprep.subr.bf16.mxu0 0
        %2260 = vmatpush1.bf16.msra.mxu0 0
        %2261 = vmatprep.subr.bf16.mxu0 0
        %2262 = vmatpush1.bf16.msra.mxu0 0
        %2263 = vmatprep.subr.bf16.mxu0 0
        %2264 = vmatpush1.bf16.msra.mxu0 0
        %2265 = vmatprep.subr.bf16.mxu0 0
        %2266 = vmatpush1.bf16.msra.mxu0 0
        %2267 = vmatprep.mubr.bf16.mxu0 0
        %2268 = vmatmul.mubr.bf16.gmra.mrb[0].mxu0 %v2230
        %v2269 = vpop.f32.mrb[0].mxu0
        %v2270 = vadd.f32 %v2227, %v2269
        %v2271 = vpop.f32.mrb[0].mxu0
        %v2272 = vpop.f32.mrb[0].mxu0
        %v2273 = vpop.f32.mrb[0].mxu0
        %2274 = vdwg.mxu0
        %v2275 = vmul.f32 %v2270, %v418
        %v2276 = vadd.f32 %v2275, %v1629
        %s2277 = scalar_lea.vmem %s5, 16
        %v2278 = vld [vmem:[%s2277] sm:$0xff]
        %s2279 = scalar_lea.vmem %s6, 16
        %v2280 = vld [vmem:[%s2279] sm:$0xff]
        %s2281 = scalar_lea.vmem %s9, 16
        %v2282 = vld [vmem:[%s2281] sm:$0xff]
        %s2283 = scalar_lea.vmem %s10, 16
        %v2284 = vld [vmem:[%s2283] sm:$0xff]
        %v2285 = vpack.c.bf16 %v2276, %v2276
        %2286 = vmatprep.subr.bf16.mxu0 %v707
        %2287 = vmatpush1.bf16.msra.mxu0 %v706
        %2288 = vmatprep.subr.bf16.mxu0 %v709
        %2289 = vmatpush1.bf16.msra.mxu0 %v708
        %2290 = vmatprep.subr.bf16.mxu0 %v711
        %2291 = vmatpush1.bf16.msra.mxu0 %v710
        %2292 = vmatprep.subr.bf16.mxu0 %v713
        %2293 = vmatpush1.bf16.msra.mxu0 %v712
        %2294 = vmatprep.subr.bf16.mxu0 %v715
        %2295 = vmatpush1.bf16.msra.mxu0 %v714
        %2296 = vmatprep.subr.bf16.mxu0 %v717
        %2297 = vmatpush1.bf16.msra.mxu0 %v716
        %2298 = vmatprep.subr.bf16.mxu0 %v719
        %2299 = vmatpush1.bf16.msra.mxu0 %v718
        %2300 = vmatprep.subr.bf16.mxu0 %v721
        %2301 = vmatpush1.bf16.msra.mxu0 %v720
        %2302 = vmatprep.subr.bf16.mxu0 %v723
        %2303 = vmatpush1.bf16.msra.mxu0 %v722
        %2304 = vmatprep.subr.bf16.mxu0 %v725
        %2305 = vmatpush1.bf16.msra.mxu0 %v724
        %2306 = vmatprep.subr.bf16.mxu0 %v727
        %2307 = vmatpush1.bf16.msra.mxu0 %v726
        %2308 = vmatprep.subr.bf16.mxu0 %v729
        %2309 = vmatpush1.bf16.msra.mxu0 %v728
        %2310 = vmatprep.subr.bf16.mxu0 %v731
        %2311 = vmatpush1.bf16.msra.mxu0 %v730
        %2312 = vmatprep.subr.bf16.mxu0 %v733
        %2313 = vmatpush1.bf16.msra.mxu0 %v732
        %2314 = vmatprep.subr.bf16.mxu0 %v735
        %2315 = vmatpush1.bf16.msra.mxu0 %v734
        %2316 = vmatprep.subr.bf16.mxu0 %v737
        %2317 = vmatpush1.bf16.msra.mxu0 %v736
        %2318 = vmatprep.mubr.bf16.mxu0 %v2285
        %2319 = vmatmul.mubr.bf16.gmra.mrb[0].mxu0 %v560
        %v2320 = vpop.f32.mrb[0].mxu0
        %v2321 = vadd.f32 0.0, %v2320
        %v2322 = vpop.f32.mrb[0].mxu0
        %v2323 = vadd.f32 0.0, %v2322
        %v2324 = vpop.f32.mrb[0].mxu0
        %v2325 = vpop.f32.mrb[0].mxu0
        %2326 = vdwg.mxu0
        %2327 = vmatprep.subr.bf16.mxu0 %v739
        %2328 = vmatpush1.bf16.msra.mxu0 %v738
        %2329 = vmatprep.subr.bf16.mxu0 %v741
        %2330 = vmatpush1.bf16.msra.mxu0 %v740
        %2331 = vmatprep.subr.bf16.mxu0 %v743
        %2332 = vmatpush1.bf16.msra.mxu0 %v742
        %2333 = vmatprep.subr.bf16.mxu0 %v745
        %2334 = vmatpush1.bf16.msra.mxu0 %v744
        %2335 = vmatprep.subr.bf16.mxu0 %v747
        %2336 = vmatpush1.bf16.msra.mxu0 %v746
        %2337 = vmatprep.subr.bf16.mxu0 %v749
        %2338 = vmatpush1.bf16.msra.mxu0 %v748
        %2339 = vmatprep.subr.bf16.mxu0 %v751
        %2340 = vmatpush1.bf16.msra.mxu0 %v750
        %2341 = vmatprep.subr.bf16.mxu0 %v753
        %2342 = vmatpush1.bf16.msra.mxu0 %v752
        %2343 = vmatprep.subr.bf16.mxu0 0
        %2344 = vmatpush1.bf16.msra.mxu0 0
        %2345 = vmatprep.subr.bf16.mxu0 0
        %2346 = vmatpush1.bf16.msra.mxu0 0
        %2347 = vmatprep.subr.bf16.mxu0 0
        %2348 = vmatpush1.bf16.msra.mxu0 0
        %2349 = vmatprep.subr.bf16.mxu0 0
        %2350 = vmatpush1.bf16.msra.mxu0 0
        %2351 = vmatprep.subr.bf16.mxu0 0
        %2352 = vmatpush1.bf16.msra.mxu0 0
        %2353 = vmatprep.subr.bf16.mxu0 0
        %2354 = vmatpush1.bf16.msra.mxu0 0
        %2355 = vmatprep.subr.bf16.mxu0 0
        %2356 = vmatpush1.bf16.msra.mxu0 0
        %2357 = vmatprep.subr.bf16.mxu0 0
        %2358 = vmatpush1.bf16.msra.mxu0 0
        %2359 = vmatprep.mubr.bf16.mxu0 0
        %2360 = vmatmul.mubr.bf16.gmra.mrb[0].mxu0 %v560
        %v2361 = vpop.f32.mrb[0].mxu0
        %v2362 = vadd.f32 %v2321, %v2361
        %v2363 = vpop.f32.mrb[0].mxu0
        %v2364 = vadd.f32 %v2323, %v2363
        %v2365 = vpop.f32.mrb[0].mxu0
        %v2366 = vpop.f32.mrb[0].mxu0
        %2367 = vdwg.mxu0
        %2369 = vset.pattern.permute.xlu0 0
        %2370 = vperm.xlu0 %2369, %v2278
        %v2371 = vpop.permute.xlu0 %2370
        %v2373 = vmul.f32 %v2371, %v2362
        %v2374 = vmul.f32 %v2371, %v2364
        %v2375 = vand.u32 2147483647, %v2373
        %vm2376 = vcmp.le.f32.partialorder %v2375, 0.7853982
        %vm2377 = vcmp.lt.s32.totalorder %v2373, 0
        %v2378 = vand.u32 %v2373, 2139095040
        %v2379 = vshrl.u32 %v2378, 23
        %v2380 = vsub.s32 %v2379, 127
        %v2381 = vand.u32 2147483647, %v2373
        %v2382 = vand.u32 %v2381, 8388607
        %v2383 = vor.u32 %v2382, 8388608
        %v2384 = vsub.s32 0, %v2383
        %v2385 = vadd.s32 %v2380, 1
        %vm2386 = vcmp.gt.s32.totalorder %v2385, 0
        %v2387 = vsel %vm2386, %v2385, 0
        %v2388 = vshrl.u32 %v2387, 5
        %v2389 = vand.u32 %v2387, 31
        %v2390 = vsub.s32 32, %v2389
        %v2391 = vshrl.u32 683565275, %v2390
        %v2392 = vshll.u32 683565275, %v2389
        %v2393 = vshrl.u32 2475754826, %v2390
        %v2394 = vor.u32 %v2392, %v2393
        %v2395 = vshll.u32 2475754826, %v2389
        %v2396 = vshrl.u32 2131351028, %v2390
        %v2397 = vor.u32 %v2395, %v2396
        %v2398 = vshll.u32 2131351028, %v2389
        %v2399 = vshrl.u32 2102212464, %v2390
        %v2400 = vor.u32 %v2398, %v2399
        %v2401 = vshll.u32 2102212464, %v2389
        %v2402 = vshrl.u32 920167782, %v2390
        %v2403 = vor.u32 %v2401, %v2402
        %v2404 = vshll.u32 920167782, %v2389
        %v2405 = vshrl.u32 1326507024, %v2390
        %v2406 = vor.u32 %v2404, %v2405
        %vm2407 = vcmp.lt.s32.totalorder %v2388, 1
        %vm2408 = vcmp.lt.s32.totalorder %v2388, 2
        %vm2409 = vcmp.lt.s32.totalorder %v2388, 3
        %vm2410 = vcmp.lt.s32.totalorder %v2388, 4
        %v2411 = vsel %vm2407, %v2391, %v2394
        %v2412 = vsel %vm2410, %v2400, 2102212464
        %v2413 = vsel %vm2409, %v2397, %v2412
        %v2414 = vsel %vm2408, %v2411, %v2413
        %v2415 = vsel %vm2407, %v2394, %v2397
        %v2416 = vsel %vm2410, %v2403, 920167782
        %v2417 = vsel %vm2409, %v2400, %v2416
        %v2418 = vsel %vm2408, %v2415, %v2417
        %v2419 = vsel %vm2407, %v2397, %v2400
        %v2420 = vsel %vm2410, %v2406, 1326507024
        %v2421 = vsel %vm2409, %v2403, %v2420
        %v2422 = vsel %vm2408, %v2419, %v2421
        %v2423 = vshll.u32 %v2383, 8
        %v2424 = vmul.u32.u64.compose %v2423, %v2422
        %v2425 = vextract.low.u32 %v2424
        %v2426 = vextract.high.u32 %v2424
        %v2427 = vmul.u32.u64.compose %v2423, %v2418
        %v2428 = vextract.low.u32 %v2427
        %v2429 = vextract.high.u32 %v2427
        %v2430 = vmul.u32 %v2423, %v2414
        %v2431 = vadd.s32 %v2426, %v2428
        %vm2432 = vc.u32 %v2426, %v2428
        %v2433 = vadd.s32 %v2429, 1
        %v2434 = vsel %vm2432, %v2433, %v2429
        %v2435 = vadd.s32 %v2430, %v2434
        %v2436 = vadd.s32 %v2435, 536870912
        %v2437 = vshrl.u32 %v2436, 30
        %v2438 = vshll.u32 %v2437, 30
        %v2439 = vsub.s32 %v2435, %v2438
        %vm2440 = vcmp.lt.s32.totalorder %v2439, 0
        %v2441 = vsub.s32 0, %v2439
        %v2442 = vsel %vm2440, %v2441, %v2439
        %v2443 = vclz %v2442
        %v2444 = vsub.s32 %v2443, 2
        %vm2445 = vcmp.gt.s32.totalorder 0, %v2444
        %v2446 = vsel %vm2445, 0, %v2444
        %v2447 = vsub.s32 32, %v2446
        %v2448 = vshll.u32 %v2439, %v2446
        %v2449 = vshrl.u32 %v2431, %v2447
        %v2450 = vor.u32 %v2448, %v2449
        %v2451 = vsub.s32 4294967266, %v2446
        %v2452 = vadd.s32 %v2451, 127
        %v2453 = vshll.u32 %v2452, 23
        %v2454 = vor.u32 4788187, %v2453
        %v2455 = vand.u32 2147483647, %v2454
        %v2457 = vcvt.s32.f32 %v2450
        %v2458 = vmul.f32 %v2457, %v2455
        %v2459 = vxor.u32 %v2458, 2147483648
        %v2460 = vsel %vm2377, %v2459, %v2458
        %v2461 = vsub.s32 4, %v2437
        %v2462 = vsel %vm2377, %v2461, %v2437
        %v2463 = vsel %vm2376, %v2373, %v2460
        %v2464 = vsel %vm2376, 0, %v2462
        %v2465 = vcosq.f32.pop %v2463
        %v2466 = vsinq.f32.pop %v2463
        %vm2467 = vweird.f32 %v2373
        %v2468 = vadd.s32 %v2464, 3
        %v2469 = vand.u32 %v2468, 3
        %vm2470 = vcmp.lt.s32.totalorder %v2469, 2
        %vm2471 = vcmp.eq.s32.totalorder %v2469, 0
        %v2472 = vxor.u32 %v2466, 2147483648
        %v2473 = vsel %vm2471, %v2465, %v2472
        %vm2474 = vcmp.eq.s32.totalorder %v2469, 2
        %v2475 = vxor.u32 %v2465, 2147483648
        %v2476 = vsel %vm2474, %v2475, %v2466
        %v2477 = vsel %vm2470, %v2473, %v2476
        %v2478 = vsel %vm2467, nan, %v2477
        %v2479 = vand.u32 2147483647, %v2374
        %vm2480 = vcmp.le.f32.partialorder %v2479, 0.7853982
        %vm2481 = vcmp.lt.s32.totalorder %v2374, 0
        %v2482 = vand.u32 %v2374, 2139095040
        %v2483 = vshrl.u32 %v2482, 23
        %v2484 = vsub.s32 %v2483, 127
        %v2485 = vand.u32 2147483647, %v2374
        %v2486 = vand.u32 %v2485, 8388607
        %v2487 = vor.u32 %v2486, 8388608
        %v2488 = vsub.s32 0, %v2487
        %v2489 = vadd.s32 %v2484, 1
        %vm2490 = vcmp.gt.s32.totalorder %v2489, 0
        %v2491 = vsel %vm2490, %v2489, 0
        %v2492 = vshrl.u32 %v2491, 5
        %v2493 = vand.u32 %v2491, 31
        %v2494 = vsub.s32 32, %v2493
        %v2495 = vshrl.u32 683565275, %v2494
        %v2496 = vshll.u32 683565275, %v2493
        %v2497 = vshrl.u32 2475754826, %v2494
        %v2498 = vor.u32 %v2496, %v2497
        %v2499 = vshll.u32 2475754826, %v2493
        %v2500 = vshrl.u32 2131351028, %v2494
        %v2501 = vor.u32 %v2499, %v2500
        %v2502 = vshll.u32 2131351028, %v2493
        %v2503 = vshrl.u32 2102212464, %v2494
        %v2504 = vor.u32 %v2502, %v2503
        %v2505 = vshll.u32 2102212464, %v2493
        %v2506 = vshrl.u32 920167782, %v2494
        %v2507 = vor.u32 %v2505, %v2506
        %v2508 = vshll.u32 920167782, %v2493
        %v2509 = vshrl.u32 1326507024, %v2494
        %v2510 = vor.u32 %v2508, %v2509
        %vm2511 = vcmp.lt.s32.totalorder %v2492, 1
        %vm2512 = vcmp.lt.s32.totalorder %v2492, 2
        %vm2513 = vcmp.lt.s32.totalorder %v2492, 3
        %vm2514 = vcmp.lt.s32.totalorder %v2492, 4
        %v2515 = vsel %vm2511, %v2495, %v2498
        %v2516 = vsel %vm2514, %v2504, 2102212464
        %v2517 = vsel %vm2513, %v2501, %v2516
        %v2518 = vsel %vm2512, %v2515, %v2517
        %v2519 = vsel %vm2511, %v2498, %v2501
        %v2520 = vsel %vm2514, %v2507, 920167782
        %v2521 = vsel %vm2513, %v2504, %v2520
        %v2522 = vsel %vm2512, %v2519, %v2521
        %v2523 = vsel %vm2511, %v2501, %v2504
        %v2524 = vsel %vm2514, %v2510, 1326507024
        %v2525 = vsel %vm2513, %v2507, %v2524
        %v2526 = vsel %vm2512, %v2523, %v2525
        %v2527 = vshll.u32 %v2487, 8
        %v2528 = vmul.u32.u64.compose %v2527, %v2526
        %v2529 = vextract.low.u32 %v2528
        %v2530 = vextract.high.u32 %v2528
        %v2531 = vmul.u32.u64.compose %v2527, %v2522
        %v2532 = vextract.low.u32 %v2531
        %v2533 = vextract.high.u32 %v2531
        %v2534 = vmul.u32 %v2527, %v2518
        %v2535 = vadd.s32 %v2530, %v2532
        %vm2536 = vc.u32 %v2530, %v2532
        %v2537 = vadd.s32 %v2533, 1
        %v2538 = vsel %vm2536, %v2537, %v2533
        %v2539 = vadd.s32 %v2534, %v2538
        %v2540 = vadd.s32 %v2539, 536870912
        %v2541 = vshrl.u32 %v2540, 30
        %v2542 = vshll.u32 %v2541, 30
        %v2543 = vsub.s32 %v2539, %v2542
        %vm2544 = vcmp.lt.s32.totalorder %v2543, 0
        %v2545 = vsub.s32 0, %v2543
        %v2546 = vsel %vm2544, %v2545, %v2543
        %v2547 = vclz %v2546
        %v2548 = vsub.s32 %v2547, 2
        %vm2549 = vcmp.gt.s32.totalorder 0, %v2548
        %v2550 = vsel %vm2549, 0, %v2548
        %v2551 = vsub.s32 32, %v2550
        %v2552 = vshll.u32 %v2543, %v2550
        %v2553 = vshrl.u32 %v2535, %v2551
        %v2554 = vor.u32 %v2552, %v2553
        %v2555 = vsub.s32 4294967266, %v2550
        %v2556 = vadd.s32 %v2555, 127
        %v2557 = vshll.u32 %v2556, 23
        %v2558 = vor.u32 4788187, %v2557
        %v2559 = vand.u32 2147483647, %v2558
        %v2561 = vcvt.s32.f32 %v2554
        %v2562 = vmul.f32 %v2561, %v2559
        %v2563 = vxor.u32 %v2562, 2147483648
        %v2564 = vsel %vm2481, %v2563, %v2562
        %v2565 = vsub.s32 4, %v2541
        %v2566 = vsel %vm2481, %v2565, %v2541
        %v2567 = vsel %vm2480, %v2374, %v2564
        %v2568 = vsel %vm2480, 0, %v2566
        %v2569 = vcosq.f32.pop %v2567
        %v2570 = vsinq.f32.pop %v2567
        %vm2571 = vweird.f32 %v2374
        %v2572 = vadd.s32 %v2568, 3
        %v2573 = vand.u32 %v2572, 3
        %vm2574 = vcmp.lt.s32.totalorder %v2573, 2
        %vm2575 = vcmp.eq.s32.totalorder %v2573, 0
        %v2576 = vxor.u32 %v2570, 2147483648
        %v2577 = vsel %vm2575, %v2569, %v2576
        %vm2578 = vcmp.eq.s32.totalorder %v2573, 2
        %v2579 = vxor.u32 %v2569, 2147483648
        %v2580 = vsel %vm2578, %v2579, %v2570
        %v2581 = vsel %vm2574, %v2577, %v2580
        %v2582 = vsel %vm2571, nan, %v2581
        %v2583 = vmul.f32 %v2478, %v2478
        %v2584 = vmul.f32 %v2582, %v2582
        %2586 = vset.pattern.permute.xlu0 0
        %2587 = vperm.xlu0 %2586, %v2280
        %v2588 = vpop.permute.xlu0 %2587
        %v2590 = vmul.f32 %v2588, %v2583
        %v2591 = vmul.f32 %v2588, %v2584
        %v2592 = vadd.f32 %v2362, %v2590
        %v2593 = vadd.f32 %v2364, %v2591
        %v2594 = vmul.f32 %v2592, %v423
        %v2595 = vmul.f32 %v2593, %v424
        %v2596 = vpack.c.bf16 %v2594, %v2594
        %v2597 = vpack.c.bf16 %v2595, %v2595
        %2598 = vmatprep.subr.bf16.mxu0 0
        %2599 = vmatpush1.bf16.msra.mxu0 %v1242
        %2600 = vmatprep.subr.bf16.mxu0 0
        %2601 = vmatpush1.bf16.msra.mxu0 %v1243
        %2602 = vmatprep.subr.bf16.mxu0 0
        %2603 = vmatpush1.bf16.msra.mxu0 %v1244
        %2604 = vmatprep.subr.bf16.mxu0 0
        %2605 = vmatpush1.bf16.msra.mxu0 %v1245
        %2606 = vmatprep.subr.bf16.mxu0 0
        %2607 = vmatpush1.bf16.msra.mxu0 %v1246
        %2608 = vmatprep.subr.bf16.mxu0 0
        %2609 = vmatpush1.bf16.msra.mxu0 %v1247
        %2610 = vmatprep.subr.bf16.mxu0 0
        %2611 = vmatpush1.bf16.msra.mxu0 %v1248
        %2612 = vmatprep.subr.bf16.mxu0 0
        %2613 = vmatpush1.bf16.msra.mxu0 %v1249
        %2614 = vmatprep.subr.bf16.mxu0 0
        %2615 = vmatpush1.bf16.msra.mxu0 %v1250
        %2616 = vmatprep.subr.bf16.mxu0 0
        %2617 = vmatpush1.bf16.msra.mxu0 %v1251
        %2618 = vmatprep.subr.bf16.mxu0 0
        %2619 = vmatpush1.bf16.msra.mxu0 %v1252
        %2620 = vmatprep.subr.bf16.mxu0 0
        %2621 = vmatpush1.bf16.msra.mxu0 %v1253
        %2622 = vmatprep.subr.bf16.mxu0 0
        %2623 = vmatpush1.bf16.msra.mxu0 %v1254
        %2624 = vmatprep.subr.bf16.mxu0 0
        %2625 = vmatpush1.bf16.msra.mxu0 %v1255
        %2626 = vmatprep.subr.bf16.mxu0 0
        %2627 = vmatpush1.bf16.msra.mxu0 %v1256
        %2628 = vmatprep.subr.bf16.mxu0 0
        %2629 = vmatpush1.bf16.msra.mxu0 %v1257
        %2630 = vmatprep.mubr.bf16.mxu0 %v2596
        %2631 = vmatmul.mubr.bf16.gmra.mrb[0].mxu0 %v560
        %v2632 = vpop.f32.mrb[0].mxu0
        %v2633 = vadd.f32 0.0, %v2632
        %v2634 = vpop.f32.mrb[0].mxu0
        %v2635 = vpop.f32.mrb[0].mxu0
        %v2636 = vpop.f32.mrb[0].mxu0
        %2637 = vdwg.mxu0
        %2638 = vmatprep.subr.bf16.mxu0 0
        %2639 = vmatpush1.bf16.msra.mxu0 %v1258
        %2640 = vmatprep.subr.bf16.mxu0 0
        %2641 = vmatpush1.bf16.msra.mxu0 %v1259
        %2642 = vmatprep.subr.bf16.mxu0 0
        %2643 = vmatpush1.bf16.msra.mxu0 %v1260
        %2644 = vmatprep.subr.bf16.mxu0 0
        %2645 = vmatpush1.bf16.msra.mxu0 %v1261
        %2646 = vmatprep.subr.bf16.mxu0 0
        %2647 = vmatpush1.bf16.msra.mxu0 %v1262
        %2648 = vmatprep.subr.bf16.mxu0 0
        %2649 = vmatpush1.bf16.msra.mxu0 %v1263
        %2650 = vmatprep.subr.bf16.mxu0 0
        %2651 = vmatpush1.bf16.msra.mxu0 %v1264
        %2652 = vmatprep.subr.bf16.mxu0 0
        %2653 = vmatpush1.bf16.msra.mxu0 %v1265
        %2654 = vmatprep.subr.bf16.mxu0 0
        %2655 = vmatpush1.bf16.msra.mxu0 %v1266
        %2656 = vmatprep.subr.bf16.mxu0 0
        %2657 = vmatpush1.bf16.msra.mxu0 %v1267
        %2658 = vmatprep.subr.bf16.mxu0 0
        %2659 = vmatpush1.bf16.msra.mxu0 %v1268
        %2660 = vmatprep.subr.bf16.mxu0 0
        %2661 = vmatpush1.bf16.msra.mxu0 %v1269
        %2662 = vmatprep.subr.bf16.mxu0 0
        %2663 = vmatpush1.bf16.msra.mxu0 %v1270
        %2664 = vmatprep.subr.bf16.mxu0 0
        %2665 = vmatpush1.bf16.msra.mxu0 %v1271
        %2666 = vmatprep.subr.bf16.mxu0 0
        %2667 = vmatpush1.bf16.msra.mxu0 %v1272
        %2668 = vmatprep.subr.bf16.mxu0 0
        %2669 = vmatpush1.bf16.msra.mxu0 %v1273
        %2670 = vmatprep.mubr.bf16.mxu0 %v560
        %2671 = vmatmul.mubr.bf16.gmra.mrb[0].mxu0 %v2597
        %v2672 = vpop.f32.mrb[0].mxu0
        %v2673 = vadd.f32 %v2633, %v2672
        %v2674 = vpop.f32.mrb[0].mxu0
        %v2675 = vpop.f32.mrb[0].mxu0
        %v2676 = vpop.f32.mrb[0].mxu0
        %2677 = vdwg.mxu0
        %s2678 = scalar_lea.vmem %s3, 8
        %v2679 = vld [vmem:[%s2678] sm:$0xf]
        %s2680 = scalar_lea.vmem %s4, 16
        %v2681 = vld [vmem:[%s2680] sm:$0xff]
        %2682 = vrot.lane.b32.xlu0 %v2673, 5
        %v2683 = vpop.permute.xlu0 %2682
        %v2684 = vmul.f32 %v2683, %v439
        %2685 = vrot.lane.b32.xlu0 %v2673, 123
        %v2686 = vpop.permute.xlu0 %2685
        %v2687 = vmul.f32 %v2686, %v442
        %v2688 = vpack.c.bf16 %v2673, %v2684
        %v2689 = vpack.c.bf16 %v2687, %v2687
        %2691 = vset.pattern.permute.xlu0 0
        %2692 = vperm.xlu0 %2691, %v2681
        %v2693 = vpop.permute.xlu0 %2692
        %v2696 = vsel %vm1401, %v2679, 0
        %v2699 = vsel %vm1405, %v2689, 0
        %2701 = vmatprep.subr.bf16.mxu0 0
        %2702 = vmatpush1.bf16.msra.mxu0 %v2688
        %2703 = vmatprep.subr.bf16.mxu0 0
        %2704 = vmatpush1.bf16.msra.mxu0 %v2699
        %2705 = vmatprep.subr.bf16.mxu0 0
        %2706 = vmatpush1.bf16.msra.mxu0 0
        %2707 = vmatprep.subr.bf16.mxu0 0
        %2708 = vmatpush1.bf16.msra.mxu0 0
        %2709 = vmatprep.subr.bf16.mxu0 0
        %2710 = vmatpush1.bf16.msra.mxu0 0
        %2711 = vmatprep.subr.bf16.mxu0 0
        %2712 = vmatpush1.bf16.msra.mxu0 0
        %2713 = vmatprep.subr.bf16.mxu0 0
        %2714 = vmatpush1.bf16.msra.mxu0 0
        %2715 = vmatprep.subr.bf16.mxu0 0
        %2716 = vmatpush1.bf16.msra.mxu0 0
        %2717 = vmatprep.subr.bf16.mxu0 0
        %2718 = vmatpush1.bf16.msra.mxu0 0
        %2719 = vmatprep.subr.bf16.mxu0 0
        %2720 = vmatpush1.bf16.msra.mxu0 0
        %2721 = vmatprep.subr.bf16.mxu0 0
        %2722 = vmatpush1.bf16.msra.mxu0 0
        %2723 = vmatprep.subr.bf16.mxu0 0
        %2724 = vmatpush1.bf16.msra.mxu0 0
        %2725 = vmatprep.subr.bf16.mxu0 0
        %2726 = vmatpush1.bf16.msra.mxu0 0
        %2727 = vmatprep.subr.bf16.mxu0 0
        %2728 = vmatpush1.bf16.msra.mxu0 0
        %2729 = vmatprep.subr.bf16.mxu0 0
        %2730 = vmatpush1.bf16.msra.mxu0 0
        %2731 = vmatprep.subr.bf16.mxu0 0
        %2732 = vmatpush1.bf16.msra.mxu0 0
        %2733 = vmatprep.mubr.bf16.mxu0 0
        %2734 = vmatmul.mubr.bf16.gmra.mrb[0].mxu0 %v2696
        %v2735 = vpop.f32.mrb[0].mxu0
        %v2736 = vadd.f32 %v2693, %v2735
        %v2737 = vpop.f32.mrb[0].mxu0
        %v2738 = vpop.f32.mrb[0].mxu0
        %v2739 = vpop.f32.mrb[0].mxu0
        %2740 = vdwg.mxu0
        %2742 = vset.pattern.permute.xlu0 0
        %2743 = vperm.xlu0 %2742, %v2282
        %v2744 = vpop.permute.xlu0 %2743
        %v2746 = vmul.f32 %v2744, %v2736
        %v2747 = vand.u32 2147483647, %v2746
        %vm2748 = vcmp.le.f32.partialorder %v2747, 0.7853982
        %vm2749 = vcmp.lt.s32.totalorder %v2746, 0
        %v2750 = vand.u32 %v2746, 2139095040
        %v2751 = vshrl.u32 %v2750, 23
        %v2752 = vsub.s32 %v2751, 127
        %v2753 = vand.u32 2147483647, %v2746
        %v2754 = vand.u32 %v2753, 8388607
        %v2755 = vor.u32 %v2754, 8388608
        %v2756 = vsub.s32 0, %v2755
        %v2757 = vadd.s32 %v2752, 1
        %vm2758 = vcmp.gt.s32.totalorder %v2757, 0
        %v2759 = vsel %vm2758, %v2757, 0
        %v2760 = vshrl.u32 %v2759, 5
        %v2761 = vand.u32 %v2759, 31
        %v2762 = vsub.s32 32, %v2761
        %v2763 = vshrl.u32 683565275, %v2762
        %v2764 = vshll.u32 683565275, %v2761
        %v2765 = vshrl.u32 2475754826, %v2762
        %v2766 = vor.u32 %v2764, %v2765
        %v2767 = vshll.u32 2475754826, %v2761
        %v2768 = vshrl.u32 2131351028, %v2762
        %v2769 = vor.u32 %v2767, %v2768
        %v2770 = vshll.u32 2131351028, %v2761
        %v2771 = vshrl.u32 2102212464, %v2762
        %v2772 = vor.u32 %v2770, %v2771
        %v2773 = vshll.u32 2102212464, %v2761
        %v2774 = vshrl.u32 920167782, %v2762
        %v2775 = vor.u32 %v2773, %v2774
        %v2776 = vshll.u32 920167782, %v2761
        %v2777 = vshrl.u32 1326507024, %v2762
        %v2778 = vor.u32 %v2776, %v2777
        %vm2779 = vcmp.lt.s32.totalorder %v2760, 1
        %vm2780 = vcmp.lt.s32.totalorder %v2760, 2
        %vm2781 = vcmp.lt.s32.totalorder %v2760, 3
        %vm2782 = vcmp.lt.s32.totalorder %v2760, 4
        %v2783 = vsel %vm2779, %v2763, %v2766
        %v2784 = vsel %vm2782, %v2772, 2102212464
        %v2785 = vsel %vm2781, %v2769, %v2784
        %v2786 = vsel %vm2780, %v2783, %v2785
        %v2787 = vsel %vm2779, %v2766, %v2769
        %v2788 = vsel %vm2782, %v2775, 920167782
        %v2789 = vsel %vm2781, %v2772, %v2788
        %v2790 = vsel %vm2780, %v2787, %v2789
        %v2791 = vsel %vm2779, %v2769, %v2772
        %v2792 = vsel %vm2782, %v2778, 1326507024
        %v2793 = vsel %vm2781, %v2775, %v2792
        %v2794 = vsel %vm2780, %v2791, %v2793
        %v2795 = vshll.u32 %v2755, 8
        %v2796 = vmul.u32.u64.compose %v2795, %v2794
        %v2797 = vextract.low.u32 %v2796
        %v2798 = vextract.high.u32 %v2796
        %v2799 = vmul.u32.u64.compose %v2795, %v2790
        %v2800 = vextract.low.u32 %v2799
        %v2801 = vextract.high.u32 %v2799
        %v2802 = vmul.u32 %v2795, %v2786
        %v2803 = vadd.s32 %v2798, %v2800
        %vm2804 = vc.u32 %v2798, %v2800
        %v2805 = vadd.s32 %v2801, 1
        %v2806 = vsel %vm2804, %v2805, %v2801
        %v2807 = vadd.s32 %v2802, %v2806
        %v2808 = vadd.s32 %v2807, 536870912
        %v2809 = vshrl.u32 %v2808, 30
        %v2810 = vshll.u32 %v2809, 30
        %v2811 = vsub.s32 %v2807, %v2810
        %vm2812 = vcmp.lt.s32.totalorder %v2811, 0
        %v2813 = vsub.s32 0, %v2811
        %v2814 = vsel %vm2812, %v2813, %v2811
        %v2815 = vclz %v2814
        %v2816 = vsub.s32 %v2815, 2
        %vm2817 = vcmp.gt.s32.totalorder 0, %v2816
        %v2818 = vsel %vm2817, 0, %v2816
        %v2819 = vsub.s32 32, %v2818
        %v2820 = vshll.u32 %v2811, %v2818
        %v2821 = vshrl.u32 %v2803, %v2819
        %v2822 = vor.u32 %v2820, %v2821
        %v2823 = vsub.s32 4294967266, %v2818
        %v2824 = vadd.s32 %v2823, 127
        %v2825 = vshll.u32 %v2824, 23
        %v2826 = vor.u32 4788187, %v2825
        %v2827 = vand.u32 2147483647, %v2826
        %v2829 = vcvt.s32.f32 %v2822
        %v2830 = vmul.f32 %v2829, %v2827
        %v2831 = vxor.u32 %v2830, 2147483648
        %v2832 = vsel %vm2749, %v2831, %v2830
        %v2833 = vsub.s32 4, %v2809
        %v2834 = vsel %vm2749, %v2833, %v2809
        %v2835 = vsel %vm2748, %v2746, %v2832
        %v2836 = vsel %vm2748, 0, %v2834
        %v2837 = vcosq.f32.pop %v2835
        %v2838 = vsinq.f32.pop %v2835
        %vm2839 = vweird.f32 %v2746
        %v2840 = vadd.s32 %v2836, 3
        %v2841 = vand.u32 %v2840, 3
        %vm2842 = vcmp.lt.s32.totalorder %v2841, 2
        %vm2843 = vcmp.eq.s32.totalorder %v2841, 0
        %v2844 = vxor.u32 %v2838, 2147483648
        %v2845 = vsel %vm2843, %v2837, %v2844
        %vm2846 = vcmp.eq.s32.totalorder %v2841, 2
        %v2847 = vxor.u32 %v2837, 2147483648
        %v2848 = vsel %vm2846, %v2847, %v2838
        %v2849 = vsel %vm2842, %v2845, %v2848
        %v2850 = vsel %vm2839, nan, %v2849
        %v2851 = vmul.f32 %v2850, %v2850
        %2853 = vset.pattern.permute.xlu0 0
        %2854 = vperm.xlu0 %2853, %v2284
        %v2855 = vpop.permute.xlu0 %2854
        %v2857 = vmul.f32 %v2855, %v2851
        %v2858 = vadd.f32 %v2736, %v2857
        %s2859 = scalar_lea.vmem %s7, 8
        %v2860 = vld [vmem:[%s2859] sm:$0xf]
        %s2861 = scalar_lea.vmem %s8, 16
        %v2862 = vld [vmem:[%s2861] sm:$0xff]
        %2863 = vrot.lane.b32.xlu0 %v2858, 1
        %v2864 = vpop.permute.xlu0 %2863
        %v2865 = vmul.f32 %v2864, %v427
        %2866 = vrot.lane.b32.xlu0 %v2858, 127
        %v2867 = vpop.permute.xlu0 %2866
        %v2868 = vmul.f32 %v2867, %v430
        %v2869 = vpack.c.bf16 %v2858, %v2865
        %v2870 = vpack.c.bf16 %v2868, %v2868
        %2872 = vset.pattern.permute.xlu0 0
        %2873 = vperm.xlu0 %2872, %v2862
        %v2874 = vpop.permute.xlu0 %2873
        %v2877 = vsel %vm1401, %v2860, 0
        %v2880 = vsel %vm1405, %v2870, 0
        %2882 = vmatprep.subr.bf16.mxu0 0
        %2883 = vmatpush1.bf16.msra.mxu0 %v2869
        %2884 = vmatprep.subr.bf16.mxu0 0
        %2885 = vmatpush1.bf16.msra.mxu0 %v2880
        %2886 = vmatprep.subr.bf16.mxu0 0
        %2887 = vmatpush1.bf16.msra.mxu0 0
        %2888 = vmatprep.subr.bf16.mxu0 0
        %2889 = vmatpush1.bf16.msra.mxu0 0
        %2890 = vmatprep.subr.bf16.mxu0 0
        %2891 = vmatpush1.bf16.msra.mxu0 0
        %2892 = vmatprep.subr.bf16.mxu0 0
        %2893 = vmatpush1.bf16.msra.mxu0 0
        %2894 = vmatprep.subr.bf16.mxu0 0
        %2895 = vmatpush1.bf16.msra.mxu0 0
        %2896 = vmatprep.subr.bf16.mxu0 0
        %2897 = vmatpush1.bf16.msra.mxu0 0
        %2898 = vmatprep.subr.bf16.mxu0 0
        %2899 = vmatpush1.bf16.msra.mxu0 0
        %2900 = vmatprep.subr.bf16.mxu0 0
        %2901 = vmatpush1.bf16.msra.mxu0 0
        %2902 = vmatprep.subr.bf16.mxu0 0
        %2903 = vmatpush1.bf16.msra.mxu0 0
        %2904 = vmatprep.subr.bf16.mxu0 0
        %2905 = vmatpush1.bf16.msra.mxu0 0
        %2906 = vmatprep.subr.bf16.mxu0 0
        %2907 = vmatpush1.bf16.msra.mxu0 0
        %2908 = vmatprep.subr.bf16.mxu0 0
        %2909 = vmatpush1.bf16.msra.mxu0 0
        %2910 = vmatprep.subr.bf16.mxu0 0
        %2911 = vmatpush1.bf16.msra.mxu0 0
        %2912 = vmatprep.subr.bf16.mxu0 0
        %2913 = vmatpush1.bf16.msra.mxu0 0
        %2914 = vmatprep.mubr.bf16.mxu0 0
        %2915 = vmatmul.mubr.bf16.gmra.mrb[0].mxu0 %v2877
        %v2916 = vpop.f32.mrb[0].mxu0
        %v2917 = vadd.f32 %v2874, %v2916
        %v2918 = vpop.f32.mrb[0].mxu0
        %v2919 = vpop.f32.mrb[0].mxu0
        %v2920 = vpop.f32.mrb[0].mxu0
        %2921 = vdwg.mxu0
        %v2922 = vmul.f32 %v2917, %v418
        %v2923 = vadd.f32 %v2922, %v2276
        %2924 = vst [vmem:[%s407] sm:$0xff] %v2923
        %s2925 = sand.u32 %s271, 1
        %s2926 = scalar_lea.sflag [#allocation4], %s2925
        %s2927 = sand.u32 %s271, 1
        %s2928 = smul.addr %s2927, 8
        %s2929 = scalar_lea.vmem [#allocation7], %s2928
        // Predicated region
        $region73: #{tpu_custom_call.1} parent=63 // pred_check
          %p2930 = pneg %p281
        $region74: #{tpu_custom_call.1} parent=63 // pred_check_branch
          %2932 = sbr.rel (%p2930) target = $region76
        $region75: #{tpu_custom_call.1} parent=63 // pred_region
          %s2934 = ssub.s32 128, 128
          %2935 = vsyncadd %s2926, %s2934
          %s2936 = smul.addr %s27, 128
          %s2937 = scalar_lea.hbm %s11, %s2936
          %s2939 = sshll.u32 %s2929, 4
          %s2940 = int_to_ptr.vmem [resolvable:$true] %s2939
          %2942 = dma.vmem_to_hbm [thread:$0]  %s2940, 128, %s2937, %s2926
        $region76: #{tpu_custom_call.1} parent=63 // pred_fallthru
          _
      $region64: #{tpu_custom_call.1} parent=5 // pred_fallthru
        _
      %p2943 = scmp.le.s32.totalorder 2, %s22
      // Predicated region
      $region77: #{tpu_custom_call.1} parent=5 // pred_check
        %p2944 = pneg %p2943
      $region78: #{tpu_custom_call.1} parent=5 // pred_check_branch
        %2946 = sbr.rel (%p2944) target = $region80
      $region79: #{tpu_custom_call.1} parent=5 // pred_region
        %s2947 = ssub.s32 %s22, 2
        // Predicated region
        $region81: #{tpu_custom_call.1} parent=79 // pred_check
          %p2948 = pneg %p287
        $region82: #{tpu_custom_call.1} parent=79 // pred_check_branch
          %2950 = sbr.rel (%p2948) target = $region84
        $region83: #{tpu_custom_call.1} parent=79 // pred_region
          %s2951 = sand.u32 %s272, 1
          %s2952 = scalar_lea.sflag [#allocation4], %s2951
          %s2953 = sand.u32 %s272, 1
          %s2954 = smul.addr %s2953, 8
          %s2955 = scalar_lea.vmem [#allocation7], %s2954
          %2956 = dma.done %s2952, 128
        $region84: #{tpu_custom_call.1} parent=79 // pred_fallthru
          _
      $region80: #{tpu_custom_call.1} parent=5 // pred_fallthru
        _
    $region6: #{tpu_custom_call.1} parent=1 // loop_footer
      %s26 = sadd.s32 1, %s22
    $region7: #{tpu_custom_call.1} parent=1 // loop_footer_branch
      %21 = sbr.rel target = $region3
    $region8: #{tpu_custom_call.1} parent=1 // loop_exit
      _
    %2957 = vsyncpa [#allocation3], 1
    %s2958 = scalar_lea.sflag [#allocation3], 1
    %2959 = vsyncpa %s2958, 1
    %2960 = vsyncpa [#allocation6], 1
    %2961 = vsyncpa [#allocation4], 1
    %s2962 = scalar_lea.sflag [#allocation4], 1
    %2963 = vsyncpa %s2962, 1

</llo_original>
